<compile_context>
chip_gen: v7x
topology: tpu7x:2x2x1
jax: 0.10.0
libtpu: 0.0.40
codegen_flags: <defaults>
</compile_context>

<pallas_src>
import functools

import numpy as np
import jax
import jax.numpy as jnp
from jax.experimental import pallas as pl
from jax.experimental.pallas import tpu as pltpu


_VMEM = pl.BlockSpec(memory_space=pltpu.MemorySpace.VMEM)


# ----------------------------------------------------------------------------
# Fused encoder kernel
# ----------------------------------------------------------------------------

def _encoder_kernel(x_ref, m0_ref, m1_ref, m2_ref, m3_ref,
                    w0_ref, b0_ref, u0_ref,
                    w1_ref, b1_ref, u1_ref,
                    w2_ref, b2_ref, u2_ref,
                    w3_ref, b3_ref, u3_ref,
                    kvw_ref, kvb_ref,
                    out_ref,
                    g_ref, a1_ref, a2_ref, a3_ref, h3_ref,
                    *, B, H):
    """Whole LAS encoder in one kernel.

    x_ref:   (T*B, Din)  f32, time-major (row = t*B + b), B = padded batch.
    m*_ref:  (T_l*B, 2H) f32 {0,1} per-layer validity masks
             (cols [0,H) gate the fwd direction at time s,
              cols [H,2H) gate the bwd direction at time T_l-1-s).
    w*_ref:  (Din_l, 8H) bf16   [fwd i,f,g,o | bwd i,f,g,o] input weights.
    b*_ref:  (1, 8H)     f32    input + recurrent biases folded.
    u*_ref:  (2H, 8H)    bf16   block-diagonal recurrent weights.
    kvw_ref: (2H, 2*KV)  bf16,  kvb_ref: (1, 2*KV) f32.
    out_ref: (T3*B, 2*KV) f32   fused key|value projection output.
    g_ref:   (T*B, 8H) f32 scratch (hoisted input-side gate pre-activations).
    a1/a2/a3: time-pair-packed activations (T_l/2*B, 4H) f32.
    h3_ref:  (T3*B, 2H) f32 final BiLSTM output (unpacked).
    """
    H2, H4, H8 = 2 * H, 4 * H, 8 * H

    def input_proj(x2d, w_ref, b_ref):
        # Hoisted, whole-sequence input projection for both directions.
        rows = x2d.shape[0]
        g_ref[pl.ds(0, rows), :] = (
            jnp.dot(x2d.astype(jnp.bfloat16), w_ref[...],
                    preferred_element_type=jnp.float32) + b_ref[...])

    def recurrence(T_l, u_ref, m_ref, store_fn):
        u = u_ref[...]                                   # (2H, 8H) bf16
        h = jnp.zeros((B, H2), jnp.float32)              # [h_fwd | h_bwd]
        c = jnp.zeros((B, H2), jnp.float32)              # [c_fwd | c_bwd]
        for s in range(T_l):                             # static unroll
            tb = T_l - 1 - s
            gx_f = g_ref[pl.ds(s * B, B), 0:H4]          # fwd gates @ t = s
            gx_b = g_ref[pl.ds(tb * B, B), H4:H8]        # bwd gates @ t = tb
            gates = (jnp.concatenate([gx_f, gx_b], axis=1) +
                     jnp.dot(h.astype(jnp.bfloat16), u,
                             preferred_element_type=jnp.float32))   # (B, 8H)
            sig = jax.nn.sigmoid(gates)
            tnh = jnp.tanh(gates)
            # PyTorch gate order i, f, g, o (per direction).
            i_g = jnp.concatenate([sig[:, 0:H], sig[:, H4:H4 + H]], axis=1)
            f_g = jnp.concatenate([sig[:, H:H2], sig[:, H4 + H:H4 + H2]], axis=1)
            g_g = jnp.concatenate([tnh[:, H2:H2 + H],
                                   tnh[:, H4 + H2:H4 + H2 + H]], axis=1)
            o_g = jnp.concatenate([sig[:, H2 + H:H4], sig[:, H8 - H:H8]], axis=1)
            m = m_ref[pl.ds(s * B, B), :]                # (B, 2H) {0,1}
            # Multiplicative masking == packed-sequence semantics:
            #  - bwd stays zero until t < len (starts at t = len-1),
            #  - padded positions / padded batch rows produce zero outputs.
            c = m * (f_g * c + i_g * g_g)
            h = m * (o_g * jnp.tanh(c))
            store_fn(s, tb, h)

    def store_packed(dst_ref):
        # Emit output already time-pair-packed: row u holds
        # [fwd(2u), bwd(2u), fwd(2u+1), bwd(2u+1)]  (4H = 128 lanes).
        def store(s, tb, h):
            dst_ref[pl.ds((s // 2) * B, B),
                    (s % 2) * H2:(s % 2) * H2 + H] = h[:, 0:H]
            dst_ref[pl.ds((tb // 2) * B, B),
                    (tb % 2) * H2 + H:(tb % 2) * H2 + H2] = h[:, H:H2]
        return store

    def store_flat(dst_ref):
        def store(s, tb, h):
            dst_ref[pl.ds(s * B, B), 0:H] = h[:, 0:H]
            dst_ref[pl.ds(tb * B, B), H:H2] = h[:, H:H2]
        return store

    T0 = x_ref.shape[0] // B
    T1 = a1_ref.shape[0] // B
    T2 = a2_ref.shape[0] // B
    T3 = a3_ref.shape[0] // B

    # Layer 0: first BiLSTM, output time-pair-packed for the first pBLSTM.
    input_proj(x_ref[...], w0_ref, b0_ref)
    recurrence(T0, u0_ref, m0_ref, store_packed(a1_ref))

    # Three pyramidal BiLSTM layers (inputs already packed, 4H = 128 lanes).
    input_proj(a1_ref[...], w1_ref, b1_ref)
    recurrence(T1, u1_ref, m1_ref, store_packed(a2_ref))

    input_proj(a2_ref[...], w2_ref, b2_ref)
    recurrence(T2, u2_ref, m2_ref, store_packed(a3_ref))

    input_proj(a3_ref[...], w3_ref, b3_ref)
    recurrence(T3, u3_ref, m3_ref, store_flat(h3_ref))

    # Fused key/value projection epilogue (lane-dense 2*KV output).
    out_ref[...] = (jnp.dot(h3_ref[...].astype(jnp.bfloat16), kvw_ref[...],
                            preferred_element_type=jnp.float32) + kvb_ref[...])


# ----------------------------------------------------------------------------
# Host-side helpers (static-length mask tables, parameter construction)
# ----------------------------------------------------------------------------

def _layer_mask(T_l, B_pad, H, lens):
    """(T_l*B_pad, 2H) f32 {0,1} mask; built on host from static lengths."""
    t = np.arange(T_l, dtype=np.int32)[:, None]                    # (T_l, 1)
    fwd = (t < lens[None, :]).astype(np.float32)                   # (T_l, B)
    bwd = ((T_l - 1 - t) < lens[None, :]).astype(np.float32)       # (T_l, B)
    m = np.concatenate(
        [np.broadcast_to(fwd[:, :, None], (T_l, B_pad, H)),
         np.broadcast_to(bwd[:, :, None], (T_l, B_pad, H))], axis=2)
    return jnp.asarray(m.reshape(T_l * B_pad, 2 * H))


def _uniform(key, shape, scale):
    return jax.random.uniform(key, shape, jnp.float32, -scale, scale)


def _make_bilstm_params(key, din, h):
    """PyTorch-style bidirectional LSTM params, pre-fused for the kernel."""
    ks = jax.random.split(key, 8)
    s = 1.0 / np.sqrt(h)
    wih_f = _uniform(ks[0], (4 * h, din), s)
    whh_f = _uniform(ks[1], (4 * h, h), s)
    bih_f = _uniform(ks[2], (4 * h,), s)
    bhh_f = _uniform(ks[3], (4 * h,), s)
    wih_b = _uniform(ks[4], (4 * h, din), s)
    whh_b = _uniform(ks[5], (4 * h, h), s)
    bih_b = _uniform(ks[6], (4 * h,), s)
    bhh_b = _uniform(ks[7], (4 * h,), s)
    w_in = jnp.concatenate([wih_f.T, wih_b.T], axis=1).astype(jnp.bfloat16)
    b_in = jnp.concatenate([bih_f + bhh_f, bih_b + bhh_b]).reshape(1, 8 * h)
    # Block-diagonal recurrent weight: [h_f | h_b] @ u == [h_f@Whh_f | h_b@Whh_b]
    u = jnp.zeros((2 * h, 8 * h), jnp.float32)
    u = u.at[:h, :4 * h].set(whh_f.T)
    u = u.at[h:, 4 * h:].set(whh_b.T)
    return w_in, b_in, u.astype(jnp.bfloat16)


def init_encoder_params(key, input_dim, hidden_dim, key_value_size):
    ks = jax.random.split(key, 8)
    dims = [input_dim, 4 * hidden_dim, 4 * hidden_dim, 4 * hidden_dim]
    w, b, u = [], [], []
    for i in range(4):
        wi, bi, ui = _make_bilstm_params(ks[i], dims[i], hidden_dim)
        w.append(wi)
        b.append(bi)
        u.append(ui)
    sl = 1.0 / np.sqrt(2 * hidden_dim)
    key_w = _uniform(ks[4], (2 * hidden_dim, key_value_size), sl)
    key_b = _uniform(ks[5], (1, key_value_size), sl)
    val_w = _uniform(ks[6], (2 * hidden_dim, key_value_size), sl)
    val_b = _uniform(ks[7], (1, key_value_size), sl)
    return dict(
        w=w, b=b, u=u,
        kv_w=jnp.concatenate([key_w, val_w], axis=1).astype(jnp.bfloat16),
        kv_b=jnp.concatenate([key_b, val_b], axis=1),
    )


# ----------------------------------------------------------------------------
# Encoder forward (mirrors the PyTorch Encoder.forward), fully jit'ed.
# ----------------------------------------------------------------------------

@functools.partial(jax.jit, static_argnames=("x_len",))
def encoder_forward(x, params, *, x_len):
    """x: (B, T, Din) f32; x_len: static tuple of ints (host lengths).

    Returns (key, value, out_lengths) with key/value: (B, T_final, KV).
    """
    B, T, Din = x.shape
    H = params["u"][0].shape[0] // 2
    KV = params["kv_w"].shape[1] // 2

    lens = np.minimum(np.asarray(x_len, np.int64), T).astype(np.int32)
    B_pad = -(-B // 8) * 8                    # pad batch to 8 sublanes
    T_pad = max(8, -(-T // 8) * 8)            # pad time to a multiple of 8
    T3 = T_pad // 8

    # Time-major layout, zero-pad batch/time (padded region is masked out).
    xt = jnp.transpose(x, (1, 0, 2))
    xt = jnp.pad(xt, ((0, T_pad - T), (0, B_pad - B), (0, 0)))
    x_flat = xt.reshape(T_pad * B_pad, Din)

    # Static per-layer lengths and hoisted {0,1} mask tables.
    lens_pad = np.zeros((B_pad,), np.int32)
    lens_pad[:B] = lens
    masks, lens_i, T_i = [], lens_pad, T_pad
    for layer in range(4):
        if layer:
            lens_i, T_i = lens_i // 2, T_i // 2
        masks.append(_layer_mask(T_i, B_pad, H, lens_i))

    flat_in = [x_flat] + masks
    for i in range(4):
        flat_in += [params["w"][i], params["b"][i], params["u"][i]]
    flat_in += [params["kv_w"], params["kv_b"]]

    kernel = functools.partial(_encoder_kernel, B=B_pad, H=H)
    out = pl.pallas_call(
        kernel,
        out_shape=jax.ShapeDtypeStruct((T3 * B_pad, 2 * KV), jnp.float32),
        in_specs=[_VMEM] * len(flat_in),
        out_specs=_VMEM,
        scratch_shapes=[
            pltpu.VMEM((T_pad * B_pad, 8 * H), jnp.float32),       # gate scratch
            pltpu.VMEM((T_pad // 2 * B_pad, 4 * H), jnp.float32),  # packed act 1
            pltpu.VMEM((T_pad // 4 * B_pad, 4 * H), jnp.float32),  # packed act 2
            pltpu.VMEM((T3 * B_pad, 4 * H), jnp.float32),          # packed act 3
            pltpu.VMEM((T3 * B_pad, 2 * H), jnp.float32),          # final BiLSTM out
        ],
    )(*flat_in)

    out = out.reshape(T3, B_pad, 2 * KV).transpose(1, 0, 2)[:B]    # (B, T3, 2KV)
    out_lens = lens // 8                                           # 3x floor-halving
    T_out = max(int(out_lens.max()), 1)                            # pad_packed trim
    out = out[:, :T_out]
    return out[..., :KV], out[..., KV:], jnp.asarray(out_lens)


# ----------------------------------------------------------------------------
# Main
# ----------------------------------------------------------------------------

if __name__ == "__main__":
    B, T, INPUT_DIM, HIDDEN, KV = 2, 16, 32, 32, 128

    root = jax.random.PRNGKey(0)
    k_x, k_p = jax.random.split(root)

    x = jax.random.normal(k_x, (B, T, INPUT_DIM), jnp.float32)
    x_len = (16, 13)                       # static host lengths (like CPU x_len)

    params = init_encoder_params(k_p, INPUT_DIM, HIDDEN, KV)

    key_out, value_out, out_lens = encoder_forward(x, params, x_len=x_len)
    jax.block_until_ready((key_out, value_out, out_lens))

    # After 3 halvings: lengths (16, 13) -> (2, 1); T_final = 2.
    assert key_out.shape == (B, 2, KV), key_out.shape
    assert value_out.shape == (B, 2, KV), value_out.shape
    assert list(np.asarray(out_lens)) == [2, 1], np.asarray(out_lens)
    assert np.all(np.isfinite(np.asarray(key_out)))
    assert np.all(np.isfinite(np.asarray(value_out)))

    print("KERNEL_OK")
</pallas_src>

<mosaic_0001>
module attributes {stable_mosaic.version = 11 : i64} {
  func.func @_encoder_kernel(%arg0: memref<128x32xf32, #tpu.memory_space<vmem>>, %arg1: memref<128x64xf32, #tpu.memory_space<vmem>>, %arg2: memref<64x64xf32, #tpu.memory_space<vmem>>, %arg3: memref<32x64xf32, #tpu.memory_space<vmem>>, %arg4: memref<16x64xf32, #tpu.memory_space<vmem>>, %arg5: memref<32x256xbf16, #tpu.memory_space<vmem>>, %arg6: memref<1x256xf32, #tpu.memory_space<vmem>>, %arg7: memref<64x256xbf16, #tpu.memory_space<vmem>>, %arg8: memref<128x256xbf16, #tpu.memory_space<vmem>>, %arg9: memref<1x256xf32, #tpu.memory_space<vmem>>, %arg10: memref<64x256xbf16, #tpu.memory_space<vmem>>, %arg11: memref<128x256xbf16, #tpu.memory_space<vmem>>, %arg12: memref<1x256xf32, #tpu.memory_space<vmem>>, %arg13: memref<64x256xbf16, #tpu.memory_space<vmem>>, %arg14: memref<128x256xbf16, #tpu.memory_space<vmem>>, %arg15: memref<1x256xf32, #tpu.memory_space<vmem>>, %arg16: memref<64x256xbf16, #tpu.memory_space<vmem>>, %arg17: memref<64x256xbf16, #tpu.memory_space<vmem>>, %arg18: memref<1x256xf32, #tpu.memory_space<vmem>>, %arg19: memref<16x256xf32, #tpu.memory_space<vmem>>, %arg20: memref<128x256xf32, #tpu.memory_space<vmem>>, %arg21: memref<64x128xf32, #tpu.memory_space<vmem>>, %arg22: memref<32x128xf32, #tpu.memory_space<vmem>>, %arg23: memref<16x128xf32, #tpu.memory_space<vmem>>, %arg24: memref<16x64xf32, #tpu.memory_space<vmem>>) attributes {dimension_semantics = [], scalar_prefetch = 0 : i64, scratch_operands = 5 : i64, tpu.core_type = #tpu.core_type<tc>} {
    %c0 = arith.constant 0 : index
    %c0_0 = arith.constant 0 : index
    %0 = vector.load %arg0[%c0, %c0_0] : memref<128x32xf32, #tpu.memory_space<vmem>>, vector<128x32xf32>
    %1 = arith.truncf %0 : vector<128x32xf32> to vector<128x32xbf16>
    %c0_1 = arith.constant 0 : index
    %c0_2 = arith.constant 0 : index
    %2 = vector.load %arg5[%c0_1, %c0_2] : memref<32x256xbf16, #tpu.memory_space<vmem>>, vector<32x256xbf16>
    %cst = arith.constant dense<0.000000e+00> : vector<128x256xf32>
    %3 = tpu.matmul %1, %2, %cst {dimension_numbers = #tpu.dot_dimension_numbers<[1], [0], [0], [1], [0, 0, 1, 1], [], []>} : vector<128x32xbf16>, vector<32x256xbf16>, vector<128x256xf32> -> vector<128x256xf32>
    %c0_3 = arith.constant 0 : index
    %c0_4 = arith.constant 0 : index
    %4 = vector.load %arg6[%c0_3, %c0_4] : memref<1x256xf32, #tpu.memory_space<vmem>>, vector<1x256xf32>
    %5 = vector.broadcast %4 : vector<1x256xf32> to vector<128x256xf32>
    %6 = arith.addf %3, %5 : vector<128x256xf32>
    %c0_5 = arith.constant 0 : index
    %c0_6 = arith.constant 0 : index
    %7 = vector.load %arg20[%c0_5, %c0_6] : memref<128x256xf32, #tpu.memory_space<vmem>>, vector<128x256xf32>
    tpu.vector_store %arg20[%c0_5, %c0_6], %6 {strides = array<i32>} : memref<128x256xf32, #tpu.memory_space<vmem>>, vector<128x256xf32>,
    %c0_7 = arith.constant 0 : index
    %c0_8 = arith.constant 0 : index
    %8 = vector.load %arg7[%c0_7, %c0_8] : memref<64x256xbf16, #tpu.memory_space<vmem>>, vector<64x256xbf16>
    %cst_9 = arith.constant 0.000000e+00 : f32
    %9 = vector.broadcast %cst_9 : f32 to vector<8x64xf32>
    %cst_10 = arith.constant 0.000000e+00 : f32
    %10 = vector.broadcast %cst_10 : f32 to vector<8x64xf32>
    %c0_11 = arith.constant 0 : index
    %c0_12 = arith.constant 0 : index
    %11 = vector.load %arg20[%c0_11, %c0_12] : memref<128x256xf32, #tpu.memory_space<vmem>>, vector<8x128xf32>
    %c120 = arith.constant 120 : index
    %c128 = arith.constant 128 : index
    %12 = vector.load %arg20[%c120, %c128] : memref<128x256xf32, #tpu.memory_space<vmem>>, vector<8x128xf32>
    %13 = tpu.concatenate %11, %12 in 1 : vector<8x128xf32>, vector<8x128xf32> -> vector<8x256xf32>
    %14 = arith.truncf %9 : vector<8x64xf32> to vector<8x64xbf16>
    %cst_13 = arith.constant dense<0.000000e+00> : vector<8x256xf32>
    %15 = tpu.matmul %14, %8, %cst_13 {dimension_numbers = #tpu.dot_dimension_numbers<[1], [0], [0], [1], [0, 0, 1, 1], [], []>} : vector<8x64xbf16>, vector<64x256xbf16>, vector<8x256xf32> -> vector<8x256xf32>
    %16 = arith.addf %13, %15 : vector<8x256xf32>
    %17 = arith.negf %16 : vector<8x256xf32>
    %18 = math.exp %17 : vector<8x256xf32>
    %cst_14 = arith.constant 1.000000e+00 : f32
    %19 = vector.broadcast %cst_14 : f32 to vector<8x256xf32>
    %20 = arith.addf %19, %18 : vector<8x256xf32>
    %21 = arith.divf %19, %20 : vector<8x256xf32>
    %22 = math.tanh %16 : vector<8x256xf32>
    %23 = vector.extract_strided_slice %21 {offsets = [0, 0], sizes = [8, 32], strides = [1, 1]} : vector<8x256xf32> to vector<8x32xf32>
    %24 = vector.extract_strided_slice %21 {offsets = [0, 128], sizes = [8, 32], strides = [1, 1]} : vector<8x256xf32> to vector<8x32xf32>
    %25 = tpu.concatenate %23, %24 in 1 : vector<8x32xf32>, vector<8x32xf32> -> vector<8x64xf32>
    %26 = vector.extract_strided_slice %21 {offsets = [0, 32], sizes = [8, 32], strides = [1, 1]} : vector<8x256xf32> to vector<8x32xf32>
    %27 = vector.extract_strided_slice %21 {offsets = [0, 160], sizes = [8, 32], strides = [1, 1]} : vector<8x256xf32> to vector<8x32xf32>
    %28 = tpu.concatenate %26, %27 in 1 : vector<8x32xf32>, vector<8x32xf32> -> vector<8x64xf32>
    %29 = vector.extract_strided_slice %22 {offsets = [0, 64], sizes = [8, 32], strides = [1, 1]} : vector<8x256xf32> to vector<8x32xf32>
    %30 = vector.extract_strided_slice %22 {offsets = [0, 192], sizes = [8, 32], strides = [1, 1]} : vector<8x256xf32> to vector<8x32xf32>
    %31 = tpu.concatenate %29, %30 in 1 : vector<8x32xf32>, vector<8x32xf32> -> vector<8x64xf32>
    %32 = vector.extract_strided_slice %21 {offsets = [0, 96], sizes = [8, 32], strides = [1, 1]} : vector<8x256xf32> to vector<8x32xf32>
    %33 = vector.extract_strided_slice %21 {offsets = [0, 224], sizes = [8, 32], strides = [1, 1]} : vector<8x256xf32> to vector<8x32xf32>
    %34 = tpu.concatenate %32, %33 in 1 : vector<8x32xf32>, vector<8x32xf32> -> vector<8x64xf32>
    %c0_15 = arith.constant 0 : index
    %c0_16 = arith.constant 0 : index
    %35 = vector.load %arg1[%c0_15, %c0_16] : memref<128x64xf32, #tpu.memory_space<vmem>>, vector<8x64xf32>
    %36 = arith.mulf %28, %10 : vector<8x64xf32>
    %37 = arith.mulf %25, %31 : vector<8x64xf32>
    %38 = arith.addf %36, %37 : vector<8x64xf32>
    %39 = arith.mulf %35, %38 : vector<8x64xf32>
    %40 = math.tanh %39 : vector<8x64xf32>
    %41 = arith.mulf %34, %40 : vector<8x64xf32>
    %42 = arith.mulf %35, %41 : vector<8x64xf32>
    %43 = vector.extract_strided_slice %42 {offsets = [0, 0], sizes = [8, 32], strides = [1, 1]} : vector<8x64xf32> to vector<8x32xf32>
    %c0_17 = arith.constant 0 : index
    %c0_18 = arith.constant 0 : index
    %44 = vector.load %arg21[%c0_17, %c0_18] : memref<64x128xf32, #tpu.memory_space<vmem>>, vector<8x32xf32>
    tpu.vector_store %arg21[%c0_17, %c0_18], %43 {strides = array<i32>} : memref<64x128xf32, #tpu.memory_space<vmem>>, vector<8x32xf32>,
    %45 = vector.extract_strided_slice %42 {offsets = [0, 32], sizes = [8, 32], strides = [1, 1]} : vector<8x64xf32> to vector<8x32xf32>
    %c56 = arith.constant 56 : index
    %c96 = arith.constant 96 : index
    %46 = vector.load %arg21[%c56, %c96] : memref<64x128xf32, #tpu.memory_space<vmem>>, vector<8x32xf32>
    tpu.vector_store %arg21[%c56, %c96], %45 {strides = array<i32>} : memref<64x128xf32, #tpu.memory_space<vmem>>, vector<8x32xf32>,
    %c8 = arith.constant 8 : index
    %c0_19 = arith.constant 0 : index
    %47 = vector.load %arg20[%c8, %c0_19] : memref<128x256xf32, #tpu.memory_space<vmem>>, vector<8x128xf32>
    %c112 = arith.constant 112 : index
    %c128_20 = arith.constant 128 : index
    %48 = vector.load %arg20[%c112, %c128_20] : memref<128x256xf32, #tpu.memory_space<vmem>>, vector<8x128xf32>
    %49 = tpu.concatenate %47, %48 in 1 : vector<8x128xf32>, vector<8x128xf32> -> vector<8x256xf32>
    %50 = arith.truncf %42 : vector<8x64xf32> to vector<8x64xbf16>
    %cst_21 = arith.constant dense<0.000000e+00> : vector<8x256xf32>
    %51 = tpu.matmul %50, %8, %cst_21 {dimension_numbers = #tpu.dot_dimension_numbers<[1], [0], [0], [1], [0, 0, 1, 1], [], []>} : vector<8x64xbf16>, vector<64x256xbf16>, vector<8x256xf32> -> vector<8x256xf32>
    %52 = arith.addf %49, %51 : vector<8x256xf32>
    %53 = arith.negf %52 : vector<8x256xf32>
    %54 = math.exp %53 : vector<8x256xf32>
    %cst_22 = arith.constant 1.000000e+00 : f32
    %55 = vector.broadcast %cst_22 : f32 to vector<8x256xf32>
    %56 = arith.addf %55, %54 : vector<8x256xf32>
    %57 = arith.divf %55, %56 : vector<8x256xf32>
    %58 = math.tanh %52 : vector<8x256xf32>
    %59 = vector.extract_strided_slice %57 {offsets = [0, 0], sizes = [8, 32], strides = [1, 1]} : vector<8x256xf32> to vector<8x32xf32>
    %60 = vector.extract_strided_slice %57 {offsets = [0, 128], sizes = [8, 32], strides = [1, 1]} : vector<8x256xf32> to vector<8x32xf32>
    %61 = tpu.concatenate %59, %60 in 1 : vector<8x32xf32>, vector<8x32xf32> -> vector<8x64xf32>
    %62 = vector.extract_strided_slice %57 {offsets = [0, 32], sizes = [8, 32], strides = [1, 1]} : vector<8x256xf32> to vector<8x32xf32>
    %63 = vector.extract_strided_slice %57 {offsets = [0, 160], sizes = [8, 32], strides = [1, 1]} : vector<8x256xf32> to vector<8x32xf32>
    %64 = tpu.concatenate %62, %63 in 1 : vector<8x32xf32>, vector<8x32xf32> -> vector<8x64xf32>
    %65 = vector.extract_strided_slice %58 {offsets = [0, 64], sizes = [8, 32], strides = [1, 1]} : vector<8x256xf32> to vector<8x32xf32>
    %66 = vector.extract_strided_slice %58 {offsets = [0, 192], sizes = [8, 32], strides = [1, 1]} : vector<8x256xf32> to vector<8x32xf32>
    %67 = tpu.concatenate %65, %66 in 1 : vector<8x32xf32>, vector<8x32xf32> -> vector<8x64xf32>
    %68 = vector.extract_strided_slice %57 {offsets = [0, 96], sizes = [8, 32], strides = [1, 1]} : vector<8x256xf32> to vector<8x32xf32>
    %69 = vector.extract_strided_slice %57 {offsets = [0, 224], sizes = [8, 32], strides = [1, 1]} : vector<8x256xf32> to vector<8x32xf32>
    %70 = tpu.concatenate %68, %69 in 1 : vector<8x32xf32>, vector<8x32xf32> -> vector<8x64xf32>
    %c8_23 = arith.constant 8 : index
    %c0_24 = arith.constant 0 : index
    %71 = vector.load %arg1[%c8_23, %c0_24] : memref<128x64xf32, #tpu.memory_space<vmem>>, vector<8x64xf32>
    %72 = arith.mulf %64, %39 : vector<8x64xf32>
    %73 = arith.mulf %61, %67 : vector<8x64xf32>
    %74 = arith.addf %72, %73 : vector<8x64xf32>
    %75 = arith.mulf %71, %74 : vector<8x64xf32>
    %76 = math.tanh %75 : vector<8x64xf32>
    %77 = arith.mulf %70, %76 : vector<8x64xf32>
    %78 = arith.mulf %71, %77 : vector<8x64xf32>
    %79 = vector.extract_strided_slice %78 {offsets = [0, 0], sizes = [8, 32], strides = [1, 1]} : vector<8x64xf32> to vector<8x32xf32>
    %c0_25 = arith.constant 0 : index
    %c64 = arith.constant 64 : index
    %80 = vector.load %arg21[%c0_25, %c64] : memref<64x128xf32, #tpu.memory_space<vmem>>, vector<8x32xf32>
    tpu.vector_store %arg21[%c0_25, %c64], %79 {strides = array<i32>} : memref<64x128xf32, #tpu.memory_space<vmem>>, vector<8x32xf32>,
    %81 = vector.extract_strided_slice %78 {offsets = [0, 32], sizes = [8, 32], strides = [1, 1]} : vector<8x64xf32> to vector<8x32xf32>
    %c56_26 = arith.constant 56 : index
    %c32 = arith.constant 32 : index
    %82 = vector.load %arg21[%c56_26, %c32] : memref<64x128xf32, #tpu.memory_space<vmem>>, vector<8x32xf32>
    tpu.vector_store %arg21[%c56_26, %c32], %81 {strides = array<i32>} : memref<64x128xf32, #tpu.memory_space<vmem>>, vector<8x32xf32>,
    %c16 = arith.constant 16 : index
    %c0_27 = arith.constant 0 : index
    %83 = vector.load %arg20[%c16, %c0_27] : memref<128x256xf32, #tpu.memory_space<vmem>>, vector<8x128xf32>
    %c104 = arith.constant 104 : index
    %c128_28 = arith.constant 128 : index
    %84 = vector.load %arg20[%c104, %c128_28] : memref<128x256xf32, #tpu.memory_space<vmem>>, vector<8x128xf32>
    %85 = tpu.concatenate %83, %84 in 1 : vector<8x128xf32>, vector<8x128xf32> -> vector<8x256xf32>
    %86 = arith.truncf %78 : vector<8x64xf32> to vector<8x64xbf16>
    %cst_29 = arith.constant dense<0.000000e+00> : vector<8x256xf32>
    %87 = tpu.matmul %86, %8, %cst_29 {dimension_numbers = #tpu.dot_dimension_numbers<[1], [0], [0], [1], [0, 0, 1, 1], [], []>} : vector<8x64xbf16>, vector<64x256xbf16>, vector<8x256xf32> -> vector<8x256xf32>
    %88 = arith.addf %85, %87 : vector<8x256xf32>
    %89 = arith.negf %88 : vector<8x256xf32>
    %90 = math.exp %89 : vector<8x256xf32>
    %cst_30 = arith.constant 1.000000e+00 : f32
    %91 = vector.broadcast %cst_30 : f32 to vector<8x256xf32>
    %92 = arith.addf %91, %90 : vector<8x256xf32>
    %93 = arith.divf %91, %92 : vector<8x256xf32>
    %94 = math.tanh %88 : vector<8x256xf32>
    %95 = vector.extract_strided_slice %93 {offsets = [0, 0], sizes = [8, 32], strides = [1, 1]} : vector<8x256xf32> to vector<8x32xf32>
    %96 = vector.extract_strided_slice %93 {offsets = [0, 128], sizes = [8, 32], strides = [1, 1]} : vector<8x256xf32> to vector<8x32xf32>
    %97 = tpu.concatenate %95, %96 in 1 : vector<8x32xf32>, vector<8x32xf32> -> vector<8x64xf32>
    %98 = vector.extract_strided_slice %93 {offsets = [0, 32], sizes = [8, 32], strides = [1, 1]} : vector<8x256xf32> to vector<8x32xf32>
    %99 = vector.extract_strided_slice %93 {offsets = [0, 160], sizes = [8, 32], strides = [1, 1]} : vector<8x256xf32> to vector<8x32xf32>
    %100 = tpu.concatenate %98, %99 in 1 : vector<8x32xf32>, vector<8x32xf32> -> vector<8x64xf32>
    %101 = vector.extract_strided_slice %94 {offsets = [0, 64], sizes = [8, 32], strides = [1, 1]} : vector<8x256xf32> to vector<8x32xf32>
    %102 = vector.extract_strided_slice %94 {offsets = [0, 192], sizes = [8, 32], strides = [1, 1]} : vector<8x256xf32> to vector<8x32xf32>
    %103 = tpu.concatenate %101, %102 in 1 : vector<8x32xf32>, vector<8x32xf32> -> vector<8x64xf32>
    %104 = vector.extract_strided_slice %93 {offsets = [0, 96], sizes = [8, 32], strides = [1, 1]} : vector<8x256xf32> to vector<8x32xf32>
    %105 = vector.extract_strided_slice %93 {offsets = [0, 224], sizes = [8, 32], strides = [1, 1]} : vector<8x256xf32> to vector<8x32xf32>
    %106 = tpu.concatenate %104, %105 in 1 : vector<8x32xf32>, vector<8x32xf32> -> vector<8x64xf32>
    %c16_31 = arith.constant 16 : index
    %c0_32 = arith.constant 0 : index
    %107 = vector.load %arg1[%c16_31, %c0_32] : memref<128x64xf32, #tpu.memory_space<vmem>>, vector<8x64xf32>
    %108 = arith.mulf %100, %75 : vector<8x64xf32>
    %109 = arith.mulf %97, %103 : vector<8x64xf32>
    %110 = arith.addf %108, %109 : vector<8x64xf32>
    %111 = arith.mulf %107, %110 : vector<8x64xf32>
    %112 = math.tanh %111 : vector<8x64xf32>
    %113 = arith.mulf %106, %112 : vector<8x64xf32>
    %114 = arith.mulf %107, %113 : vector<8x64xf32>
    %115 = vector.extract_strided_slice %114 {offsets = [0, 0], sizes = [8, 32], strides = [1, 1]} : vector<8x64xf32> to vector<8x32xf32>
    %c8_33 = arith.constant 8 : index
    %c0_34 = arith.constant 0 : index
    %116 = vector.load %arg21[%c8_33, %c0_34] : memref<64x128xf32, #tpu.memory_space<vmem>>, vector<8x32xf32>
    tpu.vector_store %arg21[%c8_33, %c0_34], %115 {strides = array<i32>} : memref<64x128xf32, #tpu.memory_space<vmem>>, vector<8x32xf32>,
    %117 = vector.extract_strided_slice %114 {offsets = [0, 32], sizes = [8, 32], strides = [1, 1]} : vector<8x64xf32> to vector<8x32xf32>
    %c48 = arith.constant 48 : index
    %c96_35 = arith.constant 96 : index
    %118 = vector.load %arg21[%c48, %c96_35] : memref<64x128xf32, #tpu.memory_space<vmem>>, vector<8x32xf32>
    tpu.vector_store %arg21[%c48, %c96_35], %117 {strides = array<i32>} : memref<64x128xf32, #tpu.memory_space<vmem>>, vector<8x32xf32>,
    %c24 = arith.constant 24 : index
    %c0_36 = arith.constant 0 : index
    %119 = vector.load %arg20[%c24, %c0_36] : memref<128x256xf32, #tpu.memory_space<vmem>>, vector<8x128xf32>
    %c96_37 = arith.constant 96 : index
    %c128_38 = arith.constant 128 : index
    %120 = vector.load %arg20[%c96_37, %c128_38] : memref<128x256xf32, #tpu.memory_space<vmem>>, vector<8x128xf32>
    %121 = tpu.concatenate %119, %120 in 1 : vector<8x128xf32>, vector<8x128xf32> -> vector<8x256xf32>
    %122 = arith.truncf %114 : vector<8x64xf32> to vector<8x64xbf16>
    %cst_39 = arith.constant dense<0.000000e+00> : vector<8x256xf32>
    %123 = tpu.matmul %122, %8, %cst_39 {dimension_numbers = #tpu.dot_dimension_numbers<[1], [0], [0], [1], [0, 0, 1, 1], [], []>} : vector<8x64xbf16>, vector<64x256xbf16>, vector<8x256xf32> -> vector<8x256xf32>
    %124 = arith.addf %121, %123 : vector<8x256xf32>
    %125 = arith.negf %124 : vector<8x256xf32>
    %126 = math.exp %125 : vector<8x256xf32>
    %cst_40 = arith.constant 1.000000e+00 : f32
    %127 = vector.broadcast %cst_40 : f32 to vector<8x256xf32>
    %128 = arith.addf %127, %126 : vector<8x256xf32>
    %129 = arith.divf %127, %128 : vector<8x256xf32>
    %130 = math.tanh %124 : vector<8x256xf32>
    %131 = vector.extract_strided_slice %129 {offsets = [0, 0], sizes = [8, 32], strides = [1, 1]} : vector<8x256xf32> to vector<8x32xf32>
    %132 = vector.extract_strided_slice %129 {offsets = [0, 128], sizes = [8, 32], strides = [1, 1]} : vector<8x256xf32> to vector<8x32xf32>
    %133 = tpu.concatenate %131, %132 in 1 : vector<8x32xf32>, vector<8x32xf32> -> vector<8x64xf32>
    %134 = vector.extract_strided_slice %129 {offsets = [0, 32], sizes = [8, 32], strides = [1, 1]} : vector<8x256xf32> to vector<8x32xf32>
    %135 = vector.extract_strided_slice %129 {offsets = [0, 160], sizes = [8, 32], strides = [1, 1]} : vector<8x256xf32> to vector<8x32xf32>
    %136 = tpu.concatenate %134, %135 in 1 : vector<8x32xf32>, vector<8x32xf32> -> vector<8x64xf32>
    %137 = vector.extract_strided_slice %130 {offsets = [0, 64], sizes = [8, 32], strides = [1, 1]} : vector<8x256xf32> to vector<8x32xf32>
    %138 = vector.extract_strided_slice %130 {offsets = [0, 192], sizes = [8, 32], strides = [1, 1]} : vector<8x256xf32> to vector<8x32xf32>
    %139 = tpu.concatenate %137, %138 in 1 : vector<8x32xf32>, vector<8x32xf32> -> vector<8x64xf32>
    %140 = vector.extract_strided_slice %129 {offsets = [0, 96], sizes = [8, 32], strides = [1, 1]} : vector<8x256xf32> to vector<8x32xf32>
    %141 = vector.extract_strided_slice %129 {offsets = [0, 224], sizes = [8, 32], strides = [1, 1]} : vector<8x256xf32> to vector<8x32xf32>
    %142 = tpu.concatenate %140, %141 in 1 : vector<8x32xf32>, vector<8x32xf32> -> vector<8x64xf32>
    %c24_41 = arith.constant 24 : index
    %c0_42 = arith.constant 0 : index
    %143 = vector.load %arg1[%c24_41, %c0_42] : memref<128x64xf32, #tpu.memory_space<vmem>>, vector<8x64xf32>
    %144 = arith.mulf %136, %111 : vector<8x64xf32>
    %145 = arith.mulf %133, %139 : vector<8x64xf32>
    %146 = arith.addf %144, %145 : vector<8x64xf32>
    %147 = arith.mulf %143, %146 : vector<8x64xf32>
    %148 = math.tanh %147 : vector<8x64xf32>
    %149 = arith.mulf %142, %148 : vector<8x64xf32>
    %150 = arith.mulf %143, %149 : vector<8x64xf32>
    %151 = vector.extract_strided_slice %150 {offsets = [0, 0], sizes = [8, 32], strides = [1, 1]} : vector<8x64xf32> to vector<8x32xf32>
    %c8_43 = arith.constant 8 : index
    %c64_44 = arith.constant 64 : index
    %152 = vector.load %arg21[%c8_43, %c64_44] : memref<64x128xf32, #tpu.memory_space<vmem>>, vector<8x32xf32>
    tpu.vector_store %arg21[%c8_43, %c64_44], %151 {strides = array<i32>} : memref<64x128xf32, #tpu.memory_space<vmem>>, vector<8x32xf32>,
    %153 = vector.extract_strided_slice %150 {offsets = [0, 32], sizes = [8, 32], strides = [1, 1]} : vector<8x64xf32> to vector<8x32xf32>
    %c48_45 = arith.constant 48 : index
    %c32_46 = arith.constant 32 : index
    %154 = vector.load %arg21[%c48_45, %c32_46] : memref<64x128xf32, #tpu.memory_space<vmem>>, vector<8x32xf32>
    tpu.vector_store %arg21[%c48_45, %c32_46], %153 {strides = array<i32>} : memref<64x128xf32, #tpu.memory_space<vmem>>, vector<8x32xf32>,
    %c32_47 = arith.constant 32 : index
    %c0_48 = arith.constant 0 : index
    %155 = vector.load %arg20[%c32_47, %c0_48] : memref<128x256xf32, #tpu.memory_space<vmem>>, vector<8x128xf32>
    %c88 = arith.constant 88 : index
    %c128_49 = arith.constant 128 : index
    %156 = vector.load %arg20[%c88, %c128_49] : memref<128x256xf32, #tpu.memory_space<vmem>>, vector<8x128xf32>
    %157 = tpu.concatenate %155, %156 in 1 : vector<8x128xf32>, vector<8x128xf32> -> vector<8x256xf32>
    %158 = arith.truncf %150 : vector<8x64xf32> to vector<8x64xbf16>
    %cst_50 = arith.constant dense<0.000000e+00> : vector<8x256xf32>
    %159 = tpu.matmul %158, %8, %cst_50 {dimension_numbers = #tpu.dot_dimension_numbers<[1], [0], [0], [1], [0, 0, 1, 1], [], []>} : vector<8x64xbf16>, vector<64x256xbf16>, vector<8x256xf32> -> vector<8x256xf32>
    %160 = arith.addf %157, %159 : vector<8x256xf32>
    %161 = arith.negf %160 : vector<8x256xf32>
    %162 = math.exp %161 : vector<8x256xf32>
    %cst_51 = arith.constant 1.000000e+00 : f32
    %163 = vector.broadcast %cst_51 : f32 to vector<8x256xf32>
    %164 = arith.addf %163, %162 : vector<8x256xf32>
    %165 = arith.divf %163, %164 : vector<8x256xf32>
    %166 = math.tanh %160 : vector<8x256xf32>
    %167 = vector.extract_strided_slice %165 {offsets = [0, 0], sizes = [8, 32], strides = [1, 1]} : vector<8x256xf32> to vector<8x32xf32>
    %168 = vector.extract_strided_slice %165 {offsets = [0, 128], sizes = [8, 32], strides = [1, 1]} : vector<8x256xf32> to vector<8x32xf32>
    %169 = tpu.concatenate %167, %168 in 1 : vector<8x32xf32>, vector<8x32xf32> -> vector<8x64xf32>
    %170 = vector.extract_strided_slice %165 {offsets = [0, 32], sizes = [8, 32], strides = [1, 1]} : vector<8x256xf32> to vector<8x32xf32>
    %171 = vector.extract_strided_slice %165 {offsets = [0, 160], sizes = [8, 32], strides = [1, 1]} : vector<8x256xf32> to vector<8x32xf32>
    %172 = tpu.concatenate %170, %171 in 1 : vector<8x32xf32>, vector<8x32xf32> -> vector<8x64xf32>
    %173 = vector.extract_strided_slice %166 {offsets = [0, 64], sizes = [8, 32], strides = [1, 1]} : vector<8x256xf32> to vector<8x32xf32>
    %174 = vector.extract_strided_slice %166 {offsets = [0, 192], sizes = [8, 32], strides = [1, 1]} : vector<8x256xf32> to vector<8x32xf32>
    %175 = tpu.concatenate %173, %174 in 1 : vector<8x32xf32>, vector<8x32xf32> -> vector<8x64xf32>
    %176 = vector.extract_strided_slice %165 {offsets = [0, 96], sizes = [8, 32], strides = [1, 1]} : vector<8x256xf32> to vector<8x32xf32>
    %177 = vector.extract_strided_slice %165 {offsets = [0, 224], sizes = [8, 32], strides = [1, 1]} : vector<8x256xf32> to vector<8x32xf32>
    %178 = tpu.concatenate %176, %177 in 1 : vector<8x32xf32>, vector<8x32xf32> -> vector<8x64xf32>
    %c32_52 = arith.constant 32 : index
    %c0_53 = arith.constant 0 : index
    %179 = vector.load %arg1[%c32_52, %c0_53] : memref<128x64xf32, #tpu.memory_space<vmem>>, vector<8x64xf32>
    %180 = arith.mulf %172, %147 : vector<8x64xf32>
    %181 = arith.mulf %169, %175 : vector<8x64xf32>
    %182 = arith.addf %180, %181 : vector<8x64xf32>
    %183 = arith.mulf %179, %182 : vector<8x64xf32>
    %184 = math.tanh %183 : vector<8x64xf32>
    %185 = arith.mulf %178, %184 : vector<8x64xf32>
    %186 = arith.mulf %179, %185 : vector<8x64xf32>
    %187 = vector.extract_strided_slice %186 {offsets = [0, 0], sizes = [8, 32], strides = [1, 1]} : vector<8x64xf32> to vector<8x32xf32>
    %c16_54 = arith.constant 16 : index
    %c0_55 = arith.constant 0 : index
    %188 = vector.load %arg21[%c16_54, %c0_55] : memref<64x128xf32, #tpu.memory_space<vmem>>, vector<8x32xf32>
    tpu.vector_store %arg21[%c16_54, %c0_55], %187 {strides = array<i32>} : memref<64x128xf32, #tpu.memory_space<vmem>>, vector<8x32xf32>,
    %189 = vector.extract_strided_slice %186 {offsets = [0, 32], sizes = [8, 32], strides = [1, 1]} : vector<8x64xf32> to vector<8x32xf32>
    %c40 = arith.constant 40 : index
    %c96_56 = arith.constant 96 : index
    %190 = vector.load %arg21[%c40, %c96_56] : memref<64x128xf32, #tpu.memory_space<vmem>>, vector<8x32xf32>
    tpu.vector_store %arg21[%c40, %c96_56], %189 {strides = array<i32>} : memref<64x128xf32, #tpu.memory_space<vmem>>, vector<8x32xf32>,
    %c40_57 = arith.constant 40 : index
    %c0_58 = arith.constant 0 : index
    %191 = vector.load %arg20[%c40_57, %c0_58] : memref<128x256xf32, #tpu.memory_space<vmem>>, vector<8x128xf32>
    %c80 = arith.constant 80 : index
    %c128_59 = arith.constant 128 : index
    %192 = vector.load %arg20[%c80, %c128_59] : memref<128x256xf32, #tpu.memory_space<vmem>>, vector<8x128xf32>
    %193 = tpu.concatenate %191, %192 in 1 : vector<8x128xf32>, vector<8x128xf32> -> vector<8x256xf32>
    %194 = arith.truncf %186 : vector<8x64xf32> to vector<8x64xbf16>
    %cst_60 = arith.constant dense<0.000000e+00> : vector<8x256xf32>
    %195 = tpu.matmul %194, %8, %cst_60 {dimension_numbers = #tpu.dot_dimension_numbers<[1], [0], [0], [1], [0, 0, 1, 1], [], []>} : vector<8x64xbf16>, vector<64x256xbf16>, vector<8x256xf32> -> vector<8x256xf32>
    %196 = arith.addf %193, %195 : vector<8x256xf32>
    %197 = arith.negf %196 : vector<8x256xf32>
    %198 = math.exp %197 : vector<8x256xf32>
    %cst_61 = arith.constant 1.000000e+00 : f32
    %199 = vector.broadcast %cst_61 : f32 to vector<8x256xf32>
    %200 = arith.addf %199, %198 : vector<8x256xf32>
    %201 = arith.divf %199, %200 : vector<8x256xf32>
    %202 = math.tanh %196 : vector<8x256xf32>
    %203 = vector.extract_strided_slice %201 {offsets = [0, 0], sizes = [8, 32], strides = [1, 1]} : vector<8x256xf32> to vector<8x32xf32>
    %204 = vector.extract_strided_slice %201 {offsets = [0, 128], sizes = [8, 32], strides = [1, 1]} : vector<8x256xf32> to vector<8x32xf32>
    %205 = tpu.concatenate %203, %204 in 1 : vector<8x32xf32>, vector<8x32xf32> -> vector<8x64xf32>
    %206 = vector.extract_strided_slice %201 {offsets = [0, 32], sizes = [8, 32], strides = [1, 1]} : vector<8x256xf32> to vector<8x32xf32>
    %207 = vector.extract_strided_slice %201 {offsets = [0, 160], sizes = [8, 32], strides = [1, 1]} : vector<8x256xf32> to vector<8x32xf32>
    %208 = tpu.concatenate %206, %207 in 1 : vector<8x32xf32>, vector<8x32xf32> -> vector<8x64xf32>
    %209 = vector.extract_strided_slice %202 {offsets = [0, 64], sizes = [8, 32], strides = [1, 1]} : vector<8x256xf32> to vector<8x32xf32>
    %210 = vector.extract_strided_slice %202 {offsets = [0, 192], sizes = [8, 32], strides = [1, 1]} : vector<8x256xf32> to vector<8x32xf32>
    %211 = tpu.concatenate %209, %210 in 1 : vector<8x32xf32>, vector<8x32xf32> -> vector<8x64xf32>
    %212 = vector.extract_strided_slice %201 {offsets = [0, 96], sizes = [8, 32], strides = [1, 1]} : vector<8x256xf32> to vector<8x32xf32>
    %213 = vector.extract_strided_slice %201 {offsets = [0, 224], sizes = [8, 32], strides = [1, 1]} : vector<8x256xf32> to vector<8x32xf32>
    %214 = tpu.concatenate %212, %213 in 1 : vector<8x32xf32>, vector<8x32xf32> -> vector<8x64xf32>
    %c40_62 = arith.constant 40 : index
    %c0_63 = arith.constant 0 : index
    %215 = vector.load %arg1[%c40_62, %c0_63] : memref<128x64xf32, #tpu.memory_space<vmem>>, vector<8x64xf32>
    %216 = arith.mulf %208, %183 : vector<8x64xf32>
    %217 = arith.mulf %205, %211 : vector<8x64xf32>
    %218 = arith.addf %216, %217 : vector<8x64xf32>
    %219 = arith.mulf %215, %218 : vector<8x64xf32>
    %220 = math.tanh %219 : vector<8x64xf32>
    %221 = arith.mulf %214, %220 : vector<8x64xf32>
    %222 = arith.mulf %215, %221 : vector<8x64xf32>
    %223 = vector.extract_strided_slice %222 {offsets = [0, 0], sizes = [8, 32], strides = [1, 1]} : vector<8x64xf32> to vector<8x32xf32>
    %c16_64 = arith.constant 16 : index
    %c64_65 = arith.constant 64 : index
    %224 = vector.load %arg21[%c16_64, %c64_65] : memref<64x128xf32, #tpu.memory_space<vmem>>, vector<8x32xf32>
    tpu.vector_store %arg21[%c16_64, %c64_65], %223 {strides = array<i32>} : memref<64x128xf32, #tpu.memory_space<vmem>>, vector<8x32xf32>,
    %225 = vector.extract_strided_slice %222 {offsets = [0, 32], sizes = [8, 32], strides = [1, 1]} : vector<8x64xf32> to vector<8x32xf32>
    %c40_66 = arith.constant 40 : index
    %c32_67 = arith.constant 32 : index
    %226 = vector.load %arg21[%c40_66, %c32_67] : memref<64x128xf32, #tpu.memory_space<vmem>>, vector<8x32xf32>
    tpu.vector_store %arg21[%c40_66, %c32_67], %225 {strides = array<i32>} : memref<64x128xf32, #tpu.memory_space<vmem>>, vector<8x32xf32>,
    %c48_68 = arith.constant 48 : index
    %c0_69 = arith.constant 0 : index
    %227 = vector.load %arg20[%c48_68, %c0_69] : memref<128x256xf32, #tpu.memory_space<vmem>>, vector<8x128xf32>
    %c72 = arith.constant 72 : index
    %c128_70 = arith.constant 128 : index
    %228 = vector.load %arg20[%c72, %c128_70] : memref<128x256xf32, #tpu.memory_space<vmem>>, vector<8x128xf32>
    %229 = tpu.concatenate %227, %228 in 1 : vector<8x128xf32>, vector<8x128xf32> -> vector<8x256xf32>
    %230 = arith.truncf %222 : vector<8x64xf32> to vector<8x64xbf16>
    %cst_71 = arith.constant dense<0.000000e+00> : vector<8x256xf32>
    %231 = tpu.matmul %230, %8, %cst_71 {dimension_numbers = #tpu.dot_dimension_numbers<[1], [0], [0], [1], [0, 0, 1, 1], [], []>} : vector<8x64xbf16>, vector<64x256xbf16>, vector<8x256xf32> -> vector<8x256xf32>
    %232 = arith.addf %229, %231 : vector<8x256xf32>
    %233 = arith.negf %232 : vector<8x256xf32>
    %234 = math.exp %233 : vector<8x256xf32>
    %cst_72 = arith.constant 1.000000e+00 : f32
    %235 = vector.broadcast %cst_72 : f32 to vector<8x256xf32>
    %236 = arith.addf %235, %234 : vector<8x256xf32>
    %237 = arith.divf %235, %236 : vector<8x256xf32>
    %238 = math.tanh %232 : vector<8x256xf32>
    %239 = vector.extract_strided_slice %237 {offsets = [0, 0], sizes = [8, 32], strides = [1, 1]} : vector<8x256xf32> to vector<8x32xf32>
    %240 = vector.extract_strided_slice %237 {offsets = [0, 128], sizes = [8, 32], strides = [1, 1]} : vector<8x256xf32> to vector<8x32xf32>
    %241 = tpu.concatenate %239, %240 in 1 : vector<8x32xf32>, vector<8x32xf32> -> vector<8x64xf32>
    %242 = vector.extract_strided_slice %237 {offsets = [0, 32], sizes = [8, 32], strides = [1, 1]} : vector<8x256xf32> to vector<8x32xf32>
    %243 = vector.extract_strided_slice %237 {offsets = [0, 160], sizes = [8, 32], strides = [1, 1]} : vector<8x256xf32> to vector<8x32xf32>
    %244 = tpu.concatenate %242, %243 in 1 : vector<8x32xf32>, vector<8x32xf32> -> vector<8x64xf32>
    %245 = vector.extract_strided_slice %238 {offsets = [0, 64], sizes = [8, 32], strides = [1, 1]} : vector<8x256xf32> to vector<8x32xf32>
    %246 = vector.extract_strided_slice %238 {offsets = [0, 192], sizes = [8, 32], strides = [1, 1]} : vector<8x256xf32> to vector<8x32xf32>
    %247 = tpu.concatenate %245, %246 in 1 : vector<8x32xf32>, vector<8x32xf32> -> vector<8x64xf32>
    %248 = vector.extract_strided_slice %237 {offsets = [0, 96], sizes = [8, 32], strides = [1, 1]} : vector<8x256xf32> to vector<8x32xf32>
    %249 = vector.extract_strided_slice %237 {offsets = [0, 224], sizes = [8, 32], strides = [1, 1]} : vector<8x256xf32> to vector<8x32xf32>
    %250 = tpu.concatenate %248, %249 in 1 : vector<8x32xf32>, vector<8x32xf32> -> vector<8x64xf32>
    %c48_73 = arith.constant 48 : index
    %c0_74 = arith.constant 0 : index
    %251 = vector.load %arg1[%c48_73, %c0_74] : memref<128x64xf32, #tpu.memory_space<vmem>>, vector<8x64xf32>
    %252 = arith.mulf %244, %219 : vector<8x64xf32>
    %253 = arith.mulf %241, %247 : vector<8x64xf32>
    %254 = arith.addf %252, %253 : vector<8x64xf32>
    %255 = arith.mulf %251, %254 : vector<8x64xf32>
    %256 = math.tanh %255 : vector<8x64xf32>
    %257 = arith.mulf %250, %256 : vector<8x64xf32>
    %258 = arith.mulf %251, %257 : vector<8x64xf32>
    %259 = vector.extract_strided_slice %258 {offsets = [0, 0], sizes = [8, 32], strides = [1, 1]} : vector<8x64xf32> to vector<8x32xf32>
    %c24_75 = arith.constant 24 : index
    %c0_76 = arith.constant 0 : index
    %260 = vector.load %arg21[%c24_75, %c0_76] : memref<64x128xf32, #tpu.memory_space<vmem>>, vector<8x32xf32>
    tpu.vector_store %arg21[%c24_75, %c0_76], %259 {strides = array<i32>} : memref<64x128xf32, #tpu.memory_space<vmem>>, vector<8x32xf32>,
    %261 = vector.extract_strided_slice %258 {offsets = [0, 32], sizes = [8, 32], strides = [1, 1]} : vector<8x64xf32> to vector<8x32xf32>
    %c32_77 = arith.constant 32 : index
    %c96_78 = arith.constant 96 : index
    %262 = vector.load %arg21[%c32_77, %c96_78] : memref<64x128xf32, #tpu.memory_space<vmem>>, vector<8x32xf32>
    tpu.vector_store %arg21[%c32_77, %c96_78], %261 {strides = array<i32>} : memref<64x128xf32, #tpu.memory_space<vmem>>, vector<8x32xf32>,
    %c56_79 = arith.constant 56 : index
    %c0_80 = arith.constant 0 : index
    %263 = vector.load %arg20[%c56_79, %c0_80] : memref<128x256xf32, #tpu.memory_space<vmem>>, vector<8x128xf32>
    %c64_81 = arith.constant 64 : index
    %c128_82 = arith.constant 128 : index
    %264 = vector.load %arg20[%c64_81, %c128_82] : memref<128x256xf32, #tpu.memory_space<vmem>>, vector<8x128xf32>
    %265 = tpu.concatenate %263, %264 in 1 : vector<8x128xf32>, vector<8x128xf32> -> vector<8x256xf32>
    %266 = arith.truncf %258 : vector<8x64xf32> to vector<8x64xbf16>
    %cst_83 = arith.constant dense<0.000000e+00> : vector<8x256xf32>
    %267 = tpu.matmul %266, %8, %cst_83 {dimension_numbers = #tpu.dot_dimension_numbers<[1], [0], [0], [1], [0, 0, 1, 1], [], []>} : vector<8x64xbf16>, vector<64x256xbf16>, vector<8x256xf32> -> vector<8x256xf32>
    %268 = arith.addf %265, %267 : vector<8x256xf32>
    %269 = arith.negf %268 : vector<8x256xf32>
    %270 = math.exp %269 : vector<8x256xf32>
    %cst_84 = arith.constant 1.000000e+00 : f32
    %271 = vector.broadcast %cst_84 : f32 to vector<8x256xf32>
    %272 = arith.addf %271, %270 : vector<8x256xf32>
    %273 = arith.divf %271, %272 : vector<8x256xf32>
    %274 = math.tanh %268 : vector<8x256xf32>
    %275 = vector.extract_strided_slice %273 {offsets = [0, 0], sizes = [8, 32], strides = [1, 1]} : vector<8x256xf32> to vector<8x32xf32>
    %276 = vector.extract_strided_slice %273 {offsets = [0, 128], sizes = [8, 32], strides = [1, 1]} : vector<8x256xf32> to vector<8x32xf32>
    %277 = tpu.concatenate %275, %276 in 1 : vector<8x32xf32>, vector<8x32xf32> -> vector<8x64xf32>
    %278 = vector.extract_strided_slice %273 {offsets = [0, 32], sizes = [8, 32], strides = [1, 1]} : vector<8x256xf32> to vector<8x32xf32>
    %279 = vector.extract_strided_slice %273 {offsets = [0, 160], sizes = [8, 32], strides = [1, 1]} : vector<8x256xf32> to vector<8x32xf32>
    %280 = tpu.concatenate %278, %279 in 1 : vector<8x32xf32>, vector<8x32xf32> -> vector<8x64xf32>
    %281 = vector.extract_strided_slice %274 {offsets = [0, 64], sizes = [8, 32], strides = [1, 1]} : vector<8x256xf32> to vector<8x32xf32>
    %282 = vector.extract_strided_slice %274 {offsets = [0, 192], sizes = [8, 32], strides = [1, 1]} : vector<8x256xf32> to vector<8x32xf32>
    %283 = tpu.concatenate %281, %282 in 1 : vector<8x32xf32>, vector<8x32xf32> -> vector<8x64xf32>
    %284 = vector.extract_strided_slice %273 {offsets = [0, 96], sizes = [8, 32], strides = [1, 1]} : vector<8x256xf32> to vector<8x32xf32>
    %285 = vector.extract_strided_slice %273 {offsets = [0, 224], sizes = [8, 32], strides = [1, 1]} : vector<8x256xf32> to vector<8x32xf32>
    %286 = tpu.concatenate %284, %285 in 1 : vector<8x32xf32>, vector<8x32xf32> -> vector<8x64xf32>
    %c56_85 = arith.constant 56 : index
    %c0_86 = arith.constant 0 : index
    %287 = vector.load %arg1[%c56_85, %c0_86] : memref<128x64xf32, #tpu.memory_space<vmem>>, vector<8x64xf32>
    %288 = arith.mulf %280, %255 : vector<8x64xf32>
    %289 = arith.mulf %277, %283 : vector<8x64xf32>
    %290 = arith.addf %288, %289 : vector<8x64xf32>
    %291 = arith.mulf %287, %290 : vector<8x64xf32>
    %292 = math.tanh %291 : vector<8x64xf32>
    %293 = arith.mulf %286, %292 : vector<8x64xf32>
    %294 = arith.mulf %287, %293 : vector<8x64xf32>
    %295 = vector.extract_strided_slice %294 {offsets = [0, 0], sizes = [8, 32], strides = [1, 1]} : vector<8x64xf32> to vector<8x32xf32>
    %c24_87 = arith.constant 24 : index
    %c64_88 = arith.constant 64 : index
    %296 = vector.load %arg21[%c24_87, %c64_88] : memref<64x128xf32, #tpu.memory_space<vmem>>, vector<8x32xf32>
    tpu.vector_store %arg21[%c24_87, %c64_88], %295 {strides = array<i32>} : memref<64x128xf32, #tpu.memory_space<vmem>>, vector<8x32xf32>,
    %297 = vector.extract_strided_slice %294 {offsets = [0, 32], sizes = [8, 32], strides = [1, 1]} : vector<8x64xf32> to vector<8x32xf32>
    %c32_89 = arith.constant 32 : index
    %c32_90 = arith.constant 32 : index
    %298 = vector.load %arg21[%c32_89, %c32_90] : memref<64x128xf32, #tpu.memory_space<vmem>>, vector<8x32xf32>
    tpu.vector_store %arg21[%c32_89, %c32_90], %297 {strides = array<i32>} : memref<64x128xf32, #tpu.memory_space<vmem>>, vector<8x32xf32>,
    %c64_91 = arith.constant 64 : index
    %c0_92 = arith.constant 0 : index
    %299 = vector.load %arg20[%c64_91, %c0_92] : memref<128x256xf32, #tpu.memory_space<vmem>>, vector<8x128xf32>
    %c56_93 = arith.constant 56 : index
    %c128_94 = arith.constant 128 : index
    %300 = vector.load %arg20[%c56_93, %c128_94] : memref<128x256xf32, #tpu.memory_space<vmem>>, vector<8x128xf32>
    %301 = tpu.concatenate %299, %300 in 1 : vector<8x128xf32>, vector<8x128xf32> -> vector<8x256xf32>
    %302 = arith.truncf %294 : vector<8x64xf32> to vector<8x64xbf16>
    %cst_95 = arith.constant dense<0.000000e+00> : vector<8x256xf32>
    %303 = tpu.matmul %302, %8, %cst_95 {dimension_numbers = #tpu.dot_dimension_numbers<[1], [0], [0], [1], [0, 0, 1, 1], [], []>} : vector<8x64xbf16>, vector<64x256xbf16>, vector<8x256xf32> -> vector<8x256xf32>
    %304 = arith.addf %301, %303 : vector<8x256xf32>
    %305 = arith.negf %304 : vector<8x256xf32>
    %306 = math.exp %305 : vector<8x256xf32>
    %cst_96 = arith.constant 1.000000e+00 : f32
    %307 = vector.broadcast %cst_96 : f32 to vector<8x256xf32>
    %308 = arith.addf %307, %306 : vector<8x256xf32>
    %309 = arith.divf %307, %308 : vector<8x256xf32>
    %310 = math.tanh %304 : vector<8x256xf32>
    %311 = vector.extract_strided_slice %309 {offsets = [0, 0], sizes = [8, 32], strides = [1, 1]} : vector<8x256xf32> to vector<8x32xf32>
    %312 = vector.extract_strided_slice %309 {offsets = [0, 128], sizes = [8, 32], strides = [1, 1]} : vector<8x256xf32> to vector<8x32xf32>
    %313 = tpu.concatenate %311, %312 in 1 : vector<8x32xf32>, vector<8x32xf32> -> vector<8x64xf32>
    %314 = vector.extract_strided_slice %309 {offsets = [0, 32], sizes = [8, 32], strides = [1, 1]} : vector<8x256xf32> to vector<8x32xf32>
    %315 = vector.extract_strided_slice %309 {offsets = [0, 160], sizes = [8, 32], strides = [1, 1]} : vector<8x256xf32> to vector<8x32xf32>
    %316 = tpu.concatenate %314, %315 in 1 : vector<8x32xf32>, vector<8x32xf32> -> vector<8x64xf32>
    %317 = vector.extract_strided_slice %310 {offsets = [0, 64], sizes = [8, 32], strides = [1, 1]} : vector<8x256xf32> to vector<8x32xf32>
    %318 = vector.extract_strided_slice %310 {offsets = [0, 192], sizes = [8, 32], strides = [1, 1]} : vector<8x256xf32> to vector<8x32xf32>
    %319 = tpu.concatenate %317, %318 in 1 : vector<8x32xf32>, vector<8x32xf32> -> vector<8x64xf32>
    %320 = vector.extract_strided_slice %309 {offsets = [0, 96], sizes = [8, 32], strides = [1, 1]} : vector<8x256xf32> to vector<8x32xf32>
    %321 = vector.extract_strided_slice %309 {offsets = [0, 224], sizes = [8, 32], strides = [1, 1]} : vector<8x256xf32> to vector<8x32xf32>
    %322 = tpu.concatenate %320, %321 in 1 : vector<8x32xf32>, vector<8x32xf32> -> vector<8x64xf32>
    %c64_97 = arith.constant 64 : index
    %c0_98 = arith.constant 0 : index
    %323 = vector.load %arg1[%c64_97, %c0_98] : memref<128x64xf32, #tpu.memory_space<vmem>>, vector<8x64xf32>
    %324 = arith.mulf %316, %291 : vector<8x64xf32>
    %325 = arith.mulf %313, %319 : vector<8x64xf32>
    %326 = arith.addf %324, %325 : vector<8x64xf32>
    %327 = arith.mulf %323, %326 : vector<8x64xf32>
    %328 = math.tanh %327 : vector<8x64xf32>
    %329 = arith.mulf %322, %328 : vector<8x64xf32>
    %330 = arith.mulf %323, %329 : vector<8x64xf32>
    %331 = vector.extract_strided_slice %330 {offsets = [0, 0], sizes = [8, 32], strides = [1, 1]} : vector<8x64xf32> to vector<8x32xf32>
    %c32_99 = arith.constant 32 : index
    %c0_100 = arith.constant 0 : index
    %332 = vector.load %arg21[%c32_99, %c0_100] : memref<64x128xf32, #tpu.memory_space<vmem>>, vector<8x32xf32>
    tpu.vector_store %arg21[%c32_99, %c0_100], %331 {strides = array<i32>} : memref<64x128xf32, #tpu.memory_space<vmem>>, vector<8x32xf32>,
    %333 = vector.extract_strided_slice %330 {offsets = [0, 32], sizes = [8, 32], strides = [1, 1]} : vector<8x64xf32> to vector<8x32xf32>
    %c24_101 = arith.constant 24 : index
    %c96_102 = arith.constant 96 : index
    %334 = vector.load %arg21[%c24_101, %c96_102] : memref<64x128xf32, #tpu.memory_space<vmem>>, vector<8x32xf32>
    tpu.vector_store %arg21[%c24_101, %c96_102], %333 {strides = array<i32>} : memref<64x128xf32, #tpu.memory_space<vmem>>, vector<8x32xf32>,
    %c72_103 = arith.constant 72 : index
    %c0_104 = arith.constant 0 : index
    %335 = vector.load %arg20[%c72_103, %c0_104] : memref<128x256xf32, #tpu.memory_space<vmem>>, vector<8x128xf32>
    %c48_105 = arith.constant 48 : index
    %c128_106 = arith.constant 128 : index
    %336 = vector.load %arg20[%c48_105, %c128_106] : memref<128x256xf32, #tpu.memory_space<vmem>>, vector<8x128xf32>
    %337 = tpu.concatenate %335, %336 in 1 : vector<8x128xf32>, vector<8x128xf32> -> vector<8x256xf32>
    %338 = arith.truncf %330 : vector<8x64xf32> to vector<8x64xbf16>
    %cst_107 = arith.constant dense<0.000000e+00> : vector<8x256xf32>
    %339 = tpu.matmul %338, %8, %cst_107 {dimension_numbers = #tpu.dot_dimension_numbers<[1], [0], [0], [1], [0, 0, 1, 1], [], []>} : vector<8x64xbf16>, vector<64x256xbf16>, vector<8x256xf32> -> vector<8x256xf32>
    %340 = arith.addf %337, %339 : vector<8x256xf32>
    %341 = arith.negf %340 : vector<8x256xf32>
    %342 = math.exp %341 : vector<8x256xf32>
    %cst_108 = arith.constant 1.000000e+00 : f32
    %343 = vector.broadcast %cst_108 : f32 to vector<8x256xf32>
    %344 = arith.addf %343, %342 : vector<8x256xf32>
    %345 = arith.divf %343, %344 : vector<8x256xf32>
    %346 = math.tanh %340 : vector<8x256xf32>
    %347 = vector.extract_strided_slice %345 {offsets = [0, 0], sizes = [8, 32], strides = [1, 1]} : vector<8x256xf32> to vector<8x32xf32>
    %348 = vector.extract_strided_slice %345 {offsets = [0, 128], sizes = [8, 32], strides = [1, 1]} : vector<8x256xf32> to vector<8x32xf32>
    %349 = tpu.concatenate %347, %348 in 1 : vector<8x32xf32>, vector<8x32xf32> -> vector<8x64xf32>
    %350 = vector.extract_strided_slice %345 {offsets = [0, 32], sizes = [8, 32], strides = [1, 1]} : vector<8x256xf32> to vector<8x32xf32>
    %351 = vector.extract_strided_slice %345 {offsets = [0, 160], sizes = [8, 32], strides = [1, 1]} : vector<8x256xf32> to vector<8x32xf32>
    %352 = tpu.concatenate %350, %351 in 1 : vector<8x32xf32>, vector<8x32xf32> -> vector<8x64xf32>
    %353 = vector.extract_strided_slice %346 {offsets = [0, 64], sizes = [8, 32], strides = [1, 1]} : vector<8x256xf32> to vector<8x32xf32>
    %354 = vector.extract_strided_slice %346 {offsets = [0, 192], sizes = [8, 32], strides = [1, 1]} : vector<8x256xf32> to vector<8x32xf32>
    %355 = tpu.concatenate %353, %354 in 1 : vector<8x32xf32>, vector<8x32xf32> -> vector<8x64xf32>
    %356 = vector.extract_strided_slice %345 {offsets = [0, 96], sizes = [8, 32], strides = [1, 1]} : vector<8x256xf32> to vector<8x32xf32>
    %357 = vector.extract_strided_slice %345 {offsets = [0, 224], sizes = [8, 32], strides = [1, 1]} : vector<8x256xf32> to vector<8x32xf32>
    %358 = tpu.concatenate %356, %357 in 1 : vector<8x32xf32>, vector<8x32xf32> -> vector<8x64xf32>
    %c72_109 = arith.constant 72 : index
    %c0_110 = arith.constant 0 : index
    %359 = vector.load %arg1[%c72_109, %c0_110] : memref<128x64xf32, #tpu.memory_space<vmem>>, vector<8x64xf32>
    %360 = arith.mulf %352, %327 : vector<8x64xf32>
    %361 = arith.mulf %349, %355 : vector<8x64xf32>
    %362 = arith.addf %360, %361 : vector<8x64xf32>
    %363 = arith.mulf %359, %362 : vector<8x64xf32>
    %364 = math.tanh %363 : vector<8x64xf32>
    %365 = arith.mulf %358, %364 : vector<8x64xf32>
    %366 = arith.mulf %359, %365 : vector<8x64xf32>
    %367 = vector.extract_strided_slice %366 {offsets = [0, 0], sizes = [8, 32], strides = [1, 1]} : vector<8x64xf32> to vector<8x32xf32>
    %c32_111 = arith.constant 32 : index
    %c64_112 = arith.constant 64 : index
    %368 = vector.load %arg21[%c32_111, %c64_112] : memref<64x128xf32, #tpu.memory_space<vmem>>, vector<8x32xf32>
    tpu.vector_store %arg21[%c32_111, %c64_112], %367 {strides = array<i32>} : memref<64x128xf32, #tpu.memory_space<vmem>>, vector<8x32xf32>,
    %369 = vector.extract_strided_slice %366 {offsets = [0, 32], sizes = [8, 32], strides = [1, 1]} : vector<8x64xf32> to vector<8x32xf32>
    %c24_113 = arith.constant 24 : index
    %c32_114 = arith.constant 32 : index
    %370 = vector.load %arg21[%c24_113, %c32_114] : memref<64x128xf32, #tpu.memory_space<vmem>>, vector<8x32xf32>
    tpu.vector_store %arg21[%c24_113, %c32_114], %369 {strides = array<i32>} : memref<64x128xf32, #tpu.memory_space<vmem>>, vector<8x32xf32>,
    %c80_115 = arith.constant 80 : index
    %c0_116 = arith.constant 0 : index
    %371 = vector.load %arg20[%c80_115, %c0_116] : memref<128x256xf32, #tpu.memory_space<vmem>>, vector<8x128xf32>
    %c40_117 = arith.constant 40 : index
    %c128_118 = arith.constant 128 : index
    %372 = vector.load %arg20[%c40_117, %c128_118] : memref<128x256xf32, #tpu.memory_space<vmem>>, vector<8x128xf32>
    %373 = tpu.concatenate %371, %372 in 1 : vector<8x128xf32>, vector<8x128xf32> -> vector<8x256xf32>
    %374 = arith.truncf %366 : vector<8x64xf32> to vector<8x64xbf16>
    %cst_119 = arith.constant dense<0.000000e+00> : vector<8x256xf32>
    %375 = tpu.matmul %374, %8, %cst_119 {dimension_numbers = #tpu.dot_dimension_numbers<[1], [0], [0], [1], [0, 0, 1, 1], [], []>} : vector<8x64xbf16>, vector<64x256xbf16>, vector<8x256xf32> -> vector<8x256xf32>
    %376 = arith.addf %373, %375 : vector<8x256xf32>
    %377 = arith.negf %376 : vector<8x256xf32>
    %378 = math.exp %377 : vector<8x256xf32>
    %cst_120 = arith.constant 1.000000e+00 : f32
    %379 = vector.broadcast %cst_120 : f32 to vector<8x256xf32>
    %380 = arith.addf %379, %378 : vector<8x256xf32>
    %381 = arith.divf %379, %380 : vector<8x256xf32>
    %382 = math.tanh %376 : vector<8x256xf32>
    %383 = vector.extract_strided_slice %381 {offsets = [0, 0], sizes = [8, 32], strides = [1, 1]} : vector<8x256xf32> to vector<8x32xf32>
    %384 = vector.extract_strided_slice %381 {offsets = [0, 128], sizes = [8, 32], strides = [1, 1]} : vector<8x256xf32> to vector<8x32xf32>
    %385 = tpu.concatenate %383, %384 in 1 : vector<8x32xf32>, vector<8x32xf32> -> vector<8x64xf32>
    %386 = vector.extract_strided_slice %381 {offsets = [0, 32], sizes = [8, 32], strides = [1, 1]} : vector<8x256xf32> to vector<8x32xf32>
    %387 = vector.extract_strided_slice %381 {offsets = [0, 160], sizes = [8, 32], strides = [1, 1]} : vector<8x256xf32> to vector<8x32xf32>
    %388 = tpu.concatenate %386, %387 in 1 : vector<8x32xf32>, vector<8x32xf32> -> vector<8x64xf32>
    %389 = vector.extract_strided_slice %382 {offsets = [0, 64], sizes = [8, 32], strides = [1, 1]} : vector<8x256xf32> to vector<8x32xf32>
    %390 = vector.extract_strided_slice %382 {offsets = [0, 192], sizes = [8, 32], strides = [1, 1]} : vector<8x256xf32> to vector<8x32xf32>
    %391 = tpu.concatenate %389, %390 in 1 : vector<8x32xf32>, vector<8x32xf32> -> vector<8x64xf32>
    %392 = vector.extract_strided_slice %381 {offsets = [0, 96], sizes = [8, 32], strides = [1, 1]} : vector<8x256xf32> to vector<8x32xf32>
    %393 = vector.extract_strided_slice %381 {offsets = [0, 224], sizes = [8, 32], strides = [1, 1]} : vector<8x256xf32> to vector<8x32xf32>
    %394 = tpu.concatenate %392, %393 in 1 : vector<8x32xf32>, vector<8x32xf32> -> vector<8x64xf32>
    %c80_121 = arith.constant 80 : index
    %c0_122 = arith.constant 0 : index
    %395 = vector.load %arg1[%c80_121, %c0_122] : memref<128x64xf32, #tpu.memory_space<vmem>>, vector<8x64xf32>
    %396 = arith.mulf %388, %363 : vector<8x64xf32>
    %397 = arith.mulf %385, %391 : vector<8x64xf32>
    %398 = arith.addf %396, %397 : vector<8x64xf32>
    %399 = arith.mulf %395, %398 : vector<8x64xf32>
    %400 = math.tanh %399 : vector<8x64xf32>
    %401 = arith.mulf %394, %400 : vector<8x64xf32>
    %402 = arith.mulf %395, %401 : vector<8x64xf32>
    %403 = vector.extract_strided_slice %402 {offsets = [0, 0], sizes = [8, 32], strides = [1, 1]} : vector<8x64xf32> to vector<8x32xf32>
    %c40_123 = arith.constant 40 : index
    %c0_124 = arith.constant 0 : index
    %404 = vector.load %arg21[%c40_123, %c0_124] : memref<64x128xf32, #tpu.memory_space<vmem>>, vector<8x32xf32>
    tpu.vector_store %arg21[%c40_123, %c0_124], %403 {strides = array<i32>} : memref<64x128xf32, #tpu.memory_space<vmem>>, vector<8x32xf32>,
    %405 = vector.extract_strided_slice %402 {offsets = [0, 32], sizes = [8, 32], strides = [1, 1]} : vector<8x64xf32> to vector<8x32xf32>
    %c16_125 = arith.constant 16 : index
    %c96_126 = arith.constant 96 : index
    %406 = vector.load %arg21[%c16_125, %c96_126] : memref<64x128xf32, #tpu.memory_space<vmem>>, vector<8x32xf32>
    tpu.vector_store %arg21[%c16_125, %c96_126], %405 {strides = array<i32>} : memref<64x128xf32, #tpu.memory_space<vmem>>, vector<8x32xf32>,
    %c88_127 = arith.constant 88 : index
    %c0_128 = arith.constant 0 : index
    %407 = vector.load %arg20[%c88_127, %c0_128] : memref<128x256xf32, #tpu.memory_space<vmem>>, vector<8x128xf32>
    %c32_129 = arith.constant 32 : index
    %c128_130 = arith.constant 128 : index
    %408 = vector.load %arg20[%c32_129, %c128_130] : memref<128x256xf32, #tpu.memory_space<vmem>>, vector<8x128xf32>
    %409 = tpu.concatenate %407, %408 in 1 : vector<8x128xf32>, vector<8x128xf32> -> vector<8x256xf32>
    %410 = arith.truncf %402 : vector<8x64xf32> to vector<8x64xbf16>
    %cst_131 = arith.constant dense<0.000000e+00> : vector<8x256xf32>
    %411 = tpu.matmul %410, %8, %cst_131 {dimension_numbers = #tpu.dot_dimension_numbers<[1], [0], [0], [1], [0, 0, 1, 1], [], []>} : vector<8x64xbf16>, vector<64x256xbf16>, vector<8x256xf32> -> vector<8x256xf32>
    %412 = arith.addf %409, %411 : vector<8x256xf32>
    %413 = arith.negf %412 : vector<8x256xf32>
    %414 = math.exp %413 : vector<8x256xf32>
    %cst_132 = arith.constant 1.000000e+00 : f32
    %415 = vector.broadcast %cst_132 : f32 to vector<8x256xf32>
    %416 = arith.addf %415, %414 : vector<8x256xf32>
    %417 = arith.divf %415, %416 : vector<8x256xf32>
    %418 = math.tanh %412 : vector<8x256xf32>
    %419 = vector.extract_strided_slice %417 {offsets = [0, 0], sizes = [8, 32], strides = [1, 1]} : vector<8x256xf32> to vector<8x32xf32>
    %420 = vector.extract_strided_slice %417 {offsets = [0, 128], sizes = [8, 32], strides = [1, 1]} : vector<8x256xf32> to vector<8x32xf32>
    %421 = tpu.concatenate %419, %420 in 1 : vector<8x32xf32>, vector<8x32xf32> -> vector<8x64xf32>
    %422 = vector.extract_strided_slice %417 {offsets = [0, 32], sizes = [8, 32], strides = [1, 1]} : vector<8x256xf32> to vector<8x32xf32>
    %423 = vector.extract_strided_slice %417 {offsets = [0, 160], sizes = [8, 32], strides = [1, 1]} : vector<8x256xf32> to vector<8x32xf32>
    %424 = tpu.concatenate %422, %423 in 1 : vector<8x32xf32>, vector<8x32xf32> -> vector<8x64xf32>
    %425 = vector.extract_strided_slice %418 {offsets = [0, 64], sizes = [8, 32], strides = [1, 1]} : vector<8x256xf32> to vector<8x32xf32>
    %426 = vector.extract_strided_slice %418 {offsets = [0, 192], sizes = [8, 32], strides = [1, 1]} : vector<8x256xf32> to vector<8x32xf32>
    %427 = tpu.concatenate %425, %426 in 1 : vector<8x32xf32>, vector<8x32xf32> -> vector<8x64xf32>
    %428 = vector.extract_strided_slice %417 {offsets = [0, 96], sizes = [8, 32], strides = [1, 1]} : vector<8x256xf32> to vector<8x32xf32>
    %429 = vector.extract_strided_slice %417 {offsets = [0, 224], sizes = [8, 32], strides = [1, 1]} : vector<8x256xf32> to vector<8x32xf32>
    %430 = tpu.concatenate %428, %429 in 1 : vector<8x32xf32>, vector<8x32xf32> -> vector<8x64xf32>
    %c88_133 = arith.constant 88 : index
    %c0_134 = arith.constant 0 : index
    %431 = vector.load %arg1[%c88_133, %c0_134] : memref<128x64xf32, #tpu.memory_space<vmem>>, vector<8x64xf32>
    %432 = arith.mulf %424, %399 : vector<8x64xf32>
    %433 = arith.mulf %421, %427 : vector<8x64xf32>
    %434 = arith.addf %432, %433 : vector<8x64xf32>
    %435 = arith.mulf %431, %434 : vector<8x64xf32>
    %436 = math.tanh %435 : vector<8x64xf32>
    %437 = arith.mulf %430, %436 : vector<8x64xf32>
    %438 = arith.mulf %431, %437 : vector<8x64xf32>
    %439 = vector.extract_strided_slice %438 {offsets = [0, 0], sizes = [8, 32], strides = [1, 1]} : vector<8x64xf32> to vector<8x32xf32>
    %c40_135 = arith.constant 40 : index
    %c64_136 = arith.constant 64 : index
    %440 = vector.load %arg21[%c40_135, %c64_136] : memref<64x128xf32, #tpu.memory_space<vmem>>, vector<8x32xf32>
    tpu.vector_store %arg21[%c40_135, %c64_136], %439 {strides = array<i32>} : memref<64x128xf32, #tpu.memory_space<vmem>>, vector<8x32xf32>,
    %441 = vector.extract_strided_slice %438 {offsets = [0, 32], sizes = [8, 32], strides = [1, 1]} : vector<8x64xf32> to vector<8x32xf32>
    %c16_137 = arith.constant 16 : index
    %c32_138 = arith.constant 32 : index
    %442 = vector.load %arg21[%c16_137, %c32_138] : memref<64x128xf32, #tpu.memory_space<vmem>>, vector<8x32xf32>
    tpu.vector_store %arg21[%c16_137, %c32_138], %441 {strides = array<i32>} : memref<64x128xf32, #tpu.memory_space<vmem>>, vector<8x32xf32>,
    %c96_139 = arith.constant 96 : index
    %c0_140 = arith.constant 0 : index
    %443 = vector.load %arg20[%c96_139, %c0_140] : memref<128x256xf32, #tpu.memory_space<vmem>>, vector<8x128xf32>
    %c24_141 = arith.constant 24 : index
    %c128_142 = arith.constant 128 : index
    %444 = vector.load %arg20[%c24_141, %c128_142] : memref<128x256xf32, #tpu.memory_space<vmem>>, vector<8x128xf32>
    %445 = tpu.concatenate %443, %444 in 1 : vector<8x128xf32>, vector<8x128xf32> -> vector<8x256xf32>
    %446 = arith.truncf %438 : vector<8x64xf32> to vector<8x64xbf16>
    %cst_143 = arith.constant dense<0.000000e+00> : vector<8x256xf32>
    %447 = tpu.matmul %446, %8, %cst_143 {dimension_numbers = #tpu.dot_dimension_numbers<[1], [0], [0], [1], [0, 0, 1, 1], [], []>} : vector<8x64xbf16>, vector<64x256xbf16>, vector<8x256xf32> -> vector<8x256xf32>
    %448 = arith.addf %445, %447 : vector<8x256xf32>
    %449 = arith.negf %448 : vector<8x256xf32>
    %450 = math.exp %449 : vector<8x256xf32>
    %cst_144 = arith.constant 1.000000e+00 : f32
    %451 = vector.broadcast %cst_144 : f32 to vector<8x256xf32>
    %452 = arith.addf %451, %450 : vector<8x256xf32>
    %453 = arith.divf %451, %452 : vector<8x256xf32>
    %454 = math.tanh %448 : vector<8x256xf32>
    %455 = vector.extract_strided_slice %453 {offsets = [0, 0], sizes = [8, 32], strides = [1, 1]} : vector<8x256xf32> to vector<8x32xf32>
    %456 = vector.extract_strided_slice %453 {offsets = [0, 128], sizes = [8, 32], strides = [1, 1]} : vector<8x256xf32> to vector<8x32xf32>
    %457 = tpu.concatenate %455, %456 in 1 : vector<8x32xf32>, vector<8x32xf32> -> vector<8x64xf32>
    %458 = vector.extract_strided_slice %453 {offsets = [0, 32], sizes = [8, 32], strides = [1, 1]} : vector<8x256xf32> to vector<8x32xf32>
    %459 = vector.extract_strided_slice %453 {offsets = [0, 160], sizes = [8, 32], strides = [1, 1]} : vector<8x256xf32> to vector<8x32xf32>
    %460 = tpu.concatenate %458, %459 in 1 : vector<8x32xf32>, vector<8x32xf32> -> vector<8x64xf32>
    %461 = vector.extract_strided_slice %454 {offsets = [0, 64], sizes = [8, 32], strides = [1, 1]} : vector<8x256xf32> to vector<8x32xf32>
    %462 = vector.extract_strided_slice %454 {offsets = [0, 192], sizes = [8, 32], strides = [1, 1]} : vector<8x256xf32> to vector<8x32xf32>
    %463 = tpu.concatenate %461, %462 in 1 : vector<8x32xf32>, vector<8x32xf32> -> vector<8x64xf32>
    %464 = vector.extract_strided_slice %453 {offsets = [0, 96], sizes = [8, 32], strides = [1, 1]} : vector<8x256xf32> to vector<8x32xf32>
    %465 = vector.extract_strided_slice %453 {offsets = [0, 224], sizes = [8, 32], strides = [1, 1]} : vector<8x256xf32> to vector<8x32xf32>
    %466 = tpu.concatenate %464, %465 in 1 : vector<8x32xf32>, vector<8x32xf32> -> vector<8x64xf32>
    %c96_145 = arith.constant 96 : index
    %c0_146 = arith.constant 0 : index
    %467 = vector.load %arg1[%c96_145, %c0_146] : memref<128x64xf32, #tpu.memory_space<vmem>>, vector<8x64xf32>
    %468 = arith.mulf %460, %435 : vector<8x64xf32>
    %469 = arith.mulf %457, %463 : vector<8x64xf32>
    %470 = arith.addf %468, %469 : vector<8x64xf32>
    %471 = arith.mulf %467, %470 : vector<8x64xf32>
    %472 = math.tanh %471 : vector<8x64xf32>
    %473 = arith.mulf %466, %472 : vector<8x64xf32>
    %474 = arith.mulf %467, %473 : vector<8x64xf32>
    %475 = vector.extract_strided_slice %474 {offsets = [0, 0], sizes = [8, 32], strides = [1, 1]} : vector<8x64xf32> to vector<8x32xf32>
    %c48_147 = arith.constant 48 : index
    %c0_148 = arith.constant 0 : index
    %476 = vector.load %arg21[%c48_147, %c0_148] : memref<64x128xf32, #tpu.memory_space<vmem>>, vector<8x32xf32>
    tpu.vector_store %arg21[%c48_147, %c0_148], %475 {strides = array<i32>} : memref<64x128xf32, #tpu.memory_space<vmem>>, vector<8x32xf32>,
    %477 = vector.extract_strided_slice %474 {offsets = [0, 32], sizes = [8, 32], strides = [1, 1]} : vector<8x64xf32> to vector<8x32xf32>
    %c8_149 = arith.constant 8 : index
    %c96_150 = arith.constant 96 : index
    %478 = vector.load %arg21[%c8_149, %c96_150] : memref<64x128xf32, #tpu.memory_space<vmem>>, vector<8x32xf32>
    tpu.vector_store %arg21[%c8_149, %c96_150], %477 {strides = array<i32>} : memref<64x128xf32, #tpu.memory_space<vmem>>, vector<8x32xf32>,
    %c104_151 = arith.constant 104 : index
    %c0_152 = arith.constant 0 : index
    %479 = vector.load %arg20[%c104_151, %c0_152] : memref<128x256xf32, #tpu.memory_space<vmem>>, vector<8x128xf32>
    %c16_153 = arith.constant 16 : index
    %c128_154 = arith.constant 128 : index
    %480 = vector.load %arg20[%c16_153, %c128_154] : memref<128x256xf32, #tpu.memory_space<vmem>>, vector<8x128xf32>
    %481 = tpu.concatenate %479, %480 in 1 : vector<8x128xf32>, vector<8x128xf32> -> vector<8x256xf32>
    %482 = arith.truncf %474 : vector<8x64xf32> to vector<8x64xbf16>
    %cst_155 = arith.constant dense<0.000000e+00> : vector<8x256xf32>
    %483 = tpu.matmul %482, %8, %cst_155 {dimension_numbers = #tpu.dot_dimension_numbers<[1], [0], [0], [1], [0, 0, 1, 1], [], []>} : vector<8x64xbf16>, vector<64x256xbf16>, vector<8x256xf32> -> vector<8x256xf32>
    %484 = arith.addf %481, %483 : vector<8x256xf32>
    %485 = arith.negf %484 : vector<8x256xf32>
    %486 = math.exp %485 : vector<8x256xf32>
    %cst_156 = arith.constant 1.000000e+00 : f32
    %487 = vector.broadcast %cst_156 : f32 to vector<8x256xf32>
    %488 = arith.addf %487, %486 : vector<8x256xf32>
    %489 = arith.divf %487, %488 : vector<8x256xf32>
    %490 = math.tanh %484 : vector<8x256xf32>
    %491 = vector.extract_strided_slice %489 {offsets = [0, 0], sizes = [8, 32], strides = [1, 1]} : vector<8x256xf32> to vector<8x32xf32>
    %492 = vector.extract_strided_slice %489 {offsets = [0, 128], sizes = [8, 32], strides = [1, 1]} : vector<8x256xf32> to vector<8x32xf32>
    %493 = tpu.concatenate %491, %492 in 1 : vector<8x32xf32>, vector<8x32xf32> -> vector<8x64xf32>
    %494 = vector.extract_strided_slice %489 {offsets = [0, 32], sizes = [8, 32], strides = [1, 1]} : vector<8x256xf32> to vector<8x32xf32>
    %495 = vector.extract_strided_slice %489 {offsets = [0, 160], sizes = [8, 32], strides = [1, 1]} : vector<8x256xf32> to vector<8x32xf32>
    %496 = tpu.concatenate %494, %495 in 1 : vector<8x32xf32>, vector<8x32xf32> -> vector<8x64xf32>
    %497 = vector.extract_strided_slice %490 {offsets = [0, 64], sizes = [8, 32], strides = [1, 1]} : vector<8x256xf32> to vector<8x32xf32>
    %498 = vector.extract_strided_slice %490 {offsets = [0, 192], sizes = [8, 32], strides = [1, 1]} : vector<8x256xf32> to vector<8x32xf32>
    %499 = tpu.concatenate %497, %498 in 1 : vector<8x32xf32>, vector<8x32xf32> -> vector<8x64xf32>
    %500 = vector.extract_strided_slice %489 {offsets = [0, 96], sizes = [8, 32], strides = [1, 1]} : vector<8x256xf32> to vector<8x32xf32>
    %501 = vector.extract_strided_slice %489 {offsets = [0, 224], sizes = [8, 32], strides = [1, 1]} : vector<8x256xf32> to vector<8x32xf32>
    %502 = tpu.concatenate %500, %501 in 1 : vector<8x32xf32>, vector<8x32xf32> -> vector<8x64xf32>
    %c104_157 = arith.constant 104 : index
    %c0_158 = arith.constant 0 : index
    %503 = vector.load %arg1[%c104_157, %c0_158] : memref<128x64xf32, #tpu.memory_space<vmem>>, vector<8x64xf32>
    %504 = arith.mulf %496, %471 : vector<8x64xf32>
    %505 = arith.mulf %493, %499 : vector<8x64xf32>
    %506 = arith.addf %504, %505 : vector<8x64xf32>
    %507 = arith.mulf %503, %506 : vector<8x64xf32>
    %508 = math.tanh %507 : vector<8x64xf32>
    %509 = arith.mulf %502, %508 : vector<8x64xf32>
    %510 = arith.mulf %503, %509 : vector<8x64xf32>
    %511 = vector.extract_strided_slice %510 {offsets = [0, 0], sizes = [8, 32], strides = [1, 1]} : vector<8x64xf32> to vector<8x32xf32>
    %c48_159 = arith.constant 48 : index
    %c64_160 = arith.constant 64 : index
    %512 = vector.load %arg21[%c48_159, %c64_160] : memref<64x128xf32, #tpu.memory_space<vmem>>, vector<8x32xf32>
    tpu.vector_store %arg21[%c48_159, %c64_160], %511 {strides = array<i32>} : memref<64x128xf32, #tpu.memory_space<vmem>>, vector<8x32xf32>,
    %513 = vector.extract_strided_slice %510 {offsets = [0, 32], sizes = [8, 32], strides = [1, 1]} : vector<8x64xf32> to vector<8x32xf32>
    %c8_161 = arith.constant 8 : index
    %c32_162 = arith.constant 32 : index
    %514 = vector.load %arg21[%c8_161, %c32_162] : memref<64x128xf32, #tpu.memory_space<vmem>>, vector<8x32xf32>
    tpu.vector_store %arg21[%c8_161, %c32_162], %513 {strides = array<i32>} : memref<64x128xf32, #tpu.memory_space<vmem>>, vector<8x32xf32>,
    %c112_163 = arith.constant 112 : index
    %c0_164 = arith.constant 0 : index
    %515 = vector.load %arg20[%c112_163, %c0_164] : memref<128x256xf32, #tpu.memory_space<vmem>>, vector<8x128xf32>
    %c8_165 = arith.constant 8 : index
    %c128_166 = arith.constant 128 : index
    %516 = vector.load %arg20[%c8_165, %c128_166] : memref<128x256xf32, #tpu.memory_space<vmem>>, vector<8x128xf32>
    %517 = tpu.concatenate %515, %516 in 1 : vector<8x128xf32>, vector<8x128xf32> -> vector<8x256xf32>
    %518 = arith.truncf %510 : vector<8x64xf32> to vector<8x64xbf16>
    %cst_167 = arith.constant dense<0.000000e+00> : vector<8x256xf32>
    %519 = tpu.matmul %518, %8, %cst_167 {dimension_numbers = #tpu.dot_dimension_numbers<[1], [0], [0], [1], [0, 0, 1, 1], [], []>} : vector<8x64xbf16>, vector<64x256xbf16>, vector<8x256xf32> -> vector<8x256xf32>
    %520 = arith.addf %517, %519 : vector<8x256xf32>
    %521 = arith.negf %520 : vector<8x256xf32>
    %522 = math.exp %521 : vector<8x256xf32>
    %cst_168 = arith.constant 1.000000e+00 : f32
    %523 = vector.broadcast %cst_168 : f32 to vector<8x256xf32>
    %524 = arith.addf %523, %522 : vector<8x256xf32>
    %525 = arith.divf %523, %524 : vector<8x256xf32>
    %526 = math.tanh %520 : vector<8x256xf32>
    %527 = vector.extract_strided_slice %525 {offsets = [0, 0], sizes = [8, 32], strides = [1, 1]} : vector<8x256xf32> to vector<8x32xf32>
    %528 = vector.extract_strided_slice %525 {offsets = [0, 128], sizes = [8, 32], strides = [1, 1]} : vector<8x256xf32> to vector<8x32xf32>
    %529 = tpu.concatenate %527, %528 in 1 : vector<8x32xf32>, vector<8x32xf32> -> vector<8x64xf32>
    %530 = vector.extract_strided_slice %525 {offsets = [0, 32], sizes = [8, 32], strides = [1, 1]} : vector<8x256xf32> to vector<8x32xf32>
    %531 = vector.extract_strided_slice %525 {offsets = [0, 160], sizes = [8, 32], strides = [1, 1]} : vector<8x256xf32> to vector<8x32xf32>
    %532 = tpu.concatenate %530, %531 in 1 : vector<8x32xf32>, vector<8x32xf32> -> vector<8x64xf32>
    %533 = vector.extract_strided_slice %526 {offsets = [0, 64], sizes = [8, 32], strides = [1, 1]} : vector<8x256xf32> to vector<8x32xf32>
    %534 = vector.extract_strided_slice %526 {offsets = [0, 192], sizes = [8, 32], strides = [1, 1]} : vector<8x256xf32> to vector<8x32xf32>
    %535 = tpu.concatenate %533, %534 in 1 : vector<8x32xf32>, vector<8x32xf32> -> vector<8x64xf32>
    %536 = vector.extract_strided_slice %525 {offsets = [0, 96], sizes = [8, 32], strides = [1, 1]} : vector<8x256xf32> to vector<8x32xf32>
    %537 = vector.extract_strided_slice %525 {offsets = [0, 224], sizes = [8, 32], strides = [1, 1]} : vector<8x256xf32> to vector<8x32xf32>
    %538 = tpu.concatenate %536, %537 in 1 : vector<8x32xf32>, vector<8x32xf32> -> vector<8x64xf32>
    %c112_169 = arith.constant 112 : index
    %c0_170 = arith.constant 0 : index
    %539 = vector.load %arg1[%c112_169, %c0_170] : memref<128x64xf32, #tpu.memory_space<vmem>>, vector<8x64xf32>
    %540 = arith.mulf %532, %507 : vector<8x64xf32>
    %541 = arith.mulf %529, %535 : vector<8x64xf32>
    %542 = arith.addf %540, %541 : vector<8x64xf32>
    %543 = arith.mulf %539, %542 : vector<8x64xf32>
    %544 = math.tanh %543 : vector<8x64xf32>
    %545 = arith.mulf %538, %544 : vector<8x64xf32>
    %546 = arith.mulf %539, %545 : vector<8x64xf32>
    %547 = vector.extract_strided_slice %546 {offsets = [0, 0], sizes = [8, 32], strides = [1, 1]} : vector<8x64xf32> to vector<8x32xf32>
    %c56_171 = arith.constant 56 : index
    %c0_172 = arith.constant 0 : index
    %548 = vector.load %arg21[%c56_171, %c0_172] : memref<64x128xf32, #tpu.memory_space<vmem>>, vector<8x32xf32>
    tpu.vector_store %arg21[%c56_171, %c0_172], %547 {strides = array<i32>} : memref<64x128xf32, #tpu.memory_space<vmem>>, vector<8x32xf32>,
    %549 = vector.extract_strided_slice %546 {offsets = [0, 32], sizes = [8, 32], strides = [1, 1]} : vector<8x64xf32> to vector<8x32xf32>
    %c0_173 = arith.constant 0 : index
    %c96_174 = arith.constant 96 : index
    %550 = vector.load %arg21[%c0_173, %c96_174] : memref<64x128xf32, #tpu.memory_space<vmem>>, vector<8x32xf32>
    tpu.vector_store %arg21[%c0_173, %c96_174], %549 {strides = array<i32>} : memref<64x128xf32, #tpu.memory_space<vmem>>, vector<8x32xf32>,
    %c120_175 = arith.constant 120 : index
    %c0_176 = arith.constant 0 : index
    %551 = vector.load %arg20[%c120_175, %c0_176] : memref<128x256xf32, #tpu.memory_space<vmem>>, vector<8x128xf32>
    %c0_177 = arith.constant 0 : index
    %c128_178 = arith.constant 128 : index
    %552 = vector.load %arg20[%c0_177, %c128_178] : memref<128x256xf32, #tpu.memory_space<vmem>>, vector<8x128xf32>
    %553 = tpu.concatenate %551, %552 in 1 : vector<8x128xf32>, vector<8x128xf32> -> vector<8x256xf32>
    %554 = arith.truncf %546 : vector<8x64xf32> to vector<8x64xbf16>
    %cst_179 = arith.constant dense<0.000000e+00> : vector<8x256xf32>
    %555 = tpu.matmul %554, %8, %cst_179 {dimension_numbers = #tpu.dot_dimension_numbers<[1], [0], [0], [1], [0, 0, 1, 1], [], []>} : vector<8x64xbf16>, vector<64x256xbf16>, vector<8x256xf32> -> vector<8x256xf32>
    %556 = arith.addf %553, %555 : vector<8x256xf32>
    %557 = arith.negf %556 : vector<8x256xf32>
    %558 = math.exp %557 : vector<8x256xf32>
    %cst_180 = arith.constant 1.000000e+00 : f32
    %559 = vector.broadcast %cst_180 : f32 to vector<8x256xf32>
    %560 = arith.addf %559, %558 : vector<8x256xf32>
    %561 = arith.divf %559, %560 : vector<8x256xf32>
    %562 = math.tanh %556 : vector<8x256xf32>
    %563 = vector.extract_strided_slice %561 {offsets = [0, 0], sizes = [8, 32], strides = [1, 1]} : vector<8x256xf32> to vector<8x32xf32>
    %564 = vector.extract_strided_slice %561 {offsets = [0, 128], sizes = [8, 32], strides = [1, 1]} : vector<8x256xf32> to vector<8x32xf32>
    %565 = tpu.concatenate %563, %564 in 1 : vector<8x32xf32>, vector<8x32xf32> -> vector<8x64xf32>
    %566 = vector.extract_strided_slice %561 {offsets = [0, 32], sizes = [8, 32], strides = [1, 1]} : vector<8x256xf32> to vector<8x32xf32>
    %567 = vector.extract_strided_slice %561 {offsets = [0, 160], sizes = [8, 32], strides = [1, 1]} : vector<8x256xf32> to vector<8x32xf32>
    %568 = tpu.concatenate %566, %567 in 1 : vector<8x32xf32>, vector<8x32xf32> -> vector<8x64xf32>
    %569 = vector.extract_strided_slice %562 {offsets = [0, 64], sizes = [8, 32], strides = [1, 1]} : vector<8x256xf32> to vector<8x32xf32>
    %570 = vector.extract_strided_slice %562 {offsets = [0, 192], sizes = [8, 32], strides = [1, 1]} : vector<8x256xf32> to vector<8x32xf32>
    %571 = tpu.concatenate %569, %570 in 1 : vector<8x32xf32>, vector<8x32xf32> -> vector<8x64xf32>
    %572 = vector.extract_strided_slice %561 {offsets = [0, 96], sizes = [8, 32], strides = [1, 1]} : vector<8x256xf32> to vector<8x32xf32>
    %573 = vector.extract_strided_slice %561 {offsets = [0, 224], sizes = [8, 32], strides = [1, 1]} : vector<8x256xf32> to vector<8x32xf32>
    %574 = tpu.concatenate %572, %573 in 1 : vector<8x32xf32>, vector<8x32xf32> -> vector<8x64xf32>
    %c120_181 = arith.constant 120 : index
    %c0_182 = arith.constant 0 : index
    %575 = vector.load %arg1[%c120_181, %c0_182] : memref<128x64xf32, #tpu.memory_space<vmem>>, vector<8x64xf32>
    %576 = arith.mulf %568, %543 : vector<8x64xf32>
    %577 = arith.mulf %565, %571 : vector<8x64xf32>
    %578 = arith.addf %576, %577 : vector<8x64xf32>
    %579 = arith.mulf %575, %578 : vector<8x64xf32>
    %580 = math.tanh %579 : vector<8x64xf32>
    %581 = arith.mulf %574, %580 : vector<8x64xf32>
    %582 = arith.mulf %575, %581 : vector<8x64xf32>
    %583 = vector.extract_strided_slice %582 {offsets = [0, 0], sizes = [8, 32], strides = [1, 1]} : vector<8x64xf32> to vector<8x32xf32>
    %c56_183 = arith.constant 56 : index
    %c64_184 = arith.constant 64 : index
    %584 = vector.load %arg21[%c56_183, %c64_184] : memref<64x128xf32, #tpu.memory_space<vmem>>, vector<8x32xf32>
    tpu.vector_store %arg21[%c56_183, %c64_184], %583 {strides = array<i32>} : memref<64x128xf32, #tpu.memory_space<vmem>>, vector<8x32xf32>,
    %585 = vector.extract_strided_slice %582 {offsets = [0, 32], sizes = [8, 32], strides = [1, 1]} : vector<8x64xf32> to vector<8x32xf32>
    %c0_185 = arith.constant 0 : index
    %c32_186 = arith.constant 32 : index
    %586 = vector.load %arg21[%c0_185, %c32_186] : memref<64x128xf32, #tpu.memory_space<vmem>>, vector<8x32xf32>
    tpu.vector_store %arg21[%c0_185, %c32_186], %585 {strides = array<i32>} : memref<64x128xf32, #tpu.memory_space<vmem>>, vector<8x32xf32>,
    %c0_187 = arith.constant 0 : index
    %c0_188 = arith.constant 0 : index
    %587 = vector.load %arg21[%c0_187, %c0_188] : memref<64x128xf32, #tpu.memory_space<vmem>>, vector<64x128xf32>
    %588 = arith.truncf %587 : vector<64x128xf32> to vector<64x128xbf16>
    %c0_189 = arith.constant 0 : index
    %c0_190 = arith.constant 0 : index
    %589 = vector.load %arg8[%c0_189, %c0_190] : memref<128x256xbf16, #tpu.memory_space<vmem>>, vector<128x256xbf16>
    %cst_191 = arith.constant dense<0.000000e+00> : vector<64x256xf32>
    %590 = tpu.matmul %588, %589, %cst_191 {dimension_numbers = #tpu.dot_dimension_numbers<[1], [0], [0], [1], [0, 0, 1, 1], [], []>} : vector<64x128xbf16>, vector<128x256xbf16>, vector<64x256xf32> -> vector<64x256xf32>
    %c0_192 = arith.constant 0 : index
    %c0_193 = arith.constant 0 : index
    %591 = vector.load %arg9[%c0_192, %c0_193] : memref<1x256xf32, #tpu.memory_space<vmem>>, vector<1x256xf32>
    %592 = vector.broadcast %591 : vector<1x256xf32> to vector<64x256xf32>
    %593 = arith.addf %590, %592 : vector<64x256xf32>
    %c0_194 = arith.constant 0 : index
    %c0_195 = arith.constant 0 : index
    %594 = vector.load %arg20[%c0_194, %c0_195] : memref<128x256xf32, #tpu.memory_space<vmem>>, vector<64x256xf32>
    tpu.vector_store %arg20[%c0_194, %c0_195], %593 {strides = array<i32>} : memref<128x256xf32, #tpu.memory_space<vmem>>, vector<64x256xf32>,
    %c0_196 = arith.constant 0 : index
    %c0_197 = arith.constant 0 : index
    %595 = vector.load %arg10[%c0_196, %c0_197] : memref<64x256xbf16, #tpu.memory_space<vmem>>, vector<64x256xbf16>
    %cst_198 = arith.constant 0.000000e+00 : f32
    %596 = vector.broadcast %cst_198 : f32 to vector<8x64xf32>
    %cst_199 = arith.constant 0.000000e+00 : f32
    %597 = vector.broadcast %cst_199 : f32 to vector<8x64xf32>
    %c0_200 = arith.constant 0 : index
    %c0_201 = arith.constant 0 : index
    %598 = vector.load %arg20[%c0_200, %c0_201] : memref<128x256xf32, #tpu.memory_space<vmem>>, vector<8x128xf32>
    %c56_202 = arith.constant 56 : index
    %c128_203 = arith.constant 128 : index
    %599 = vector.load %arg20[%c56_202, %c128_203] : memref<128x256xf32, #tpu.memory_space<vmem>>, vector<8x128xf32>
    %600 = tpu.concatenate %598, %599 in 1 : vector<8x128xf32>, vector<8x128xf32> -> vector<8x256xf32>
    %601 = arith.truncf %596 : vector<8x64xf32> to vector<8x64xbf16>
    %cst_204 = arith.constant dense<0.000000e+00> : vector<8x256xf32>
    %602 = tpu.matmul %601, %595, %cst_204 {dimension_numbers = #tpu.dot_dimension_numbers<[1], [0], [0], [1], [0, 0, 1, 1], [], []>} : vector<8x64xbf16>, vector<64x256xbf16>, vector<8x256xf32> -> vector<8x256xf32>
    %603 = arith.addf %600, %602 : vector<8x256xf32>
    %604 = arith.negf %603 : vector<8x256xf32>
    %605 = math.exp %604 : vector<8x256xf32>
    %cst_205 = arith.constant 1.000000e+00 : f32
    %606 = vector.broadcast %cst_205 : f32 to vector<8x256xf32>
    %607 = arith.addf %606, %605 : vector<8x256xf32>
    %608 = arith.divf %606, %607 : vector<8x256xf32>
    %609 = math.tanh %603 : vector<8x256xf32>
    %610 = vector.extract_strided_slice %608 {offsets = [0, 0], sizes = [8, 32], strides = [1, 1]} : vector<8x256xf32> to vector<8x32xf32>
    %611 = vector.extract_strided_slice %608 {offsets = [0, 128], sizes = [8, 32], strides = [1, 1]} : vector<8x256xf32> to vector<8x32xf32>
    %612 = tpu.concatenate %610, %611 in 1 : vector<8x32xf32>, vector<8x32xf32> -> vector<8x64xf32>
    %613 = vector.extract_strided_slice %608 {offsets = [0, 32], sizes = [8, 32], strides = [1, 1]} : vector<8x256xf32> to vector<8x32xf32>
    %614 = vector.extract_strided_slice %608 {offsets = [0, 160], sizes = [8, 32], strides = [1, 1]} : vector<8x256xf32> to vector<8x32xf32>
    %615 = tpu.concatenate %613, %614 in 1 : vector<8x32xf32>, vector<8x32xf32> -> vector<8x64xf32>
    %616 = vector.extract_strided_slice %609 {offsets = [0, 64], sizes = [8, 32], strides = [1, 1]} : vector<8x256xf32> to vector<8x32xf32>
    %617 = vector.extract_strided_slice %609 {offsets = [0, 192], sizes = [8, 32], strides = [1, 1]} : vector<8x256xf32> to vector<8x32xf32>
    %618 = tpu.concatenate %616, %617 in 1 : vector<8x32xf32>, vector<8x32xf32> -> vector<8x64xf32>
    %619 = vector.extract_strided_slice %608 {offsets = [0, 96], sizes = [8, 32], strides = [1, 1]} : vector<8x256xf32> to vector<8x32xf32>
    %620 = vector.extract_strided_slice %608 {offsets = [0, 224], sizes = [8, 32], strides = [1, 1]} : vector<8x256xf32> to vector<8x32xf32>
    %621 = tpu.concatenate %619, %620 in 1 : vector<8x32xf32>, vector<8x32xf32> -> vector<8x64xf32>
    %c0_206 = arith.constant 0 : index
    %c0_207 = arith.constant 0 : index
    %622 = vector.load %arg2[%c0_206, %c0_207] : memref<64x64xf32, #tpu.memory_space<vmem>>, vector<8x64xf32>
    %623 = arith.mulf %615, %597 : vector<8x64xf32>
    %624 = arith.mulf %612, %618 : vector<8x64xf32>
    %625 = arith.addf %623, %624 : vector<8x64xf32>
    %626 = arith.mulf %622, %625 : vector<8x64xf32>
    %627 = math.tanh %626 : vector<8x64xf32>
    %628 = arith.mulf %621, %627 : vector<8x64xf32>
    %629 = arith.mulf %622, %628 : vector<8x64xf32>
    %630 = vector.extract_strided_slice %629 {offsets = [0, 0], sizes = [8, 32], strides = [1, 1]} : vector<8x64xf32> to vector<8x32xf32>
    %c0_208 = arith.constant 0 : index
    %c0_209 = arith.constant 0 : index
    %631 = vector.load %arg22[%c0_208, %c0_209] : memref<32x128xf32, #tpu.memory_space<vmem>>, vector<8x32xf32>
    tpu.vector_store %arg22[%c0_208, %c0_209], %630 {strides = array<i32>} : memref<32x128xf32, #tpu.memory_space<vmem>>, vector<8x32xf32>,
    %632 = vector.extract_strided_slice %629 {offsets = [0, 32], sizes = [8, 32], strides = [1, 1]} : vector<8x64xf32> to vector<8x32xf32>
    %c24_210 = arith.constant 24 : index
    %c96_211 = arith.constant 96 : index
    %633 = vector.load %arg22[%c24_210, %c96_211] : memref<32x128xf32, #tpu.memory_space<vmem>>, vector<8x32xf32>
    tpu.vector_store %arg22[%c24_210, %c96_211], %632 {strides = array<i32>} : memref<32x128xf32, #tpu.memory_space<vmem>>, vector<8x32xf32>,
    %c8_212 = arith.constant 8 : index
    %c0_213 = arith.constant 0 : index
    %634 = vector.load %arg20[%c8_212, %c0_213] : memref<128x256xf32, #tpu.memory_space<vmem>>, vector<8x128xf32>
    %c48_214 = arith.constant 48 : index
    %c128_215 = arith.constant 128 : index
    %635 = vector.load %arg20[%c48_214, %c128_215] : memref<128x256xf32, #tpu.memory_space<vmem>>, vector<8x128xf32>
    %636 = tpu.concatenate %634, %635 in 1 : vector<8x128xf32>, vector<8x128xf32> -> vector<8x256xf32>
    %637 = arith.truncf %629 : vector<8x64xf32> to vector<8x64xbf16>
    %cst_216 = arith.constant dense<0.000000e+00> : vector<8x256xf32>
    %638 = tpu.matmul %637, %595, %cst_216 {dimension_numbers = #tpu.dot_dimension_numbers<[1], [0], [0], [1], [0, 0, 1, 1], [], []>} : vector<8x64xbf16>, vector<64x256xbf16>, vector<8x256xf32> -> vector<8x256xf32>
    %639 = arith.addf %636, %638 : vector<8x256xf32>
    %640 = arith.negf %639 : vector<8x256xf32>
    %641 = math.exp %640 : vector<8x256xf32>
    %cst_217 = arith.constant 1.000000e+00 : f32
    %642 = vector.broadcast %cst_217 : f32 to vector<8x256xf32>
    %643 = arith.addf %642, %641 : vector<8x256xf32>
    %644 = arith.divf %642, %643 : vector<8x256xf32>
    %645 = math.tanh %639 : vector<8x256xf32>
    %646 = vector.extract_strided_slice %644 {offsets = [0, 0], sizes = [8, 32], strides = [1, 1]} : vector<8x256xf32> to vector<8x32xf32>
    %647 = vector.extract_strided_slice %644 {offsets = [0, 128], sizes = [8, 32], strides = [1, 1]} : vector<8x256xf32> to vector<8x32xf32>
    %648 = tpu.concatenate %646, %647 in 1 : vector<8x32xf32>, vector<8x32xf32> -> vector<8x64xf32>
    %649 = vector.extract_strided_slice %644 {offsets = [0, 32], sizes = [8, 32], strides = [1, 1]} : vector<8x256xf32> to vector<8x32xf32>
    %650 = vector.extract_strided_slice %644 {offsets = [0, 160], sizes = [8, 32], strides = [1, 1]} : vector<8x256xf32> to vector<8x32xf32>
    %651 = tpu.concatenate %649, %650 in 1 : vector<8x32xf32>, vector<8x32xf32> -> vector<8x64xf32>
    %652 = vector.extract_strided_slice %645 {offsets = [0, 64], sizes = [8, 32], strides = [1, 1]} : vector<8x256xf32> to vector<8x32xf32>
    %653 = vector.extract_strided_slice %645 {offsets = [0, 192], sizes = [8, 32], strides = [1, 1]} : vector<8x256xf32> to vector<8x32xf32>
    %654 = tpu.concatenate %652, %653 in 1 : vector<8x32xf32>, vector<8x32xf32> -> vector<8x64xf32>
    %655 = vector.extract_strided_slice %644 {offsets = [0, 96], sizes = [8, 32], strides = [1, 1]} : vector<8x256xf32> to vector<8x32xf32>
    %656 = vector.extract_strided_slice %644 {offsets = [0, 224], sizes = [8, 32], strides = [1, 1]} : vector<8x256xf32> to vector<8x32xf32>
    %657 = tpu.concatenate %655, %656 in 1 : vector<8x32xf32>, vector<8x32xf32> -> vector<8x64xf32>
    %c8_218 = arith.constant 8 : index
    %c0_219 = arith.constant 0 : index
    %658 = vector.load %arg2[%c8_218, %c0_219] : memref<64x64xf32, #tpu.memory_space<vmem>>, vector<8x64xf32>
    %659 = arith.mulf %651, %626 : vector<8x64xf32>
    %660 = arith.mulf %648, %654 : vector<8x64xf32>
    %661 = arith.addf %659, %660 : vector<8x64xf32>
    %662 = arith.mulf %658, %661 : vector<8x64xf32>
    %663 = math.tanh %662 : vector<8x64xf32>
    %664 = arith.mulf %657, %663 : vector<8x64xf32>
    %665 = arith.mulf %658, %664 : vector<8x64xf32>
    %666 = vector.extract_strided_slice %665 {offsets = [0, 0], sizes = [8, 32], strides = [1, 1]} : vector<8x64xf32> to vector<8x32xf32>
    %c0_220 = arith.constant 0 : index
    %c64_221 = arith.constant 64 : index
    %667 = vector.load %arg22[%c0_220, %c64_221] : memref<32x128xf32, #tpu.memory_space<vmem>>, vector<8x32xf32>
    tpu.vector_store %arg22[%c0_220, %c64_221], %666 {strides = array<i32>} : memref<32x128xf32, #tpu.memory_space<vmem>>, vector<8x32xf32>,
    %668 = vector.extract_strided_slice %665 {offsets = [0, 32], sizes = [8, 32], strides = [1, 1]} : vector<8x64xf32> to vector<8x32xf32>
    %c24_222 = arith.constant 24 : index
    %c32_223 = arith.constant 32 : index
    %669 = vector.load %arg22[%c24_222, %c32_223] : memref<32x128xf32, #tpu.memory_space<vmem>>, vector<8x32xf32>
    tpu.vector_store %arg22[%c24_222, %c32_223], %668 {strides = array<i32>} : memref<32x128xf32, #tpu.memory_space<vmem>>, vector<8x32xf32>,
    %c16_224 = arith.constant 16 : index
    %c0_225 = arith.constant 0 : index
    %670 = vector.load %arg20[%c16_224, %c0_225] : memref<128x256xf32, #tpu.memory_space<vmem>>, vector<8x128xf32>
    %c40_226 = arith.constant 40 : index
    %c128_227 = arith.constant 128 : index
    %671 = vector.load %arg20[%c40_226, %c128_227] : memref<128x256xf32, #tpu.memory_space<vmem>>, vector<8x128xf32>
    %672 = tpu.concatenate %670, %671 in 1 : vector<8x128xf32>, vector<8x128xf32> -> vector<8x256xf32>
    %673 = arith.truncf %665 : vector<8x64xf32> to vector<8x64xbf16>
    %cst_228 = arith.constant dense<0.000000e+00> : vector<8x256xf32>
    %674 = tpu.matmul %673, %595, %cst_228 {dimension_numbers = #tpu.dot_dimension_numbers<[1], [0], [0], [1], [0, 0, 1, 1], [], []>} : vector<8x64xbf16>, vector<64x256xbf16>, vector<8x256xf32> -> vector<8x256xf32>
    %675 = arith.addf %672, %674 : vector<8x256xf32>
    %676 = arith.negf %675 : vector<8x256xf32>
    %677 = math.exp %676 : vector<8x256xf32>
    %cst_229 = arith.constant 1.000000e+00 : f32
    %678 = vector.broadcast %cst_229 : f32 to vector<8x256xf32>
    %679 = arith.addf %678, %677 : vector<8x256xf32>
    %680 = arith.divf %678, %679 : vector<8x256xf32>
    %681 = math.tanh %675 : vector<8x256xf32>
    %682 = vector.extract_strided_slice %680 {offsets = [0, 0], sizes = [8, 32], strides = [1, 1]} : vector<8x256xf32> to vector<8x32xf32>
    %683 = vector.extract_strided_slice %680 {offsets = [0, 128], sizes = [8, 32], strides = [1, 1]} : vector<8x256xf32> to vector<8x32xf32>
    %684 = tpu.concatenate %682, %683 in 1 : vector<8x32xf32>, vector<8x32xf32> -> vector<8x64xf32>
    %685 = vector.extract_strided_slice %680 {offsets = [0, 32], sizes = [8, 32], strides = [1, 1]} : vector<8x256xf32> to vector<8x32xf32>
    %686 = vector.extract_strided_slice %680 {offsets = [0, 160], sizes = [8, 32], strides = [1, 1]} : vector<8x256xf32> to vector<8x32xf32>
    %687 = tpu.concatenate %685, %686 in 1 : vector<8x32xf32>, vector<8x32xf32> -> vector<8x64xf32>
    %688 = vector.extract_strided_slice %681 {offsets = [0, 64], sizes = [8, 32], strides = [1, 1]} : vector<8x256xf32> to vector<8x32xf32>
    %689 = vector.extract_strided_slice %681 {offsets = [0, 192], sizes = [8, 32], strides = [1, 1]} : vector<8x256xf32> to vector<8x32xf32>
    %690 = tpu.concatenate %688, %689 in 1 : vector<8x32xf32>, vector<8x32xf32> -> vector<8x64xf32>
    %691 = vector.extract_strided_slice %680 {offsets = [0, 96], sizes = [8, 32], strides = [1, 1]} : vector<8x256xf32> to vector<8x32xf32>
    %692 = vector.extract_strided_slice %680 {offsets = [0, 224], sizes = [8, 32], strides = [1, 1]} : vector<8x256xf32> to vector<8x32xf32>
    %693 = tpu.concatenate %691, %692 in 1 : vector<8x32xf32>, vector<8x32xf32> -> vector<8x64xf32>
    %c16_230 = arith.constant 16 : index
    %c0_231 = arith.constant 0 : index
    %694 = vector.load %arg2[%c16_230, %c0_231] : memref<64x64xf32, #tpu.memory_space<vmem>>, vector<8x64xf32>
    %695 = arith.mulf %687, %662 : vector<8x64xf32>
    %696 = arith.mulf %684, %690 : vector<8x64xf32>
    %697 = arith.addf %695, %696 : vector<8x64xf32>
    %698 = arith.mulf %694, %697 : vector<8x64xf32>
    %699 = math.tanh %698 : vector<8x64xf32>
    %700 = arith.mulf %693, %699 : vector<8x64xf32>
    %701 = arith.mulf %694, %700 : vector<8x64xf32>
    %702 = vector.extract_strided_slice %701 {offsets = [0, 0], sizes = [8, 32], strides = [1, 1]} : vector<8x64xf32> to vector<8x32xf32>
    %c8_232 = arith.constant 8 : index
    %c0_233 = arith.constant 0 : index
    %703 = vector.load %arg22[%c8_232, %c0_233] : memref<32x128xf32, #tpu.memory_space<vmem>>, vector<8x32xf32>
    tpu.vector_store %arg22[%c8_232, %c0_233], %702 {strides = array<i32>} : memref<32x128xf32, #tpu.memory_space<vmem>>, vector<8x32xf32>,
    %704 = vector.extract_strided_slice %701 {offsets = [0, 32], sizes = [8, 32], strides = [1, 1]} : vector<8x64xf32> to vector<8x32xf32>
    %c16_234 = arith.constant 16 : index
    %c96_235 = arith.constant 96 : index
    %705 = vector.load %arg22[%c16_234, %c96_235] : memref<32x128xf32, #tpu.memory_space<vmem>>, vector<8x32xf32>
    tpu.vector_store %arg22[%c16_234, %c96_235], %704 {strides = array<i32>} : memref<32x128xf32, #tpu.memory_space<vmem>>, vector<8x32xf32>,
    %c24_236 = arith.constant 24 : index
    %c0_237 = arith.constant 0 : index
    %706 = vector.load %arg20[%c24_236, %c0_237] : memref<128x256xf32, #tpu.memory_space<vmem>>, vector<8x128xf32>
    %c32_238 = arith.constant 32 : index
    %c128_239 = arith.constant 128 : index
    %707 = vector.load %arg20[%c32_238, %c128_239] : memref<128x256xf32, #tpu.memory_space<vmem>>, vector<8x128xf32>
    %708 = tpu.concatenate %706, %707 in 1 : vector<8x128xf32>, vector<8x128xf32> -> vector<8x256xf32>
    %709 = arith.truncf %701 : vector<8x64xf32> to vector<8x64xbf16>
    %cst_240 = arith.constant dense<0.000000e+00> : vector<8x256xf32>
    %710 = tpu.matmul %709, %595, %cst_240 {dimension_numbers = #tpu.dot_dimension_numbers<[1], [0], [0], [1], [0, 0, 1, 1], [], []>} : vector<8x64xbf16>, vector<64x256xbf16>, vector<8x256xf32> -> vector<8x256xf32>
    %711 = arith.addf %708, %710 : vector<8x256xf32>
    %712 = arith.negf %711 : vector<8x256xf32>
    %713 = math.exp %712 : vector<8x256xf32>
    %cst_241 = arith.constant 1.000000e+00 : f32
    %714 = vector.broadcast %cst_241 : f32 to vector<8x256xf32>
    %715 = arith.addf %714, %713 : vector<8x256xf32>
    %716 = arith.divf %714, %715 : vector<8x256xf32>
    %717 = math.tanh %711 : vector<8x256xf32>
    %718 = vector.extract_strided_slice %716 {offsets = [0, 0], sizes = [8, 32], strides = [1, 1]} : vector<8x256xf32> to vector<8x32xf32>
    %719 = vector.extract_strided_slice %716 {offsets = [0, 128], sizes = [8, 32], strides = [1, 1]} : vector<8x256xf32> to vector<8x32xf32>
    %720 = tpu.concatenate %718, %719 in 1 : vector<8x32xf32>, vector<8x32xf32> -> vector<8x64xf32>
    %721 = vector.extract_strided_slice %716 {offsets = [0, 32], sizes = [8, 32], strides = [1, 1]} : vector<8x256xf32> to vector<8x32xf32>
    %722 = vector.extract_strided_slice %716 {offsets = [0, 160], sizes = [8, 32], strides = [1, 1]} : vector<8x256xf32> to vector<8x32xf32>
    %723 = tpu.concatenate %721, %722 in 1 : vector<8x32xf32>, vector<8x32xf32> -> vector<8x64xf32>
    %724 = vector.extract_strided_slice %717 {offsets = [0, 64], sizes = [8, 32], strides = [1, 1]} : vector<8x256xf32> to vector<8x32xf32>
    %725 = vector.extract_strided_slice %717 {offsets = [0, 192], sizes = [8, 32], strides = [1, 1]} : vector<8x256xf32> to vector<8x32xf32>
    %726 = tpu.concatenate %724, %725 in 1 : vector<8x32xf32>, vector<8x32xf32> -> vector<8x64xf32>
    %727 = vector.extract_strided_slice %716 {offsets = [0, 96], sizes = [8, 32], strides = [1, 1]} : vector<8x256xf32> to vector<8x32xf32>
    %728 = vector.extract_strided_slice %716 {offsets = [0, 224], sizes = [8, 32], strides = [1, 1]} : vector<8x256xf32> to vector<8x32xf32>
    %729 = tpu.concatenate %727, %728 in 1 : vector<8x32xf32>, vector<8x32xf32> -> vector<8x64xf32>
    %c24_242 = arith.constant 24 : index
    %c0_243 = arith.constant 0 : index
    %730 = vector.load %arg2[%c24_242, %c0_243] : memref<64x64xf32, #tpu.memory_space<vmem>>, vector<8x64xf32>
    %731 = arith.mulf %723, %698 : vector<8x64xf32>
    %732 = arith.mulf %720, %726 : vector<8x64xf32>
    %733 = arith.addf %731, %732 : vector<8x64xf32>
    %734 = arith.mulf %730, %733 : vector<8x64xf32>
    %735 = math.tanh %734 : vector<8x64xf32>
    %736 = arith.mulf %729, %735 : vector<8x64xf32>
    %737 = arith.mulf %730, %736 : vector<8x64xf32>
    %738 = vector.extract_strided_slice %737 {offsets = [0, 0], sizes = [8, 32], strides = [1, 1]} : vector<8x64xf32> to vector<8x32xf32>
    %c8_244 = arith.constant 8 : index
    %c64_245 = arith.constant 64 : index
    %739 = vector.load %arg22[%c8_244, %c64_245] : memref<32x128xf32, #tpu.memory_space<vmem>>, vector<8x32xf32>
    tpu.vector_store %arg22[%c8_244, %c64_245], %738 {strides = array<i32>} : memref<32x128xf32, #tpu.memory_space<vmem>>, vector<8x32xf32>,
    %740 = vector.extract_strided_slice %737 {offsets = [0, 32], sizes = [8, 32], strides = [1, 1]} : vector<8x64xf32> to vector<8x32xf32>
    %c16_246 = arith.constant 16 : index
    %c32_247 = arith.constant 32 : index
    %741 = vector.load %arg22[%c16_246, %c32_247] : memref<32x128xf32, #tpu.memory_space<vmem>>, vector<8x32xf32>
    tpu.vector_store %arg22[%c16_246, %c32_247], %740 {strides = array<i32>} : memref<32x128xf32, #tpu.memory_space<vmem>>, vector<8x32xf32>,
    %c32_248 = arith.constant 32 : index
    %c0_249 = arith.constant 0 : index
    %742 = vector.load %arg20[%c32_248, %c0_249] : memref<128x256xf32, #tpu.memory_space<vmem>>, vector<8x128xf32>
    %c24_250 = arith.constant 24 : index
    %c128_251 = arith.constant 128 : index
    %743 = vector.load %arg20[%c24_250, %c128_251] : memref<128x256xf32, #tpu.memory_space<vmem>>, vector<8x128xf32>
    %744 = tpu.concatenate %742, %743 in 1 : vector<8x128xf32>, vector<8x128xf32> -> vector<8x256xf32>
    %745 = arith.truncf %737 : vector<8x64xf32> to vector<8x64xbf16>
    %cst_252 = arith.constant dense<0.000000e+00> : vector<8x256xf32>
    %746 = tpu.matmul %745, %595, %cst_252 {dimension_numbers = #tpu.dot_dimension_numbers<[1], [0], [0], [1], [0, 0, 1, 1], [], []>} : vector<8x64xbf16>, vector<64x256xbf16>, vector<8x256xf32> -> vector<8x256xf32>
    %747 = arith.addf %744, %746 : vector<8x256xf32>
    %748 = arith.negf %747 : vector<8x256xf32>
    %749 = math.exp %748 : vector<8x256xf32>
    %cst_253 = arith.constant 1.000000e+00 : f32
    %750 = vector.broadcast %cst_253 : f32 to vector<8x256xf32>
    %751 = arith.addf %750, %749 : vector<8x256xf32>
    %752 = arith.divf %750, %751 : vector<8x256xf32>
    %753 = math.tanh %747 : vector<8x256xf32>
    %754 = vector.extract_strided_slice %752 {offsets = [0, 0], sizes = [8, 32], strides = [1, 1]} : vector<8x256xf32> to vector<8x32xf32>
    %755 = vector.extract_strided_slice %752 {offsets = [0, 128], sizes = [8, 32], strides = [1, 1]} : vector<8x256xf32> to vector<8x32xf32>
    %756 = tpu.concatenate %754, %755 in 1 : vector<8x32xf32>, vector<8x32xf32> -> vector<8x64xf32>
    %757 = vector.extract_strided_slice %752 {offsets = [0, 32], sizes = [8, 32], strides = [1, 1]} : vector<8x256xf32> to vector<8x32xf32>
    %758 = vector.extract_strided_slice %752 {offsets = [0, 160], sizes = [8, 32], strides = [1, 1]} : vector<8x256xf32> to vector<8x32xf32>
    %759 = tpu.concatenate %757, %758 in 1 : vector<8x32xf32>, vector<8x32xf32> -> vector<8x64xf32>
    %760 = vector.extract_strided_slice %753 {offsets = [0, 64], sizes = [8, 32], strides = [1, 1]} : vector<8x256xf32> to vector<8x32xf32>
    %761 = vector.extract_strided_slice %753 {offsets = [0, 192], sizes = [8, 32], strides = [1, 1]} : vector<8x256xf32> to vector<8x32xf32>
    %762 = tpu.concatenate %760, %761 in 1 : vector<8x32xf32>, vector<8x32xf32> -> vector<8x64xf32>
    %763 = vector.extract_strided_slice %752 {offsets = [0, 96], sizes = [8, 32], strides = [1, 1]} : vector<8x256xf32> to vector<8x32xf32>
    %764 = vector.extract_strided_slice %752 {offsets = [0, 224], sizes = [8, 32], strides = [1, 1]} : vector<8x256xf32> to vector<8x32xf32>
    %765 = tpu.concatenate %763, %764 in 1 : vector<8x32xf32>, vector<8x32xf32> -> vector<8x64xf32>
    %c32_254 = arith.constant 32 : index
    %c0_255 = arith.constant 0 : index
    %766 = vector.load %arg2[%c32_254, %c0_255] : memref<64x64xf32, #tpu.memory_space<vmem>>, vector<8x64xf32>
    %767 = arith.mulf %759, %734 : vector<8x64xf32>
    %768 = arith.mulf %756, %762 : vector<8x64xf32>
    %769 = arith.addf %767, %768 : vector<8x64xf32>
    %770 = arith.mulf %766, %769 : vector<8x64xf32>
    %771 = math.tanh %770 : vector<8x64xf32>
    %772 = arith.mulf %765, %771 : vector<8x64xf32>
    %773 = arith.mulf %766, %772 : vector<8x64xf32>
    %774 = vector.extract_strided_slice %773 {offsets = [0, 0], sizes = [8, 32], strides = [1, 1]} : vector<8x64xf32> to vector<8x32xf32>
    %c16_256 = arith.constant 16 : index
    %c0_257 = arith.constant 0 : index
    %775 = vector.load %arg22[%c16_256, %c0_257] : memref<32x128xf32, #tpu.memory_space<vmem>>, vector<8x32xf32>
    tpu.vector_store %arg22[%c16_256, %c0_257], %774 {strides = array<i32>} : memref<32x128xf32, #tpu.memory_space<vmem>>, vector<8x32xf32>,
    %776 = vector.extract_strided_slice %773 {offsets = [0, 32], sizes = [8, 32], strides = [1, 1]} : vector<8x64xf32> to vector<8x32xf32>
    %c8_258 = arith.constant 8 : index
    %c96_259 = arith.constant 96 : index
    %777 = vector.load %arg22[%c8_258, %c96_259] : memref<32x128xf32, #tpu.memory_space<vmem>>, vector<8x32xf32>
    tpu.vector_store %arg22[%c8_258, %c96_259], %776 {strides = array<i32>} : memref<32x128xf32, #tpu.memory_space<vmem>>, vector<8x32xf32>,
    %c40_260 = arith.constant 40 : index
    %c0_261 = arith.constant 0 : index
    %778 = vector.load %arg20[%c40_260, %c0_261] : memref<128x256xf32, #tpu.memory_space<vmem>>, vector<8x128xf32>
    %c16_262 = arith.constant 16 : index
    %c128_263 = arith.constant 128 : index
    %779 = vector.load %arg20[%c16_262, %c128_263] : memref<128x256xf32, #tpu.memory_space<vmem>>, vector<8x128xf32>
    %780 = tpu.concatenate %778, %779 in 1 : vector<8x128xf32>, vector<8x128xf32> -> vector<8x256xf32>
    %781 = arith.truncf %773 : vector<8x64xf32> to vector<8x64xbf16>
    %cst_264 = arith.constant dense<0.000000e+00> : vector<8x256xf32>
    %782 = tpu.matmul %781, %595, %cst_264 {dimension_numbers = #tpu.dot_dimension_numbers<[1], [0], [0], [1], [0, 0, 1, 1], [], []>} : vector<8x64xbf16>, vector<64x256xbf16>, vector<8x256xf32> -> vector<8x256xf32>
    %783 = arith.addf %780, %782 : vector<8x256xf32>
    %784 = arith.negf %783 : vector<8x256xf32>
    %785 = math.exp %784 : vector<8x256xf32>
    %cst_265 = arith.constant 1.000000e+00 : f32
    %786 = vector.broadcast %cst_265 : f32 to vector<8x256xf32>
    %787 = arith.addf %786, %785 : vector<8x256xf32>
    %788 = arith.divf %786, %787 : vector<8x256xf32>
    %789 = math.tanh %783 : vector<8x256xf32>
    %790 = vector.extract_strided_slice %788 {offsets = [0, 0], sizes = [8, 32], strides = [1, 1]} : vector<8x256xf32> to vector<8x32xf32>
    %791 = vector.extract_strided_slice %788 {offsets = [0, 128], sizes = [8, 32], strides = [1, 1]} : vector<8x256xf32> to vector<8x32xf32>
    %792 = tpu.concatenate %790, %791 in 1 : vector<8x32xf32>, vector<8x32xf32> -> vector<8x64xf32>
    %793 = vector.extract_strided_slice %788 {offsets = [0, 32], sizes = [8, 32], strides = [1, 1]} : vector<8x256xf32> to vector<8x32xf32>
    %794 = vector.extract_strided_slice %788 {offsets = [0, 160], sizes = [8, 32], strides = [1, 1]} : vector<8x256xf32> to vector<8x32xf32>
    %795 = tpu.concatenate %793, %794 in 1 : vector<8x32xf32>, vector<8x32xf32> -> vector<8x64xf32>
    %796 = vector.extract_strided_slice %789 {offsets = [0, 64], sizes = [8, 32], strides = [1, 1]} : vector<8x256xf32> to vector<8x32xf32>
    %797 = vector.extract_strided_slice %789 {offsets = [0, 192], sizes = [8, 32], strides = [1, 1]} : vector<8x256xf32> to vector<8x32xf32>
    %798 = tpu.concatenate %796, %797 in 1 : vector<8x32xf32>, vector<8x32xf32> -> vector<8x64xf32>
    %799 = vector.extract_strided_slice %788 {offsets = [0, 96], sizes = [8, 32], strides = [1, 1]} : vector<8x256xf32> to vector<8x32xf32>
    %800 = vector.extract_strided_slice %788 {offsets = [0, 224], sizes = [8, 32], strides = [1, 1]} : vector<8x256xf32> to vector<8x32xf32>
    %801 = tpu.concatenate %799, %800 in 1 : vector<8x32xf32>, vector<8x32xf32> -> vector<8x64xf32>
    %c40_266 = arith.constant 40 : index
    %c0_267 = arith.constant 0 : index
    %802 = vector.load %arg2[%c40_266, %c0_267] : memref<64x64xf32, #tpu.memory_space<vmem>>, vector<8x64xf32>
    %803 = arith.mulf %795, %770 : vector<8x64xf32>
    %804 = arith.mulf %792, %798 : vector<8x64xf32>
    %805 = arith.addf %803, %804 : vector<8x64xf32>
    %806 = arith.mulf %802, %805 : vector<8x64xf32>
    %807 = math.tanh %806 : vector<8x64xf32>
    %808 = arith.mulf %801, %807 : vector<8x64xf32>
    %809 = arith.mulf %802, %808 : vector<8x64xf32>
    %810 = vector.extract_strided_slice %809 {offsets = [0, 0], sizes = [8, 32], strides = [1, 1]} : vector<8x64xf32> to vector<8x32xf32>
    %c16_268 = arith.constant 16 : index
    %c64_269 = arith.constant 64 : index
    %811 = vector.load %arg22[%c16_268, %c64_269] : memref<32x128xf32, #tpu.memory_space<vmem>>, vector<8x32xf32>
    tpu.vector_store %arg22[%c16_268, %c64_269], %810 {strides = array<i32>} : memref<32x128xf32, #tpu.memory_space<vmem>>, vector<8x32xf32>,
    %812 = vector.extract_strided_slice %809 {offsets = [0, 32], sizes = [8, 32], strides = [1, 1]} : vector<8x64xf32> to vector<8x32xf32>
    %c8_270 = arith.constant 8 : index
    %c32_271 = arith.constant 32 : index
    %813 = vector.load %arg22[%c8_270, %c32_271] : memref<32x128xf32, #tpu.memory_space<vmem>>, vector<8x32xf32>
    tpu.vector_store %arg22[%c8_270, %c32_271], %812 {strides = array<i32>} : memref<32x128xf32, #tpu.memory_space<vmem>>, vector<8x32xf32>,
    %c48_272 = arith.constant 48 : index
    %c0_273 = arith.constant 0 : index
    %814 = vector.load %arg20[%c48_272, %c0_273] : memref<128x256xf32, #tpu.memory_space<vmem>>, vector<8x128xf32>
    %c8_274 = arith.constant 8 : index
    %c128_275 = arith.constant 128 : index
    %815 = vector.load %arg20[%c8_274, %c128_275] : memref<128x256xf32, #tpu.memory_space<vmem>>, vector<8x128xf32>
    %816 = tpu.concatenate %814, %815 in 1 : vector<8x128xf32>, vector<8x128xf32> -> vector<8x256xf32>
    %817 = arith.truncf %809 : vector<8x64xf32> to vector<8x64xbf16>
    %cst_276 = arith.constant dense<0.000000e+00> : vector<8x256xf32>
    %818 = tpu.matmul %817, %595, %cst_276 {dimension_numbers = #tpu.dot_dimension_numbers<[1], [0], [0], [1], [0, 0, 1, 1], [], []>} : vector<8x64xbf16>, vector<64x256xbf16>, vector<8x256xf32> -> vector<8x256xf32>
    %819 = arith.addf %816, %818 : vector<8x256xf32>
    %820 = arith.negf %819 : vector<8x256xf32>
    %821 = math.exp %820 : vector<8x256xf32>
    %cst_277 = arith.constant 1.000000e+00 : f32
    %822 = vector.broadcast %cst_277 : f32 to vector<8x256xf32>
    %823 = arith.addf %822, %821 : vector<8x256xf32>
    %824 = arith.divf %822, %823 : vector<8x256xf32>
    %825 = math.tanh %819 : vector<8x256xf32>
    %826 = vector.extract_strided_slice %824 {offsets = [0, 0], sizes = [8, 32], strides = [1, 1]} : vector<8x256xf32> to vector<8x32xf32>
    %827 = vector.extract_strided_slice %824 {offsets = [0, 128], sizes = [8, 32], strides = [1, 1]} : vector<8x256xf32> to vector<8x32xf32>
    %828 = tpu.concatenate %826, %827 in 1 : vector<8x32xf32>, vector<8x32xf32> -> vector<8x64xf32>
    %829 = vector.extract_strided_slice %824 {offsets = [0, 32], sizes = [8, 32], strides = [1, 1]} : vector<8x256xf32> to vector<8x32xf32>
    %830 = vector.extract_strided_slice %824 {offsets = [0, 160], sizes = [8, 32], strides = [1, 1]} : vector<8x256xf32> to vector<8x32xf32>
    %831 = tpu.concatenate %829, %830 in 1 : vector<8x32xf32>, vector<8x32xf32> -> vector<8x64xf32>
    %832 = vector.extract_strided_slice %825 {offsets = [0, 64], sizes = [8, 32], strides = [1, 1]} : vector<8x256xf32> to vector<8x32xf32>
    %833 = vector.extract_strided_slice %825 {offsets = [0, 192], sizes = [8, 32], strides = [1, 1]} : vector<8x256xf32> to vector<8x32xf32>
    %834 = tpu.concatenate %832, %833 in 1 : vector<8x32xf32>, vector<8x32xf32> -> vector<8x64xf32>
    %835 = vector.extract_strided_slice %824 {offsets = [0, 96], sizes = [8, 32], strides = [1, 1]} : vector<8x256xf32> to vector<8x32xf32>
    %836 = vector.extract_strided_slice %824 {offsets = [0, 224], sizes = [8, 32], strides = [1, 1]} : vector<8x256xf32> to vector<8x32xf32>
    %837 = tpu.concatenate %835, %836 in 1 : vector<8x32xf32>, vector<8x32xf32> -> vector<8x64xf32>
    %c48_278 = arith.constant 48 : index
    %c0_279 = arith.constant 0 : index
    %838 = vector.load %arg2[%c48_278, %c0_279] : memref<64x64xf32, #tpu.memory_space<vmem>>, vector<8x64xf32>
    %839 = arith.mulf %831, %806 : vector<8x64xf32>
    %840 = arith.mulf %828, %834 : vector<8x64xf32>
    %841 = arith.addf %839, %840 : vector<8x64xf32>
    %842 = arith.mulf %838, %841 : vector<8x64xf32>
    %843 = math.tanh %842 : vector<8x64xf32>
    %844 = arith.mulf %837, %843 : vector<8x64xf32>
    %845 = arith.mulf %838, %844 : vector<8x64xf32>
    %846 = vector.extract_strided_slice %845 {offsets = [0, 0], sizes = [8, 32], strides = [1, 1]} : vector<8x64xf32> to vector<8x32xf32>
    %c24_280 = arith.constant 24 : index
    %c0_281 = arith.constant 0 : index
    %847 = vector.load %arg22[%c24_280, %c0_281] : memref<32x128xf32, #tpu.memory_space<vmem>>, vector<8x32xf32>
    tpu.vector_store %arg22[%c24_280, %c0_281], %846 {strides = array<i32>} : memref<32x128xf32, #tpu.memory_space<vmem>>, vector<8x32xf32>,
    %848 = vector.extract_strided_slice %845 {offsets = [0, 32], sizes = [8, 32], strides = [1, 1]} : vector<8x64xf32> to vector<8x32xf32>
    %c0_282 = arith.constant 0 : index
    %c96_283 = arith.constant 96 : index
    %849 = vector.load %arg22[%c0_282, %c96_283] : memref<32x128xf32, #tpu.memory_space<vmem>>, vector<8x32xf32>
    tpu.vector_store %arg22[%c0_282, %c96_283], %848 {strides = array<i32>} : memref<32x128xf32, #tpu.memory_space<vmem>>, vector<8x32xf32>,
    %c56_284 = arith.constant 56 : index
    %c0_285 = arith.constant 0 : index
    %850 = vector.load %arg20[%c56_284, %c0_285] : memref<128x256xf32, #tpu.memory_space<vmem>>, vector<8x128xf32>
    %c0_286 = arith.constant 0 : index
    %c128_287 = arith.constant 128 : index
    %851 = vector.load %arg20[%c0_286, %c128_287] : memref<128x256xf32, #tpu.memory_space<vmem>>, vector<8x128xf32>
    %852 = tpu.concatenate %850, %851 in 1 : vector<8x128xf32>, vector<8x128xf32> -> vector<8x256xf32>
    %853 = arith.truncf %845 : vector<8x64xf32> to vector<8x64xbf16>
    %cst_288 = arith.constant dense<0.000000e+00> : vector<8x256xf32>
    %854 = tpu.matmul %853, %595, %cst_288 {dimension_numbers = #tpu.dot_dimension_numbers<[1], [0], [0], [1], [0, 0, 1, 1], [], []>} : vector<8x64xbf16>, vector<64x256xbf16>, vector<8x256xf32> -> vector<8x256xf32>
    %855 = arith.addf %852, %854 : vector<8x256xf32>
    %856 = arith.negf %855 : vector<8x256xf32>
    %857 = math.exp %856 : vector<8x256xf32>
    %cst_289 = arith.constant 1.000000e+00 : f32
    %858 = vector.broadcast %cst_289 : f32 to vector<8x256xf32>
    %859 = arith.addf %858, %857 : vector<8x256xf32>
    %860 = arith.divf %858, %859 : vector<8x256xf32>
    %861 = math.tanh %855 : vector<8x256xf32>
    %862 = vector.extract_strided_slice %860 {offsets = [0, 0], sizes = [8, 32], strides = [1, 1]} : vector<8x256xf32> to vector<8x32xf32>
    %863 = vector.extract_strided_slice %860 {offsets = [0, 128], sizes = [8, 32], strides = [1, 1]} : vector<8x256xf32> to vector<8x32xf32>
    %864 = tpu.concatenate %862, %863 in 1 : vector<8x32xf32>, vector<8x32xf32> -> vector<8x64xf32>
    %865 = vector.extract_strided_slice %860 {offsets = [0, 32], sizes = [8, 32], strides = [1, 1]} : vector<8x256xf32> to vector<8x32xf32>
    %866 = vector.extract_strided_slice %860 {offsets = [0, 160], sizes = [8, 32], strides = [1, 1]} : vector<8x256xf32> to vector<8x32xf32>
    %867 = tpu.concatenate %865, %866 in 1 : vector<8x32xf32>, vector<8x32xf32> -> vector<8x64xf32>
    %868 = vector.extract_strided_slice %861 {offsets = [0, 64], sizes = [8, 32], strides = [1, 1]} : vector<8x256xf32> to vector<8x32xf32>
    %869 = vector.extract_strided_slice %861 {offsets = [0, 192], sizes = [8, 32], strides = [1, 1]} : vector<8x256xf32> to vector<8x32xf32>
    %870 = tpu.concatenate %868, %869 in 1 : vector<8x32xf32>, vector<8x32xf32> -> vector<8x64xf32>
    %871 = vector.extract_strided_slice %860 {offsets = [0, 96], sizes = [8, 32], strides = [1, 1]} : vector<8x256xf32> to vector<8x32xf32>
    %872 = vector.extract_strided_slice %860 {offsets = [0, 224], sizes = [8, 32], strides = [1, 1]} : vector<8x256xf32> to vector<8x32xf32>
    %873 = tpu.concatenate %871, %872 in 1 : vector<8x32xf32>, vector<8x32xf32> -> vector<8x64xf32>
    %c56_290 = arith.constant 56 : index
    %c0_291 = arith.constant 0 : index
    %874 = vector.load %arg2[%c56_290, %c0_291] : memref<64x64xf32, #tpu.memory_space<vmem>>, vector<8x64xf32>
    %875 = arith.mulf %867, %842 : vector<8x64xf32>
    %876 = arith.mulf %864, %870 : vector<8x64xf32>
    %877 = arith.addf %875, %876 : vector<8x64xf32>
    %878 = arith.mulf %874, %877 : vector<8x64xf32>
    %879 = math.tanh %878 : vector<8x64xf32>
    %880 = arith.mulf %873, %879 : vector<8x64xf32>
    %881 = arith.mulf %874, %880 : vector<8x64xf32>
    %882 = vector.extract_strided_slice %881 {offsets = [0, 0], sizes = [8, 32], strides = [1, 1]} : vector<8x64xf32> to vector<8x32xf32>
    %c24_292 = arith.constant 24 : index
    %c64_293 = arith.constant 64 : index
    %883 = vector.load %arg22[%c24_292, %c64_293] : memref<32x128xf32, #tpu.memory_space<vmem>>, vector<8x32xf32>
    tpu.vector_store %arg22[%c24_292, %c64_293], %882 {strides = array<i32>} : memref<32x128xf32, #tpu.memory_space<vmem>>, vector<8x32xf32>,
    %884 = vector.extract_strided_slice %881 {offsets = [0, 32], sizes = [8, 32], strides = [1, 1]} : vector<8x64xf32> to vector<8x32xf32>
    %c0_294 = arith.constant 0 : index
    %c32_295 = arith.constant 32 : index
    %885 = vector.load %arg22[%c0_294, %c32_295] : memref<32x128xf32, #tpu.memory_space<vmem>>, vector<8x32xf32>
    tpu.vector_store %arg22[%c0_294, %c32_295], %884 {strides = array<i32>} : memref<32x128xf32, #tpu.memory_space<vmem>>, vector<8x32xf32>,
    %c0_296 = arith.constant 0 : index
    %c0_297 = arith.constant 0 : index
    %886 = vector.load %arg22[%c0_296, %c0_297] : memref<32x128xf32, #tpu.memory_space<vmem>>, vector<32x128xf32>
    %887 = arith.truncf %886 : vector<32x128xf32> to vector<32x128xbf16>
    %c0_298 = arith.constant 0 : index
    %c0_299 = arith.constant 0 : index
    %888 = vector.load %arg11[%c0_298, %c0_299] : memref<128x256xbf16, #tpu.memory_space<vmem>>, vector<128x256xbf16>
    %cst_300 = arith.constant dense<0.000000e+00> : vector<32x256xf32>
    %889 = tpu.matmul %887, %888, %cst_300 {dimension_numbers = #tpu.dot_dimension_numbers<[1], [0], [0], [1], [0, 0, 1, 1], [], []>} : vector<32x128xbf16>, vector<128x256xbf16>, vector<32x256xf32> -> vector<32x256xf32>
    %c0_301 = arith.constant 0 : index
    %c0_302 = arith.constant 0 : index
    %890 = vector.load %arg12[%c0_301, %c0_302] : memref<1x256xf32, #tpu.memory_space<vmem>>, vector<1x256xf32>
    %891 = vector.broadcast %890 : vector<1x256xf32> to vector<32x256xf32>
    %892 = arith.addf %889, %891 : vector<32x256xf32>
    %c0_303 = arith.constant 0 : index
    %c0_304 = arith.constant 0 : index
    %893 = vector.load %arg20[%c0_303, %c0_304] : memref<128x256xf32, #tpu.memory_space<vmem>>, vector<32x256xf32>
    tpu.vector_store %arg20[%c0_303, %c0_304], %892 {strides = array<i32>} : memref<128x256xf32, #tpu.memory_space<vmem>>, vector<32x256xf32>,
    %c0_305 = arith.constant 0 : index
    %c0_306 = arith.constant 0 : index
    %894 = vector.load %arg13[%c0_305, %c0_306] : memref<64x256xbf16, #tpu.memory_space<vmem>>, vector<64x256xbf16>
    %cst_307 = arith.constant 0.000000e+00 : f32
    %895 = vector.broadcast %cst_307 : f32 to vector<8x64xf32>
    %cst_308 = arith.constant 0.000000e+00 : f32
    %896 = vector.broadcast %cst_308 : f32 to vector<8x64xf32>
    %c0_309 = arith.constant 0 : index
    %c0_310 = arith.constant 0 : index
    %897 = vector.load %arg20[%c0_309, %c0_310] : memref<128x256xf32, #tpu.memory_space<vmem>>, vector<8x128xf32>
    %c24_311 = arith.constant 24 : index
    %c128_312 = arith.constant 128 : index
    %898 = vector.load %arg20[%c24_311, %c128_312] : memref<128x256xf32, #tpu.memory_space<vmem>>, vector<8x128xf32>
    %899 = tpu.concatenate %897, %898 in 1 : vector<8x128xf32>, vector<8x128xf32> -> vector<8x256xf32>
    %900 = arith.truncf %895 : vector<8x64xf32> to vector<8x64xbf16>
    %cst_313 = arith.constant dense<0.000000e+00> : vector<8x256xf32>
    %901 = tpu.matmul %900, %894, %cst_313 {dimension_numbers = #tpu.dot_dimension_numbers<[1], [0], [0], [1], [0, 0, 1, 1], [], []>} : vector<8x64xbf16>, vector<64x256xbf16>, vector<8x256xf32> -> vector<8x256xf32>
    %902 = arith.addf %899, %901 : vector<8x256xf32>
    %903 = arith.negf %902 : vector<8x256xf32>
    %904 = math.exp %903 : vector<8x256xf32>
    %cst_314 = arith.constant 1.000000e+00 : f32
    %905 = vector.broadcast %cst_314 : f32 to vector<8x256xf32>
    %906 = arith.addf %905, %904 : vector<8x256xf32>
    %907 = arith.divf %905, %906 : vector<8x256xf32>
    %908 = math.tanh %902 : vector<8x256xf32>
    %909 = vector.extract_strided_slice %907 {offsets = [0, 0], sizes = [8, 32], strides = [1, 1]} : vector<8x256xf32> to vector<8x32xf32>
    %910 = vector.extract_strided_slice %907 {offsets = [0, 128], sizes = [8, 32], strides = [1, 1]} : vector<8x256xf32> to vector<8x32xf32>
    %911 = tpu.concatenate %909, %910 in 1 : vector<8x32xf32>, vector<8x32xf32> -> vector<8x64xf32>
    %912 = vector.extract_strided_slice %907 {offsets = [0, 32], sizes = [8, 32], strides = [1, 1]} : vector<8x256xf32> to vector<8x32xf32>
    %913 = vector.extract_strided_slice %907 {offsets = [0, 160], sizes = [8, 32], strides = [1, 1]} : vector<8x256xf32> to vector<8x32xf32>
    %914 = tpu.concatenate %912, %913 in 1 : vector<8x32xf32>, vector<8x32xf32> -> vector<8x64xf32>
    %915 = vector.extract_strided_slice %908 {offsets = [0, 64], sizes = [8, 32], strides = [1, 1]} : vector<8x256xf32> to vector<8x32xf32>
    %916 = vector.extract_strided_slice %908 {offsets = [0, 192], sizes = [8, 32], strides = [1, 1]} : vector<8x256xf32> to vector<8x32xf32>
    %917 = tpu.concatenate %915, %916 in 1 : vector<8x32xf32>, vector<8x32xf32> -> vector<8x64xf32>
    %918 = vector.extract_strided_slice %907 {offsets = [0, 96], sizes = [8, 32], strides = [1, 1]} : vector<8x256xf32> to vector<8x32xf32>
    %919 = vector.extract_strided_slice %907 {offsets = [0, 224], sizes = [8, 32], strides = [1, 1]} : vector<8x256xf32> to vector<8x32xf32>
    %920 = tpu.concatenate %918, %919 in 1 : vector<8x32xf32>, vector<8x32xf32> -> vector<8x64xf32>
    %c0_315 = arith.constant 0 : index
    %c0_316 = arith.constant 0 : index
    %921 = vector.load %arg3[%c0_315, %c0_316] : memref<32x64xf32, #tpu.memory_space<vmem>>, vector<8x64xf32>
    %922 = arith.mulf %914, %896 : vector<8x64xf32>
    %923 = arith.mulf %911, %917 : vector<8x64xf32>
    %924 = arith.addf %922, %923 : vector<8x64xf32>
    %925 = arith.mulf %921, %924 : vector<8x64xf32>
    %926 = math.tanh %925 : vector<8x64xf32>
    %927 = arith.mulf %920, %926 : vector<8x64xf32>
    %928 = arith.mulf %921, %927 : vector<8x64xf32>
    %929 = vector.extract_strided_slice %928 {offsets = [0, 0], sizes = [8, 32], strides = [1, 1]} : vector<8x64xf32> to vector<8x32xf32>
    %c0_317 = arith.constant 0 : index
    %c0_318 = arith.constant 0 : index
    %930 = vector.load %arg23[%c0_317, %c0_318] : memref<16x128xf32, #tpu.memory_space<vmem>>, vector<8x32xf32>
    tpu.vector_store %arg23[%c0_317, %c0_318], %929 {strides = array<i32>} : memref<16x128xf32, #tpu.memory_space<vmem>>, vector<8x32xf32>,
    %931 = vector.extract_strided_slice %928 {offsets = [0, 32], sizes = [8, 32], strides = [1, 1]} : vector<8x64xf32> to vector<8x32xf32>
    %c8_319 = arith.constant 8 : index
    %c96_320 = arith.constant 96 : index
    %932 = vector.load %arg23[%c8_319, %c96_320] : memref<16x128xf32, #tpu.memory_space<vmem>>, vector<8x32xf32>
    tpu.vector_store %arg23[%c8_319, %c96_320], %931 {strides = array<i32>} : memref<16x128xf32, #tpu.memory_space<vmem>>, vector<8x32xf32>,
    %c8_321 = arith.constant 8 : index
    %c0_322 = arith.constant 0 : index
    %933 = vector.load %arg20[%c8_321, %c0_322] : memref<128x256xf32, #tpu.memory_space<vmem>>, vector<8x128xf32>
    %c16_323 = arith.constant 16 : index
    %c128_324 = arith.constant 128 : index
    %934 = vector.load %arg20[%c16_323, %c128_324] : memref<128x256xf32, #tpu.memory_space<vmem>>, vector<8x128xf32>
    %935 = tpu.concatenate %933, %934 in 1 : vector<8x128xf32>, vector<8x128xf32> -> vector<8x256xf32>
    %936 = arith.truncf %928 : vector<8x64xf32> to vector<8x64xbf16>
    %cst_325 = arith.constant dense<0.000000e+00> : vector<8x256xf32>
    %937 = tpu.matmul %936, %894, %cst_325 {dimension_numbers = #tpu.dot_dimension_numbers<[1], [0], [0], [1], [0, 0, 1, 1], [], []>} : vector<8x64xbf16>, vector<64x256xbf16>, vector<8x256xf32> -> vector<8x256xf32>
    %938 = arith.addf %935, %937 : vector<8x256xf32>
    %939 = arith.negf %938 : vector<8x256xf32>
    %940 = math.exp %939 : vector<8x256xf32>
    %cst_326 = arith.constant 1.000000e+00 : f32
    %941 = vector.broadcast %cst_326 : f32 to vector<8x256xf32>
    %942 = arith.addf %941, %940 : vector<8x256xf32>
    %943 = arith.divf %941, %942 : vector<8x256xf32>
    %944 = math.tanh %938 : vector<8x256xf32>
    %945 = vector.extract_strided_slice %943 {offsets = [0, 0], sizes = [8, 32], strides = [1, 1]} : vector<8x256xf32> to vector<8x32xf32>
    %946 = vector.extract_strided_slice %943 {offsets = [0, 128], sizes = [8, 32], strides = [1, 1]} : vector<8x256xf32> to vector<8x32xf32>
    %947 = tpu.concatenate %945, %946 in 1 : vector<8x32xf32>, vector<8x32xf32> -> vector<8x64xf32>
    %948 = vector.extract_strided_slice %943 {offsets = [0, 32], sizes = [8, 32], strides = [1, 1]} : vector<8x256xf32> to vector<8x32xf32>
    %949 = vector.extract_strided_slice %943 {offsets = [0, 160], sizes = [8, 32], strides = [1, 1]} : vector<8x256xf32> to vector<8x32xf32>
    %950 = tpu.concatenate %948, %949 in 1 : vector<8x32xf32>, vector<8x32xf32> -> vector<8x64xf32>
    %951 = vector.extract_strided_slice %944 {offsets = [0, 64], sizes = [8, 32], strides = [1, 1]} : vector<8x256xf32> to vector<8x32xf32>
    %952 = vector.extract_strided_slice %944 {offsets = [0, 192], sizes = [8, 32], strides = [1, 1]} : vector<8x256xf32> to vector<8x32xf32>
    %953 = tpu.concatenate %951, %952 in 1 : vector<8x32xf32>, vector<8x32xf32> -> vector<8x64xf32>
    %954 = vector.extract_strided_slice %943 {offsets = [0, 96], sizes = [8, 32], strides = [1, 1]} : vector<8x256xf32> to vector<8x32xf32>
    %955 = vector.extract_strided_slice %943 {offsets = [0, 224], sizes = [8, 32], strides = [1, 1]} : vector<8x256xf32> to vector<8x32xf32>
    %956 = tpu.concatenate %954, %955 in 1 : vector<8x32xf32>, vector<8x32xf32> -> vector<8x64xf32>
    %c8_327 = arith.constant 8 : index
    %c0_328 = arith.constant 0 : index
    %957 = vector.load %arg3[%c8_327, %c0_328] : memref<32x64xf32, #tpu.memory_space<vmem>>, vector<8x64xf32>
    %958 = arith.mulf %950, %925 : vector<8x64xf32>
    %959 = arith.mulf %947, %953 : vector<8x64xf32>
    %960 = arith.addf %958, %959 : vector<8x64xf32>
    %961 = arith.mulf %957, %960 : vector<8x64xf32>
    %962 = math.tanh %961 : vector<8x64xf32>
    %963 = arith.mulf %956, %962 : vector<8x64xf32>
    %964 = arith.mulf %957, %963 : vector<8x64xf32>
    %965 = vector.extract_strided_slice %964 {offsets = [0, 0], sizes = [8, 32], strides = [1, 1]} : vector<8x64xf32> to vector<8x32xf32>
    %c0_329 = arith.constant 0 : index
    %c64_330 = arith.constant 64 : index
    %966 = vector.load %arg23[%c0_329, %c64_330] : memref<16x128xf32, #tpu.memory_space<vmem>>, vector<8x32xf32>
    tpu.vector_store %arg23[%c0_329, %c64_330], %965 {strides = array<i32>} : memref<16x128xf32, #tpu.memory_space<vmem>>, vector<8x32xf32>,
    %967 = vector.extract_strided_slice %964 {offsets = [0, 32], sizes = [8, 32], strides = [1, 1]} : vector<8x64xf32> to vector<8x32xf32>
    %c8_331 = arith.constant 8 : index
    %c32_332 = arith.constant 32 : index
    %968 = vector.load %arg23[%c8_331, %c32_332] : memref<16x128xf32, #tpu.memory_space<vmem>>, vector<8x32xf32>
    tpu.vector_store %arg23[%c8_331, %c32_332], %967 {strides = array<i32>} : memref<16x128xf32, #tpu.memory_space<vmem>>, vector<8x32xf32>,
    %c16_333 = arith.constant 16 : index
    %c0_334 = arith.constant 0 : index
    %969 = vector.load %arg20[%c16_333, %c0_334] : memref<128x256xf32, #tpu.memory_space<vmem>>, vector<8x128xf32>
    %c8_335 = arith.constant 8 : index
    %c128_336 = arith.constant 128 : index
    %970 = vector.load %arg20[%c8_335, %c128_336] : memref<128x256xf32, #tpu.memory_space<vmem>>, vector<8x128xf32>
    %971 = tpu.concatenate %969, %970 in 1 : vector<8x128xf32>, vector<8x128xf32> -> vector<8x256xf32>
    %972 = arith.truncf %964 : vector<8x64xf32> to vector<8x64xbf16>
    %cst_337 = arith.constant dense<0.000000e+00> : vector<8x256xf32>
    %973 = tpu.matmul %972, %894, %cst_337 {dimension_numbers = #tpu.dot_dimension_numbers<[1], [0], [0], [1], [0, 0, 1, 1], [], []>} : vector<8x64xbf16>, vector<64x256xbf16>, vector<8x256xf32> -> vector<8x256xf32>
    %974 = arith.addf %971, %973 : vector<8x256xf32>
    %975 = arith.negf %974 : vector<8x256xf32>
    %976 = math.exp %975 : vector<8x256xf32>
    %cst_338 = arith.constant 1.000000e+00 : f32
    %977 = vector.broadcast %cst_338 : f32 to vector<8x256xf32>
    %978 = arith.addf %977, %976 : vector<8x256xf32>
    %979 = arith.divf %977, %978 : vector<8x256xf32>
    %980 = math.tanh %974 : vector<8x256xf32>
    %981 = vector.extract_strided_slice %979 {offsets = [0, 0], sizes = [8, 32], strides = [1, 1]} : vector<8x256xf32> to vector<8x32xf32>
    %982 = vector.extract_strided_slice %979 {offsets = [0, 128], sizes = [8, 32], strides = [1, 1]} : vector<8x256xf32> to vector<8x32xf32>
    %983 = tpu.concatenate %981, %982 in 1 : vector<8x32xf32>, vector<8x32xf32> -> vector<8x64xf32>
    %984 = vector.extract_strided_slice %979 {offsets = [0, 32], sizes = [8, 32], strides = [1, 1]} : vector<8x256xf32> to vector<8x32xf32>
    %985 = vector.extract_strided_slice %979 {offsets = [0, 160], sizes = [8, 32], strides = [1, 1]} : vector<8x256xf32> to vector<8x32xf32>
    %986 = tpu.concatenate %984, %985 in 1 : vector<8x32xf32>, vector<8x32xf32> -> vector<8x64xf32>
    %987 = vector.extract_strided_slice %980 {offsets = [0, 64], sizes = [8, 32], strides = [1, 1]} : vector<8x256xf32> to vector<8x32xf32>
    %988 = vector.extract_strided_slice %980 {offsets = [0, 192], sizes = [8, 32], strides = [1, 1]} : vector<8x256xf32> to vector<8x32xf32>
    %989 = tpu.concatenate %987, %988 in 1 : vector<8x32xf32>, vector<8x32xf32> -> vector<8x64xf32>
    %990 = vector.extract_strided_slice %979 {offsets = [0, 96], sizes = [8, 32], strides = [1, 1]} : vector<8x256xf32> to vector<8x32xf32>
    %991 = vector.extract_strided_slice %979 {offsets = [0, 224], sizes = [8, 32], strides = [1, 1]} : vector<8x256xf32> to vector<8x32xf32>
    %992 = tpu.concatenate %990, %991 in 1 : vector<8x32xf32>, vector<8x32xf32> -> vector<8x64xf32>
    %c16_339 = arith.constant 16 : index
    %c0_340 = arith.constant 0 : index
    %993 = vector.load %arg3[%c16_339, %c0_340] : memref<32x64xf32, #tpu.memory_space<vmem>>, vector<8x64xf32>
    %994 = arith.mulf %986, %961 : vector<8x64xf32>
    %995 = arith.mulf %983, %989 : vector<8x64xf32>
    %996 = arith.addf %994, %995 : vector<8x64xf32>
    %997 = arith.mulf %993, %996 : vector<8x64xf32>
    %998 = math.tanh %997 : vector<8x64xf32>
    %999 = arith.mulf %992, %998 : vector<8x64xf32>
    %1000 = arith.mulf %993, %999 : vector<8x64xf32>
    %1001 = vector.extract_strided_slice %1000 {offsets = [0, 0], sizes = [8, 32], strides = [1, 1]} : vector<8x64xf32> to vector<8x32xf32>
    %c8_341 = arith.constant 8 : index
    %c0_342 = arith.constant 0 : index
    %1002 = vector.load %arg23[%c8_341, %c0_342] : memref<16x128xf32, #tpu.memory_space<vmem>>, vector<8x32xf32>
    tpu.vector_store %arg23[%c8_341, %c0_342], %1001 {strides = array<i32>} : memref<16x128xf32, #tpu.memory_space<vmem>>, vector<8x32xf32>,
    %1003 = vector.extract_strided_slice %1000 {offsets = [0, 32], sizes = [8, 32], strides = [1, 1]} : vector<8x64xf32> to vector<8x32xf32>
    %c0_343 = arith.constant 0 : index
    %c96_344 = arith.constant 96 : index
    %1004 = vector.load %arg23[%c0_343, %c96_344] : memref<16x128xf32, #tpu.memory_space<vmem>>, vector<8x32xf32>
    tpu.vector_store %arg23[%c0_343, %c96_344], %1003 {strides = array<i32>} : memref<16x128xf32, #tpu.memory_space<vmem>>, vector<8x32xf32>,
    %c24_345 = arith.constant 24 : index
    %c0_346 = arith.constant 0 : index
    %1005 = vector.load %arg20[%c24_345, %c0_346] : memref<128x256xf32, #tpu.memory_space<vmem>>, vector<8x128xf32>
    %c0_347 = arith.constant 0 : index
    %c128_348 = arith.constant 128 : index
    %1006 = vector.load %arg20[%c0_347, %c128_348] : memref<128x256xf32, #tpu.memory_space<vmem>>, vector<8x128xf32>
    %1007 = tpu.concatenate %1005, %1006 in 1 : vector<8x128xf32>, vector<8x128xf32> -> vector<8x256xf32>
    %1008 = arith.truncf %1000 : vector<8x64xf32> to vector<8x64xbf16>
    %cst_349 = arith.constant dense<0.000000e+00> : vector<8x256xf32>
    %1009 = tpu.matmul %1008, %894, %cst_349 {dimension_numbers = #tpu.dot_dimension_numbers<[1], [0], [0], [1], [0, 0, 1, 1], [], []>} : vector<8x64xbf16>, vector<64x256xbf16>, vector<8x256xf32> -> vector<8x256xf32>
    %1010 = arith.addf %1007, %1009 : vector<8x256xf32>
    %1011 = arith.negf %1010 : vector<8x256xf32>
    %1012 = math.exp %1011 : vector<8x256xf32>
    %cst_350 = arith.constant 1.000000e+00 : f32
    %1013 = vector.broadcast %cst_350 : f32 to vector<8x256xf32>
    %1014 = arith.addf %1013, %1012 : vector<8x256xf32>
    %1015 = arith.divf %1013, %1014 : vector<8x256xf32>
    %1016 = math.tanh %1010 : vector<8x256xf32>
    %1017 = vector.extract_strided_slice %1015 {offsets = [0, 0], sizes = [8, 32], strides = [1, 1]} : vector<8x256xf32> to vector<8x32xf32>
    %1018 = vector.extract_strided_slice %1015 {offsets = [0, 128], sizes = [8, 32], strides = [1, 1]} : vector<8x256xf32> to vector<8x32xf32>
    %1019 = tpu.concatenate %1017, %1018 in 1 : vector<8x32xf32>, vector<8x32xf32> -> vector<8x64xf32>
    %1020 = vector.extract_strided_slice %1015 {offsets = [0, 32], sizes = [8, 32], strides = [1, 1]} : vector<8x256xf32> to vector<8x32xf32>
    %1021 = vector.extract_strided_slice %1015 {offsets = [0, 160], sizes = [8, 32], strides = [1, 1]} : vector<8x256xf32> to vector<8x32xf32>
    %1022 = tpu.concatenate %1020, %1021 in 1 : vector<8x32xf32>, vector<8x32xf32> -> vector<8x64xf32>
    %1023 = vector.extract_strided_slice %1016 {offsets = [0, 64], sizes = [8, 32], strides = [1, 1]} : vector<8x256xf32> to vector<8x32xf32>
    %1024 = vector.extract_strided_slice %1016 {offsets = [0, 192], sizes = [8, 32], strides = [1, 1]} : vector<8x256xf32> to vector<8x32xf32>
    %1025 = tpu.concatenate %1023, %1024 in 1 : vector<8x32xf32>, vector<8x32xf32> -> vector<8x64xf32>
    %1026 = vector.extract_strided_slice %1015 {offsets = [0, 96], sizes = [8, 32], strides = [1, 1]} : vector<8x256xf32> to vector<8x32xf32>
    %1027 = vector.extract_strided_slice %1015 {offsets = [0, 224], sizes = [8, 32], strides = [1, 1]} : vector<8x256xf32> to vector<8x32xf32>
    %1028 = tpu.concatenate %1026, %1027 in 1 : vector<8x32xf32>, vector<8x32xf32> -> vector<8x64xf32>
    %c24_351 = arith.constant 24 : index
    %c0_352 = arith.constant 0 : index
    %1029 = vector.load %arg3[%c24_351, %c0_352] : memref<32x64xf32, #tpu.memory_space<vmem>>, vector<8x64xf32>
    %1030 = arith.mulf %1022, %997 : vector<8x64xf32>
    %1031 = arith.mulf %1019, %1025 : vector<8x64xf32>
    %1032 = arith.addf %1030, %1031 : vector<8x64xf32>
    %1033 = arith.mulf %1029, %1032 : vector<8x64xf32>
    %1034 = math.tanh %1033 : vector<8x64xf32>
    %1035 = arith.mulf %1028, %1034 : vector<8x64xf32>
    %1036 = arith.mulf %1029, %1035 : vector<8x64xf32>
    %1037 = vector.extract_strided_slice %1036 {offsets = [0, 0], sizes = [8, 32], strides = [1, 1]} : vector<8x64xf32> to vector<8x32xf32>
    %c8_353 = arith.constant 8 : index
    %c64_354 = arith.constant 64 : index
    %1038 = vector.load %arg23[%c8_353, %c64_354] : memref<16x128xf32, #tpu.memory_space<vmem>>, vector<8x32xf32>
    tpu.vector_store %arg23[%c8_353, %c64_354], %1037 {strides = array<i32>} : memref<16x128xf32, #tpu.memory_space<vmem>>, vector<8x32xf32>,
    %1039 = vector.extract_strided_slice %1036 {offsets = [0, 32], sizes = [8, 32], strides = [1, 1]} : vector<8x64xf32> to vector<8x32xf32>
    %c0_355 = arith.constant 0 : index
    %c32_356 = arith.constant 32 : index
    %1040 = vector.load %arg23[%c0_355, %c32_356] : memref<16x128xf32, #tpu.memory_space<vmem>>, vector<8x32xf32>
    tpu.vector_store %arg23[%c0_355, %c32_356], %1039 {strides = array<i32>} : memref<16x128xf32, #tpu.memory_space<vmem>>, vector<8x32xf32>,
    %c0_357 = arith.constant 0 : index
    %c0_358 = arith.constant 0 : index
    %1041 = vector.load %arg23[%c0_357, %c0_358] : memref<16x128xf32, #tpu.memory_space<vmem>>, vector<16x128xf32>
    %1042 = arith.truncf %1041 : vector<16x128xf32> to vector<16x128xbf16>
    %c0_359 = arith.constant 0 : index
    %c0_360 = arith.constant 0 : index
    %1043 = vector.load %arg14[%c0_359, %c0_360] : memref<128x256xbf16, #tpu.memory_space<vmem>>, vector<128x256xbf16>
    %cst_361 = arith.constant dense<0.000000e+00> : vector<16x256xf32>
    %1044 = tpu.matmul %1042, %1043, %cst_361 {dimension_numbers = #tpu.dot_dimension_numbers<[1], [0], [0], [1], [0, 0, 1, 1], [], []>} : vector<16x128xbf16>, vector<128x256xbf16>, vector<16x256xf32> -> vector<16x256xf32>
    %c0_362 = arith.constant 0 : index
    %c0_363 = arith.constant 0 : index
    %1045 = vector.load %arg15[%c0_362, %c0_363] : memref<1x256xf32, #tpu.memory_space<vmem>>, vector<1x256xf32>
    %1046 = vector.broadcast %1045 : vector<1x256xf32> to vector<16x256xf32>
    %1047 = arith.addf %1044, %1046 : vector<16x256xf32>
    %c0_364 = arith.constant 0 : index
    %c0_365 = arith.constant 0 : index
    %1048 = vector.load %arg20[%c0_364, %c0_365] : memref<128x256xf32, #tpu.memory_space<vmem>>, vector<16x256xf32>
    tpu.vector_store %arg20[%c0_364, %c0_365], %1047 {strides = array<i32>} : memref<128x256xf32, #tpu.memory_space<vmem>>, vector<16x256xf32>,
    %c0_366 = arith.constant 0 : index
    %c0_367 = arith.constant 0 : index
    %1049 = vector.load %arg16[%c0_366, %c0_367] : memref<64x256xbf16, #tpu.memory_space<vmem>>, vector<64x256xbf16>
    %cst_368 = arith.constant 0.000000e+00 : f32
    %1050 = vector.broadcast %cst_368 : f32 to vector<8x64xf32>
    %cst_369 = arith.constant 0.000000e+00 : f32
    %1051 = vector.broadcast %cst_369 : f32 to vector<8x64xf32>
    %c0_370 = arith.constant 0 : index
    %c0_371 = arith.constant 0 : index
    %1052 = vector.load %arg20[%c0_370, %c0_371] : memref<128x256xf32, #tpu.memory_space<vmem>>, vector<8x128xf32>
    %c8_372 = arith.constant 8 : index
    %c128_373 = arith.constant 128 : index
    %1053 = vector.load %arg20[%c8_372, %c128_373] : memref<128x256xf32, #tpu.memory_space<vmem>>, vector<8x128xf32>
    %1054 = tpu.concatenate %1052, %1053 in 1 : vector<8x128xf32>, vector<8x128xf32> -> vector<8x256xf32>
    %1055 = arith.truncf %1050 : vector<8x64xf32> to vector<8x64xbf16>
    %cst_374 = arith.constant dense<0.000000e+00> : vector<8x256xf32>
    %1056 = tpu.matmul %1055, %1049, %cst_374 {dimension_numbers = #tpu.dot_dimension_numbers<[1], [0], [0], [1], [0, 0, 1, 1], [], []>} : vector<8x64xbf16>, vector<64x256xbf16>, vector<8x256xf32> -> vector<8x256xf32>
    %1057 = arith.addf %1054, %1056 : vector<8x256xf32>
    %1058 = arith.negf %1057 : vector<8x256xf32>
    %1059 = math.exp %1058 : vector<8x256xf32>
    %cst_375 = arith.constant 1.000000e+00 : f32
    %1060 = vector.broadcast %cst_375 : f32 to vector<8x256xf32>
    %1061 = arith.addf %1060, %1059 : vector<8x256xf32>
    %1062 = arith.divf %1060, %1061 : vector<8x256xf32>
    %1063 = math.tanh %1057 : vector<8x256xf32>
    %1064 = vector.extract_strided_slice %1062 {offsets = [0, 0], sizes = [8, 32], strides = [1, 1]} : vector<8x256xf32> to vector<8x32xf32>
    %1065 = vector.extract_strided_slice %1062 {offsets = [0, 128], sizes = [8, 32], strides = [1, 1]} : vector<8x256xf32> to vector<8x32xf32>
    %1066 = tpu.concatenate %1064, %1065 in 1 : vector<8x32xf32>, vector<8x32xf32> -> vector<8x64xf32>
    %1067 = vector.extract_strided_slice %1062 {offsets = [0, 32], sizes = [8, 32], strides = [1, 1]} : vector<8x256xf32> to vector<8x32xf32>
    %1068 = vector.extract_strided_slice %1062 {offsets = [0, 160], sizes = [8, 32], strides = [1, 1]} : vector<8x256xf32> to vector<8x32xf32>
    %1069 = tpu.concatenate %1067, %1068 in 1 : vector<8x32xf32>, vector<8x32xf32> -> vector<8x64xf32>
    %1070 = vector.extract_strided_slice %1063 {offsets = [0, 64], sizes = [8, 32], strides = [1, 1]} : vector<8x256xf32> to vector<8x32xf32>
    %1071 = vector.extract_strided_slice %1063 {offsets = [0, 192], sizes = [8, 32], strides = [1, 1]} : vector<8x256xf32> to vector<8x32xf32>
    %1072 = tpu.concatenate %1070, %1071 in 1 : vector<8x32xf32>, vector<8x32xf32> -> vector<8x64xf32>
    %1073 = vector.extract_strided_slice %1062 {offsets = [0, 96], sizes = [8, 32], strides = [1, 1]} : vector<8x256xf32> to vector<8x32xf32>
    %1074 = vector.extract_strided_slice %1062 {offsets = [0, 224], sizes = [8, 32], strides = [1, 1]} : vector<8x256xf32> to vector<8x32xf32>
    %1075 = tpu.concatenate %1073, %1074 in 1 : vector<8x32xf32>, vector<8x32xf32> -> vector<8x64xf32>
    %c0_376 = arith.constant 0 : index
    %c0_377 = arith.constant 0 : index
    %1076 = vector.load %arg4[%c0_376, %c0_377] : memref<16x64xf32, #tpu.memory_space<vmem>>, vector<8x64xf32>
    %1077 = arith.mulf %1069, %1051 : vector<8x64xf32>
    %1078 = arith.mulf %1066, %1072 : vector<8x64xf32>
    %1079 = arith.addf %1077, %1078 : vector<8x64xf32>
    %1080 = arith.mulf %1076, %1079 : vector<8x64xf32>
    %1081 = math.tanh %1080 : vector<8x64xf32>
    %1082 = arith.mulf %1075, %1081 : vector<8x64xf32>
    %1083 = arith.mulf %1076, %1082 : vector<8x64xf32>
    %1084 = vector.extract_strided_slice %1083 {offsets = [0, 0], sizes = [8, 32], strides = [1, 1]} : vector<8x64xf32> to vector<8x32xf32>
    %c0_378 = arith.constant 0 : index
    %c0_379 = arith.constant 0 : index
    %1085 = vector.load %arg24[%c0_378, %c0_379] : memref<16x64xf32, #tpu.memory_space<vmem>>, vector<8x32xf32>
    tpu.vector_store %arg24[%c0_378, %c0_379], %1084 {strides = array<i32>} : memref<16x64xf32, #tpu.memory_space<vmem>>, vector<8x32xf32>,
    %1086 = vector.extract_strided_slice %1083 {offsets = [0, 32], sizes = [8, 32], strides = [1, 1]} : vector<8x64xf32> to vector<8x32xf32>
    %c8_380 = arith.constant 8 : index
    %c32_381 = arith.constant 32 : index
    %1087 = vector.load %arg24[%c8_380, %c32_381] : memref<16x64xf32, #tpu.memory_space<vmem>>, vector<8x32xf32>
    tpu.vector_store %arg24[%c8_380, %c32_381], %1086 {strides = array<i32>} : memref<16x64xf32, #tpu.memory_space<vmem>>, vector<8x32xf32>,
    %c8_382 = arith.constant 8 : index
    %c0_383 = arith.constant 0 : index
    %1088 = vector.load %arg20[%c8_382, %c0_383] : memref<128x256xf32, #tpu.memory_space<vmem>>, vector<8x128xf32>
    %c0_384 = arith.constant 0 : index
    %c128_385 = arith.constant 128 : index
    %1089 = vector.load %arg20[%c0_384, %c128_385] : memref<128x256xf32, #tpu.memory_space<vmem>>, vector<8x128xf32>
    %1090 = tpu.concatenate %1088, %1089 in 1 : vector<8x128xf32>, vector<8x128xf32> -> vector<8x256xf32>
    %1091 = arith.truncf %1083 : vector<8x64xf32> to vector<8x64xbf16>
    %cst_386 = arith.constant dense<0.000000e+00> : vector<8x256xf32>
    %1092 = tpu.matmul %1091, %1049, %cst_386 {dimension_numbers = #tpu.dot_dimension_numbers<[1], [0], [0], [1], [0, 0, 1, 1], [], []>} : vector<8x64xbf16>, vector<64x256xbf16>, vector<8x256xf32> -> vector<8x256xf32>
    %1093 = arith.addf %1090, %1092 : vector<8x256xf32>
    %1094 = arith.negf %1093 : vector<8x256xf32>
    %1095 = math.exp %1094 : vector<8x256xf32>
    %cst_387 = arith.constant 1.000000e+00 : f32
    %1096 = vector.broadcast %cst_387 : f32 to vector<8x256xf32>
    %1097 = arith.addf %1096, %1095 : vector<8x256xf32>
    %1098 = arith.divf %1096, %1097 : vector<8x256xf32>
    %1099 = math.tanh %1093 : vector<8x256xf32>
    %1100 = vector.extract_strided_slice %1098 {offsets = [0, 0], sizes = [8, 32], strides = [1, 1]} : vector<8x256xf32> to vector<8x32xf32>
    %1101 = vector.extract_strided_slice %1098 {offsets = [0, 128], sizes = [8, 32], strides = [1, 1]} : vector<8x256xf32> to vector<8x32xf32>
    %1102 = tpu.concatenate %1100, %1101 in 1 : vector<8x32xf32>, vector<8x32xf32> -> vector<8x64xf32>
    %1103 = vector.extract_strided_slice %1098 {offsets = [0, 32], sizes = [8, 32], strides = [1, 1]} : vector<8x256xf32> to vector<8x32xf32>
    %1104 = vector.extract_strided_slice %1098 {offsets = [0, 160], sizes = [8, 32], strides = [1, 1]} : vector<8x256xf32> to vector<8x32xf32>
    %1105 = tpu.concatenate %1103, %1104 in 1 : vector<8x32xf32>, vector<8x32xf32> -> vector<8x64xf32>
    %1106 = vector.extract_strided_slice %1099 {offsets = [0, 64], sizes = [8, 32], strides = [1, 1]} : vector<8x256xf32> to vector<8x32xf32>
    %1107 = vector.extract_strided_slice %1099 {offsets = [0, 192], sizes = [8, 32], strides = [1, 1]} : vector<8x256xf32> to vector<8x32xf32>
    %1108 = tpu.concatenate %1106, %1107 in 1 : vector<8x32xf32>, vector<8x32xf32> -> vector<8x64xf32>
    %1109 = vector.extract_strided_slice %1098 {offsets = [0, 96], sizes = [8, 32], strides = [1, 1]} : vector<8x256xf32> to vector<8x32xf32>
    %1110 = vector.extract_strided_slice %1098 {offsets = [0, 224], sizes = [8, 32], strides = [1, 1]} : vector<8x256xf32> to vector<8x32xf32>
    %1111 = tpu.concatenate %1109, %1110 in 1 : vector<8x32xf32>, vector<8x32xf32> -> vector<8x64xf32>
    %c8_388 = arith.constant 8 : index
    %c0_389 = arith.constant 0 : index
    %1112 = vector.load %arg4[%c8_388, %c0_389] : memref<16x64xf32, #tpu.memory_space<vmem>>, vector<8x64xf32>
    %1113 = arith.mulf %1105, %1080 : vector<8x64xf32>
    %1114 = arith.mulf %1102, %1108 : vector<8x64xf32>
    %1115 = arith.addf %1113, %1114 : vector<8x64xf32>
    %1116 = arith.mulf %1112, %1115 : vector<8x64xf32>
    %1117 = math.tanh %1116 : vector<8x64xf32>
    %1118 = arith.mulf %1111, %1117 : vector<8x64xf32>
    %1119 = arith.mulf %1112, %1118 : vector<8x64xf32>
    %1120 = vector.extract_strided_slice %1119 {offsets = [0, 0], sizes = [8, 32], strides = [1, 1]} : vector<8x64xf32> to vector<8x32xf32>
    %c8_390 = arith.constant 8 : index
    %c0_391 = arith.constant 0 : index
    %1121 = vector.load %arg24[%c8_390, %c0_391] : memref<16x64xf32, #tpu.memory_space<vmem>>, vector<8x32xf32>
    tpu.vector_store %arg24[%c8_390, %c0_391], %1120 {strides = array<i32>} : memref<16x64xf32, #tpu.memory_space<vmem>>, vector<8x32xf32>,
    %1122 = vector.extract_strided_slice %1119 {offsets = [0, 32], sizes = [8, 32], strides = [1, 1]} : vector<8x64xf32> to vector<8x32xf32>
    %c0_392 = arith.constant 0 : index
    %c32_393 = arith.constant 32 : index
    %1123 = vector.load %arg24[%c0_392, %c32_393] : memref<16x64xf32, #tpu.memory_space<vmem>>, vector<8x32xf32>
    tpu.vector_store %arg24[%c0_392, %c32_393], %1122 {strides = array<i32>} : memref<16x64xf32, #tpu.memory_space<vmem>>, vector<8x32xf32>,
    %c0_394 = arith.constant 0 : index
    %c0_395 = arith.constant 0 : index
    %1124 = vector.load %arg24[%c0_394, %c0_395] : memref<16x64xf32, #tpu.memory_space<vmem>>, vector<16x64xf32>
    %1125 = arith.truncf %1124 : vector<16x64xf32> to vector<16x64xbf16>
    %c0_396 = arith.constant 0 : index
    %c0_397 = arith.constant 0 : index
    %1126 = vector.load %arg17[%c0_396, %c0_397] : memref<64x256xbf16, #tpu.memory_space<vmem>>, vector<64x256xbf16>
    %cst_398 = arith.constant dense<0.000000e+00> : vector<16x256xf32>
    %1127 = tpu.matmul %1125, %1126, %cst_398 {dimension_numbers = #tpu.dot_dimension_numbers<[1], [0], [0], [1], [0, 0, 1, 1], [], []>} : vector<16x64xbf16>, vector<64x256xbf16>, vector<16x256xf32> -> vector<16x256xf32>
    %c0_399 = arith.constant 0 : index
    %c0_400 = arith.constant 0 : index
    %1128 = vector.load %arg18[%c0_399, %c0_400] : memref<1x256xf32, #tpu.memory_space<vmem>>, vector<1x256xf32>
    %1129 = vector.broadcast %1128 : vector<1x256xf32> to vector<16x256xf32>
    %1130 = arith.addf %1127, %1129 : vector<16x256xf32>
    %c0_401 = arith.constant 0 : index
    %c0_402 = arith.constant 0 : index
    %1131 = vector.load %arg19[%c0_401, %c0_402] : memref<16x256xf32, #tpu.memory_space<vmem>>, vector<16x256xf32>
    tpu.vector_store %arg19[%c0_401, %c0_402], %1130 {strides = array<i32>} : memref<16x256xf32, #tpu.memory_space<vmem>>, vector<16x256xf32>,
    return
  }
}

</mosaic_0001>

<llo_original>
// kernel: encoder_forward.1
$region0: #{encoder_forward.1}
  #allocation0 [shape = 'u32[]', space=smem, size = 0x4, offset = 0x4, fixed_abs, tag = 'smem constant byte address 0x4 - core index']
  #allocation1 [shape = 'u32[144,128]{1,0:T(1,128)}', space=vmem, size = 0x12000, scoped, tag = 'internal scratch']
  #allocation2 [shape = 'f32[128,256]{1,0:T(8,128)}', space=vmem, size = 0x20000, scoped, tag = 'scratch operand']
  #allocation3 [shape = 'f32[64,128]{1,0:T(8,128)}', space=vmem, size = 0x8000, scoped, tag = 'scratch operand']
  #allocation4 [shape = 'f32[32,128]{1,0:T(8,128)}', space=vmem, size = 0x4000, scoped, tag = 'scratch operand']
  #allocation5 [shape = 'f32[16,128]{1,0:T(8,128)}', space=vmem, size = 0x2000, scoped, tag = 'scratch operand']
  #allocation6 [shape = 'f32[16,64]{1,0:T(8,128)}', space=vmem, size = 0x2000, scoped, tag = 'scratch operand']
  %s0 = inlined_call_operand.vmem [shape: f32[128,32], index: 0, kind: input, shape index: {}]
  %s1 = inlined_call_operand.vmem [shape: f32[128,64], index: 1, kind: input, shape index: {}]
  %s2 = inlined_call_operand.hbm [shape: f32[64,64], index: 2, kind: input, shape index: {}]
  %s3 = inlined_call_operand.vmem [shape: f32[32,64], index: 3, kind: input, shape index: {}]
  %s4 = inlined_call_operand.hbm [shape: f32[16,64], index: 4, kind: input, shape index: {}]
  %s5 = inlined_call_operand.hbm [shape: bf16[32,256], index: 5, kind: input, shape index: {}]
  %s6 = inlined_call_operand.hbm [shape: f32[1,256], index: 6, kind: input, shape index: {}]
  %s7 = inlined_call_operand.hbm [shape: bf16[64,256], index: 7, kind: input, shape index: {}]
  %s8 = inlined_call_operand.vmem [shape: bf16[128,256], index: 8, kind: input, shape index: {}]
  %s9 = inlined_call_operand.hbm [shape: f32[1,256], index: 9, kind: input, shape index: {}]
  %s10 = inlined_call_operand.hbm [shape: bf16[64,256], index: 10, kind: input, shape index: {}]
  %s11 = inlined_call_operand.hbm [shape: bf16[128,256], index: 11, kind: input, shape index: {}]
  %s12 = inlined_call_operand.hbm [shape: f32[1,256], index: 12, kind: input, shape index: {}]
  %s13 = inlined_call_operand.hbm [shape: bf16[64,256], index: 13, kind: input, shape index: {}]
  %s14 = inlined_call_operand.hbm [shape: bf16[128,256], index: 14, kind: input, shape index: {}]
  %s15 = inlined_call_operand.hbm [shape: f32[1,256], index: 15, kind: input, shape index: {}]
  %s16 = inlined_call_operand.hbm [shape: bf16[64,256], index: 16, kind: input, shape index: {}]
  %s17 = inlined_call_operand.hbm [shape: bf16[64,256], index: 17, kind: input, shape index: {}]
  %s18 = inlined_call_operand.hbm [shape: f32[1,256], index: 18, kind: input, shape index: {}]
  %s19 = inlined_call_operand.vmem [shape: f32[16,256], index: 19, kind: output, shape index: {}]
  %s20 = sld [smem:[#allocation0]]
  $region146: #{encoder_forward.1} parent=0
    _
  %s22 = ssub.s32 1, %s20
  %s23 = scalar_select 0, %s22, %s20
  $region1: #{encoder_forward.1} parent=0
    #allocation7 [shape = 'u8[32768]{0}', space=vmem, size = 0x8000, scoped, tag = 'input window, operand 2, single buffered']
    #allocation8 [shape = 's32[1]{0}', space=sflag, size = 0x4, scoped, tag = 'scoped memory for encoder_forward.1']
    #allocation9 [shape = 'u8[8192]{0}', space=vmem, size = 0x2000, scoped, tag = 'input window, operand 4, single buffered']
    #allocation10 [shape = 's32[1]{0}', space=sflag, size = 0x4, scoped, tag = 'scoped memory for encoder_forward.1']
    #allocation11 [shape = 'u8[16384]{0}', space=vmem, size = 0x4000, scoped, tag = 'input window, operand 5, single buffered']
    #allocation12 [shape = 'u8[1024]{0}', space=vmem, size = 0x400, scoped, tag = 'input window, operand 6, single buffered']
    #allocation13 [shape = 's32[1]{0}', space=sflag, size = 0x4, scoped, tag = 'scoped memory for encoder_forward.1']
    #allocation14 [shape = 'u8[32768]{0}', space=vmem, size = 0x8000, scoped, tag = 'input window, operand 7, single buffered']
    #allocation15 [shape = 'u8[1024]{0}', space=vmem, size = 0x400, scoped, tag = 'input window, operand 9, single buffered']
    #allocation16 [shape = 's32[1]{0}', space=sflag, size = 0x4, scoped, tag = 'scoped memory for encoder_forward.1']
    #allocation17 [shape = 'u8[32768]{0}', space=vmem, size = 0x8000, scoped, tag = 'input window, operand 10, single buffered']
    #allocation18 [shape = 'u8[65536]{0}', space=vmem, size = 0x10000, scoped, tag = 'input window, operand 11, single buffered']
    #allocation19 [shape = 's32[1]{0}', space=sflag, size = 0x4, scoped, tag = 'scoped memory for encoder_forward.1']
    #allocation20 [shape = 'u8[1024]{0}', space=vmem, size = 0x400, scoped, tag = 'input window, operand 12, single buffered']
    #allocation21 [shape = 'u8[32768]{0}', space=vmem, size = 0x8000, scoped, tag = 'input window, operand 13, single buffered']
    #allocation22 [shape = 's32[1]{0}', space=sflag, size = 0x4, scoped, tag = 'scoped memory for encoder_forward.1']
    #allocation23 [shape = 'u8[65536]{0}', space=vmem, size = 0x10000, scoped, tag = 'input window, operand 14, single buffered']
    #allocation24 [shape = 'u8[1024]{0}', space=vmem, size = 0x400, scoped, tag = 'input window, operand 15, single buffered']
    #allocation25 [shape = 's32[1]{0}', space=sflag, size = 0x4, scoped, tag = 'scoped memory for encoder_forward.1']
    #allocation26 [shape = 'u8[32768]{0}', space=vmem, size = 0x8000, scoped, tag = 'input window, operand 16, single buffered']
    #allocation27 [shape = 'u8[32768]{0}', space=vmem, size = 0x8000, scoped, tag = 'input window, operand 17, single buffered']
    #allocation28 [shape = 's32[1]{0}', space=sflag, size = 0x4, scoped, tag = 'scoped memory for encoder_forward.1']
    #allocation29 [shape = 'u8[1024]{0}', space=vmem, size = 0x400, scoped, tag = 'input window, operand 18, single buffered']
    %24 = vsyncpa [#allocation8], 0
    %25 = vsyncpa [#allocation10], 0
    %26 = vsyncpa [#allocation13], 0
    %27 = vsyncpa [#allocation16], 0
    %28 = vsyncpa [#allocation19], 0
    %29 = vsyncpa [#allocation22], 0
    %30 = vsyncpa [#allocation25], 0
    %31 = vsyncpa [#allocation28], 0
    // Predicated region
    $region2: #{encoder_forward.1} parent=1 // pred_check
      _
    $region3: #{encoder_forward.1} parent=1 // pred_check_branch
      %33 = sbr.rel (0) target = $region5
    $region4: #{encoder_forward.1} parent=1 // pred_region
      _
    $region5: #{encoder_forward.1} parent=1 // pred_fallthru
      _
    // Predicated region
    $region6: #{encoder_forward.1} parent=1 // pred_check
      _
    $region7: #{encoder_forward.1} parent=1 // pred_check_branch
      %35 = sbr.rel (0) target = $region9
    $region8: #{encoder_forward.1} parent=1 // pred_region
      _
    $region9: #{encoder_forward.1} parent=1 // pred_fallthru
      _
    // Predicated region
    $region10: #{encoder_forward.1} parent=1 // pred_check
      _
    $region11: #{encoder_forward.1} parent=1 // pred_check_branch
      %37 = sbr.rel (0) target = $region13
    $region12: #{encoder_forward.1} parent=1 // pred_region
      %s39 = ssub.s32 1024, 1024
      %40 = vsyncadd [#allocation8], %s39
      %s41 = sshll.u32 [#allocation7], 4
      %s42 = int_to_ptr.vmem [resolvable:$true] %s41
      %47 = dma.hbm_to_vmem [thread:$0]  %s2, 1024, %s42, [#allocation8], 128, 128, 8
    $region13: #{encoder_forward.1} parent=1 // pred_fallthru
      _
    // Predicated region
    $region14: #{encoder_forward.1} parent=1 // pred_check
      _
    $region15: #{encoder_forward.1} parent=1 // pred_check_branch
      %49 = sbr.rel (0) target = $region17
    $region16: #{encoder_forward.1} parent=1 // pred_region
      _
    $region17: #{encoder_forward.1} parent=1 // pred_fallthru
      _
    // Predicated region
    $region18: #{encoder_forward.1} parent=1 // pred_check
      _
    $region19: #{encoder_forward.1} parent=1 // pred_check_branch
      %51 = sbr.rel (0) target = $region21
    $region20: #{encoder_forward.1} parent=1 // pred_region
      %s53 = ssub.s32 256, 256
      %54 = vsyncadd [#allocation10], %s53
      %s55 = sshll.u32 [#allocation9], 4
      %s56 = int_to_ptr.vmem [resolvable:$true] %s55
      %61 = dma.hbm_to_vmem [thread:$0]  %s4, 256, %s56, [#allocation10], 128, 128, 8
    $region21: #{encoder_forward.1} parent=1 // pred_fallthru
      _
    // Predicated region
    $region22: #{encoder_forward.1} parent=1 // pred_check
      _
    $region23: #{encoder_forward.1} parent=1 // pred_check_branch
      %63 = sbr.rel (0) target = $region25
    $region24: #{encoder_forward.1} parent=1 // pred_region
      %s65 = ssub.s32 512, 512
      %66 = vsyncadd [#allocation10], %s65
      %s67 = sshll.u32 [#allocation11], 4
      %s68 = int_to_ptr.vmem [resolvable:$true] %s67
      %73 = dma.hbm_to_vmem [thread:$0]  %s5, 512, %s68, [#allocation10], 128, 128, 8
    $region25: #{encoder_forward.1} parent=1 // pred_fallthru
      _
    // Predicated region
    $region26: #{encoder_forward.1} parent=1 // pred_check
      _
    $region27: #{encoder_forward.1} parent=1 // pred_check_branch
      %75 = sbr.rel (0) target = $region29
    $region28: #{encoder_forward.1} parent=1 // pred_region
      %s77 = ssub.s32 32, 32
      %78 = vsyncadd [#allocation13], %s77
      %s80 = sshll.u32 [#allocation12], 4
      %s81 = int_to_ptr.vmem [resolvable:$true] %s80
      %83 = dma.hbm_to_vmem [thread:$0]  %s6, 32, %s81, [#allocation13]
    $region29: #{encoder_forward.1} parent=1 // pred_fallthru
      _
    // Predicated region
    $region30: #{encoder_forward.1} parent=1 // pred_check
      _
    $region31: #{encoder_forward.1} parent=1 // pred_check_branch
      %85 = sbr.rel (0) target = $region33
    $region32: #{encoder_forward.1} parent=1 // pred_region
      %s87 = ssub.s32 1024, 1024
      %88 = vsyncadd [#allocation13], %s87
      %s89 = sshll.u32 [#allocation14], 4
      %s90 = int_to_ptr.vmem [resolvable:$true] %s89
      %95 = dma.hbm_to_vmem [thread:$0]  %s7, 1024, %s90, [#allocation13], 128, 128, 8
    $region33: #{encoder_forward.1} parent=1 // pred_fallthru
      _
    // Predicated region
    $region34: #{encoder_forward.1} parent=1 // pred_check
      _
    $region35: #{encoder_forward.1} parent=1 // pred_check_branch
      %97 = sbr.rel (0) target = $region37
    $region36: #{encoder_forward.1} parent=1 // pred_region
      _
    $region37: #{encoder_forward.1} parent=1 // pred_fallthru
      _
    // Predicated region
    $region38: #{encoder_forward.1} parent=1 // pred_check
      _
    $region39: #{encoder_forward.1} parent=1 // pred_check_branch
      %99 = sbr.rel (0) target = $region41
    $region40: #{encoder_forward.1} parent=1 // pred_region
      %s101 = ssub.s32 32, 32
      %102 = vsyncadd [#allocation16], %s101
      %s104 = sshll.u32 [#allocation15], 4
      %s105 = int_to_ptr.vmem [resolvable:$true] %s104
      %107 = dma.hbm_to_vmem [thread:$0]  %s9, 32, %s105, [#allocation16]
    $region41: #{encoder_forward.1} parent=1 // pred_fallthru
      _
    // Predicated region
    $region42: #{encoder_forward.1} parent=1 // pred_check
      _
    $region43: #{encoder_forward.1} parent=1 // pred_check_branch
      %109 = sbr.rel (0) target = $region45
    $region44: #{encoder_forward.1} parent=1 // pred_region
      %s111 = ssub.s32 1024, 1024
      %112 = vsyncadd [#allocation16], %s111
      %s113 = sshll.u32 [#allocation17], 4
      %s114 = int_to_ptr.vmem [resolvable:$true] %s113
      %119 = dma.hbm_to_vmem [thread:$0]  %s10, 1024, %s114, [#allocation16], 128, 128, 8
    $region45: #{encoder_forward.1} parent=1 // pred_fallthru
      _
    // Predicated region
    $region46: #{encoder_forward.1} parent=1 // pred_check
      _
    $region47: #{encoder_forward.1} parent=1 // pred_check_branch
      %121 = sbr.rel (0) target = $region49
    $region48: #{encoder_forward.1} parent=1 // pred_region
      %s123 = ssub.s32 2048, 2048
      %124 = vsyncadd [#allocation19], %s123
      %s125 = sshll.u32 [#allocation18], 4
      %s126 = int_to_ptr.vmem [resolvable:$true] %s125
      %131 = dma.hbm_to_vmem [thread:$0]  %s11, 2048, %s126, [#allocation19], 128, 128, 8
    $region49: #{encoder_forward.1} parent=1 // pred_fallthru
      _
    // Predicated region
    $region50: #{encoder_forward.1} parent=1 // pred_check
      _
    $region51: #{encoder_forward.1} parent=1 // pred_check_branch
      %133 = sbr.rel (0) target = $region53
    $region52: #{encoder_forward.1} parent=1 // pred_region
      %s135 = ssub.s32 32, 32
      %136 = vsyncadd [#allocation19], %s135
      %s138 = sshll.u32 [#allocation20], 4
      %s139 = int_to_ptr.vmem [resolvable:$true] %s138
      %141 = dma.hbm_to_vmem [thread:$0]  %s12, 32, %s139, [#allocation19]
    $region53: #{encoder_forward.1} parent=1 // pred_fallthru
      _
    // Predicated region
    $region54: #{encoder_forward.1} parent=1 // pred_check
      _
    $region55: #{encoder_forward.1} parent=1 // pred_check_branch
      %143 = sbr.rel (0) target = $region57
    $region56: #{encoder_forward.1} parent=1 // pred_region
      %s145 = ssub.s32 1024, 1024
      %146 = vsyncadd [#allocation22], %s145
      %s147 = sshll.u32 [#allocation21], 4
      %s148 = int_to_ptr.vmem [resolvable:$true] %s147
      %153 = dma.hbm_to_vmem [thread:$0]  %s13, 1024, %s148, [#allocation22], 128, 128, 8
    $region57: #{encoder_forward.1} parent=1 // pred_fallthru
      _
    // Predicated region
    $region58: #{encoder_forward.1} parent=1 // pred_check
      _
    $region59: #{encoder_forward.1} parent=1 // pred_check_branch
      %155 = sbr.rel (0) target = $region61
    $region60: #{encoder_forward.1} parent=1 // pred_region
      %s157 = ssub.s32 2048, 2048
      %158 = vsyncadd [#allocation22], %s157
      %s159 = sshll.u32 [#allocation23], 4
      %s160 = int_to_ptr.vmem [resolvable:$true] %s159
      %165 = dma.hbm_to_vmem [thread:$0]  %s14, 2048, %s160, [#allocation22], 128, 128, 8
    $region61: #{encoder_forward.1} parent=1 // pred_fallthru
      _
    // Predicated region
    $region62: #{encoder_forward.1} parent=1 // pred_check
      _
    $region63: #{encoder_forward.1} parent=1 // pred_check_branch
      %167 = sbr.rel (0) target = $region65
    $region64: #{encoder_forward.1} parent=1 // pred_region
      %s169 = ssub.s32 32, 32
      %170 = vsyncadd [#allocation25], %s169
      %s172 = sshll.u32 [#allocation24], 4
      %s173 = int_to_ptr.vmem [resolvable:$true] %s172
      %175 = dma.hbm_to_vmem [thread:$0]  %s15, 32, %s173, [#allocation25]
    $region65: #{encoder_forward.1} parent=1 // pred_fallthru
      _
    // Predicated region
    $region66: #{encoder_forward.1} parent=1 // pred_check
      _
    $region67: #{encoder_forward.1} parent=1 // pred_check_branch
      %177 = sbr.rel (0) target = $region69
    $region68: #{encoder_forward.1} parent=1 // pred_region
      %s179 = ssub.s32 1024, 1024
      %180 = vsyncadd [#allocation25], %s179
      %s181 = sshll.u32 [#allocation26], 4
      %s182 = int_to_ptr.vmem [resolvable:$true] %s181
      %187 = dma.hbm_to_vmem [thread:$0]  %s16, 1024, %s182, [#allocation25], 128, 128, 8
    $region69: #{encoder_forward.1} parent=1 // pred_fallthru
      _
    // Predicated region
    $region70: #{encoder_forward.1} parent=1 // pred_check
      _
    $region71: #{encoder_forward.1} parent=1 // pred_check_branch
      %189 = sbr.rel (0) target = $region73
    $region72: #{encoder_forward.1} parent=1 // pred_region
      %s191 = ssub.s32 1024, 1024
      %192 = vsyncadd [#allocation28], %s191
      %s193 = sshll.u32 [#allocation27], 4
      %s194 = int_to_ptr.vmem [resolvable:$true] %s193
      %199 = dma.hbm_to_vmem [thread:$0]  %s17, 1024, %s194, [#allocation28], 128, 128, 8
    $region73: #{encoder_forward.1} parent=1 // pred_fallthru
      _
    // Predicated region
    $region74: #{encoder_forward.1} parent=1 // pred_check
      _
    $region75: #{encoder_forward.1} parent=1 // pred_check_branch
      %201 = sbr.rel (0) target = $region77
    $region76: #{encoder_forward.1} parent=1 // pred_region
      %s203 = ssub.s32 32, 32
      %204 = vsyncadd [#allocation28], %s203
      %s206 = sshll.u32 [#allocation29], 4
      %s207 = int_to_ptr.vmem [resolvable:$true] %s206
      %209 = dma.hbm_to_vmem [thread:$0]  %s18, 32, %s207, [#allocation28]
    $region77: #{encoder_forward.1} parent=1 // pred_fallthru
      _
    // Predicated region
    $region78: #{encoder_forward.1} parent=1 // pred_check
      _
    $region79: #{encoder_forward.1} parent=1 // pred_check_branch
      %211 = sbr.rel (0) target = $region81
    $region80: #{encoder_forward.1} parent=1 // pred_region
      %212 = dma.done [#allocation8], 1024
    $region81: #{encoder_forward.1} parent=1 // pred_fallthru
      _
    // Predicated region
    $region82: #{encoder_forward.1} parent=1 // pred_check
      _
    $region83: #{encoder_forward.1} parent=1 // pred_check_branch
      %214 = sbr.rel (0) target = $region85
    $region84: #{encoder_forward.1} parent=1 // pred_region
      %215 = dma.done [#allocation10], 256
    $region85: #{encoder_forward.1} parent=1 // pred_fallthru
      _
    // Predicated region
    $region86: #{encoder_forward.1} parent=1 // pred_check
      _
    $region87: #{encoder_forward.1} parent=1 // pred_check_branch
      %217 = sbr.rel (0) target = $region89
    $region88: #{encoder_forward.1} parent=1 // pred_region
      %218 = dma.done [#allocation10], 512
    $region89: #{encoder_forward.1} parent=1 // pred_fallthru
      _
    // Predicated region
    $region90: #{encoder_forward.1} parent=1 // pred_check
      _
    $region91: #{encoder_forward.1} parent=1 // pred_check_branch
      %220 = sbr.rel (0) target = $region93
    $region92: #{encoder_forward.1} parent=1 // pred_region
      %221 = dma.done [#allocation13], 32
    $region93: #{encoder_forward.1} parent=1 // pred_fallthru
      _
    // Predicated region
    $region94: #{encoder_forward.1} parent=1 // pred_check
      _
    $region95: #{encoder_forward.1} parent=1 // pred_check_branch
      %223 = sbr.rel (0) target = $region97
    $region96: #{encoder_forward.1} parent=1 // pred_region
      %224 = dma.done [#allocation13], 1024
    $region97: #{encoder_forward.1} parent=1 // pred_fallthru
      _
    // Predicated region
    $region98: #{encoder_forward.1} parent=1 // pred_check
      _
    $region99: #{encoder_forward.1} parent=1 // pred_check_branch
      %226 = sbr.rel (0) target = $region101
    $region100: #{encoder_forward.1} parent=1 // pred_region
      %227 = dma.done [#allocation16], 32
    $region101: #{encoder_forward.1} parent=1 // pred_fallthru
      _
    // Predicated region
    $region102: #{encoder_forward.1} parent=1 // pred_check
      _
    $region103: #{encoder_forward.1} parent=1 // pred_check_branch
      %229 = sbr.rel (0) target = $region105
    $region104: #{encoder_forward.1} parent=1 // pred_region
      %230 = dma.done [#allocation16], 1024
    $region105: #{encoder_forward.1} parent=1 // pred_fallthru
      _
    // Predicated region
    $region106: #{encoder_forward.1} parent=1 // pred_check
      _
    $region107: #{encoder_forward.1} parent=1 // pred_check_branch
      %232 = sbr.rel (0) target = $region109
    $region108: #{encoder_forward.1} parent=1 // pred_region
      %233 = dma.done [#allocation19], 2048
    $region109: #{encoder_forward.1} parent=1 // pred_fallthru
      _
    // Predicated region
    $region110: #{encoder_forward.1} parent=1 // pred_check
      _
    $region111: #{encoder_forward.1} parent=1 // pred_check_branch
      %235 = sbr.rel (0) target = $region113
    $region112: #{encoder_forward.1} parent=1 // pred_region
      %236 = dma.done [#allocation19], 32
    $region113: #{encoder_forward.1} parent=1 // pred_fallthru
      _
    // Predicated region
    $region114: #{encoder_forward.1} parent=1 // pred_check
      _
    $region115: #{encoder_forward.1} parent=1 // pred_check_branch
      %238 = sbr.rel (0) target = $region117
    $region116: #{encoder_forward.1} parent=1 // pred_region
      %239 = dma.done [#allocation22], 1024
    $region117: #{encoder_forward.1} parent=1 // pred_fallthru
      _
    // Predicated region
    $region118: #{encoder_forward.1} parent=1 // pred_check
      _
    $region119: #{encoder_forward.1} parent=1 // pred_check_branch
      %241 = sbr.rel (0) target = $region121
    $region120: #{encoder_forward.1} parent=1 // pred_region
      %242 = dma.done [#allocation22], 2048
    $region121: #{encoder_forward.1} parent=1 // pred_fallthru
      _
    // Predicated region
    $region122: #{encoder_forward.1} parent=1 // pred_check
      _
    $region123: #{encoder_forward.1} parent=1 // pred_check_branch
      %244 = sbr.rel (0) target = $region125
    $region124: #{encoder_forward.1} parent=1 // pred_region
      %245 = dma.done [#allocation25], 32
    $region125: #{encoder_forward.1} parent=1 // pred_fallthru
      _
    // Predicated region
    $region126: #{encoder_forward.1} parent=1 // pred_check
      _
    $region127: #{encoder_forward.1} parent=1 // pred_check_branch
      %247 = sbr.rel (0) target = $region129
    $region128: #{encoder_forward.1} parent=1 // pred_region
      %248 = dma.done [#allocation25], 1024
    $region129: #{encoder_forward.1} parent=1 // pred_fallthru
      _
    // Predicated region
    $region130: #{encoder_forward.1} parent=1 // pred_check
      _
    $region131: #{encoder_forward.1} parent=1 // pred_check_branch
      %250 = sbr.rel (0) target = $region133
    $region132: #{encoder_forward.1} parent=1 // pred_region
      %251 = dma.done [#allocation28], 1024
    $region133: #{encoder_forward.1} parent=1 // pred_fallthru
      _
    // Predicated region
    $region134: #{encoder_forward.1} parent=1 // pred_check
      _
    $region135: #{encoder_forward.1} parent=1 // pred_check_branch
      %253 = sbr.rel (0) target = $region137
    $region136: #{encoder_forward.1} parent=1 // pred_region
      %254 = dma.done [#allocation28], 32
    $region137: #{encoder_forward.1} parent=1 // pred_fallthru
      _
    %v256 = vld [vmem:[%s0] sm:$0xff]
    %v257 = vld [vmem:[%s0 + $0x8] sm:$0xff]
    %v258 = vld [vmem:[%s0 + $0x10] sm:$0xff]
    %v259 = vld [vmem:[%s0 + $0x18] sm:$0xff]
    %v260 = vld [vmem:[%s0 + $0x20] sm:$0xff]
    %v261 = vld [vmem:[%s0 + $0x28] sm:$0xff]
    %v262 = vld [vmem:[%s0 + $0x30] sm:$0xff]
    %v263 = vld [vmem:[%s0 + $0x38] sm:$0xff]
    %v264 = vld [vmem:[%s0 + $0x40] sm:$0xff]
    %v265 = vld [vmem:[%s0 + $0x48] sm:$0xff]
    %v266 = vld [vmem:[%s0 + $0x50] sm:$0xff]
    %v267 = vld [vmem:[%s0 + $0x58] sm:$0xff]
    %v268 = vld [vmem:[%s0 + $0x60] sm:$0xff]
    %v269 = vld [vmem:[%s0 + $0x68] sm:$0xff]
    %v270 = vld [vmem:[%s0 + $0x70] sm:$0xff]
    %v271 = vld [vmem:[%s0 + $0x78] sm:$0xff]
    %v272 = vpack.c.bf16 %v257, %v256
    %v273 = vpack.c.bf16 %v259, %v258
    %v274 = vpack.c.bf16 %v261, %v260
    %v275 = vpack.c.bf16 %v263, %v262
    %v276 = vpack.c.bf16 %v265, %v264
    %v277 = vpack.c.bf16 %v267, %v266
    %v278 = vpack.c.bf16 %v269, %v268
    %v279 = vpack.c.bf16 %v271, %v270
    %v280 = vld [vmem:[#allocation11] sm:$0xff]
    %v281 = vld [vmem:[#allocation11 + $0x8] sm:$0xff]
    %v282 = vld [vmem:[#allocation11 + $0x10] sm:$0xff]
    %v283 = vld [vmem:[#allocation11 + $0x18] sm:$0xff]
    %v284 = vld [vmem:[#allocation12] sm:$0x3]
    %v286 = vlaneseq
    %v287 = vshrl.u32 %v286, 7
    %v288 = vsub.s32 0, %v287
    %v289 = vrot.slane %v284, %v288
    %v290 = vlaneseq
    %v291 = vshrl.u32 %v290, 7
    %v292 = vsub.s32 1, %v291
    %v293 = vrot.slane %v284, %v292
    %v300 = vunpack.c.l.b16 %v280
    %v301 = vunpack.c.h.b16 %v280
    %v302 = vunpack.c.l.b16 %v281
    %v303 = vunpack.c.h.b16 %v281
    %v304 = vunpack.c.l.b16 %v282
    %v305 = vunpack.c.h.b16 %v282
    %v306 = vunpack.c.l.b16 %v283
    %v307 = vunpack.c.h.b16 %v283
    %v308 = vpack.c.b16 %v302, %v300
    %v309 = vpack.c.b16 %v303, %v301
    %v310 = vpack.c.b16 %v306, %v304
    %v311 = vpack.c.b16 %v307, %v305
    %vm316 = vcmask 261120
    %v318 = vsel %vm316, %v272, 0
    %v321 = vsel %vm316, %v273, 0
    %v324 = vsel %vm316, %v274, 0
    %v327 = vsel %vm316, %v275, 0
    %v330 = vsel %vm316, %v276, 0
    %v333 = vsel %vm316, %v277, 0
    %v336 = vsel %vm316, %v278, 0
    %v339 = vsel %vm316, %v279, 0
    %341 = vmatprep.subr.bf16.mxu0 %v309
    %342 = vmatpush1.bf16.msra.mxu0 %v308
    %343 = vmatprep.subr.bf16.mxu0 %v311
    %344 = vmatpush1.bf16.msra.mxu0 %v310
    %345 = vmatprep.subr.bf16.mxu0 0
    %346 = vmatpush1.bf16.msra.mxu0 0
    %347 = vmatprep.subr.bf16.mxu0 0
    %348 = vmatpush1.bf16.msra.mxu0 0
    %349 = vmatprep.subr.bf16.mxu0 0
    %350 = vmatpush1.bf16.msra.mxu0 0
    %351 = vmatprep.subr.bf16.mxu0 0
    %352 = vmatpush1.bf16.msra.mxu0 0
    %353 = vmatprep.subr.bf16.mxu0 0
    %354 = vmatpush1.bf16.msra.mxu0 0
    %355 = vmatprep.subr.bf16.mxu0 0
    %356 = vmatpush1.bf16.msra.mxu0 0
    %357 = vmatprep.subr.bf16.mxu0 0
    %358 = vmatpush1.bf16.msra.mxu0 0
    %359 = vmatprep.subr.bf16.mxu0 0
    %360 = vmatpush1.bf16.msra.mxu0 0
    %361 = vmatprep.subr.bf16.mxu0 0
    %362 = vmatpush1.bf16.msra.mxu0 0
    %363 = vmatprep.subr.bf16.mxu0 0
    %364 = vmatpush1.bf16.msra.mxu0 0
    %365 = vmatprep.subr.bf16.mxu0 0
    %366 = vmatpush1.bf16.msra.mxu0 0
    %367 = vmatprep.subr.bf16.mxu0 0
    %368 = vmatpush1.bf16.msra.mxu0 0
    %369 = vmatprep.subr.bf16.mxu0 0
    %370 = vmatpush1.bf16.msra.mxu0 0
    %371 = vmatprep.subr.bf16.mxu0 0
    %372 = vmatpush1.bf16.msra.mxu0 0
    %373 = vmatprep.mubr.bf16.mxu0 0
    %374 = vmatmul.mubr.bf16.gmra.mrb[0].mxu0 %v318
    %v375 = vpop.f32.mrb[0].mxu0
    %v376 = vadd.f32 %v289, %v375
    %v377 = vpop.f32.mrb[0].mxu0
    %v378 = vadd.f32 %v293, %v377
    %v379 = vpop.f32.mrb[0].mxu0
    %v380 = vadd.f32 %v289, %v379
    %v381 = vpop.f32.mrb[0].mxu0
    %v382 = vadd.f32 %v293, %v381
    %383 = vmatprep.mubr.bf16.mxu0 0
    %384 = vmatmul.mubr.bf16.gmra.mrb[0].mxu0 %v321
    %v385 = vpop.f32.mrb[0].mxu0
    %v386 = vadd.f32 %v289, %v385
    %v387 = vpop.f32.mrb[0].mxu0
    %v388 = vadd.f32 %v293, %v387
    %v389 = vpop.f32.mrb[0].mxu0
    %v390 = vadd.f32 %v289, %v389
    %v391 = vpop.f32.mrb[0].mxu0
    %v392 = vadd.f32 %v293, %v391
    %393 = vmatprep.mubr.bf16.mxu0 0
    %394 = vmatmul.mubr.bf16.gmra.mrb[0].mxu0 %v324
    %v395 = vpop.f32.mrb[0].mxu0
    %v396 = vadd.f32 %v289, %v395
    %v397 = vpop.f32.mrb[0].mxu0
    %v398 = vadd.f32 %v293, %v397
    %v399 = vpop.f32.mrb[0].mxu0
    %v400 = vadd.f32 %v289, %v399
    %v401 = vpop.f32.mrb[0].mxu0
    %v402 = vadd.f32 %v293, %v401
    %403 = vmatprep.mubr.bf16.mxu0 0
    %404 = vmatmul.mubr.bf16.gmra.mrb[0].mxu0 %v327
    %v405 = vpop.f32.mrb[0].mxu0
    %v406 = vadd.f32 %v289, %v405
    %v407 = vpop.f32.mrb[0].mxu0
    %v408 = vadd.f32 %v293, %v407
    %v409 = vpop.f32.mrb[0].mxu0
    %v410 = vadd.f32 %v289, %v409
    %v411 = vpop.f32.mrb[0].mxu0
    %v412 = vadd.f32 %v293, %v411
    %413 = vmatprep.mubr.bf16.mxu0 0
    %414 = vmatmul.mubr.bf16.gmra.mrb[0].mxu0 %v330
    %v415 = vpop.f32.mrb[0].mxu0
    %v416 = vadd.f32 %v289, %v415
    %v417 = vpop.f32.mrb[0].mxu0
    %v418 = vadd.f32 %v293, %v417
    %v419 = vpop.f32.mrb[0].mxu0
    %v420 = vadd.f32 %v289, %v419
    %v421 = vpop.f32.mrb[0].mxu0
    %v422 = vadd.f32 %v293, %v421
    %423 = vmatprep.mubr.bf16.mxu0 0
    %424 = vmatmul.mubr.bf16.gmra.mrb[0].mxu0 %v333
    %v425 = vpop.f32.mrb[0].mxu0
    %v426 = vadd.f32 %v289, %v425
    %v427 = vpop.f32.mrb[0].mxu0
    %v428 = vadd.f32 %v293, %v427
    %v429 = vpop.f32.mrb[0].mxu0
    %v430 = vadd.f32 %v289, %v429
    %v431 = vpop.f32.mrb[0].mxu0
    %v432 = vadd.f32 %v293, %v431
    %433 = vmatprep.mubr.bf16.mxu0 0
    %434 = vmatmul.mubr.bf16.gmra.mrb[0].mxu0 %v336
    %v435 = vpop.f32.mrb[0].mxu0
    %v436 = vadd.f32 %v289, %v435
    %v437 = vpop.f32.mrb[0].mxu0
    %v438 = vadd.f32 %v293, %v437
    %v439 = vpop.f32.mrb[0].mxu0
    %v440 = vadd.f32 %v289, %v439
    %v441 = vpop.f32.mrb[0].mxu0
    %v442 = vadd.f32 %v293, %v441
    %443 = vmatprep.mubr.bf16.mxu0 0
    %444 = vmatmul.mubr.bf16.gmra.mrb[0].mxu0 %v339
    %v445 = vpop.f32.mrb[0].mxu0
    %v446 = vadd.f32 %v289, %v445
    %v447 = vpop.f32.mrb[0].mxu0
    %v448 = vadd.f32 %v293, %v447
    %v449 = vpop.f32.mrb[0].mxu0
    %v450 = vadd.f32 %v289, %v449
    %v451 = vpop.f32.mrb[0].mxu0
    %v452 = vadd.f32 %v293, %v451
    %453 = vdwg.mxu0
    %454 = vst [vmem:[#allocation2] sm:$0xff] %v376
    %455 = vst [vmem:[#allocation2 + $0x8] sm:$0xff] %v378
    %456 = vst [vmem:[#allocation2 + $0x10] sm:$0xff] %v380
    %457 = vst [vmem:[#allocation2 + $0x18] sm:$0xff] %v382
    %458 = vst [vmem:[#allocation2 + $0x20] sm:$0xff] %v386
    %459 = vst [vmem:[#allocation2 + $0x28] sm:$0xff] %v388
    %460 = vst [vmem:[#allocation2 + $0x30] sm:$0xff] %v390
    %461 = vst [vmem:[#allocation2 + $0x38] sm:$0xff] %v392
    %462 = vst [vmem:[#allocation2 + $0x40] sm:$0xff] %v396
    %463 = vst [vmem:[#allocation2 + $0x48] sm:$0xff] %v398
    %464 = vst [vmem:[#allocation2 + $0x50] sm:$0xff] %v400
    %465 = vst [vmem:[#allocation2 + $0x58] sm:$0xff] %v402
    %466 = vst [vmem:[#allocation2 + $0x60] sm:$0xff] %v406
    %467 = vst [vmem:[#allocation2 + $0x68] sm:$0xff] %v408
    %468 = vst [vmem:[#allocation2 + $0x70] sm:$0xff] %v410
    %469 = vst [vmem:[#allocation2 + $0x78] sm:$0xff] %v412
    %470 = vst [vmem:[#allocation2 + $0x80] sm:$0xff] %v416
    %471 = vst [vmem:[#allocation2 + $0x88] sm:$0xff] %v418
    %472 = vst [vmem:[#allocation2 + $0x90] sm:$0xff] %v420
    %473 = vst [vmem:[#allocation2 + $0x98] sm:$0xff] %v422
    %474 = vst [vmem:[#allocation2 + $0xa0] sm:$0xff] %v426
    %475 = vst [vmem:[#allocation2 + $0xa8] sm:$0xff] %v428
    %476 = vst [vmem:[#allocation2 + $0xb0] sm:$0xff] %v430
    %477 = vst [vmem:[#allocation2 + $0xb8] sm:$0xff] %v432
    %478 = vst [vmem:[#allocation2 + $0xc0] sm:$0xff] %v436
    %479 = vst [vmem:[#allocation2 + $0xc8] sm:$0xff] %v438
    %480 = vst [vmem:[#allocation2 + $0xd0] sm:$0xff] %v440
    %481 = vst [vmem:[#allocation2 + $0xd8] sm:$0xff] %v442
    %482 = vst [vmem:[#allocation2 + $0xe0] sm:$0xff] %v446
    %483 = vst [vmem:[#allocation2 + $0xe8] sm:$0xff] %v448
    %484 = vst [vmem:[#allocation2 + $0xf0] sm:$0xff] %v450
    %485 = vst [vmem:[#allocation2 + $0xf8] sm:$0xff] %v452
    %v486 = vld [vmem:[#allocation14] sm:$0xff]
    %v487 = vld [vmem:[#allocation14 + $0x8] sm:$0xff]
    %v488 = vld [vmem:[#allocation14 + $0x10] sm:$0xff]
    %v489 = vld [vmem:[#allocation14 + $0x18] sm:$0xff]
    %v490 = vld [vmem:[#allocation14 + $0x20] sm:$0xff]
    %v491 = vld [vmem:[#allocation14 + $0x28] sm:$0xff]
    %v492 = vld [vmem:[#allocation14 + $0x30] sm:$0xff]
    %v493 = vld [vmem:[#allocation14 + $0x38] sm:$0xff]
    %v494 = vld [vmem:[#allocation2] sm:$0xff]
    %v495 = vld [vmem:[#allocation2 + $0xf8] sm:$0xff]
    %v504 = vunpack.c.l.b16 %v486
    %v505 = vunpack.c.h.b16 %v486
    %v506 = vunpack.c.l.b16 %v487
    %v507 = vunpack.c.h.b16 %v487
    %v508 = vunpack.c.l.b16 %v488
    %v509 = vunpack.c.h.b16 %v488
    %v510 = vunpack.c.l.b16 %v489
    %v511 = vunpack.c.h.b16 %v489
    %v512 = vunpack.c.l.b16 %v490
    %v513 = vunpack.c.h.b16 %v490
    %v514 = vunpack.c.l.b16 %v491
    %v515 = vunpack.c.h.b16 %v491
    %v516 = vunpack.c.l.b16 %v492
    %v517 = vunpack.c.h.b16 %v492
    %v518 = vunpack.c.l.b16 %v493
    %v519 = vunpack.c.h.b16 %v493
    %v520 = vpack.c.b16 %v506, %v504
    %v521 = vpack.c.b16 %v507, %v505
    %v522 = vpack.c.b16 %v510, %v508
    %v523 = vpack.c.b16 %v511, %v509
    %v524 = vpack.c.b16 %v514, %v512
    %v525 = vpack.c.b16 %v515, %v513
    %v526 = vpack.c.b16 %v518, %v516
    %v527 = vpack.c.b16 %v519, %v517
    %vm536 = vcmask 523264
    %v538 = vsel %vm536, 0, 0
    %540 = vmatprep.subr.bf16.mxu0 %v521
    %541 = vmatpush1.bf16.msra.mxu0 %v520
    %542 = vmatprep.subr.bf16.mxu0 %v523
    %543 = vmatpush1.bf16.msra.mxu0 %v522
    %544 = vmatprep.subr.bf16.mxu0 %v525
    %545 = vmatpush1.bf16.msra.mxu0 %v524
    %546 = vmatprep.subr.bf16.mxu0 %v527
    %547 = vmatpush1.bf16.msra.mxu0 %v526
    %548 = vmatprep.subr.bf16.mxu0 0
    %549 = vmatpush1.bf16.msra.mxu0 0
    %550 = vmatprep.subr.bf16.mxu0 0
    %551 = vmatpush1.bf16.msra.mxu0 0
    %552 = vmatprep.subr.bf16.mxu0 0
    %553 = vmatpush1.bf16.msra.mxu0 0
    %554 = vmatprep.subr.bf16.mxu0 0
    %555 = vmatpush1.bf16.msra.mxu0 0
    %556 = vmatprep.subr.bf16.mxu0 0
    %557 = vmatpush1.bf16.msra.mxu0 0
    %558 = vmatprep.subr.bf16.mxu0 0
    %559 = vmatpush1.bf16.msra.mxu0 0
    %560 = vmatprep.subr.bf16.mxu0 0
    %561 = vmatpush1.bf16.msra.mxu0 0
    %562 = vmatprep.subr.bf16.mxu0 0
    %563 = vmatpush1.bf16.msra.mxu0 0
    %564 = vmatprep.subr.bf16.mxu0 0
    %565 = vmatpush1.bf16.msra.mxu0 0
    %566 = vmatprep.subr.bf16.mxu0 0
    %567 = vmatpush1.bf16.msra.mxu0 0
    %568 = vmatprep.subr.bf16.mxu0 0
    %569 = vmatpush1.bf16.msra.mxu0 0
    %570 = vmatprep.subr.bf16.mxu0 0
    %571 = vmatpush1.bf16.msra.mxu0 0
    %572 = vmatprep.mubr.bf16.mxu0 0
    %573 = vmatmul.mubr.bf16.gmra.mrb[0].mxu0 %v538
    %v574 = vpop.f32.mrb[0].mxu0
    %v575 = vadd.f32 0.0, %v574
    %v576 = vpop.f32.mrb[0].mxu0
    %v577 = vadd.f32 0.0, %v576
    %v578 = vpop.f32.mrb[0].mxu0
    %v579 = vpop.f32.mrb[0].mxu0
    %580 = vdwg.mxu0
    %v581 = vadd.f32 %v494, %v575
    %v582 = vadd.f32 %v495, %v577
    %v583 = vxor.u32 %v581, 2147483648
    %v584 = vxor.u32 %v582, 2147483648
    %v585 = vmul.f32 %v583, 1.442695
    %v586 = vpow.pop %v585
    %v587 = vmul.f32 %v584, 1.442695
    %v588 = vpow.pop %v587
    %v589 = vadd.f32 %v586, 1.0
    %v590 = vadd.f32 %v588, 1.0
    %v591 = vrcp.pop %v589
    %v592 = vmul.f32 1.0, %v591
    %v593 = vrcp.pop %v590
    %v594 = vmul.f32 1.0, %v593
    %v595 = vtanh.pop %v581
    %v596 = vtanh.pop %v582
    %598 = vrot.lane.b32.xlu0 %v594, 32
    %v599 = vpop.permute.xlu0 %598
    %v601 = vsel %vm316, %v592, %v599
    %603 = vrot.lane.b32.xlu0 %v592, 96
    %v604 = vpop.permute.xlu0 %603
    %v606 = vsel %vm316, %v604, %v594
    %608 = vrot.lane.b32.xlu0 %v595, 64
    %v609 = vpop.permute.xlu0 %608
    %612 = vrot.lane.b32.xlu0 %v596, 96
    %v613 = vpop.permute.xlu0 %612
    %v615 = vsel %vm316, %v609, %v613
    %616 = vrot.lane.b32.xlu0 %v592, 32
    %v617 = vpop.permute.xlu0 %616
    %619 = vrot.lane.b32.xlu0 %v594, 64
    %v620 = vpop.permute.xlu0 %619
    %v622 = vsel %vm316, %v617, %v620
    %v623 = vld [vmem:[%s1] sm:$0xff]
    %v624 = vmul.f32 %v606, 0.0
    %v625 = vmul.f32 %v601, %v615
    %v626 = vadd.f32 %v624, %v625
    %v627 = vmul.f32 %v623, %v626
    %v628 = vtanh.pop %v627
    %v629 = vmul.f32 %v622, %v628
    %v630 = vmul.f32 %v623, %v629
    %631 = vst.msk [vmem:[#allocation3] sm:$0xff] %vm316, %v630
    %633 = vrot.lane.b32.xlu0 %v630, 64
    %v634 = vpop.permute.xlu0 %633
    %vm636 = vcmask 1048320
    %637 = vst.msk [vmem:[#allocation3 + $0x38] sm:$0xff] %vm636, %v634
    %v638 = vld [vmem:[#allocation2 + $0x10] sm:$0xff]
    %v639 = vld [vmem:[#allocation2 + $0xe8] sm:$0xff]
    %v640 = vpack.c.bf16 %v630, %v630
    %v642 = vsel %vm536, %v640, 0
    %644 = vmatprep.subr.bf16.mxu0 %v521
    %645 = vmatpush1.bf16.msra.mxu0 %v520
    %646 = vmatprep.subr.bf16.mxu0 %v523
    %647 = vmatpush1.bf16.msra.mxu0 %v522
    %648 = vmatprep.subr.bf16.mxu0 %v525
    %649 = vmatpush1.bf16.msra.mxu0 %v524
    %650 = vmatprep.subr.bf16.mxu0 %v527
    %651 = vmatpush1.bf16.msra.mxu0 %v526
    %652 = vmatprep.subr.bf16.mxu0 0
    %653 = vmatpush1.bf16.msra.mxu0 0
    %654 = vmatprep.subr.bf16.mxu0 0
    %655 = vmatpush1.bf16.msra.mxu0 0
    %656 = vmatprep.subr.bf16.mxu0 0
    %657 = vmatpush1.bf16.msra.mxu0 0
    %658 = vmatprep.subr.bf16.mxu0 0
    %659 = vmatpush1.bf16.msra.mxu0 0
    %660 = vmatprep.subr.bf16.mxu0 0
    %661 = vmatpush1.bf16.msra.mxu0 0
    %662 = vmatprep.subr.bf16.mxu0 0
    %663 = vmatpush1.bf16.msra.mxu0 0
    %664 = vmatprep.subr.bf16.mxu0 0
    %665 = vmatpush1.bf16.msra.mxu0 0
    %666 = vmatprep.subr.bf16.mxu0 0
    %667 = vmatpush1.bf16.msra.mxu0 0
    %668 = vmatprep.subr.bf16.mxu0 0
    %669 = vmatpush1.bf16.msra.mxu0 0
    %670 = vmatprep.subr.bf16.mxu0 0
    %671 = vmatpush1.bf16.msra.mxu0 0
    %672 = vmatprep.subr.bf16.mxu0 0
    %673 = vmatpush1.bf16.msra.mxu0 0
    %674 = vmatprep.subr.bf16.mxu0 0
    %675 = vmatpush1.bf16.msra.mxu0 0
    %676 = vmatprep.mubr.bf16.mxu0 0
    %677 = vmatmul.mubr.bf16.gmra.mrb[0].mxu0 %v642
    %v678 = vpop.f32.mrb[0].mxu0
    %v679 = vadd.f32 0.0, %v678
    %v680 = vpop.f32.mrb[0].mxu0
    %v681 = vadd.f32 0.0, %v680
    %v682 = vpop.f32.mrb[0].mxu0
    %v683 = vpop.f32.mrb[0].mxu0
    %684 = vdwg.mxu0
    %v685 = vadd.f32 %v638, %v679
    %v686 = vadd.f32 %v639, %v681
    %v687 = vxor.u32 %v685, 2147483648
    %v688 = vxor.u32 %v686, 2147483648
    %v689 = vmul.f32 %v687, 1.442695
    %v690 = vpow.pop %v689
    %v691 = vmul.f32 %v688, 1.442695
    %v692 = vpow.pop %v691
    %v693 = vadd.f32 %v690, 1.0
    %v694 = vadd.f32 %v692, 1.0
    %v695 = vrcp.pop %v693
    %v696 = vmul.f32 1.0, %v695
    %v697 = vrcp.pop %v694
    %v698 = vmul.f32 1.0, %v697
    %v699 = vtanh.pop %v685
    %v700 = vtanh.pop %v686
    %702 = vrot.lane.b32.xlu0 %v698, 32
    %v703 = vpop.permute.xlu0 %702
    %v705 = vsel %vm316, %v696, %v703
    %707 = vrot.lane.b32.xlu0 %v696, 96
    %v708 = vpop.permute.xlu0 %707
    %v710 = vsel %vm316, %v708, %v698
    %712 = vrot.lane.b32.xlu0 %v699, 64
    %v713 = vpop.permute.xlu0 %712
    %716 = vrot.lane.b32.xlu0 %v700, 96
    %v717 = vpop.permute.xlu0 %716
    %v719 = vsel %vm316, %v713, %v717
    %720 = vrot.lane.b32.xlu0 %v696, 32
    %v721 = vpop.permute.xlu0 %720
    %723 = vrot.lane.b32.xlu0 %v698, 64
    %v724 = vpop.permute.xlu0 %723
    %v726 = vsel %vm316, %v721, %v724
    %v727 = vld [vmem:[%s1 + $0x8] sm:$0xff]
    %v728 = vmul.f32 %v710, %v627
    %v729 = vmul.f32 %v705, %v719
    %v730 = vadd.f32 %v728, %v729
    %v731 = vmul.f32 %v727, %v730
    %v732 = vtanh.pop %v731
    %v733 = vmul.f32 %v726, %v732
    %v734 = vmul.f32 %v727, %v733
    %736 = vrot.lane.b32.xlu0 %v734, 64
    %v737 = vpop.permute.xlu0 %736
    %vm739 = vcmask 785920
    %740 = vst.msk [vmem:[#allocation3] sm:$0xff] %vm739, %v737
    %vm741 = vcmask 523520
    %742 = vst.msk [vmem:[#allocation3 + $0x38] sm:$0xff] %vm741, %v734
    %v743 = vld [vmem:[#allocation2 + $0x20] sm:$0xff]
    %v744 = vld [vmem:[#allocation2 + $0xd8] sm:$0xff]
    %v745 = vpack.c.bf16 %v734, %v734
    %v747 = vsel %vm536, %v745, 0
    %749 = vmatprep.subr.bf16.mxu0 %v521
    %750 = vmatpush1.bf16.msra.mxu0 %v520
    %751 = vmatprep.subr.bf16.mxu0 %v523
    %752 = vmatpush1.bf16.msra.mxu0 %v522
    %753 = vmatprep.subr.bf16.mxu0 %v525
    %754 = vmatpush1.bf16.msra.mxu0 %v524
    %755 = vmatprep.subr.bf16.mxu0 %v527
    %756 = vmatpush1.bf16.msra.mxu0 %v526
    %757 = vmatprep.subr.bf16.mxu0 0
    %758 = vmatpush1.bf16.msra.mxu0 0
    %759 = vmatprep.subr.bf16.mxu0 0
    %760 = vmatpush1.bf16.msra.mxu0 0
    %761 = vmatprep.subr.bf16.mxu0 0
    %762 = vmatpush1.bf16.msra.mxu0 0
    %763 = vmatprep.subr.bf16.mxu0 0
    %764 = vmatpush1.bf16.msra.mxu0 0
    %765 = vmatprep.subr.bf16.mxu0 0
    %766 = vmatpush1.bf16.msra.mxu0 0
    %767 = vmatprep.subr.bf16.mxu0 0
    %768 = vmatpush1.bf16.msra.mxu0 0
    %769 = vmatprep.subr.bf16.mxu0 0
    %770 = vmatpush1.bf16.msra.mxu0 0
    %771 = vmatprep.subr.bf16.mxu0 0
    %772 = vmatpush1.bf16.msra.mxu0 0
    %773 = vmatprep.subr.bf16.mxu0 0
    %774 = vmatpush1.bf16.msra.mxu0 0
    %775 = vmatprep.subr.bf16.mxu0 0
    %776 = vmatpush1.bf16.msra.mxu0 0
    %777 = vmatprep.subr.bf16.mxu0 0
    %778 = vmatpush1.bf16.msra.mxu0 0
    %779 = vmatprep.subr.bf16.mxu0 0
    %780 = vmatpush1.bf16.msra.mxu0 0
    %781 = vmatprep.mubr.bf16.mxu0 0
    %782 = vmatmul.mubr.bf16.gmra.mrb[0].mxu0 %v747
    %v783 = vpop.f32.mrb[0].mxu0
    %v784 = vadd.f32 0.0, %v783
    %v785 = vpop.f32.mrb[0].mxu0
    %v786 = vadd.f32 0.0, %v785
    %v787 = vpop.f32.mrb[0].mxu0
    %v788 = vpop.f32.mrb[0].mxu0
    %789 = vdwg.mxu0
    %v790 = vadd.f32 %v743, %v784
    %v791 = vadd.f32 %v744, %v786
    %v792 = vxor.u32 %v790, 2147483648
    %v793 = vxor.u32 %v791, 2147483648
    %v794 = vmul.f32 %v792, 1.442695
    %v795 = vpow.pop %v794
    %v796 = vmul.f32 %v793, 1.442695
    %v797 = vpow.pop %v796
    %v798 = vadd.f32 %v795, 1.0
    %v799 = vadd.f32 %v797, 1.0
    %v800 = vrcp.pop %v798
    %v801 = vmul.f32 1.0, %v800
    %v802 = vrcp.pop %v799
    %v803 = vmul.f32 1.0, %v802
    %v804 = vtanh.pop %v790
    %v805 = vtanh.pop %v791
    %807 = vrot.lane.b32.xlu0 %v803, 32
    %v808 = vpop.permute.xlu0 %807
    %v810 = vsel %vm316, %v801, %v808
    %812 = vrot.lane.b32.xlu0 %v801, 96
    %v813 = vpop.permute.xlu0 %812
    %v815 = vsel %vm316, %v813, %v803
    %817 = vrot.lane.b32.xlu0 %v804, 64
    %v818 = vpop.permute.xlu0 %817
    %821 = vrot.lane.b32.xlu0 %v805, 96
    %v822 = vpop.permute.xlu0 %821
    %v824 = vsel %vm316, %v818, %v822
    %825 = vrot.lane.b32.xlu0 %v801, 32
    %v826 = vpop.permute.xlu0 %825
    %828 = vrot.lane.b32.xlu0 %v803, 64
    %v829 = vpop.permute.xlu0 %828
    %v831 = vsel %vm316, %v826, %v829
    %v832 = vld [vmem:[%s1 + $0x10] sm:$0xff]
    %v833 = vmul.f32 %v815, %v731
    %v834 = vmul.f32 %v810, %v824
    %v835 = vadd.f32 %v833, %v834
    %v836 = vmul.f32 %v832, %v835
    %v837 = vtanh.pop %v836
    %v838 = vmul.f32 %v831, %v837
    %v839 = vmul.f32 %v832, %v838
    %840 = vst.msk [vmem:[#allocation3 + $0x8] sm:$0xff] %vm316, %v839
    %842 = vrot.lane.b32.xlu0 %v839, 64
    %v843 = vpop.permute.xlu0 %842
    %845 = vst.msk [vmem:[#allocation3 + $0x30] sm:$0xff] %vm636, %v843
    %v846 = vld [vmem:[#allocation2 + $0x30] sm:$0xff]
    %v847 = vld [vmem:[#allocation2 + $0xc8] sm:$0xff]
    %v848 = vpack.c.bf16 %v839, %v839
    %v850 = vsel %vm536, %v848, 0
    %852 = vmatprep.subr.bf16.mxu0 %v521
    %853 = vmatpush1.bf16.msra.mxu0 %v520
    %854 = vmatprep.subr.bf16.mxu0 %v523
    %855 = vmatpush1.bf16.msra.mxu0 %v522
    %856 = vmatprep.subr.bf16.mxu0 %v525
    %857 = vmatpush1.bf16.msra.mxu0 %v524
    %858 = vmatprep.subr.bf16.mxu0 %v527
    %859 = vmatpush1.bf16.msra.mxu0 %v526
    %860 = vmatprep.subr.bf16.mxu0 0
    %861 = vmatpush1.bf16.msra.mxu0 0
    %862 = vmatprep.subr.bf16.mxu0 0
    %863 = vmatpush1.bf16.msra.mxu0 0
    %864 = vmatprep.subr.bf16.mxu0 0
    %865 = vmatpush1.bf16.msra.mxu0 0
    %866 = vmatprep.subr.bf16.mxu0 0
    %867 = vmatpush1.bf16.msra.mxu0 0
    %868 = vmatprep.subr.bf16.mxu0 0
    %869 = vmatpush1.bf16.msra.mxu0 0
    %870 = vmatprep.subr.bf16.mxu0 0
    %871 = vmatpush1.bf16.msra.mxu0 0
    %872 = vmatprep.subr.bf16.mxu0 0
    %873 = vmatpush1.bf16.msra.mxu0 0
    %874 = vmatprep.subr.bf16.mxu0 0
    %875 = vmatpush1.bf16.msra.mxu0 0
    %876 = vmatprep.subr.bf16.mxu0 0
    %877 = vmatpush1.bf16.msra.mxu0 0
    %878 = vmatprep.subr.bf16.mxu0 0
    %879 = vmatpush1.bf16.msra.mxu0 0
    %880 = vmatprep.subr.bf16.mxu0 0
    %881 = vmatpush1.bf16.msra.mxu0 0
    %882 = vmatprep.subr.bf16.mxu0 0
    %883 = vmatpush1.bf16.msra.mxu0 0
    %884 = vmatprep.mubr.bf16.mxu0 0
    %885 = vmatmul.mubr.bf16.gmra.mrb[0].mxu0 %v850
    %v886 = vpop.f32.mrb[0].mxu0
    %v887 = vadd.f32 0.0, %v886
    %v888 = vpop.f32.mrb[0].mxu0
    %v889 = vadd.f32 0.0, %v888
    %v890 = vpop.f32.mrb[0].mxu0
    %v891 = vpop.f32.mrb[0].mxu0
    %892 = vdwg.mxu0
    %v893 = vadd.f32 %v846, %v887
    %v894 = vadd.f32 %v847, %v889
    %v895 = vxor.u32 %v893, 2147483648
    %v896 = vxor.u32 %v894, 2147483648
    %v897 = vmul.f32 %v895, 1.442695
    %v898 = vpow.pop %v897
    %v899 = vmul.f32 %v896, 1.442695
    %v900 = vpow.pop %v899
    %v901 = vadd.f32 %v898, 1.0
    %v902 = vadd.f32 %v900, 1.0
    %v903 = vrcp.pop %v901
    %v904 = vmul.f32 1.0, %v903
    %v905 = vrcp.pop %v902
    %v906 = vmul.f32 1.0, %v905
    %v907 = vtanh.pop %v893
    %v908 = vtanh.pop %v894
    %910 = vrot.lane.b32.xlu0 %v906, 32
    %v911 = vpop.permute.xlu0 %910
    %v913 = vsel %vm316, %v904, %v911
    %915 = vrot.lane.b32.xlu0 %v904, 96
    %v916 = vpop.permute.xlu0 %915
    %v918 = vsel %vm316, %v916, %v906
    %920 = vrot.lane.b32.xlu0 %v907, 64
    %v921 = vpop.permute.xlu0 %920
    %924 = vrot.lane.b32.xlu0 %v908, 96
    %v925 = vpop.permute.xlu0 %924
    %v927 = vsel %vm316, %v921, %v925
    %928 = vrot.lane.b32.xlu0 %v904, 32
    %v929 = vpop.permute.xlu0 %928
    %931 = vrot.lane.b32.xlu0 %v906, 64
    %v932 = vpop.permute.xlu0 %931
    %v934 = vsel %vm316, %v929, %v932
    %v935 = vld [vmem:[%s1 + $0x18] sm:$0xff]
    %v936 = vmul.f32 %v918, %v836
    %v937 = vmul.f32 %v913, %v927
    %v938 = vadd.f32 %v936, %v937
    %v939 = vmul.f32 %v935, %v938
    %v940 = vtanh.pop %v939
    %v941 = vmul.f32 %v934, %v940
    %v942 = vmul.f32 %v935, %v941
    %944 = vrot.lane.b32.xlu0 %v942, 64
    %v945 = vpop.permute.xlu0 %944
    %947 = vst.msk [vmem:[#allocation3 + $0x8] sm:$0xff] %vm739, %v945
    %948 = vst.msk [vmem:[#allocation3 + $0x30] sm:$0xff] %vm741, %v942
    %v949 = vld [vmem:[#allocation2 + $0x40] sm:$0xff]
    %v950 = vld [vmem:[#allocation2 + $0xb8] sm:$0xff]
    %v951 = vpack.c.bf16 %v942, %v942
    %v953 = vsel %vm536, %v951, 0
    %955 = vmatprep.subr.bf16.mxu0 %v521
    %956 = vmatpush1.bf16.msra.mxu0 %v520
    %957 = vmatprep.subr.bf16.mxu0 %v523
    %958 = vmatpush1.bf16.msra.mxu0 %v522
    %959 = vmatprep.subr.bf16.mxu0 %v525
    %960 = vmatpush1.bf16.msra.mxu0 %v524
    %961 = vmatprep.subr.bf16.mxu0 %v527
    %962 = vmatpush1.bf16.msra.mxu0 %v526
    %963 = vmatprep.subr.bf16.mxu0 0
    %964 = vmatpush1.bf16.msra.mxu0 0
    %965 = vmatprep.subr.bf16.mxu0 0
    %966 = vmatpush1.bf16.msra.mxu0 0
    %967 = vmatprep.subr.bf16.mxu0 0
    %968 = vmatpush1.bf16.msra.mxu0 0
    %969 = vmatprep.subr.bf16.mxu0 0
    %970 = vmatpush1.bf16.msra.mxu0 0
    %971 = vmatprep.subr.bf16.mxu0 0
    %972 = vmatpush1.bf16.msra.mxu0 0
    %973 = vmatprep.subr.bf16.mxu0 0
    %974 = vmatpush1.bf16.msra.mxu0 0
    %975 = vmatprep.subr.bf16.mxu0 0
    %976 = vmatpush1.bf16.msra.mxu0 0
    %977 = vmatprep.subr.bf16.mxu0 0
    %978 = vmatpush1.bf16.msra.mxu0 0
    %979 = vmatprep.subr.bf16.mxu0 0
    %980 = vmatpush1.bf16.msra.mxu0 0
    %981 = vmatprep.subr.bf16.mxu0 0
    %982 = vmatpush1.bf16.msra.mxu0 0
    %983 = vmatprep.subr.bf16.mxu0 0
    %984 = vmatpush1.bf16.msra.mxu0 0
    %985 = vmatprep.subr.bf16.mxu0 0
    %986 = vmatpush1.bf16.msra.mxu0 0
    %987 = vmatprep.mubr.bf16.mxu0 0
    %988 = vmatmul.mubr.bf16.gmra.mrb[0].mxu0 %v953
    %v989 = vpop.f32.mrb[0].mxu0
    %v990 = vadd.f32 0.0, %v989
    %v991 = vpop.f32.mrb[0].mxu0
    %v992 = vadd.f32 0.0, %v991
    %v993 = vpop.f32.mrb[0].mxu0
    %v994 = vpop.f32.mrb[0].mxu0
    %995 = vdwg.mxu0
    %v996 = vadd.f32 %v949, %v990
    %v997 = vadd.f32 %v950, %v992
    %v998 = vxor.u32 %v996, 2147483648
    %v999 = vxor.u32 %v997, 2147483648
    %v1000 = vmul.f32 %v998, 1.442695
    %v1001 = vpow.pop %v1000
    %v1002 = vmul.f32 %v999, 1.442695
    %v1003 = vpow.pop %v1002
    %v1004 = vadd.f32 %v1001, 1.0
    %v1005 = vadd.f32 %v1003, 1.0
    %v1006 = vrcp.pop %v1004
    %v1007 = vmul.f32 1.0, %v1006
    %v1008 = vrcp.pop %v1005
    %v1009 = vmul.f32 1.0, %v1008
    %v1010 = vtanh.pop %v996
    %v1011 = vtanh.pop %v997
    %1013 = vrot.lane.b32.xlu0 %v1009, 32
    %v1014 = vpop.permute.xlu0 %1013
    %v1016 = vsel %vm316, %v1007, %v1014
    %1018 = vrot.lane.b32.xlu0 %v1007, 96
    %v1019 = vpop.permute.xlu0 %1018
    %v1021 = vsel %vm316, %v1019, %v1009
    %1023 = vrot.lane.b32.xlu0 %v1010, 64
    %v1024 = vpop.permute.xlu0 %1023
    %1027 = vrot.lane.b32.xlu0 %v1011, 96
    %v1028 = vpop.permute.xlu0 %1027
    %v1030 = vsel %vm316, %v1024, %v1028
    %1031 = vrot.lane.b32.xlu0 %v1007, 32
    %v1032 = vpop.permute.xlu0 %1031
    %1034 = vrot.lane.b32.xlu0 %v1009, 64
    %v1035 = vpop.permute.xlu0 %1034
    %v1037 = vsel %vm316, %v1032, %v1035
    %v1038 = vld [vmem:[%s1 + $0x20] sm:$0xff]
    %v1039 = vmul.f32 %v1021, %v939
    %v1040 = vmul.f32 %v1016, %v1030
    %v1041 = vadd.f32 %v1039, %v1040
    %v1042 = vmul.f32 %v1038, %v1041
    %v1043 = vtanh.pop %v1042
    %v1044 = vmul.f32 %v1037, %v1043
    %v1045 = vmul.f32 %v1038, %v1044
    %1046 = vst.msk [vmem:[#allocation3 + $0x10] sm:$0xff] %vm316, %v1045
    %1048 = vrot.lane.b32.xlu0 %v1045, 64
    %v1049 = vpop.permute.xlu0 %1048
    %1051 = vst.msk [vmem:[#allocation3 + $0x28] sm:$0xff] %vm636, %v1049
    %v1052 = vld [vmem:[#allocation2 + $0x50] sm:$0xff]
    %v1053 = vld [vmem:[#allocation2 + $0xa8] sm:$0xff]
    %v1054 = vpack.c.bf16 %v1045, %v1045
    %v1056 = vsel %vm536, %v1054, 0
    %1058 = vmatprep.subr.bf16.mxu0 %v521
    %1059 = vmatpush1.bf16.msra.mxu0 %v520
    %1060 = vmatprep.subr.bf16.mxu0 %v523
    %1061 = vmatpush1.bf16.msra.mxu0 %v522
    %1062 = vmatprep.subr.bf16.mxu0 %v525
    %1063 = vmatpush1.bf16.msra.mxu0 %v524
    %1064 = vmatprep.subr.bf16.mxu0 %v527
    %1065 = vmatpush1.bf16.msra.mxu0 %v526
    %1066 = vmatprep.subr.bf16.mxu0 0
    %1067 = vmatpush1.bf16.msra.mxu0 0
    %1068 = vmatprep.subr.bf16.mxu0 0
    %1069 = vmatpush1.bf16.msra.mxu0 0
    %1070 = vmatprep.subr.bf16.mxu0 0
    %1071 = vmatpush1.bf16.msra.mxu0 0
    %1072 = vmatprep.subr.bf16.mxu0 0
    %1073 = vmatpush1.bf16.msra.mxu0 0
    %1074 = vmatprep.subr.bf16.mxu0 0
    %1075 = vmatpush1.bf16.msra.mxu0 0
    %1076 = vmatprep.subr.bf16.mxu0 0
    %1077 = vmatpush1.bf16.msra.mxu0 0
    %1078 = vmatprep.subr.bf16.mxu0 0
    %1079 = vmatpush1.bf16.msra.mxu0 0
    %1080 = vmatprep.subr.bf16.mxu0 0
    %1081 = vmatpush1.bf16.msra.mxu0 0
    %1082 = vmatprep.subr.bf16.mxu0 0
    %1083 = vmatpush1.bf16.msra.mxu0 0
    %1084 = vmatprep.subr.bf16.mxu0 0
    %1085 = vmatpush1.bf16.msra.mxu0 0
    %1086 = vmatprep.subr.bf16.mxu0 0
    %1087 = vmatpush1.bf16.msra.mxu0 0
    %1088 = vmatprep.subr.bf16.mxu0 0
    %1089 = vmatpush1.bf16.msra.mxu0 0
    %1090 = vmatprep.mubr.bf16.mxu0 0
    %1091 = vmatmul.mubr.bf16.gmra.mrb[0].mxu0 %v1056
    %v1092 = vpop.f32.mrb[0].mxu0
    %v1093 = vadd.f32 0.0, %v1092
    %v1094 = vpop.f32.mrb[0].mxu0
    %v1095 = vadd.f32 0.0, %v1094
    %v1096 = vpop.f32.mrb[0].mxu0
    %v1097 = vpop.f32.mrb[0].mxu0
    %1098 = vdwg.mxu0
    %v1099 = vadd.f32 %v1052, %v1093
    %v1100 = vadd.f32 %v1053, %v1095
    %v1101 = vxor.u32 %v1099, 2147483648
    %v1102 = vxor.u32 %v1100, 2147483648
    %v1103 = vmul.f32 %v1101, 1.442695
    %v1104 = vpow.pop %v1103
    %v1105 = vmul.f32 %v1102, 1.442695
    %v1106 = vpow.pop %v1105
    %v1107 = vadd.f32 %v1104, 1.0
    %v1108 = vadd.f32 %v1106, 1.0
    %v1109 = vrcp.pop %v1107
    %v1110 = vmul.f32 1.0, %v1109
    %v1111 = vrcp.pop %v1108
    %v1112 = vmul.f32 1.0, %v1111
    %v1113 = vtanh.pop %v1099
    %v1114 = vtanh.pop %v1100
    %1116 = vrot.lane.b32.xlu0 %v1112, 32
    %v1117 = vpop.permute.xlu0 %1116
    %v1119 = vsel %vm316, %v1110, %v1117
    %1121 = vrot.lane.b32.xlu0 %v1110, 96
    %v1122 = vpop.permute.xlu0 %1121
    %v1124 = vsel %vm316, %v1122, %v1112
    %1126 = vrot.lane.b32.xlu0 %v1113, 64
    %v1127 = vpop.permute.xlu0 %1126
    %1130 = vrot.lane.b32.xlu0 %v1114, 96
    %v1131 = vpop.permute.xlu0 %1130
    %v1133 = vsel %vm316, %v1127, %v1131
    %1134 = vrot.lane.b32.xlu0 %v1110, 32
    %v1135 = vpop.permute.xlu0 %1134
    %1137 = vrot.lane.b32.xlu0 %v1112, 64
    %v1138 = vpop.permute.xlu0 %1137
    %v1140 = vsel %vm316, %v1135, %v1138
    %v1141 = vld [vmem:[%s1 + $0x28] sm:$0xff]
    %v1142 = vmul.f32 %v1124, %v1042
    %v1143 = vmul.f32 %v1119, %v1133
    %v1144 = vadd.f32 %v1142, %v1143
    %v1145 = vmul.f32 %v1141, %v1144
    %v1146 = vtanh.pop %v1145
    %v1147 = vmul.f32 %v1140, %v1146
    %v1148 = vmul.f32 %v1141, %v1147
    %1150 = vrot.lane.b32.xlu0 %v1148, 64
    %v1151 = vpop.permute.xlu0 %1150
    %1153 = vst.msk [vmem:[#allocation3 + $0x10] sm:$0xff] %vm739, %v1151
    %1154 = vst.msk [vmem:[#allocation3 + $0x28] sm:$0xff] %vm741, %v1148
    %v1155 = vld [vmem:[#allocation2 + $0x60] sm:$0xff]
    %v1156 = vld [vmem:[#allocation2 + $0x98] sm:$0xff]
    %v1157 = vpack.c.bf16 %v1148, %v1148
    %v1159 = vsel %vm536, %v1157, 0
    %1161 = vmatprep.subr.bf16.mxu0 %v521
    %1162 = vmatpush1.bf16.msra.mxu0 %v520
    %1163 = vmatprep.subr.bf16.mxu0 %v523
    %1164 = vmatpush1.bf16.msra.mxu0 %v522
    %1165 = vmatprep.subr.bf16.mxu0 %v525
    %1166 = vmatpush1.bf16.msra.mxu0 %v524
    %1167 = vmatprep.subr.bf16.mxu0 %v527
    %1168 = vmatpush1.bf16.msra.mxu0 %v526
    %1169 = vmatprep.subr.bf16.mxu0 0
    %1170 = vmatpush1.bf16.msra.mxu0 0
    %1171 = vmatprep.subr.bf16.mxu0 0
    %1172 = vmatpush1.bf16.msra.mxu0 0
    %1173 = vmatprep.subr.bf16.mxu0 0
    %1174 = vmatpush1.bf16.msra.mxu0 0
    %1175 = vmatprep.subr.bf16.mxu0 0
    %1176 = vmatpush1.bf16.msra.mxu0 0
    %1177 = vmatprep.subr.bf16.mxu0 0
    %1178 = vmatpush1.bf16.msra.mxu0 0
    %1179 = vmatprep.subr.bf16.mxu0 0
    %1180 = vmatpush1.bf16.msra.mxu0 0
    %1181 = vmatprep.subr.bf16.mxu0 0
    %1182 = vmatpush1.bf16.msra.mxu0 0
    %1183 = vmatprep.subr.bf16.mxu0 0
    %1184 = vmatpush1.bf16.msra.mxu0 0
    %1185 = vmatprep.subr.bf16.mxu0 0
    %1186 = vmatpush1.bf16.msra.mxu0 0
    %1187 = vmatprep.subr.bf16.mxu0 0
    %1188 = vmatpush1.bf16.msra.mxu0 0
    %1189 = vmatprep.subr.bf16.mxu0 0
    %1190 = vmatpush1.bf16.msra.mxu0 0
    %1191 = vmatprep.subr.bf16.mxu0 0
    %1192 = vmatpush1.bf16.msra.mxu0 0
    %1193 = vmatprep.mubr.bf16.mxu0 0
    %1194 = vmatmul.mubr.bf16.gmra.mrb[0].mxu0 %v1159
    %v1195 = vpop.f32.mrb[0].mxu0
    %v1196 = vadd.f32 0.0, %v1195
    %v1197 = vpop.f32.mrb[0].mxu0
    %v1198 = vadd.f32 0.0, %v1197
    %v1199 = vpop.f32.mrb[0].mxu0
    %v1200 = vpop.f32.mrb[0].mxu0
    %1201 = vdwg.mxu0
    %v1202 = vadd.f32 %v1155, %v1196
    %v1203 = vadd.f32 %v1156, %v1198
    %v1204 = vxor.u32 %v1202, 2147483648
    %v1205 = vxor.u32 %v1203, 2147483648
    %v1206 = vmul.f32 %v1204, 1.442695
    %v1207 = vpow.pop %v1206
    %v1208 = vmul.f32 %v1205, 1.442695
    %v1209 = vpow.pop %v1208
    %v1210 = vadd.f32 %v1207, 1.0
    %v1211 = vadd.f32 %v1209, 1.0
    %v1212 = vrcp.pop %v1210
    %v1213 = vmul.f32 1.0, %v1212
    %v1214 = vrcp.pop %v1211
    %v1215 = vmul.f32 1.0, %v1214
    %v1216 = vtanh.pop %v1202
    %v1217 = vtanh.pop %v1203
    %1219 = vrot.lane.b32.xlu0 %v1215, 32
    %v1220 = vpop.permute.xlu0 %1219
    %v1222 = vsel %vm316, %v1213, %v1220
    %1224 = vrot.lane.b32.xlu0 %v1213, 96
    %v1225 = vpop.permute.xlu0 %1224
    %v1227 = vsel %vm316, %v1225, %v1215
    %1229 = vrot.lane.b32.xlu0 %v1216, 64
    %v1230 = vpop.permute.xlu0 %1229
    %1233 = vrot.lane.b32.xlu0 %v1217, 96
    %v1234 = vpop.permute.xlu0 %1233
    %v1236 = vsel %vm316, %v1230, %v1234
    %1237 = vrot.lane.b32.xlu0 %v1213, 32
    %v1238 = vpop.permute.xlu0 %1237
    %1240 = vrot.lane.b32.xlu0 %v1215, 64
    %v1241 = vpop.permute.xlu0 %1240
    %v1243 = vsel %vm316, %v1238, %v1241
    %v1244 = vld [vmem:[%s1 + $0x30] sm:$0xff]
    %v1245 = vmul.f32 %v1227, %v1145
    %v1246 = vmul.f32 %v1222, %v1236
    %v1247 = vadd.f32 %v1245, %v1246
    %v1248 = vmul.f32 %v1244, %v1247
    %v1249 = vtanh.pop %v1248
    %v1250 = vmul.f32 %v1243, %v1249
    %v1251 = vmul.f32 %v1244, %v1250
    %1252 = vst.msk [vmem:[#allocation3 + $0x18] sm:$0xff] %vm316, %v1251
    %1254 = vrot.lane.b32.xlu0 %v1251, 64
    %v1255 = vpop.permute.xlu0 %1254
    %1257 = vst.msk [vmem:[#allocation3 + $0x20] sm:$0xff] %vm636, %v1255
    %v1258 = vld [vmem:[#allocation2 + $0x70] sm:$0xff]
    %v1259 = vld [vmem:[#allocation2 + $0x88] sm:$0xff]
    %v1260 = vpack.c.bf16 %v1251, %v1251
    %v1262 = vsel %vm536, %v1260, 0
    %1264 = vmatprep.subr.bf16.mxu0 %v521
    %1265 = vmatpush1.bf16.msra.mxu0 %v520
    %1266 = vmatprep.subr.bf16.mxu0 %v523
    %1267 = vmatpush1.bf16.msra.mxu0 %v522
    %1268 = vmatprep.subr.bf16.mxu0 %v525
    %1269 = vmatpush1.bf16.msra.mxu0 %v524
    %1270 = vmatprep.subr.bf16.mxu0 %v527
    %1271 = vmatpush1.bf16.msra.mxu0 %v526
    %1272 = vmatprep.subr.bf16.mxu0 0
    %1273 = vmatpush1.bf16.msra.mxu0 0
    %1274 = vmatprep.subr.bf16.mxu0 0
    %1275 = vmatpush1.bf16.msra.mxu0 0
    %1276 = vmatprep.subr.bf16.mxu0 0
    %1277 = vmatpush1.bf16.msra.mxu0 0
    %1278 = vmatprep.subr.bf16.mxu0 0
    %1279 = vmatpush1.bf16.msra.mxu0 0
    %1280 = vmatprep.subr.bf16.mxu0 0
    %1281 = vmatpush1.bf16.msra.mxu0 0
    %1282 = vmatprep.subr.bf16.mxu0 0
    %1283 = vmatpush1.bf16.msra.mxu0 0
    %1284 = vmatprep.subr.bf16.mxu0 0
    %1285 = vmatpush1.bf16.msra.mxu0 0
    %1286 = vmatprep.subr.bf16.mxu0 0
    %1287 = vmatpush1.bf16.msra.mxu0 0
    %1288 = vmatprep.subr.bf16.mxu0 0
    %1289 = vmatpush1.bf16.msra.mxu0 0
    %1290 = vmatprep.subr.bf16.mxu0 0
    %1291 = vmatpush1.bf16.msra.mxu0 0
    %1292 = vmatprep.subr.bf16.mxu0 0
    %1293 = vmatpush1.bf16.msra.mxu0 0
    %1294 = vmatprep.subr.bf16.mxu0 0
    %1295 = vmatpush1.bf16.msra.mxu0 0
    %1296 = vmatprep.mubr.bf16.mxu0 0
    %1297 = vmatmul.mubr.bf16.gmra.mrb[0].mxu0 %v1262
    %v1298 = vpop.f32.mrb[0].mxu0
    %v1299 = vadd.f32 0.0, %v1298
    %v1300 = vpop.f32.mrb[0].mxu0
    %v1301 = vadd.f32 0.0, %v1300
    %v1302 = vpop.f32.mrb[0].mxu0
    %v1303 = vpop.f32.mrb[0].mxu0
    %1304 = vdwg.mxu0
    %v1305 = vadd.f32 %v1258, %v1299
    %v1306 = vadd.f32 %v1259, %v1301
    %v1307 = vxor.u32 %v1305, 2147483648
    %v1308 = vxor.u32 %v1306, 2147483648
    %v1309 = vmul.f32 %v1307, 1.442695
    %v1310 = vpow.pop %v1309
    %v1311 = vmul.f32 %v1308, 1.442695
    %v1312 = vpow.pop %v1311
    %v1313 = vadd.f32 %v1310, 1.0
    %v1314 = vadd.f32 %v1312, 1.0
    %v1315 = vrcp.pop %v1313
    %v1316 = vmul.f32 1.0, %v1315
    %v1317 = vrcp.pop %v1314
    %v1318 = vmul.f32 1.0, %v1317
    %v1319 = vtanh.pop %v1305
    %v1320 = vtanh.pop %v1306
    %1322 = vrot.lane.b32.xlu0 %v1318, 32
    %v1323 = vpop.permute.xlu0 %1322
    %v1325 = vsel %vm316, %v1316, %v1323
    %1327 = vrot.lane.b32.xlu0 %v1316, 96
    %v1328 = vpop.permute.xlu0 %1327
    %v1330 = vsel %vm316, %v1328, %v1318
    %1332 = vrot.lane.b32.xlu0 %v1319, 64
    %v1333 = vpop.permute.xlu0 %1332
    %1336 = vrot.lane.b32.xlu0 %v1320, 96
    %v1337 = vpop.permute.xlu0 %1336
    %v1339 = vsel %vm316, %v1333, %v1337
    %1340 = vrot.lane.b32.xlu0 %v1316, 32
    %v1341 = vpop.permute.xlu0 %1340
    %1343 = vrot.lane.b32.xlu0 %v1318, 64
    %v1344 = vpop.permute.xlu0 %1343
    %v1346 = vsel %vm316, %v1341, %v1344
    %v1347 = vld [vmem:[%s1 + $0x38] sm:$0xff]
    %v1348 = vmul.f32 %v1330, %v1248
    %v1349 = vmul.f32 %v1325, %v1339
    %v1350 = vadd.f32 %v1348, %v1349
    %v1351 = vmul.f32 %v1347, %v1350
    %v1352 = vtanh.pop %v1351
    %v1353 = vmul.f32 %v1346, %v1352
    %v1354 = vmul.f32 %v1347, %v1353
    %1356 = vrot.lane.b32.xlu0 %v1354, 64
    %v1357 = vpop.permute.xlu0 %1356
    %1359 = vst.msk [vmem:[#allocation3 + $0x18] sm:$0xff] %vm739, %v1357
    %1360 = vst.msk [vmem:[#allocation3 + $0x20] sm:$0xff] %vm741, %v1354
    %v1361 = vld [vmem:[#allocation2 + $0x80] sm:$0xff]
    %v1362 = vld [vmem:[#allocation2 + $0x78] sm:$0xff]
    %v1363 = vpack.c.bf16 %v1354, %v1354
    %v1365 = vsel %vm536, %v1363, 0
    %1367 = vmatprep.subr.bf16.mxu0 %v521
    %1368 = vmatpush1.bf16.msra.mxu0 %v520
    %1369 = vmatprep.subr.bf16.mxu0 %v523
    %1370 = vmatpush1.bf16.msra.mxu0 %v522
    %1371 = vmatprep.subr.bf16.mxu0 %v525
    %1372 = vmatpush1.bf16.msra.mxu0 %v524
    %1373 = vmatprep.subr.bf16.mxu0 %v527
    %1374 = vmatpush1.bf16.msra.mxu0 %v526
    %1375 = vmatprep.subr.bf16.mxu0 0
    %1376 = vmatpush1.bf16.msra.mxu0 0
    %1377 = vmatprep.subr.bf16.mxu0 0
    %1378 = vmatpush1.bf16.msra.mxu0 0
    %1379 = vmatprep.subr.bf16.mxu0 0
    %1380 = vmatpush1.bf16.msra.mxu0 0
    %1381 = vmatprep.subr.bf16.mxu0 0
    %1382 = vmatpush1.bf16.msra.mxu0 0
    %1383 = vmatprep.subr.bf16.mxu0 0
    %1384 = vmatpush1.bf16.msra.mxu0 0
    %1385 = vmatprep.subr.bf16.mxu0 0
    %1386 = vmatpush1.bf16.msra.mxu0 0
    %1387 = vmatprep.subr.bf16.mxu0 0
    %1388 = vmatpush1.bf16.msra.mxu0 0
    %1389 = vmatprep.subr.bf16.mxu0 0
    %1390 = vmatpush1.bf16.msra.mxu0 0
    %1391 = vmatprep.subr.bf16.mxu0 0
    %1392 = vmatpush1.bf16.msra.mxu0 0
    %1393 = vmatprep.subr.bf16.mxu0 0
    %1394 = vmatpush1.bf16.msra.mxu0 0
    %1395 = vmatprep.subr.bf16.mxu0 0
    %1396 = vmatpush1.bf16.msra.mxu0 0
    %1397 = vmatprep.subr.bf16.mxu0 0
    %1398 = vmatpush1.bf16.msra.mxu0 0
    %1399 = vmatprep.mubr.bf16.mxu0 0
    %1400 = vmatmul.mubr.bf16.gmra.mrb[0].mxu0 %v1365
    %v1401 = vpop.f32.mrb[0].mxu0
    %v1402 = vadd.f32 0.0, %v1401
    %v1403 = vpop.f32.mrb[0].mxu0
    %v1404 = vadd.f32 0.0, %v1403
    %v1405 = vpop.f32.mrb[0].mxu0
    %v1406 = vpop.f32.mrb[0].mxu0
    %1407 = vdwg.mxu0
    %v1408 = vadd.f32 %v1361, %v1402
    %v1409 = vadd.f32 %v1362, %v1404
    %v1410 = vxor.u32 %v1408, 2147483648
    %v1411 = vxor.u32 %v1409, 2147483648
    %v1412 = vmul.f32 %v1410, 1.442695
    %v1413 = vpow.pop %v1412
    %v1414 = vmul.f32 %v1411, 1.442695
    %v1415 = vpow.pop %v1414
    %v1416 = vadd.f32 %v1413, 1.0
    %v1417 = vadd.f32 %v1415, 1.0
    %v1418 = vrcp.pop %v1416
    %v1419 = vmul.f32 1.0, %v1418
    %v1420 = vrcp.pop %v1417
    %v1421 = vmul.f32 1.0, %v1420
    %v1422 = vtanh.pop %v1408
    %v1423 = vtanh.pop %v1409
    %1425 = vrot.lane.b32.xlu0 %v1421, 32
    %v1426 = vpop.permute.xlu0 %1425
    %v1428 = vsel %vm316, %v1419, %v1426
    %1430 = vrot.lane.b32.xlu0 %v1419, 96
    %v1431 = vpop.permute.xlu0 %1430
    %v1433 = vsel %vm316, %v1431, %v1421
    %1435 = vrot.lane.b32.xlu0 %v1422, 64
    %v1436 = vpop.permute.xlu0 %1435
    %1439 = vrot.lane.b32.xlu0 %v1423, 96
    %v1440 = vpop.permute.xlu0 %1439
    %v1442 = vsel %vm316, %v1436, %v1440
    %1443 = vrot.lane.b32.xlu0 %v1419, 32
    %v1444 = vpop.permute.xlu0 %1443
    %1446 = vrot.lane.b32.xlu0 %v1421, 64
    %v1447 = vpop.permute.xlu0 %1446
    %v1449 = vsel %vm316, %v1444, %v1447
    %v1450 = vld [vmem:[%s1 + $0x40] sm:$0xff]
    %v1451 = vmul.f32 %v1433, %v1351
    %v1452 = vmul.f32 %v1428, %v1442
    %v1453 = vadd.f32 %v1451, %v1452
    %v1454 = vmul.f32 %v1450, %v1453
    %v1455 = vtanh.pop %v1454
    %v1456 = vmul.f32 %v1449, %v1455
    %v1457 = vmul.f32 %v1450, %v1456
    %1458 = vst.msk [vmem:[#allocation3 + $0x20] sm:$0xff] %vm316, %v1457
    %1460 = vrot.lane.b32.xlu0 %v1457, 64
    %v1461 = vpop.permute.xlu0 %1460
    %1463 = vst.msk [vmem:[#allocation3 + $0x18] sm:$0xff] %vm636, %v1461
    %v1464 = vld [vmem:[#allocation2 + $0x90] sm:$0xff]
    %v1465 = vld [vmem:[#allocation2 + $0x68] sm:$0xff]
    %v1466 = vpack.c.bf16 %v1457, %v1457
    %v1468 = vsel %vm536, %v1466, 0
    %1470 = vmatprep.subr.bf16.mxu0 %v521
    %1471 = vmatpush1.bf16.msra.mxu0 %v520
    %1472 = vmatprep.subr.bf16.mxu0 %v523
    %1473 = vmatpush1.bf16.msra.mxu0 %v522
    %1474 = vmatprep.subr.bf16.mxu0 %v525
    %1475 = vmatpush1.bf16.msra.mxu0 %v524
    %1476 = vmatprep.subr.bf16.mxu0 %v527
    %1477 = vmatpush1.bf16.msra.mxu0 %v526
    %1478 = vmatprep.subr.bf16.mxu0 0
    %1479 = vmatpush1.bf16.msra.mxu0 0
    %1480 = vmatprep.subr.bf16.mxu0 0
    %1481 = vmatpush1.bf16.msra.mxu0 0
    %1482 = vmatprep.subr.bf16.mxu0 0
    %1483 = vmatpush1.bf16.msra.mxu0 0
    %1484 = vmatprep.subr.bf16.mxu0 0
    %1485 = vmatpush1.bf16.msra.mxu0 0
    %1486 = vmatprep.subr.bf16.mxu0 0
    %1487 = vmatpush1.bf16.msra.mxu0 0
    %1488 = vmatprep.subr.bf16.mxu0 0
    %1489 = vmatpush1.bf16.msra.mxu0 0
    %1490 = vmatprep.subr.bf16.mxu0 0
    %1491 = vmatpush1.bf16.msra.mxu0 0
    %1492 = vmatprep.subr.bf16.mxu0 0
    %1493 = vmatpush1.bf16.msra.mxu0 0
    %1494 = vmatprep.subr.bf16.mxu0 0
    %1495 = vmatpush1.bf16.msra.mxu0 0
    %1496 = vmatprep.subr.bf16.mxu0 0
    %1497 = vmatpush1.bf16.msra.mxu0 0
    %1498 = vmatprep.subr.bf16.mxu0 0
    %1499 = vmatpush1.bf16.msra.mxu0 0
    %1500 = vmatprep.subr.bf16.mxu0 0
    %1501 = vmatpush1.bf16.msra.mxu0 0
    %1502 = vmatprep.mubr.bf16.mxu0 0
    %1503 = vmatmul.mubr.bf16.gmra.mrb[0].mxu0 %v1468
    %v1504 = vpop.f32.mrb[0].mxu0
    %v1505 = vadd.f32 0.0, %v1504
    %v1506 = vpop.f32.mrb[0].mxu0
    %v1507 = vadd.f32 0.0, %v1506
    %v1508 = vpop.f32.mrb[0].mxu0
    %v1509 = vpop.f32.mrb[0].mxu0
    %1510 = vdwg.mxu0
    %v1511 = vadd.f32 %v1464, %v1505
    %v1512 = vadd.f32 %v1465, %v1507
    %v1513 = vxor.u32 %v1511, 2147483648
    %v1514 = vxor.u32 %v1512, 2147483648
    %v1515 = vmul.f32 %v1513, 1.442695
    %v1516 = vpow.pop %v1515
    %v1517 = vmul.f32 %v1514, 1.442695
    %v1518 = vpow.pop %v1517
    %v1519 = vadd.f32 %v1516, 1.0
    %v1520 = vadd.f32 %v1518, 1.0
    %v1521 = vrcp.pop %v1519
    %v1522 = vmul.f32 1.0, %v1521
    %v1523 = vrcp.pop %v1520
    %v1524 = vmul.f32 1.0, %v1523
    %v1525 = vtanh.pop %v1511
    %v1526 = vtanh.pop %v1512
    %1528 = vrot.lane.b32.xlu0 %v1524, 32
    %v1529 = vpop.permute.xlu0 %1528
    %v1531 = vsel %vm316, %v1522, %v1529
    %1533 = vrot.lane.b32.xlu0 %v1522, 96
    %v1534 = vpop.permute.xlu0 %1533
    %v1536 = vsel %vm316, %v1534, %v1524
    %1538 = vrot.lane.b32.xlu0 %v1525, 64
    %v1539 = vpop.permute.xlu0 %1538
    %1542 = vrot.lane.b32.xlu0 %v1526, 96
    %v1543 = vpop.permute.xlu0 %1542
    %v1545 = vsel %vm316, %v1539, %v1543
    %1546 = vrot.lane.b32.xlu0 %v1522, 32
    %v1547 = vpop.permute.xlu0 %1546
    %1549 = vrot.lane.b32.xlu0 %v1524, 64
    %v1550 = vpop.permute.xlu0 %1549
    %v1552 = vsel %vm316, %v1547, %v1550
    %v1553 = vld [vmem:[%s1 + $0x48] sm:$0xff]
    %v1554 = vmul.f32 %v1536, %v1454
    %v1555 = vmul.f32 %v1531, %v1545
    %v1556 = vadd.f32 %v1554, %v1555
    %v1557 = vmul.f32 %v1553, %v1556
    %v1558 = vtanh.pop %v1557
    %v1559 = vmul.f32 %v1552, %v1558
    %v1560 = vmul.f32 %v1553, %v1559
    %1562 = vrot.lane.b32.xlu0 %v1560, 64
    %v1563 = vpop.permute.xlu0 %1562
    %1565 = vst.msk [vmem:[#allocation3 + $0x20] sm:$0xff] %vm739, %v1563
    %1566 = vst.msk [vmem:[#allocation3 + $0x18] sm:$0xff] %vm741, %v1560
    %v1567 = vld [vmem:[#allocation2 + $0xa0] sm:$0xff]
    %v1568 = vld [vmem:[#allocation2 + $0x58] sm:$0xff]
    %v1569 = vpack.c.bf16 %v1560, %v1560
    %v1571 = vsel %vm536, %v1569, 0
    %1573 = vmatprep.subr.bf16.mxu0 %v521
    %1574 = vmatpush1.bf16.msra.mxu0 %v520
    %1575 = vmatprep.subr.bf16.mxu0 %v523
    %1576 = vmatpush1.bf16.msra.mxu0 %v522
    %1577 = vmatprep.subr.bf16.mxu0 %v525
    %1578 = vmatpush1.bf16.msra.mxu0 %v524
    %1579 = vmatprep.subr.bf16.mxu0 %v527
    %1580 = vmatpush1.bf16.msra.mxu0 %v526
    %1581 = vmatprep.subr.bf16.mxu0 0
    %1582 = vmatpush1.bf16.msra.mxu0 0
    %1583 = vmatprep.subr.bf16.mxu0 0
    %1584 = vmatpush1.bf16.msra.mxu0 0
    %1585 = vmatprep.subr.bf16.mxu0 0
    %1586 = vmatpush1.bf16.msra.mxu0 0
    %1587 = vmatprep.subr.bf16.mxu0 0
    %1588 = vmatpush1.bf16.msra.mxu0 0
    %1589 = vmatprep.subr.bf16.mxu0 0
    %1590 = vmatpush1.bf16.msra.mxu0 0
    %1591 = vmatprep.subr.bf16.mxu0 0
    %1592 = vmatpush1.bf16.msra.mxu0 0
    %1593 = vmatprep.subr.bf16.mxu0 0
    %1594 = vmatpush1.bf16.msra.mxu0 0
    %1595 = vmatprep.subr.bf16.mxu0 0
    %1596 = vmatpush1.bf16.msra.mxu0 0
    %1597 = vmatprep.subr.bf16.mxu0 0
    %1598 = vmatpush1.bf16.msra.mxu0 0
    %1599 = vmatprep.subr.bf16.mxu0 0
    %1600 = vmatpush1.bf16.msra.mxu0 0
    %1601 = vmatprep.subr.bf16.mxu0 0
    %1602 = vmatpush1.bf16.msra.mxu0 0
    %1603 = vmatprep.subr.bf16.mxu0 0
    %1604 = vmatpush1.bf16.msra.mxu0 0
    %1605 = vmatprep.mubr.bf16.mxu0 0
    %1606 = vmatmul.mubr.bf16.gmra.mrb[0].mxu0 %v1571
    %v1607 = vpop.f32.mrb[0].mxu0
    %v1608 = vadd.f32 0.0, %v1607
    %v1609 = vpop.f32.mrb[0].mxu0
    %v1610 = vadd.f32 0.0, %v1609
    %v1611 = vpop.f32.mrb[0].mxu0
    %v1612 = vpop.f32.mrb[0].mxu0
    %1613 = vdwg.mxu0
    %v1614 = vadd.f32 %v1567, %v1608
    %v1615 = vadd.f32 %v1568, %v1610
    %v1616 = vxor.u32 %v1614, 2147483648
    %v1617 = vxor.u32 %v1615, 2147483648
    %v1618 = vmul.f32 %v1616, 1.442695
    %v1619 = vpow.pop %v1618
    %v1620 = vmul.f32 %v1617, 1.442695
    %v1621 = vpow.pop %v1620
    %v1622 = vadd.f32 %v1619, 1.0
    %v1623 = vadd.f32 %v1621, 1.0
    %v1624 = vrcp.pop %v1622
    %v1625 = vmul.f32 1.0, %v1624
    %v1626 = vrcp.pop %v1623
    %v1627 = vmul.f32 1.0, %v1626
    %v1628 = vtanh.pop %v1614
    %v1629 = vtanh.pop %v1615
    %1631 = vrot.lane.b32.xlu0 %v1627, 32
    %v1632 = vpop.permute.xlu0 %1631
    %v1634 = vsel %vm316, %v1625, %v1632
    %1636 = vrot.lane.b32.xlu0 %v1625, 96
    %v1637 = vpop.permute.xlu0 %1636
    %v1639 = vsel %vm316, %v1637, %v1627
    %1641 = vrot.lane.b32.xlu0 %v1628, 64
    %v1642 = vpop.permute.xlu0 %1641
    %1645 = vrot.lane.b32.xlu0 %v1629, 96
    %v1646 = vpop.permute.xlu0 %1645
    %v1648 = vsel %vm316, %v1642, %v1646
    %1649 = vrot.lane.b32.xlu0 %v1625, 32
    %v1650 = vpop.permute.xlu0 %1649
    %1652 = vrot.lane.b32.xlu0 %v1627, 64
    %v1653 = vpop.permute.xlu0 %1652
    %v1655 = vsel %vm316, %v1650, %v1653
    %v1656 = vld [vmem:[%s1 + $0x50] sm:$0xff]
    %v1657 = vmul.f32 %v1639, %v1557
    %v1658 = vmul.f32 %v1634, %v1648
    %v1659 = vadd.f32 %v1657, %v1658
    %v1660 = vmul.f32 %v1656, %v1659
    %v1661 = vtanh.pop %v1660
    %v1662 = vmul.f32 %v1655, %v1661
    %v1663 = vmul.f32 %v1656, %v1662
    %1664 = vst.msk [vmem:[#allocation3 + $0x28] sm:$0xff] %vm316, %v1663
    %1666 = vrot.lane.b32.xlu0 %v1663, 64
    %v1667 = vpop.permute.xlu0 %1666
    %1669 = vst.msk [vmem:[#allocation3 + $0x10] sm:$0xff] %vm636, %v1667
    %v1670 = vld [vmem:[#allocation2 + $0xb0] sm:$0xff]
    %v1671 = vld [vmem:[#allocation2 + $0x48] sm:$0xff]
    %v1672 = vpack.c.bf16 %v1663, %v1663
    %v1674 = vsel %vm536, %v1672, 0
    %1676 = vmatprep.subr.bf16.mxu0 %v521
    %1677 = vmatpush1.bf16.msra.mxu0 %v520
    %1678 = vmatprep.subr.bf16.mxu0 %v523
    %1679 = vmatpush1.bf16.msra.mxu0 %v522
    %1680 = vmatprep.subr.bf16.mxu0 %v525
    %1681 = vmatpush1.bf16.msra.mxu0 %v524
    %1682 = vmatprep.subr.bf16.mxu0 %v527
    %1683 = vmatpush1.bf16.msra.mxu0 %v526
    %1684 = vmatprep.subr.bf16.mxu0 0
    %1685 = vmatpush1.bf16.msra.mxu0 0
    %1686 = vmatprep.subr.bf16.mxu0 0
    %1687 = vmatpush1.bf16.msra.mxu0 0
    %1688 = vmatprep.subr.bf16.mxu0 0
    %1689 = vmatpush1.bf16.msra.mxu0 0
    %1690 = vmatprep.subr.bf16.mxu0 0
    %1691 = vmatpush1.bf16.msra.mxu0 0
    %1692 = vmatprep.subr.bf16.mxu0 0
    %1693 = vmatpush1.bf16.msra.mxu0 0
    %1694 = vmatprep.subr.bf16.mxu0 0
    %1695 = vmatpush1.bf16.msra.mxu0 0
    %1696 = vmatprep.subr.bf16.mxu0 0
    %1697 = vmatpush1.bf16.msra.mxu0 0
    %1698 = vmatprep.subr.bf16.mxu0 0
    %1699 = vmatpush1.bf16.msra.mxu0 0
    %1700 = vmatprep.subr.bf16.mxu0 0
    %1701 = vmatpush1.bf16.msra.mxu0 0
    %1702 = vmatprep.subr.bf16.mxu0 0
    %1703 = vmatpush1.bf16.msra.mxu0 0
    %1704 = vmatprep.subr.bf16.mxu0 0
    %1705 = vmatpush1.bf16.msra.mxu0 0
    %1706 = vmatprep.subr.bf16.mxu0 0
    %1707 = vmatpush1.bf16.msra.mxu0 0
    %1708 = vmatprep.mubr.bf16.mxu0 0
    %1709 = vmatmul.mubr.bf16.gmra.mrb[0].mxu0 %v1674
    %v1710 = vpop.f32.mrb[0].mxu0
    %v1711 = vadd.f32 0.0, %v1710
    %v1712 = vpop.f32.mrb[0].mxu0
    %v1713 = vadd.f32 0.0, %v1712
    %v1714 = vpop.f32.mrb[0].mxu0
    %v1715 = vpop.f32.mrb[0].mxu0
    %1716 = vdwg.mxu0
    %v1717 = vadd.f32 %v1670, %v1711
    %v1718 = vadd.f32 %v1671, %v1713
    %v1719 = vxor.u32 %v1717, 2147483648
    %v1720 = vxor.u32 %v1718, 2147483648
    %v1721 = vmul.f32 %v1719, 1.442695
    %v1722 = vpow.pop %v1721
    %v1723 = vmul.f32 %v1720, 1.442695
    %v1724 = vpow.pop %v1723
    %v1725 = vadd.f32 %v1722, 1.0
    %v1726 = vadd.f32 %v1724, 1.0
    %v1727 = vrcp.pop %v1725
    %v1728 = vmul.f32 1.0, %v1727
    %v1729 = vrcp.pop %v1726
    %v1730 = vmul.f32 1.0, %v1729
    %v1731 = vtanh.pop %v1717
    %v1732 = vtanh.pop %v1718
    %1734 = vrot.lane.b32.xlu0 %v1730, 32
    %v1735 = vpop.permute.xlu0 %1734
    %v1737 = vsel %vm316, %v1728, %v1735
    %1739 = vrot.lane.b32.xlu0 %v1728, 96
    %v1740 = vpop.permute.xlu0 %1739
    %v1742 = vsel %vm316, %v1740, %v1730
    %1744 = vrot.lane.b32.xlu0 %v1731, 64
    %v1745 = vpop.permute.xlu0 %1744
    %1748 = vrot.lane.b32.xlu0 %v1732, 96
    %v1749 = vpop.permute.xlu0 %1748
    %v1751 = vsel %vm316, %v1745, %v1749
    %1752 = vrot.lane.b32.xlu0 %v1728, 32
    %v1753 = vpop.permute.xlu0 %1752
    %1755 = vrot.lane.b32.xlu0 %v1730, 64
    %v1756 = vpop.permute.xlu0 %1755
    %v1758 = vsel %vm316, %v1753, %v1756
    %v1759 = vld [vmem:[%s1 + $0x58] sm:$0xff]
    %v1760 = vmul.f32 %v1742, %v1660
    %v1761 = vmul.f32 %v1737, %v1751
    %v1762 = vadd.f32 %v1760, %v1761
    %v1763 = vmul.f32 %v1759, %v1762
    %v1764 = vtanh.pop %v1763
    %v1765 = vmul.f32 %v1758, %v1764
    %v1766 = vmul.f32 %v1759, %v1765
    %1768 = vrot.lane.b32.xlu0 %v1766, 64
    %v1769 = vpop.permute.xlu0 %1768
    %1771 = vst.msk [vmem:[#allocation3 + $0x28] sm:$0xff] %vm739, %v1769
    %1772 = vst.msk [vmem:[#allocation3 + $0x10] sm:$0xff] %vm741, %v1766
    %v1773 = vld [vmem:[#allocation2 + $0xc0] sm:$0xff]
    %v1774 = vld [vmem:[#allocation2 + $0x38] sm:$0xff]
    %v1775 = vpack.c.bf16 %v1766, %v1766
    %v1777 = vsel %vm536, %v1775, 0
    %1779 = vmatprep.subr.bf16.mxu0 %v521
    %1780 = vmatpush1.bf16.msra.mxu0 %v520
    %1781 = vmatprep.subr.bf16.mxu0 %v523
    %1782 = vmatpush1.bf16.msra.mxu0 %v522
    %1783 = vmatprep.subr.bf16.mxu0 %v525
    %1784 = vmatpush1.bf16.msra.mxu0 %v524
    %1785 = vmatprep.subr.bf16.mxu0 %v527
    %1786 = vmatpush1.bf16.msra.mxu0 %v526
    %1787 = vmatprep.subr.bf16.mxu0 0
    %1788 = vmatpush1.bf16.msra.mxu0 0
    %1789 = vmatprep.subr.bf16.mxu0 0
    %1790 = vmatpush1.bf16.msra.mxu0 0
    %1791 = vmatprep.subr.bf16.mxu0 0
    %1792 = vmatpush1.bf16.msra.mxu0 0
    %1793 = vmatprep.subr.bf16.mxu0 0
    %1794 = vmatpush1.bf16.msra.mxu0 0
    %1795 = vmatprep.subr.bf16.mxu0 0
    %1796 = vmatpush1.bf16.msra.mxu0 0
    %1797 = vmatprep.subr.bf16.mxu0 0
    %1798 = vmatpush1.bf16.msra.mxu0 0
    %1799 = vmatprep.subr.bf16.mxu0 0
    %1800 = vmatpush1.bf16.msra.mxu0 0
    %1801 = vmatprep.subr.bf16.mxu0 0
    %1802 = vmatpush1.bf16.msra.mxu0 0
    %1803 = vmatprep.subr.bf16.mxu0 0
    %1804 = vmatpush1.bf16.msra.mxu0 0
    %1805 = vmatprep.subr.bf16.mxu0 0
    %1806 = vmatpush1.bf16.msra.mxu0 0
    %1807 = vmatprep.subr.bf16.mxu0 0
    %1808 = vmatpush1.bf16.msra.mxu0 0
    %1809 = vmatprep.subr.bf16.mxu0 0
    %1810 = vmatpush1.bf16.msra.mxu0 0
    %1811 = vmatprep.mubr.bf16.mxu0 0
    %1812 = vmatmul.mubr.bf16.gmra.mrb[0].mxu0 %v1777
    %v1813 = vpop.f32.mrb[0].mxu0
    %v1814 = vadd.f32 0.0, %v1813
    %v1815 = vpop.f32.mrb[0].mxu0
    %v1816 = vadd.f32 0.0, %v1815
    %v1817 = vpop.f32.mrb[0].mxu0
    %v1818 = vpop.f32.mrb[0].mxu0
    %1819 = vdwg.mxu0
    %v1820 = vadd.f32 %v1773, %v1814
    %v1821 = vadd.f32 %v1774, %v1816
    %v1822 = vxor.u32 %v1820, 2147483648
    %v1823 = vxor.u32 %v1821, 2147483648
    %v1824 = vmul.f32 %v1822, 1.442695
    %v1825 = vpow.pop %v1824
    %v1826 = vmul.f32 %v1823, 1.442695
    %v1827 = vpow.pop %v1826
    %v1828 = vadd.f32 %v1825, 1.0
    %v1829 = vadd.f32 %v1827, 1.0
    %v1830 = vrcp.pop %v1828
    %v1831 = vmul.f32 1.0, %v1830
    %v1832 = vrcp.pop %v1829
    %v1833 = vmul.f32 1.0, %v1832
    %v1834 = vtanh.pop %v1820
    %v1835 = vtanh.pop %v1821
    %1837 = vrot.lane.b32.xlu0 %v1833, 32
    %v1838 = vpop.permute.xlu0 %1837
    %v1840 = vsel %vm316, %v1831, %v1838
    %1842 = vrot.lane.b32.xlu0 %v1831, 96
    %v1843 = vpop.permute.xlu0 %1842
    %v1845 = vsel %vm316, %v1843, %v1833
    %1847 = vrot.lane.b32.xlu0 %v1834, 64
    %v1848 = vpop.permute.xlu0 %1847
    %1851 = vrot.lane.b32.xlu0 %v1835, 96
    %v1852 = vpop.permute.xlu0 %1851
    %v1854 = vsel %vm316, %v1848, %v1852
    %1855 = vrot.lane.b32.xlu0 %v1831, 32
    %v1856 = vpop.permute.xlu0 %1855
    %1858 = vrot.lane.b32.xlu0 %v1833, 64
    %v1859 = vpop.permute.xlu0 %1858
    %v1861 = vsel %vm316, %v1856, %v1859
    %v1862 = vld [vmem:[%s1 + $0x60] sm:$0xff]
    %v1863 = vmul.f32 %v1845, %v1763
    %v1864 = vmul.f32 %v1840, %v1854
    %v1865 = vadd.f32 %v1863, %v1864
    %v1866 = vmul.f32 %v1862, %v1865
    %v1867 = vtanh.pop %v1866
    %v1868 = vmul.f32 %v1861, %v1867
    %v1869 = vmul.f32 %v1862, %v1868
    %1870 = vst.msk [vmem:[#allocation3 + $0x30] sm:$0xff] %vm316, %v1869
    %1872 = vrot.lane.b32.xlu0 %v1869, 64
    %v1873 = vpop.permute.xlu0 %1872
    %1875 = vst.msk [vmem:[#allocation3 + $0x8] sm:$0xff] %vm636, %v1873
    %v1876 = vld [vmem:[#allocation2 + $0xd0] sm:$0xff]
    %v1877 = vld [vmem:[#allocation2 + $0x28] sm:$0xff]
    %v1878 = vpack.c.bf16 %v1869, %v1869
    %v1880 = vsel %vm536, %v1878, 0
    %1882 = vmatprep.subr.bf16.mxu0 %v521
    %1883 = vmatpush1.bf16.msra.mxu0 %v520
    %1884 = vmatprep.subr.bf16.mxu0 %v523
    %1885 = vmatpush1.bf16.msra.mxu0 %v522
    %1886 = vmatprep.subr.bf16.mxu0 %v525
    %1887 = vmatpush1.bf16.msra.mxu0 %v524
    %1888 = vmatprep.subr.bf16.mxu0 %v527
    %1889 = vmatpush1.bf16.msra.mxu0 %v526
    %1890 = vmatprep.subr.bf16.mxu0 0
    %1891 = vmatpush1.bf16.msra.mxu0 0
    %1892 = vmatprep.subr.bf16.mxu0 0
    %1893 = vmatpush1.bf16.msra.mxu0 0
    %1894 = vmatprep.subr.bf16.mxu0 0
    %1895 = vmatpush1.bf16.msra.mxu0 0
    %1896 = vmatprep.subr.bf16.mxu0 0
    %1897 = vmatpush1.bf16.msra.mxu0 0
    %1898 = vmatprep.subr.bf16.mxu0 0
    %1899 = vmatpush1.bf16.msra.mxu0 0
    %1900 = vmatprep.subr.bf16.mxu0 0
    %1901 = vmatpush1.bf16.msra.mxu0 0
    %1902 = vmatprep.subr.bf16.mxu0 0
    %1903 = vmatpush1.bf16.msra.mxu0 0
    %1904 = vmatprep.subr.bf16.mxu0 0
    %1905 = vmatpush1.bf16.msra.mxu0 0
    %1906 = vmatprep.subr.bf16.mxu0 0
    %1907 = vmatpush1.bf16.msra.mxu0 0
    %1908 = vmatprep.subr.bf16.mxu0 0
    %1909 = vmatpush1.bf16.msra.mxu0 0
    %1910 = vmatprep.subr.bf16.mxu0 0
    %1911 = vmatpush1.bf16.msra.mxu0 0
    %1912 = vmatprep.subr.bf16.mxu0 0
    %1913 = vmatpush1.bf16.msra.mxu0 0
    %1914 = vmatprep.mubr.bf16.mxu0 0
    %1915 = vmatmul.mubr.bf16.gmra.mrb[0].mxu0 %v1880
    %v1916 = vpop.f32.mrb[0].mxu0
    %v1917 = vadd.f32 0.0, %v1916
    %v1918 = vpop.f32.mrb[0].mxu0
    %v1919 = vadd.f32 0.0, %v1918
    %v1920 = vpop.f32.mrb[0].mxu0
    %v1921 = vpop.f32.mrb[0].mxu0
    %1922 = vdwg.mxu0
    %v1923 = vadd.f32 %v1876, %v1917
    %v1924 = vadd.f32 %v1877, %v1919
    %v1925 = vxor.u32 %v1923, 2147483648
    %v1926 = vxor.u32 %v1924, 2147483648
    %v1927 = vmul.f32 %v1925, 1.442695
    %v1928 = vpow.pop %v1927
    %v1929 = vmul.f32 %v1926, 1.442695
    %v1930 = vpow.pop %v1929
    %v1931 = vadd.f32 %v1928, 1.0
    %v1932 = vadd.f32 %v1930, 1.0
    %v1933 = vrcp.pop %v1931
    %v1934 = vmul.f32 1.0, %v1933
    %v1935 = vrcp.pop %v1932
    %v1936 = vmul.f32 1.0, %v1935
    %v1937 = vtanh.pop %v1923
    %v1938 = vtanh.pop %v1924
    %1940 = vrot.lane.b32.xlu0 %v1936, 32
    %v1941 = vpop.permute.xlu0 %1940
    %v1943 = vsel %vm316, %v1934, %v1941
    %1945 = vrot.lane.b32.xlu0 %v1934, 96
    %v1946 = vpop.permute.xlu0 %1945
    %v1948 = vsel %vm316, %v1946, %v1936
    %1950 = vrot.lane.b32.xlu0 %v1937, 64
    %v1951 = vpop.permute.xlu0 %1950
    %1954 = vrot.lane.b32.xlu0 %v1938, 96
    %v1955 = vpop.permute.xlu0 %1954
    %v1957 = vsel %vm316, %v1951, %v1955
    %1958 = vrot.lane.b32.xlu0 %v1934, 32
    %v1959 = vpop.permute.xlu0 %1958
    %1961 = vrot.lane.b32.xlu0 %v1936, 64
    %v1962 = vpop.permute.xlu0 %1961
    %v1964 = vsel %vm316, %v1959, %v1962
    %v1965 = vld [vmem:[%s1 + $0x68] sm:$0xff]
    %v1966 = vmul.f32 %v1948, %v1866
    %v1967 = vmul.f32 %v1943, %v1957
    %v1968 = vadd.f32 %v1966, %v1967
    %v1969 = vmul.f32 %v1965, %v1968
    %v1970 = vtanh.pop %v1969
    %v1971 = vmul.f32 %v1964, %v1970
    %v1972 = vmul.f32 %v1965, %v1971
    %1974 = vrot.lane.b32.xlu0 %v1972, 64
    %v1975 = vpop.permute.xlu0 %1974
    %1977 = vst.msk [vmem:[#allocation3 + $0x30] sm:$0xff] %vm739, %v1975
    %1978 = vst.msk [vmem:[#allocation3 + $0x8] sm:$0xff] %vm741, %v1972
    %v1979 = vld [vmem:[#allocation2 + $0xe0] sm:$0xff]
    %v1980 = vld [vmem:[#allocation2 + $0x18] sm:$0xff]
    %v1981 = vpack.c.bf16 %v1972, %v1972
    %v1983 = vsel %vm536, %v1981, 0
    %1985 = vmatprep.subr.bf16.mxu0 %v521
    %1986 = vmatpush1.bf16.msra.mxu0 %v520
    %1987 = vmatprep.subr.bf16.mxu0 %v523
    %1988 = vmatpush1.bf16.msra.mxu0 %v522
    %1989 = vmatprep.subr.bf16.mxu0 %v525
    %1990 = vmatpush1.bf16.msra.mxu0 %v524
    %1991 = vmatprep.subr.bf16.mxu0 %v527
    %1992 = vmatpush1.bf16.msra.mxu0 %v526
    %1993 = vmatprep.subr.bf16.mxu0 0
    %1994 = vmatpush1.bf16.msra.mxu0 0
    %1995 = vmatprep.subr.bf16.mxu0 0
    %1996 = vmatpush1.bf16.msra.mxu0 0
    %1997 = vmatprep.subr.bf16.mxu0 0
    %1998 = vmatpush1.bf16.msra.mxu0 0
    %1999 = vmatprep.subr.bf16.mxu0 0
    %2000 = vmatpush1.bf16.msra.mxu0 0
    %2001 = vmatprep.subr.bf16.mxu0 0
    %2002 = vmatpush1.bf16.msra.mxu0 0
    %2003 = vmatprep.subr.bf16.mxu0 0
    %2004 = vmatpush1.bf16.msra.mxu0 0
    %2005 = vmatprep.subr.bf16.mxu0 0
    %2006 = vmatpush1.bf16.msra.mxu0 0
    %2007 = vmatprep.subr.bf16.mxu0 0
    %2008 = vmatpush1.bf16.msra.mxu0 0
    %2009 = vmatprep.subr.bf16.mxu0 0
    %2010 = vmatpush1.bf16.msra.mxu0 0
    %2011 = vmatprep.subr.bf16.mxu0 0
    %2012 = vmatpush1.bf16.msra.mxu0 0
    %2013 = vmatprep.subr.bf16.mxu0 0
    %2014 = vmatpush1.bf16.msra.mxu0 0
    %2015 = vmatprep.subr.bf16.mxu0 0
    %2016 = vmatpush1.bf16.msra.mxu0 0
    %2017 = vmatprep.mubr.bf16.mxu0 0
    %2018 = vmatmul.mubr.bf16.gmra.mrb[0].mxu0 %v1983
    %v2019 = vpop.f32.mrb[0].mxu0
    %v2020 = vadd.f32 0.0, %v2019
    %v2021 = vpop.f32.mrb[0].mxu0
    %v2022 = vadd.f32 0.0, %v2021
    %v2023 = vpop.f32.mrb[0].mxu0
    %v2024 = vpop.f32.mrb[0].mxu0
    %2025 = vdwg.mxu0
    %v2026 = vadd.f32 %v1979, %v2020
    %v2027 = vadd.f32 %v1980, %v2022
    %v2028 = vxor.u32 %v2026, 2147483648
    %v2029 = vxor.u32 %v2027, 2147483648
    %v2030 = vmul.f32 %v2028, 1.442695
    %v2031 = vpow.pop %v2030
    %v2032 = vmul.f32 %v2029, 1.442695
    %v2033 = vpow.pop %v2032
    %v2034 = vadd.f32 %v2031, 1.0
    %v2035 = vadd.f32 %v2033, 1.0
    %v2036 = vrcp.pop %v2034
    %v2037 = vmul.f32 1.0, %v2036
    %v2038 = vrcp.pop %v2035
    %v2039 = vmul.f32 1.0, %v2038
    %v2040 = vtanh.pop %v2026
    %v2041 = vtanh.pop %v2027
    %2043 = vrot.lane.b32.xlu0 %v2039, 32
    %v2044 = vpop.permute.xlu0 %2043
    %v2046 = vsel %vm316, %v2037, %v2044
    %2048 = vrot.lane.b32.xlu0 %v2037, 96
    %v2049 = vpop.permute.xlu0 %2048
    %v2051 = vsel %vm316, %v2049, %v2039
    %2053 = vrot.lane.b32.xlu0 %v2040, 64
    %v2054 = vpop.permute.xlu0 %2053
    %2057 = vrot.lane.b32.xlu0 %v2041, 96
    %v2058 = vpop.permute.xlu0 %2057
    %v2060 = vsel %vm316, %v2054, %v2058
    %2061 = vrot.lane.b32.xlu0 %v2037, 32
    %v2062 = vpop.permute.xlu0 %2061
    %2064 = vrot.lane.b32.xlu0 %v2039, 64
    %v2065 = vpop.permute.xlu0 %2064
    %v2067 = vsel %vm316, %v2062, %v2065
    %v2068 = vld [vmem:[%s1 + $0x70] sm:$0xff]
    %v2069 = vmul.f32 %v2051, %v1969
    %v2070 = vmul.f32 %v2046, %v2060
    %v2071 = vadd.f32 %v2069, %v2070
    %v2072 = vmul.f32 %v2068, %v2071
    %v2073 = vtanh.pop %v2072
    %v2074 = vmul.f32 %v2067, %v2073
    %v2075 = vmul.f32 %v2068, %v2074
    %2076 = vst.msk [vmem:[#allocation3 + $0x38] sm:$0xff] %vm316, %v2075
    %2078 = vrot.lane.b32.xlu0 %v2075, 64
    %v2079 = vpop.permute.xlu0 %2078
    %2081 = vst.msk [vmem:[#allocation3] sm:$0xff] %vm636, %v2079
    %v2082 = vld [vmem:[#allocation2 + $0xf0] sm:$0xff]
    %v2083 = vld [vmem:[#allocation2 + $0x8] sm:$0xff]
    %v2084 = vpack.c.bf16 %v2075, %v2075
    %v2086 = vsel %vm536, %v2084, 0
    %2088 = vmatprep.subr.bf16.mxu0 %v521
    %2089 = vmatpush1.bf16.msra.mxu0 %v520
    %2090 = vmatprep.subr.bf16.mxu0 %v523
    %2091 = vmatpush1.bf16.msra.mxu0 %v522
    %2092 = vmatprep.subr.bf16.mxu0 %v525
    %2093 = vmatpush1.bf16.msra.mxu0 %v524
    %2094 = vmatprep.subr.bf16.mxu0 %v527
    %2095 = vmatpush1.bf16.msra.mxu0 %v526
    %2096 = vmatprep.subr.bf16.mxu0 0
    %2097 = vmatpush1.bf16.msra.mxu0 0
    %2098 = vmatprep.subr.bf16.mxu0 0
    %2099 = vmatpush1.bf16.msra.mxu0 0
    %2100 = vmatprep.subr.bf16.mxu0 0
    %2101 = vmatpush1.bf16.msra.mxu0 0
    %2102 = vmatprep.subr.bf16.mxu0 0
    %2103 = vmatpush1.bf16.msra.mxu0 0
    %2104 = vmatprep.subr.bf16.mxu0 0
    %2105 = vmatpush1.bf16.msra.mxu0 0
    %2106 = vmatprep.subr.bf16.mxu0 0
    %2107 = vmatpush1.bf16.msra.mxu0 0
    %2108 = vmatprep.subr.bf16.mxu0 0
    %2109 = vmatpush1.bf16.msra.mxu0 0
    %2110 = vmatprep.subr.bf16.mxu0 0
    %2111 = vmatpush1.bf16.msra.mxu0 0
    %2112 = vmatprep.subr.bf16.mxu0 0
    %2113 = vmatpush1.bf16.msra.mxu0 0
    %2114 = vmatprep.subr.bf16.mxu0 0
    %2115 = vmatpush1.bf16.msra.mxu0 0
    %2116 = vmatprep.subr.bf16.mxu0 0
    %2117 = vmatpush1.bf16.msra.mxu0 0
    %2118 = vmatprep.subr.bf16.mxu0 0
    %2119 = vmatpush1.bf16.msra.mxu0 0
    %2120 = vmatprep.mubr.bf16.mxu0 0
    %2121 = vmatmul.mubr.bf16.gmra.mrb[0].mxu0 %v2086
    %v2122 = vpop.f32.mrb[0].mxu0
    %v2123 = vadd.f32 0.0, %v2122
    %v2124 = vpop.f32.mrb[0].mxu0
    %v2125 = vadd.f32 0.0, %v2124
    %v2126 = vpop.f32.mrb[0].mxu0
    %v2127 = vpop.f32.mrb[0].mxu0
    %2128 = vdwg.mxu0
    %v2129 = vadd.f32 %v2082, %v2123
    %v2130 = vadd.f32 %v2083, %v2125
    %v2131 = vxor.u32 %v2129, 2147483648
    %v2132 = vxor.u32 %v2130, 2147483648
    %v2133 = vmul.f32 %v2131, 1.442695
    %v2134 = vpow.pop %v2133
    %v2135 = vmul.f32 %v2132, 1.442695
    %v2136 = vpow.pop %v2135
    %v2137 = vadd.f32 %v2134, 1.0
    %v2138 = vadd.f32 %v2136, 1.0
    %v2139 = vrcp.pop %v2137
    %v2140 = vmul.f32 1.0, %v2139
    %v2141 = vrcp.pop %v2138
    %v2142 = vmul.f32 1.0, %v2141
    %v2143 = vtanh.pop %v2129
    %v2144 = vtanh.pop %v2130
    %2146 = vrot.lane.b32.xlu0 %v2142, 32
    %v2147 = vpop.permute.xlu0 %2146
    %v2149 = vsel %vm316, %v2140, %v2147
    %2151 = vrot.lane.b32.xlu0 %v2140, 96
    %v2152 = vpop.permute.xlu0 %2151
    %v2154 = vsel %vm316, %v2152, %v2142
    %2156 = vrot.lane.b32.xlu0 %v2143, 64
    %v2157 = vpop.permute.xlu0 %2156
    %2160 = vrot.lane.b32.xlu0 %v2144, 96
    %v2161 = vpop.permute.xlu0 %2160
    %v2163 = vsel %vm316, %v2157, %v2161
    %2164 = vrot.lane.b32.xlu0 %v2140, 32
    %v2165 = vpop.permute.xlu0 %2164
    %2167 = vrot.lane.b32.xlu0 %v2142, 64
    %v2168 = vpop.permute.xlu0 %2167
    %v2170 = vsel %vm316, %v2165, %v2168
    %v2171 = vld [vmem:[%s1 + $0x78] sm:$0xff]
    %v2172 = vmul.f32 %v2154, %v2072
    %v2173 = vmul.f32 %v2149, %v2163
    %v2174 = vadd.f32 %v2172, %v2173
    %v2175 = vmul.f32 %v2171, %v2174
    %v2176 = vtanh.pop %v2175
    %v2177 = vmul.f32 %v2170, %v2176
    %v2178 = vmul.f32 %v2171, %v2177
    %2180 = vrot.lane.b32.xlu0 %v2178, 64
    %v2181 = vpop.permute.xlu0 %2180
    %2183 = vst.msk [vmem:[#allocation3 + $0x38] sm:$0xff] %vm739, %v2181
    %2184 = vst.msk [vmem:[#allocation3] sm:$0xff] %vm741, %v2178
    %v2185 = vld [vmem:[#allocation3] sm:$0xff]
    %v2186 = vld [vmem:[#allocation3 + $0x8] sm:$0xff]
    %v2187 = vld [vmem:[#allocation3 + $0x10] sm:$0xff]
    %v2188 = vld [vmem:[#allocation3 + $0x18] sm:$0xff]
    %v2189 = vld [vmem:[#allocation3 + $0x20] sm:$0xff]
    %v2190 = vld [vmem:[#allocation3 + $0x28] sm:$0xff]
    %v2191 = vld [vmem:[#allocation3 + $0x30] sm:$0xff]
    %v2192 = vld [vmem:[#allocation3 + $0x38] sm:$0xff]
    %v2193 = vpack.c.bf16 %v2186, %v2185
    %v2194 = vpack.c.bf16 %v2188, %v2187
    %v2195 = vpack.c.bf16 %v2190, %v2189
    %v2196 = vpack.c.bf16 %v2192, %v2191
    %v2197 = vld [vmem:[%s8] sm:$0xff]
    %v2198 = vld [vmem:[%s8 + $0x8] sm:$0xff]
    %v2199 = vld [vmem:[%s8 + $0x10] sm:$0xff]
    %v2200 = vld [vmem:[%s8 + $0x18] sm:$0xff]
    %v2201 = vld [vmem:[%s8 + $0x20] sm:$0xff]
    %v2202 = vld [vmem:[%s8 + $0x28] sm:$0xff]
    %v2203 = vld [vmem:[%s8 + $0x30] sm:$0xff]
    %v2204 = vld [vmem:[%s8 + $0x38] sm:$0xff]
    %v2205 = vld [vmem:[%s8 + $0x40] sm:$0xff]
    %v2206 = vld [vmem:[%s8 + $0x48] sm:$0xff]
    %v2207 = vld [vmem:[%s8 + $0x50] sm:$0xff]
    %v2208 = vld [vmem:[%s8 + $0x58] sm:$0xff]
    %v2209 = vld [vmem:[%s8 + $0x60] sm:$0xff]
    %v2210 = vld [vmem:[%s8 + $0x68] sm:$0xff]
    %v2211 = vld [vmem:[%s8 + $0x70] sm:$0xff]
    %v2212 = vld [vmem:[%s8 + $0x78] sm:$0xff]
    %v2213 = vld [vmem:[#allocation15] sm:$0x3]
    %v2215 = vlaneseq
    %v2216 = vshrl.u32 %v2215, 7
    %v2217 = vsub.s32 0, %v2216
    %v2218 = vrot.slane %v2213, %v2217
    %v2219 = vlaneseq
    %v2220 = vshrl.u32 %v2219, 7
    %v2221 = vsub.s32 1, %v2220
    %v2222 = vrot.slane %v2213, %v2221
    %v2241 = vunpack.c.l.b16 %v2197
    %v2242 = vunpack.c.h.b16 %v2197
    %v2243 = vunpack.c.l.b16 %v2198
    %v2244 = vunpack.c.h.b16 %v2198
    %v2245 = vunpack.c.l.b16 %v2199
    %v2246 = vunpack.c.h.b16 %v2199
    %v2247 = vunpack.c.l.b16 %v2200
    %v2248 = vunpack.c.h.b16 %v2200
    %v2249 = vunpack.c.l.b16 %v2201
    %v2250 = vunpack.c.h.b16 %v2201
    %v2251 = vunpack.c.l.b16 %v2202
    %v2252 = vunpack.c.h.b16 %v2202
    %v2253 = vunpack.c.l.b16 %v2203
    %v2254 = vunpack.c.h.b16 %v2203
    %v2255 = vunpack.c.l.b16 %v2204
    %v2256 = vunpack.c.h.b16 %v2204
    %v2257 = vunpack.c.l.b16 %v2205
    %v2258 = vunpack.c.h.b16 %v2205
    %v2259 = vunpack.c.l.b16 %v2206
    %v2260 = vunpack.c.h.b16 %v2206
    %v2261 = vunpack.c.l.b16 %v2207
    %v2262 = vunpack.c.h.b16 %v2207
    %v2263 = vunpack.c.l.b16 %v2208
    %v2264 = vunpack.c.h.b16 %v2208
    %v2265 = vunpack.c.l.b16 %v2209
    %v2266 = vunpack.c.h.b16 %v2209
    %v2267 = vunpack.c.l.b16 %v2210
    %v2268 = vunpack.c.h.b16 %v2210
    %v2269 = vunpack.c.l.b16 %v2211
    %v2270 = vunpack.c.h.b16 %v2211
    %v2271 = vunpack.c.l.b16 %v2212
    %v2272 = vunpack.c.h.b16 %v2212
    %v2273 = vpack.c.b16 %v2243, %v2241
    %v2274 = vpack.c.b16 %v2244, %v2242
    %v2275 = vpack.c.b16 %v2247, %v2245
    %v2276 = vpack.c.b16 %v2248, %v2246
    %v2277 = vpack.c.b16 %v2251, %v2249
    %v2278 = vpack.c.b16 %v2252, %v2250
    %v2279 = vpack.c.b16 %v2255, %v2253
    %v2280 = vpack.c.b16 %v2256, %v2254
    %v2281 = vpack.c.b16 %v2259, %v2257
    %v2282 = vpack.c.b16 %v2260, %v2258
    %v2283 = vpack.c.b16 %v2263, %v2261
    %v2284 = vpack.c.b16 %v2264, %v2262
    %v2285 = vpack.c.b16 %v2267, %v2265
    %v2286 = vpack.c.b16 %v2268, %v2266
    %v2287 = vpack.c.b16 %v2271, %v2269
    %v2288 = vpack.c.b16 %v2272, %v2270
    %2305 = vmatprep.subr.bf16.mxu0 %v2274
    %2306 = vmatpush1.bf16.msra.mxu0 %v2273
    %2307 = vmatprep.subr.bf16.mxu0 %v2276
    %2308 = vmatpush1.bf16.msra.mxu0 %v2275
    %2309 = vmatprep.subr.bf16.mxu0 %v2278
    %2310 = vmatpush1.bf16.msra.mxu0 %v2277
    %2311 = vmatprep.subr.bf16.mxu0 %v2280
    %2312 = vmatpush1.bf16.msra.mxu0 %v2279
    %2313 = vmatprep.subr.bf16.mxu0 %v2282
    %2314 = vmatpush1.bf16.msra.mxu0 %v2281
    %2315 = vmatprep.subr.bf16.mxu0 %v2284
    %2316 = vmatpush1.bf16.msra.mxu0 %v2283
    %2317 = vmatprep.subr.bf16.mxu0 %v2286
    %2318 = vmatpush1.bf16.msra.mxu0 %v2285
    %2319 = vmatprep.subr.bf16.mxu0 %v2288
    %2320 = vmatpush1.bf16.msra.mxu0 %v2287
    %2321 = vmatprep.subr.bf16.mxu0 0
    %2322 = vmatpush1.bf16.msra.mxu0 0
    %2323 = vmatprep.subr.bf16.mxu0 0
    %2324 = vmatpush1.bf16.msra.mxu0 0
    %2325 = vmatprep.subr.bf16.mxu0 0
    %2326 = vmatpush1.bf16.msra.mxu0 0
    %2327 = vmatprep.subr.bf16.mxu0 0
    %2328 = vmatpush1.bf16.msra.mxu0 0
    %2329 = vmatprep.subr.bf16.mxu0 0
    %2330 = vmatpush1.bf16.msra.mxu0 0
    %2331 = vmatprep.subr.bf16.mxu0 0
    %2332 = vmatpush1.bf16.msra.mxu0 0
    %2333 = vmatprep.subr.bf16.mxu0 0
    %2334 = vmatpush1.bf16.msra.mxu0 0
    %2335 = vmatprep.subr.bf16.mxu0 0
    %2336 = vmatpush1.bf16.msra.mxu0 0
    %2337 = vmatprep.mubr.bf16.mxu0 0
    %2338 = vmatmul.mubr.bf16.gmra.mrb[0].mxu0 %v2193
    %v2339 = vpop.f32.mrb[0].mxu0
    %v2340 = vadd.f32 %v2218, %v2339
    %v2341 = vpop.f32.mrb[0].mxu0
    %v2342 = vadd.f32 %v2222, %v2341
    %v2343 = vpop.f32.mrb[0].mxu0
    %v2344 = vadd.f32 %v2218, %v2343
    %v2345 = vpop.f32.mrb[0].mxu0
    %v2346 = vadd.f32 %v2222, %v2345
    %2347 = vmatprep.mubr.bf16.mxu0 0
    %2348 = vmatmul.mubr.bf16.gmra.mrb[0].mxu0 %v2194
    %v2349 = vpop.f32.mrb[0].mxu0
    %v2350 = vadd.f32 %v2218, %v2349
    %v2351 = vpop.f32.mrb[0].mxu0
    %v2352 = vadd.f32 %v2222, %v2351
    %v2353 = vpop.f32.mrb[0].mxu0
    %v2354 = vadd.f32 %v2218, %v2353
    %v2355 = vpop.f32.mrb[0].mxu0
    %v2356 = vadd.f32 %v2222, %v2355
    %2357 = vmatprep.mubr.bf16.mxu0 0
    %2358 = vmatmul.mubr.bf16.gmra.mrb[0].mxu0 %v2195
    %v2359 = vpop.f32.mrb[0].mxu0
    %v2360 = vadd.f32 %v2218, %v2359
    %v2361 = vpop.f32.mrb[0].mxu0
    %v2362 = vadd.f32 %v2222, %v2361
    %v2363 = vpop.f32.mrb[0].mxu0
    %v2364 = vadd.f32 %v2218, %v2363
    %v2365 = vpop.f32.mrb[0].mxu0
    %v2366 = vadd.f32 %v2222, %v2365
    %2367 = vmatprep.mubr.bf16.mxu0 0
    %2368 = vmatmul.mubr.bf16.gmra.mrb[0].mxu0 %v2196
    %v2369 = vpop.f32.mrb[0].mxu0
    %v2370 = vadd.f32 %v2218, %v2369
    %v2371 = vpop.f32.mrb[0].mxu0
    %v2372 = vadd.f32 %v2222, %v2371
    %v2373 = vpop.f32.mrb[0].mxu0
    %v2374 = vadd.f32 %v2218, %v2373
    %v2375 = vpop.f32.mrb[0].mxu0
    %v2376 = vadd.f32 %v2222, %v2375
    %2377 = vdwg.mxu0
    %2378 = vst [vmem:[#allocation2] sm:$0xff] %v2340
    %2379 = vst [vmem:[#allocation2 + $0x8] sm:$0xff] %v2342
    %2380 = vst [vmem:[#allocation2 + $0x10] sm:$0xff] %v2344
    %2381 = vst [vmem:[#allocation2 + $0x18] sm:$0xff] %v2346
    %2382 = vst [vmem:[#allocation2 + $0x20] sm:$0xff] %v2350
    %2383 = vst [vmem:[#allocation2 + $0x28] sm:$0xff] %v2352
    %2384 = vst [vmem:[#allocation2 + $0x30] sm:$0xff] %v2354
    %2385 = vst [vmem:[#allocation2 + $0x38] sm:$0xff] %v2356
    %2386 = vst [vmem:[#allocation2 + $0x40] sm:$0xff] %v2360
    %2387 = vst [vmem:[#allocation2 + $0x48] sm:$0xff] %v2362
    %2388 = vst [vmem:[#allocation2 + $0x50] sm:$0xff] %v2364
    %2389 = vst [vmem:[#allocation2 + $0x58] sm:$0xff] %v2366
    %2390 = vst [vmem:[#allocation2 + $0x60] sm:$0xff] %v2370
    %2391 = vst [vmem:[#allocation2 + $0x68] sm:$0xff] %v2372
    %2392 = vst [vmem:[#allocation2 + $0x70] sm:$0xff] %v2374
    %2393 = vst [vmem:[#allocation2 + $0x78] sm:$0xff] %v2376
    %v2394 = vld [vmem:[#allocation17] sm:$0xff]
    %v2395 = vld [vmem:[#allocation17 + $0x8] sm:$0xff]
    %v2396 = vld [vmem:[#allocation17 + $0x10] sm:$0xff]
    %v2397 = vld [vmem:[#allocation17 + $0x18] sm:$0xff]
    %v2398 = vld [vmem:[#allocation17 + $0x20] sm:$0xff]
    %v2399 = vld [vmem:[#allocation17 + $0x28] sm:$0xff]
    %v2400 = vld [vmem:[#allocation17 + $0x30] sm:$0xff]
    %v2401 = vld [vmem:[#allocation17 + $0x38] sm:$0xff]
    %v2402 = vld [vmem:[#allocation2] sm:$0xff]
    %v2403 = vld [vmem:[#allocation2 + $0x78] sm:$0xff]
    %v2412 = vunpack.c.l.b16 %v2394
    %v2413 = vunpack.c.h.b16 %v2394
    %v2414 = vunpack.c.l.b16 %v2395
    %v2415 = vunpack.c.h.b16 %v2395
    %v2416 = vunpack.c.l.b16 %v2396
    %v2417 = vunpack.c.h.b16 %v2396
    %v2418 = vunpack.c.l.b16 %v2397
    %v2419 = vunpack.c.h.b16 %v2397
    %v2420 = vunpack.c.l.b16 %v2398
    %v2421 = vunpack.c.h.b16 %v2398
    %v2422 = vunpack.c.l.b16 %v2399
    %v2423 = vunpack.c.h.b16 %v2399
    %v2424 = vunpack.c.l.b16 %v2400
    %v2425 = vunpack.c.h.b16 %v2400
    %v2426 = vunpack.c.l.b16 %v2401
    %v2427 = vunpack.c.h.b16 %v2401
    %v2428 = vpack.c.b16 %v2414, %v2412
    %v2429 = vpack.c.b16 %v2415, %v2413
    %v2430 = vpack.c.b16 %v2418, %v2416
    %v2431 = vpack.c.b16 %v2419, %v2417
    %v2432 = vpack.c.b16 %v2422, %v2420
    %v2433 = vpack.c.b16 %v2423, %v2421
    %v2434 = vpack.c.b16 %v2426, %v2424
    %v2435 = vpack.c.b16 %v2427, %v2425
    %2444 = vmatprep.subr.bf16.mxu0 %v2429
    %2445 = vmatpush1.bf16.msra.mxu0 %v2428
    %2446 = vmatprep.subr.bf16.mxu0 %v2431
    %2447 = vmatpush1.bf16.msra.mxu0 %v2430
    %2448 = vmatprep.subr.bf16.mxu0 %v2433
    %2449 = vmatpush1.bf16.msra.mxu0 %v2432
    %2450 = vmatprep.subr.bf16.mxu0 %v2435
    %2451 = vmatpush1.bf16.msra.mxu0 %v2434
    %2452 = vmatprep.subr.bf16.mxu0 0
    %2453 = vmatpush1.bf16.msra.mxu0 0
    %2454 = vmatprep.subr.bf16.mxu0 0
    %2455 = vmatpush1.bf16.msra.mxu0 0
    %2456 = vmatprep.subr.bf16.mxu0 0
    %2457 = vmatpush1.bf16.msra.mxu0 0
    %2458 = vmatprep.subr.bf16.mxu0 0
    %2459 = vmatpush1.bf16.msra.mxu0 0
    %2460 = vmatprep.subr.bf16.mxu0 0
    %2461 = vmatpush1.bf16.msra.mxu0 0
    %2462 = vmatprep.subr.bf16.mxu0 0
    %2463 = vmatpush1.bf16.msra.mxu0 0
    %2464 = vmatprep.subr.bf16.mxu0 0
    %2465 = vmatpush1.bf16.msra.mxu0 0
    %2466 = vmatprep.subr.bf16.mxu0 0
    %2467 = vmatpush1.bf16.msra.mxu0 0
    %2468 = vmatprep.subr.bf16.mxu0 0
    %2469 = vmatpush1.bf16.msra.mxu0 0
    %2470 = vmatprep.subr.bf16.mxu0 0
    %2471 = vmatpush1.bf16.msra.mxu0 0
    %2472 = vmatprep.subr.bf16.mxu0 0
    %2473 = vmatpush1.bf16.msra.mxu0 0
    %2474 = vmatprep.subr.bf16.mxu0 0
    %2475 = vmatpush1.bf16.msra.mxu0 0
    %2476 = vmatprep.mubr.bf16.mxu0 0
    %2477 = vmatmul.mubr.bf16.gmra.mrb[0].mxu0 %v538
    %v2478 = vpop.f32.mrb[0].mxu0
    %v2479 = vadd.f32 0.0, %v2478
    %v2480 = vpop.f32.mrb[0].mxu0
    %v2481 = vadd.f32 0.0, %v2480
    %v2482 = vpop.f32.mrb[0].mxu0
    %v2483 = vpop.f32.mrb[0].mxu0
    %2484 = vdwg.mxu0
    %v2485 = vadd.f32 %v2402, %v2479
    %v2486 = vadd.f32 %v2403, %v2481
    %v2487 = vxor.u32 %v2485, 2147483648
    %v2488 = vxor.u32 %v2486, 2147483648
    %v2489 = vmul.f32 %v2487, 1.442695
    %v2490 = vpow.pop %v2489
    %v2491 = vmul.f32 %v2488, 1.442695
    %v2492 = vpow.pop %v2491
    %v2493 = vadd.f32 %v2490, 1.0
    %v2494 = vadd.f32 %v2492, 1.0
    %v2495 = vrcp.pop %v2493
    %v2496 = vmul.f32 1.0, %v2495
    %v2497 = vrcp.pop %v2494
    %v2498 = vmul.f32 1.0, %v2497
    %v2499 = vtanh.pop %v2485
    %v2500 = vtanh.pop %v2486
    %2502 = vrot.lane.b32.xlu0 %v2498, 32
    %v2503 = vpop.permute.xlu0 %2502
    %v2505 = vsel %vm316, %v2496, %v2503
    %2507 = vrot.lane.b32.xlu0 %v2496, 96
    %v2508 = vpop.permute.xlu0 %2507
    %v2510 = vsel %vm316, %v2508, %v2498
    %2512 = vrot.lane.b32.xlu0 %v2499, 64
    %v2513 = vpop.permute.xlu0 %2512
    %2516 = vrot.lane.b32.xlu0 %v2500, 96
    %v2517 = vpop.permute.xlu0 %2516
    %v2519 = vsel %vm316, %v2513, %v2517
    %2520 = vrot.lane.b32.xlu0 %v2496, 32
    %v2521 = vpop.permute.xlu0 %2520
    %2523 = vrot.lane.b32.xlu0 %v2498, 64
    %v2524 = vpop.permute.xlu0 %2523
    %v2526 = vsel %vm316, %v2521, %v2524
    %v2527 = vld [vmem:[#allocation7] sm:$0xff]
    %v2528 = vmul.f32 %v2510, 0.0
    %v2529 = vmul.f32 %v2505, %v2519
    %v2530 = vadd.f32 %v2528, %v2529
    %v2531 = vmul.f32 %v2527, %v2530
    %v2532 = vtanh.pop %v2531
    %v2533 = vmul.f32 %v2526, %v2532
    %v2534 = vmul.f32 %v2527, %v2533
    %2535 = vst.msk [vmem:[#allocation4] sm:$0xff] %vm316, %v2534
    %2537 = vrot.lane.b32.xlu0 %v2534, 64
    %v2538 = vpop.permute.xlu0 %2537
    %2540 = vst.msk [vmem:[#allocation4 + $0x18] sm:$0xff] %vm636, %v2538
    %v2541 = vld [vmem:[#allocation2 + $0x10] sm:$0xff]
    %v2542 = vld [vmem:[#allocation2 + $0x68] sm:$0xff]
    %v2543 = vpack.c.bf16 %v2534, %v2534
    %v2545 = vsel %vm536, %v2543, 0
    %2547 = vmatprep.subr.bf16.mxu0 %v2429
    %2548 = vmatpush1.bf16.msra.mxu0 %v2428
    %2549 = vmatprep.subr.bf16.mxu0 %v2431
    %2550 = vmatpush1.bf16.msra.mxu0 %v2430
    %2551 = vmatprep.subr.bf16.mxu0 %v2433
    %2552 = vmatpush1.bf16.msra.mxu0 %v2432
    %2553 = vmatprep.subr.bf16.mxu0 %v2435
    %2554 = vmatpush1.bf16.msra.mxu0 %v2434
    %2555 = vmatprep.subr.bf16.mxu0 0
    %2556 = vmatpush1.bf16.msra.mxu0 0
    %2557 = vmatprep.subr.bf16.mxu0 0
    %2558 = vmatpush1.bf16.msra.mxu0 0
    %2559 = vmatprep.subr.bf16.mxu0 0
    %2560 = vmatpush1.bf16.msra.mxu0 0
    %2561 = vmatprep.subr.bf16.mxu0 0
    %2562 = vmatpush1.bf16.msra.mxu0 0
    %2563 = vmatprep.subr.bf16.mxu0 0
    %2564 = vmatpush1.bf16.msra.mxu0 0
    %2565 = vmatprep.subr.bf16.mxu0 0
    %2566 = vmatpush1.bf16.msra.mxu0 0
    %2567 = vmatprep.subr.bf16.mxu0 0
    %2568 = vmatpush1.bf16.msra.mxu0 0
    %2569 = vmatprep.subr.bf16.mxu0 0
    %2570 = vmatpush1.bf16.msra.mxu0 0
    %2571 = vmatprep.subr.bf16.mxu0 0
    %2572 = vmatpush1.bf16.msra.mxu0 0
    %2573 = vmatprep.subr.bf16.mxu0 0
    %2574 = vmatpush1.bf16.msra.mxu0 0
    %2575 = vmatprep.subr.bf16.mxu0 0
    %2576 = vmatpush1.bf16.msra.mxu0 0
    %2577 = vmatprep.subr.bf16.mxu0 0
    %2578 = vmatpush1.bf16.msra.mxu0 0
    %2579 = vmatprep.mubr.bf16.mxu0 0
    %2580 = vmatmul.mubr.bf16.gmra.mrb[0].mxu0 %v2545
    %v2581 = vpop.f32.mrb[0].mxu0
    %v2582 = vadd.f32 0.0, %v2581
    %v2583 = vpop.f32.mrb[0].mxu0
    %v2584 = vadd.f32 0.0, %v2583
    %v2585 = vpop.f32.mrb[0].mxu0
    %v2586 = vpop.f32.mrb[0].mxu0
    %2587 = vdwg.mxu0
    %v2588 = vadd.f32 %v2541, %v2582
    %v2589 = vadd.f32 %v2542, %v2584
    %v2590 = vxor.u32 %v2588, 2147483648
    %v2591 = vxor.u32 %v2589, 2147483648
    %v2592 = vmul.f32 %v2590, 1.442695
    %v2593 = vpow.pop %v2592
    %v2594 = vmul.f32 %v2591, 1.442695
    %v2595 = vpow.pop %v2594
    %v2596 = vadd.f32 %v2593, 1.0
    %v2597 = vadd.f32 %v2595, 1.0
    %v2598 = vrcp.pop %v2596
    %v2599 = vmul.f32 1.0, %v2598
    %v2600 = vrcp.pop %v2597
    %v2601 = vmul.f32 1.0, %v2600
    %v2602 = vtanh.pop %v2588
    %v2603 = vtanh.pop %v2589
    %2605 = vrot.lane.b32.xlu0 %v2601, 32
    %v2606 = vpop.permute.xlu0 %2605
    %v2608 = vsel %vm316, %v2599, %v2606
    %2610 = vrot.lane.b32.xlu0 %v2599, 96
    %v2611 = vpop.permute.xlu0 %2610
    %v2613 = vsel %vm316, %v2611, %v2601
    %2615 = vrot.lane.b32.xlu0 %v2602, 64
    %v2616 = vpop.permute.xlu0 %2615
    %2619 = vrot.lane.b32.xlu0 %v2603, 96
    %v2620 = vpop.permute.xlu0 %2619
    %v2622 = vsel %vm316, %v2616, %v2620
    %2623 = vrot.lane.b32.xlu0 %v2599, 32
    %v2624 = vpop.permute.xlu0 %2623
    %2626 = vrot.lane.b32.xlu0 %v2601, 64
    %v2627 = vpop.permute.xlu0 %2626
    %v2629 = vsel %vm316, %v2624, %v2627
    %v2630 = vld [vmem:[#allocation7 + $0x8] sm:$0xff]
    %v2631 = vmul.f32 %v2613, %v2531
    %v2632 = vmul.f32 %v2608, %v2622
    %v2633 = vadd.f32 %v2631, %v2632
    %v2634 = vmul.f32 %v2630, %v2633
    %v2635 = vtanh.pop %v2634
    %v2636 = vmul.f32 %v2629, %v2635
    %v2637 = vmul.f32 %v2630, %v2636
    %2639 = vrot.lane.b32.xlu0 %v2637, 64
    %v2640 = vpop.permute.xlu0 %2639
    %2642 = vst.msk [vmem:[#allocation4] sm:$0xff] %vm739, %v2640
    %2643 = vst.msk [vmem:[#allocation4 + $0x18] sm:$0xff] %vm741, %v2637
    %v2644 = vld [vmem:[#allocation2 + $0x20] sm:$0xff]
    %v2645 = vld [vmem:[#allocation2 + $0x58] sm:$0xff]
    %v2646 = vpack.c.bf16 %v2637, %v2637
    %v2648 = vsel %vm536, %v2646, 0
    %2650 = vmatprep.subr.bf16.mxu0 %v2429
    %2651 = vmatpush1.bf16.msra.mxu0 %v2428
    %2652 = vmatprep.subr.bf16.mxu0 %v2431
    %2653 = vmatpush1.bf16.msra.mxu0 %v2430
    %2654 = vmatprep.subr.bf16.mxu0 %v2433
    %2655 = vmatpush1.bf16.msra.mxu0 %v2432
    %2656 = vmatprep.subr.bf16.mxu0 %v2435
    %2657 = vmatpush1.bf16.msra.mxu0 %v2434
    %2658 = vmatprep.subr.bf16.mxu0 0
    %2659 = vmatpush1.bf16.msra.mxu0 0
    %2660 = vmatprep.subr.bf16.mxu0 0
    %2661 = vmatpush1.bf16.msra.mxu0 0
    %2662 = vmatprep.subr.bf16.mxu0 0
    %2663 = vmatpush1.bf16.msra.mxu0 0
    %2664 = vmatprep.subr.bf16.mxu0 0
    %2665 = vmatpush1.bf16.msra.mxu0 0
    %2666 = vmatprep.subr.bf16.mxu0 0
    %2667 = vmatpush1.bf16.msra.mxu0 0
    %2668 = vmatprep.subr.bf16.mxu0 0
    %2669 = vmatpush1.bf16.msra.mxu0 0
    %2670 = vmatprep.subr.bf16.mxu0 0
    %2671 = vmatpush1.bf16.msra.mxu0 0
    %2672 = vmatprep.subr.bf16.mxu0 0
    %2673 = vmatpush1.bf16.msra.mxu0 0
    %2674 = vmatprep.subr.bf16.mxu0 0
    %2675 = vmatpush1.bf16.msra.mxu0 0
    %2676 = vmatprep.subr.bf16.mxu0 0
    %2677 = vmatpush1.bf16.msra.mxu0 0
    %2678 = vmatprep.subr.bf16.mxu0 0
    %2679 = vmatpush1.bf16.msra.mxu0 0
    %2680 = vmatprep.subr.bf16.mxu0 0
    %2681 = vmatpush1.bf16.msra.mxu0 0
    %2682 = vmatprep.mubr.bf16.mxu0 0
    %2683 = vmatmul.mubr.bf16.gmra.mrb[0].mxu0 %v2648
    %v2684 = vpop.f32.mrb[0].mxu0
    %v2685 = vadd.f32 0.0, %v2684
    %v2686 = vpop.f32.mrb[0].mxu0
    %v2687 = vadd.f32 0.0, %v2686
    %v2688 = vpop.f32.mrb[0].mxu0
    %v2689 = vpop.f32.mrb[0].mxu0
    %2690 = vdwg.mxu0
    %v2691 = vadd.f32 %v2644, %v2685
    %v2692 = vadd.f32 %v2645, %v2687
    %v2693 = vxor.u32 %v2691, 2147483648
    %v2694 = vxor.u32 %v2692, 2147483648
    %v2695 = vmul.f32 %v2693, 1.442695
    %v2696 = vpow.pop %v2695
    %v2697 = vmul.f32 %v2694, 1.442695
    %v2698 = vpow.pop %v2697
    %v2699 = vadd.f32 %v2696, 1.0
    %v2700 = vadd.f32 %v2698, 1.0
    %v2701 = vrcp.pop %v2699
    %v2702 = vmul.f32 1.0, %v2701
    %v2703 = vrcp.pop %v2700
    %v2704 = vmul.f32 1.0, %v2703
    %v2705 = vtanh.pop %v2691
    %v2706 = vtanh.pop %v2692
    %2708 = vrot.lane.b32.xlu0 %v2704, 32
    %v2709 = vpop.permute.xlu0 %2708
    %v2711 = vsel %vm316, %v2702, %v2709
    %2713 = vrot.lane.b32.xlu0 %v2702, 96
    %v2714 = vpop.permute.xlu0 %2713
    %v2716 = vsel %vm316, %v2714, %v2704
    %2718 = vrot.lane.b32.xlu0 %v2705, 64
    %v2719 = vpop.permute.xlu0 %2718
    %2722 = vrot.lane.b32.xlu0 %v2706, 96
    %v2723 = vpop.permute.xlu0 %2722
    %v2725 = vsel %vm316, %v2719, %v2723
    %2726 = vrot.lane.b32.xlu0 %v2702, 32
    %v2727 = vpop.permute.xlu0 %2726
    %2729 = vrot.lane.b32.xlu0 %v2704, 64
    %v2730 = vpop.permute.xlu0 %2729
    %v2732 = vsel %vm316, %v2727, %v2730
    %v2733 = vld [vmem:[#allocation7 + $0x10] sm:$0xff]
    %v2734 = vmul.f32 %v2716, %v2634
    %v2735 = vmul.f32 %v2711, %v2725
    %v2736 = vadd.f32 %v2734, %v2735
    %v2737 = vmul.f32 %v2733, %v2736
    %v2738 = vtanh.pop %v2737
    %v2739 = vmul.f32 %v2732, %v2738
    %v2740 = vmul.f32 %v2733, %v2739
    %2741 = vst.msk [vmem:[#allocation4 + $0x8] sm:$0xff] %vm316, %v2740
    %2743 = vrot.lane.b32.xlu0 %v2740, 64
    %v2744 = vpop.permute.xlu0 %2743
    %2746 = vst.msk [vmem:[#allocation4 + $0x10] sm:$0xff] %vm636, %v2744
    %v2747 = vld [vmem:[#allocation2 + $0x30] sm:$0xff]
    %v2748 = vld [vmem:[#allocation2 + $0x48] sm:$0xff]
    %v2749 = vpack.c.bf16 %v2740, %v2740
    %v2751 = vsel %vm536, %v2749, 0
    %2753 = vmatprep.subr.bf16.mxu0 %v2429
    %2754 = vmatpush1.bf16.msra.mxu0 %v2428
    %2755 = vmatprep.subr.bf16.mxu0 %v2431
    %2756 = vmatpush1.bf16.msra.mxu0 %v2430
    %2757 = vmatprep.subr.bf16.mxu0 %v2433
    %2758 = vmatpush1.bf16.msra.mxu0 %v2432
    %2759 = vmatprep.subr.bf16.mxu0 %v2435
    %2760 = vmatpush1.bf16.msra.mxu0 %v2434
    %2761 = vmatprep.subr.bf16.mxu0 0
    %2762 = vmatpush1.bf16.msra.mxu0 0
    %2763 = vmatprep.subr.bf16.mxu0 0
    %2764 = vmatpush1.bf16.msra.mxu0 0
    %2765 = vmatprep.subr.bf16.mxu0 0
    %2766 = vmatpush1.bf16.msra.mxu0 0
    %2767 = vmatprep.subr.bf16.mxu0 0
    %2768 = vmatpush1.bf16.msra.mxu0 0
    %2769 = vmatprep.subr.bf16.mxu0 0
    %2770 = vmatpush1.bf16.msra.mxu0 0
    %2771 = vmatprep.subr.bf16.mxu0 0
    %2772 = vmatpush1.bf16.msra.mxu0 0
    %2773 = vmatprep.subr.bf16.mxu0 0
    %2774 = vmatpush1.bf16.msra.mxu0 0
    %2775 = vmatprep.subr.bf16.mxu0 0
    %2776 = vmatpush1.bf16.msra.mxu0 0
    %2777 = vmatprep.subr.bf16.mxu0 0
    %2778 = vmatpush1.bf16.msra.mxu0 0
    %2779 = vmatprep.subr.bf16.mxu0 0
    %2780 = vmatpush1.bf16.msra.mxu0 0
    %2781 = vmatprep.subr.bf16.mxu0 0
    %2782 = vmatpush1.bf16.msra.mxu0 0
    %2783 = vmatprep.subr.bf16.mxu0 0
    %2784 = vmatpush1.bf16.msra.mxu0 0
    %2785 = vmatprep.mubr.bf16.mxu0 0
    %2786 = vmatmul.mubr.bf16.gmra.mrb[0].mxu0 %v2751
    %v2787 = vpop.f32.mrb[0].mxu0
    %v2788 = vadd.f32 0.0, %v2787
    %v2789 = vpop.f32.mrb[0].mxu0
    %v2790 = vadd.f32 0.0, %v2789
    %v2791 = vpop.f32.mrb[0].mxu0
    %v2792 = vpop.f32.mrb[0].mxu0
    %2793 = vdwg.mxu0
    %v2794 = vadd.f32 %v2747, %v2788
    %v2795 = vadd.f32 %v2748, %v2790
    %v2796 = vxor.u32 %v2794, 2147483648
    %v2797 = vxor.u32 %v2795, 2147483648
    %v2798 = vmul.f32 %v2796, 1.442695
    %v2799 = vpow.pop %v2798
    %v2800 = vmul.f32 %v2797, 1.442695
    %v2801 = vpow.pop %v2800
    %v2802 = vadd.f32 %v2799, 1.0
    %v2803 = vadd.f32 %v2801, 1.0
    %v2804 = vrcp.pop %v2802
    %v2805 = vmul.f32 1.0, %v2804
    %v2806 = vrcp.pop %v2803
    %v2807 = vmul.f32 1.0, %v2806
    %v2808 = vtanh.pop %v2794
    %v2809 = vtanh.pop %v2795
    %2811 = vrot.lane.b32.xlu0 %v2807, 32
    %v2812 = vpop.permute.xlu0 %2811
    %v2814 = vsel %vm316, %v2805, %v2812
    %2816 = vrot.lane.b32.xlu0 %v2805, 96
    %v2817 = vpop.permute.xlu0 %2816
    %v2819 = vsel %vm316, %v2817, %v2807
    %2821 = vrot.lane.b32.xlu0 %v2808, 64
    %v2822 = vpop.permute.xlu0 %2821
    %2825 = vrot.lane.b32.xlu0 %v2809, 96
    %v2826 = vpop.permute.xlu0 %2825
    %v2828 = vsel %vm316, %v2822, %v2826
    %2829 = vrot.lane.b32.xlu0 %v2805, 32
    %v2830 = vpop.permute.xlu0 %2829
    %2832 = vrot.lane.b32.xlu0 %v2807, 64
    %v2833 = vpop.permute.xlu0 %2832
    %v2835 = vsel %vm316, %v2830, %v2833
    %v2836 = vld [vmem:[#allocation7 + $0x18] sm:$0xff]
    %v2837 = vmul.f32 %v2819, %v2737
    %v2838 = vmul.f32 %v2814, %v2828
    %v2839 = vadd.f32 %v2837, %v2838
    %v2840 = vmul.f32 %v2836, %v2839
    %v2841 = vtanh.pop %v2840
    %v2842 = vmul.f32 %v2835, %v2841
    %v2843 = vmul.f32 %v2836, %v2842
    %2845 = vrot.lane.b32.xlu0 %v2843, 64
    %v2846 = vpop.permute.xlu0 %2845
    %2848 = vst.msk [vmem:[#allocation4 + $0x8] sm:$0xff] %vm739, %v2846
    %2849 = vst.msk [vmem:[#allocation4 + $0x10] sm:$0xff] %vm741, %v2843
    %v2850 = vld [vmem:[#allocation2 + $0x40] sm:$0xff]
    %v2851 = vld [vmem:[#allocation2 + $0x38] sm:$0xff]
    %v2852 = vpack.c.bf16 %v2843, %v2843
    %v2854 = vsel %vm536, %v2852, 0
    %2856 = vmatprep.subr.bf16.mxu0 %v2429
    %2857 = vmatpush1.bf16.msra.mxu0 %v2428
    %2858 = vmatprep.subr.bf16.mxu0 %v2431
    %2859 = vmatpush1.bf16.msra.mxu0 %v2430
    %2860 = vmatprep.subr.bf16.mxu0 %v2433
    %2861 = vmatpush1.bf16.msra.mxu0 %v2432
    %2862 = vmatprep.subr.bf16.mxu0 %v2435
    %2863 = vmatpush1.bf16.msra.mxu0 %v2434
    %2864 = vmatprep.subr.bf16.mxu0 0
    %2865 = vmatpush1.bf16.msra.mxu0 0
    %2866 = vmatprep.subr.bf16.mxu0 0
    %2867 = vmatpush1.bf16.msra.mxu0 0
    %2868 = vmatprep.subr.bf16.mxu0 0
    %2869 = vmatpush1.bf16.msra.mxu0 0
    %2870 = vmatprep.subr.bf16.mxu0 0
    %2871 = vmatpush1.bf16.msra.mxu0 0
    %2872 = vmatprep.subr.bf16.mxu0 0
    %2873 = vmatpush1.bf16.msra.mxu0 0
    %2874 = vmatprep.subr.bf16.mxu0 0
    %2875 = vmatpush1.bf16.msra.mxu0 0
    %2876 = vmatprep.subr.bf16.mxu0 0
    %2877 = vmatpush1.bf16.msra.mxu0 0
    %2878 = vmatprep.subr.bf16.mxu0 0
    %2879 = vmatpush1.bf16.msra.mxu0 0
    %2880 = vmatprep.subr.bf16.mxu0 0
    %2881 = vmatpush1.bf16.msra.mxu0 0
    %2882 = vmatprep.subr.bf16.mxu0 0
    %2883 = vmatpush1.bf16.msra.mxu0 0
    %2884 = vmatprep.subr.bf16.mxu0 0
    %2885 = vmatpush1.bf16.msra.mxu0 0
    %2886 = vmatprep.subr.bf16.mxu0 0
    %2887 = vmatpush1.bf16.msra.mxu0 0
    %2888 = vmatprep.mubr.bf16.mxu0 0
    %2889 = vmatmul.mubr.bf16.gmra.mrb[0].mxu0 %v2854
    %v2890 = vpop.f32.mrb[0].mxu0
    %v2891 = vadd.f32 0.0, %v2890
    %v2892 = vpop.f32.mrb[0].mxu0
    %v2893 = vadd.f32 0.0, %v2892
    %v2894 = vpop.f32.mrb[0].mxu0
    %v2895 = vpop.f32.mrb[0].mxu0
    %2896 = vdwg.mxu0
    %v2897 = vadd.f32 %v2850, %v2891
    %v2898 = vadd.f32 %v2851, %v2893
    %v2899 = vxor.u32 %v2897, 2147483648
    %v2900 = vxor.u32 %v2898, 2147483648
    %v2901 = vmul.f32 %v2899, 1.442695
    %v2902 = vpow.pop %v2901
    %v2903 = vmul.f32 %v2900, 1.442695
    %v2904 = vpow.pop %v2903
    %v2905 = vadd.f32 %v2902, 1.0
    %v2906 = vadd.f32 %v2904, 1.0
    %v2907 = vrcp.pop %v2905
    %v2908 = vmul.f32 1.0, %v2907
    %v2909 = vrcp.pop %v2906
    %v2910 = vmul.f32 1.0, %v2909
    %v2911 = vtanh.pop %v2897
    %v2912 = vtanh.pop %v2898
    %2914 = vrot.lane.b32.xlu0 %v2910, 32
    %v2915 = vpop.permute.xlu0 %2914
    %v2917 = vsel %vm316, %v2908, %v2915
    %2919 = vrot.lane.b32.xlu0 %v2908, 96
    %v2920 = vpop.permute.xlu0 %2919
    %v2922 = vsel %vm316, %v2920, %v2910
    %2924 = vrot.lane.b32.xlu0 %v2911, 64
    %v2925 = vpop.permute.xlu0 %2924
    %2928 = vrot.lane.b32.xlu0 %v2912, 96
    %v2929 = vpop.permute.xlu0 %2928
    %v2931 = vsel %vm316, %v2925, %v2929
    %2932 = vrot.lane.b32.xlu0 %v2908, 32
    %v2933 = vpop.permute.xlu0 %2932
    %2935 = vrot.lane.b32.xlu0 %v2910, 64
    %v2936 = vpop.permute.xlu0 %2935
    %v2938 = vsel %vm316, %v2933, %v2936
    %v2939 = vld [vmem:[#allocation7 + $0x20] sm:$0xff]
    %v2940 = vmul.f32 %v2922, %v2840
    %v2941 = vmul.f32 %v2917, %v2931
    %v2942 = vadd.f32 %v2940, %v2941
    %v2943 = vmul.f32 %v2939, %v2942
    %v2944 = vtanh.pop %v2943
    %v2945 = vmul.f32 %v2938, %v2944
    %v2946 = vmul.f32 %v2939, %v2945
    %2947 = vst.msk [vmem:[#allocation4 + $0x10] sm:$0xff] %vm316, %v2946
    %2949 = vrot.lane.b32.xlu0 %v2946, 64
    %v2950 = vpop.permute.xlu0 %2949
    %2952 = vst.msk [vmem:[#allocation4 + $0x8] sm:$0xff] %vm636, %v2950
    %v2953 = vld [vmem:[#allocation2 + $0x50] sm:$0xff]
    %v2954 = vld [vmem:[#allocation2 + $0x28] sm:$0xff]
    %v2955 = vpack.c.bf16 %v2946, %v2946
    %v2957 = vsel %vm536, %v2955, 0
    %2959 = vmatprep.subr.bf16.mxu0 %v2429
    %2960 = vmatpush1.bf16.msra.mxu0 %v2428
    %2961 = vmatprep.subr.bf16.mxu0 %v2431
    %2962 = vmatpush1.bf16.msra.mxu0 %v2430
    %2963 = vmatprep.subr.bf16.mxu0 %v2433
    %2964 = vmatpush1.bf16.msra.mxu0 %v2432
    %2965 = vmatprep.subr.bf16.mxu0 %v2435
    %2966 = vmatpush1.bf16.msra.mxu0 %v2434
    %2967 = vmatprep.subr.bf16.mxu0 0
    %2968 = vmatpush1.bf16.msra.mxu0 0
    %2969 = vmatprep.subr.bf16.mxu0 0
    %2970 = vmatpush1.bf16.msra.mxu0 0
    %2971 = vmatprep.subr.bf16.mxu0 0
    %2972 = vmatpush1.bf16.msra.mxu0 0
    %2973 = vmatprep.subr.bf16.mxu0 0
    %2974 = vmatpush1.bf16.msra.mxu0 0
    %2975 = vmatprep.subr.bf16.mxu0 0
    %2976 = vmatpush1.bf16.msra.mxu0 0
    %2977 = vmatprep.subr.bf16.mxu0 0
    %2978 = vmatpush1.bf16.msra.mxu0 0
    %2979 = vmatprep.subr.bf16.mxu0 0
    %2980 = vmatpush1.bf16.msra.mxu0 0
    %2981 = vmatprep.subr.bf16.mxu0 0
    %2982 = vmatpush1.bf16.msra.mxu0 0
    %2983 = vmatprep.subr.bf16.mxu0 0
    %2984 = vmatpush1.bf16.msra.mxu0 0
    %2985 = vmatprep.subr.bf16.mxu0 0
    %2986 = vmatpush1.bf16.msra.mxu0 0
    %2987 = vmatprep.subr.bf16.mxu0 0
    %2988 = vmatpush1.bf16.msra.mxu0 0
    %2989 = vmatprep.subr.bf16.mxu0 0
    %2990 = vmatpush1.bf16.msra.mxu0 0
    %2991 = vmatprep.mubr.bf16.mxu0 0
    %2992 = vmatmul.mubr.bf16.gmra.mrb[0].mxu0 %v2957
    %v2993 = vpop.f32.mrb[0].mxu0
    %v2994 = vadd.f32 0.0, %v2993
    %v2995 = vpop.f32.mrb[0].mxu0
    %v2996 = vadd.f32 0.0, %v2995
    %v2997 = vpop.f32.mrb[0].mxu0
    %v2998 = vpop.f32.mrb[0].mxu0
    %2999 = vdwg.mxu0
    %v3000 = vadd.f32 %v2953, %v2994
    %v3001 = vadd.f32 %v2954, %v2996
    %v3002 = vxor.u32 %v3000, 2147483648
    %v3003 = vxor.u32 %v3001, 2147483648
    %v3004 = vmul.f32 %v3002, 1.442695
    %v3005 = vpow.pop %v3004
    %v3006 = vmul.f32 %v3003, 1.442695
    %v3007 = vpow.pop %v3006
    %v3008 = vadd.f32 %v3005, 1.0
    %v3009 = vadd.f32 %v3007, 1.0
    %v3010 = vrcp.pop %v3008
    %v3011 = vmul.f32 1.0, %v3010
    %v3012 = vrcp.pop %v3009
    %v3013 = vmul.f32 1.0, %v3012
    %v3014 = vtanh.pop %v3000
    %v3015 = vtanh.pop %v3001
    %3017 = vrot.lane.b32.xlu0 %v3013, 32
    %v3018 = vpop.permute.xlu0 %3017
    %v3020 = vsel %vm316, %v3011, %v3018
    %3022 = vrot.lane.b32.xlu0 %v3011, 96
    %v3023 = vpop.permute.xlu0 %3022
    %v3025 = vsel %vm316, %v3023, %v3013
    %3027 = vrot.lane.b32.xlu0 %v3014, 64
    %v3028 = vpop.permute.xlu0 %3027
    %3031 = vrot.lane.b32.xlu0 %v3015, 96
    %v3032 = vpop.permute.xlu0 %3031
    %v3034 = vsel %vm316, %v3028, %v3032
    %3035 = vrot.lane.b32.xlu0 %v3011, 32
    %v3036 = vpop.permute.xlu0 %3035
    %3038 = vrot.lane.b32.xlu0 %v3013, 64
    %v3039 = vpop.permute.xlu0 %3038
    %v3041 = vsel %vm316, %v3036, %v3039
    %v3042 = vld [vmem:[#allocation7 + $0x28] sm:$0xff]
    %v3043 = vmul.f32 %v3025, %v2943
    %v3044 = vmul.f32 %v3020, %v3034
    %v3045 = vadd.f32 %v3043, %v3044
    %v3046 = vmul.f32 %v3042, %v3045
    %v3047 = vtanh.pop %v3046
    %v3048 = vmul.f32 %v3041, %v3047
    %v3049 = vmul.f32 %v3042, %v3048
    %3051 = vrot.lane.b32.xlu0 %v3049, 64
    %v3052 = vpop.permute.xlu0 %3051
    %3054 = vst.msk [vmem:[#allocation4 + $0x10] sm:$0xff] %vm739, %v3052
    %3055 = vst.msk [vmem:[#allocation4 + $0x8] sm:$0xff] %vm741, %v3049
    %v3056 = vld [vmem:[#allocation2 + $0x60] sm:$0xff]
    %v3057 = vld [vmem:[#allocation2 + $0x18] sm:$0xff]
    %v3058 = vpack.c.bf16 %v3049, %v3049
    %v3060 = vsel %vm536, %v3058, 0
    %3062 = vmatprep.subr.bf16.mxu0 %v2429
    %3063 = vmatpush1.bf16.msra.mxu0 %v2428
    %3064 = vmatprep.subr.bf16.mxu0 %v2431
    %3065 = vmatpush1.bf16.msra.mxu0 %v2430
    %3066 = vmatprep.subr.bf16.mxu0 %v2433
    %3067 = vmatpush1.bf16.msra.mxu0 %v2432
    %3068 = vmatprep.subr.bf16.mxu0 %v2435
    %3069 = vmatpush1.bf16.msra.mxu0 %v2434
    %3070 = vmatprep.subr.bf16.mxu0 0
    %3071 = vmatpush1.bf16.msra.mxu0 0
    %3072 = vmatprep.subr.bf16.mxu0 0
    %3073 = vmatpush1.bf16.msra.mxu0 0
    %3074 = vmatprep.subr.bf16.mxu0 0
    %3075 = vmatpush1.bf16.msra.mxu0 0
    %3076 = vmatprep.subr.bf16.mxu0 0
    %3077 = vmatpush1.bf16.msra.mxu0 0
    %3078 = vmatprep.subr.bf16.mxu0 0
    %3079 = vmatpush1.bf16.msra.mxu0 0
    %3080 = vmatprep.subr.bf16.mxu0 0
    %3081 = vmatpush1.bf16.msra.mxu0 0
    %3082 = vmatprep.subr.bf16.mxu0 0
    %3083 = vmatpush1.bf16.msra.mxu0 0
    %3084 = vmatprep.subr.bf16.mxu0 0
    %3085 = vmatpush1.bf16.msra.mxu0 0
    %3086 = vmatprep.subr.bf16.mxu0 0
    %3087 = vmatpush1.bf16.msra.mxu0 0
    %3088 = vmatprep.subr.bf16.mxu0 0
    %3089 = vmatpush1.bf16.msra.mxu0 0
    %3090 = vmatprep.subr.bf16.mxu0 0
    %3091 = vmatpush1.bf16.msra.mxu0 0
    %3092 = vmatprep.subr.bf16.mxu0 0
    %3093 = vmatpush1.bf16.msra.mxu0 0
    %3094 = vmatprep.mubr.bf16.mxu0 0
    %3095 = vmatmul.mubr.bf16.gmra.mrb[0].mxu0 %v3060
    %v3096 = vpop.f32.mrb[0].mxu0
    %v3097 = vadd.f32 0.0, %v3096
    %v3098 = vpop.f32.mrb[0].mxu0
    %v3099 = vadd.f32 0.0, %v3098
    %v3100 = vpop.f32.mrb[0].mxu0
    %v3101 = vpop.f32.mrb[0].mxu0
    %3102 = vdwg.mxu0
    %v3103 = vadd.f32 %v3056, %v3097
    %v3104 = vadd.f32 %v3057, %v3099
    %v3105 = vxor.u32 %v3103, 2147483648
    %v3106 = vxor.u32 %v3104, 2147483648
    %v3107 = vmul.f32 %v3105, 1.442695
    %v3108 = vpow.pop %v3107
    %v3109 = vmul.f32 %v3106, 1.442695
    %v3110 = vpow.pop %v3109
    %v3111 = vadd.f32 %v3108, 1.0
    %v3112 = vadd.f32 %v3110, 1.0
    %v3113 = vrcp.pop %v3111
    %v3114 = vmul.f32 1.0, %v3113
    %v3115 = vrcp.pop %v3112
    %v3116 = vmul.f32 1.0, %v3115
    %v3117 = vtanh.pop %v3103
    %v3118 = vtanh.pop %v3104
    %3120 = vrot.lane.b32.xlu0 %v3116, 32
    %v3121 = vpop.permute.xlu0 %3120
    %v3123 = vsel %vm316, %v3114, %v3121
    %3125 = vrot.lane.b32.xlu0 %v3114, 96
    %v3126 = vpop.permute.xlu0 %3125
    %v3128 = vsel %vm316, %v3126, %v3116
    %3130 = vrot.lane.b32.xlu0 %v3117, 64
    %v3131 = vpop.permute.xlu0 %3130
    %3134 = vrot.lane.b32.xlu0 %v3118, 96
    %v3135 = vpop.permute.xlu0 %3134
    %v3137 = vsel %vm316, %v3131, %v3135
    %3138 = vrot.lane.b32.xlu0 %v3114, 32
    %v3139 = vpop.permute.xlu0 %3138
    %3141 = vrot.lane.b32.xlu0 %v3116, 64
    %v3142 = vpop.permute.xlu0 %3141
    %v3144 = vsel %vm316, %v3139, %v3142
    %v3145 = vld [vmem:[#allocation7 + $0x30] sm:$0xff]
    %v3146 = vmul.f32 %v3128, %v3046
    %v3147 = vmul.f32 %v3123, %v3137
    %v3148 = vadd.f32 %v3146, %v3147
    %v3149 = vmul.f32 %v3145, %v3148
    %v3150 = vtanh.pop %v3149
    %v3151 = vmul.f32 %v3144, %v3150
    %v3152 = vmul.f32 %v3145, %v3151
    %3153 = vst.msk [vmem:[#allocation4 + $0x18] sm:$0xff] %vm316, %v3152
    %3155 = vrot.lane.b32.xlu0 %v3152, 64
    %v3156 = vpop.permute.xlu0 %3155
    %3158 = vst.msk [vmem:[#allocation4] sm:$0xff] %vm636, %v3156
    %v3159 = vld [vmem:[#allocation2 + $0x70] sm:$0xff]
    %v3160 = vld [vmem:[#allocation2 + $0x8] sm:$0xff]
    %v3161 = vpack.c.bf16 %v3152, %v3152
    %v3163 = vsel %vm536, %v3161, 0
    %3165 = vmatprep.subr.bf16.mxu0 %v2429
    %3166 = vmatpush1.bf16.msra.mxu0 %v2428
    %3167 = vmatprep.subr.bf16.mxu0 %v2431
    %3168 = vmatpush1.bf16.msra.mxu0 %v2430
    %3169 = vmatprep.subr.bf16.mxu0 %v2433
    %3170 = vmatpush1.bf16.msra.mxu0 %v2432
    %3171 = vmatprep.subr.bf16.mxu0 %v2435
    %3172 = vmatpush1.bf16.msra.mxu0 %v2434
    %3173 = vmatprep.subr.bf16.mxu0 0
    %3174 = vmatpush1.bf16.msra.mxu0 0
    %3175 = vmatprep.subr.bf16.mxu0 0
    %3176 = vmatpush1.bf16.msra.mxu0 0
    %3177 = vmatprep.subr.bf16.mxu0 0
    %3178 = vmatpush1.bf16.msra.mxu0 0
    %3179 = vmatprep.subr.bf16.mxu0 0
    %3180 = vmatpush1.bf16.msra.mxu0 0
    %3181 = vmatprep.subr.bf16.mxu0 0
    %3182 = vmatpush1.bf16.msra.mxu0 0
    %3183 = vmatprep.subr.bf16.mxu0 0
    %3184 = vmatpush1.bf16.msra.mxu0 0
    %3185 = vmatprep.subr.bf16.mxu0 0
    %3186 = vmatpush1.bf16.msra.mxu0 0
    %3187 = vmatprep.subr.bf16.mxu0 0
    %3188 = vmatpush1.bf16.msra.mxu0 0
    %3189 = vmatprep.subr.bf16.mxu0 0
    %3190 = vmatpush1.bf16.msra.mxu0 0
    %3191 = vmatprep.subr.bf16.mxu0 0
    %3192 = vmatpush1.bf16.msra.mxu0 0
    %3193 = vmatprep.subr.bf16.mxu0 0
    %3194 = vmatpush1.bf16.msra.mxu0 0
    %3195 = vmatprep.subr.bf16.mxu0 0
    %3196 = vmatpush1.bf16.msra.mxu0 0
    %3197 = vmatprep.mubr.bf16.mxu0 0
    %3198 = vmatmul.mubr.bf16.gmra.mrb[0].mxu0 %v3163
    %v3199 = vpop.f32.mrb[0].mxu0
    %v3200 = vadd.f32 0.0, %v3199
    %v3201 = vpop.f32.mrb[0].mxu0
    %v3202 = vadd.f32 0.0, %v3201
    %v3203 = vpop.f32.mrb[0].mxu0
    %v3204 = vpop.f32.mrb[0].mxu0
    %3205 = vdwg.mxu0
    %v3206 = vadd.f32 %v3159, %v3200
    %v3207 = vadd.f32 %v3160, %v3202
    %v3208 = vxor.u32 %v3206, 2147483648
    %v3209 = vxor.u32 %v3207, 2147483648
    %v3210 = vmul.f32 %v3208, 1.442695
    %v3211 = vpow.pop %v3210
    %v3212 = vmul.f32 %v3209, 1.442695
    %v3213 = vpow.pop %v3212
    %v3214 = vadd.f32 %v3211, 1.0
    %v3215 = vadd.f32 %v3213, 1.0
    %v3216 = vrcp.pop %v3214
    %v3217 = vmul.f32 1.0, %v3216
    %v3218 = vrcp.pop %v3215
    %v3219 = vmul.f32 1.0, %v3218
    %v3220 = vtanh.pop %v3206
    %v3221 = vtanh.pop %v3207
    %3223 = vrot.lane.b32.xlu0 %v3219, 32
    %v3224 = vpop.permute.xlu0 %3223
    %v3226 = vsel %vm316, %v3217, %v3224
    %3228 = vrot.lane.b32.xlu0 %v3217, 96
    %v3229 = vpop.permute.xlu0 %3228
    %v3231 = vsel %vm316, %v3229, %v3219
    %3233 = vrot.lane.b32.xlu0 %v3220, 64
    %v3234 = vpop.permute.xlu0 %3233
    %3237 = vrot.lane.b32.xlu0 %v3221, 96
    %v3238 = vpop.permute.xlu0 %3237
    %v3240 = vsel %vm316, %v3234, %v3238
    %3241 = vrot.lane.b32.xlu0 %v3217, 32
    %v3242 = vpop.permute.xlu0 %3241
    %3244 = vrot.lane.b32.xlu0 %v3219, 64
    %v3245 = vpop.permute.xlu0 %3244
    %v3247 = vsel %vm316, %v3242, %v3245
    %v3248 = vld [vmem:[#allocation7 + $0x38] sm:$0xff]
    %v3249 = vmul.f32 %v3231, %v3149
    %v3250 = vmul.f32 %v3226, %v3240
    %v3251 = vadd.f32 %v3249, %v3250
    %v3252 = vmul.f32 %v3248, %v3251
    %v3253 = vtanh.pop %v3252
    %v3254 = vmul.f32 %v3247, %v3253
    %v3255 = vmul.f32 %v3248, %v3254
    %3257 = vrot.lane.b32.xlu0 %v3255, 64
    %v3258 = vpop.permute.xlu0 %3257
    %3260 = vst.msk [vmem:[#allocation4 + $0x18] sm:$0xff] %vm739, %v3258
    %3261 = vst.msk [vmem:[#allocation4] sm:$0xff] %vm741, %v3255
    %v3262 = vld [vmem:[#allocation4] sm:$0xff]
    %v3263 = vld [vmem:[#allocation4 + $0x8] sm:$0xff]
    %v3264 = vld [vmem:[#allocation4 + $0x10] sm:$0xff]
    %v3265 = vld [vmem:[#allocation4 + $0x18] sm:$0xff]
    %v3266 = vpack.c.bf16 %v3263, %v3262
    %v3267 = vpack.c.bf16 %v3265, %v3264
    %v3268 = vld [vmem:[#allocation18] sm:$0xff]
    %v3269 = vld [vmem:[#allocation18 + $0x8] sm:$0xff]
    %v3270 = vld [vmem:[#allocation18 + $0x10] sm:$0xff]
    %v3271 = vld [vmem:[#allocation18 + $0x18] sm:$0xff]
    %v3272 = vld [vmem:[#allocation18 + $0x20] sm:$0xff]
    %v3273 = vld [vmem:[#allocation18 + $0x28] sm:$0xff]
    %v3274 = vld [vmem:[#allocation18 + $0x30] sm:$0xff]
    %v3275 = vld [vmem:[#allocation18 + $0x38] sm:$0xff]
    %v3276 = vld [vmem:[#allocation18 + $0x40] sm:$0xff]
    %v3277 = vld [vmem:[#allocation18 + $0x48] sm:$0xff]
    %v3278 = vld [vmem:[#allocation18 + $0x50] sm:$0xff]
    %v3279 = vld [vmem:[#allocation18 + $0x58] sm:$0xff]
    %v3280 = vld [vmem:[#allocation18 + $0x60] sm:$0xff]
    %v3281 = vld [vmem:[#allocation18 + $0x68] sm:$0xff]
    %v3282 = vld [vmem:[#allocation18 + $0x70] sm:$0xff]
    %v3283 = vld [vmem:[#allocation18 + $0x78] sm:$0xff]
    %v3284 = vld [vmem:[#allocation20] sm:$0x3]
    %v3286 = vlaneseq
    %v3287 = vshrl.u32 %v3286, 7
    %v3288 = vsub.s32 0, %v3287
    %v3289 = vrot.slane %v3284, %v3288
    %v3290 = vlaneseq
    %v3291 = vshrl.u32 %v3290, 7
    %v3292 = vsub.s32 1, %v3291
    %v3293 = vrot.slane %v3284, %v3292
    %v3312 = vunpack.c.l.b16 %v3268
    %v3313 = vunpack.c.h.b16 %v3268
    %v3314 = vunpack.c.l.b16 %v3269
    %v3315 = vunpack.c.h.b16 %v3269
    %v3316 = vunpack.c.l.b16 %v3270
    %v3317 = vunpack.c.h.b16 %v3270
    %v3318 = vunpack.c.l.b16 %v3271
    %v3319 = vunpack.c.h.b16 %v3271
    %v3320 = vunpack.c.l.b16 %v3272
    %v3321 = vunpack.c.h.b16 %v3272
    %v3322 = vunpack.c.l.b16 %v3273
    %v3323 = vunpack.c.h.b16 %v3273
    %v3324 = vunpack.c.l.b16 %v3274
    %v3325 = vunpack.c.h.b16 %v3274
    %v3326 = vunpack.c.l.b16 %v3275
    %v3327 = vunpack.c.h.b16 %v3275
    %v3328 = vunpack.c.l.b16 %v3276
    %v3329 = vunpack.c.h.b16 %v3276
    %v3330 = vunpack.c.l.b16 %v3277
    %v3331 = vunpack.c.h.b16 %v3277
    %v3332 = vunpack.c.l.b16 %v3278
    %v3333 = vunpack.c.h.b16 %v3278
    %v3334 = vunpack.c.l.b16 %v3279
    %v3335 = vunpack.c.h.b16 %v3279
    %v3336 = vunpack.c.l.b16 %v3280
    %v3337 = vunpack.c.h.b16 %v3280
    %v3338 = vunpack.c.l.b16 %v3281
    %v3339 = vunpack.c.h.b16 %v3281
    %v3340 = vunpack.c.l.b16 %v3282
    %v3341 = vunpack.c.h.b16 %v3282
    %v3342 = vunpack.c.l.b16 %v3283
    %v3343 = vunpack.c.h.b16 %v3283
    %v3344 = vpack.c.b16 %v3314, %v3312
    %v3345 = vpack.c.b16 %v3315, %v3313
    %v3346 = vpack.c.b16 %v3318, %v3316
    %v3347 = vpack.c.b16 %v3319, %v3317
    %v3348 = vpack.c.b16 %v3322, %v3320
    %v3349 = vpack.c.b16 %v3323, %v3321
    %v3350 = vpack.c.b16 %v3326, %v3324
    %v3351 = vpack.c.b16 %v3327, %v3325
    %v3352 = vpack.c.b16 %v3330, %v3328
    %v3353 = vpack.c.b16 %v3331, %v3329
    %v3354 = vpack.c.b16 %v3334, %v3332
    %v3355 = vpack.c.b16 %v3335, %v3333
    %v3356 = vpack.c.b16 %v3338, %v3336
    %v3357 = vpack.c.b16 %v3339, %v3337
    %v3358 = vpack.c.b16 %v3342, %v3340
    %v3359 = vpack.c.b16 %v3343, %v3341
    %3376 = vmatprep.subr.bf16.mxu0 %v3345
    %3377 = vmatpush1.bf16.msra.mxu0 %v3344
    %3378 = vmatprep.subr.bf16.mxu0 %v3347
    %3379 = vmatpush1.bf16.msra.mxu0 %v3346
    %3380 = vmatprep.subr.bf16.mxu0 %v3349
    %3381 = vmatpush1.bf16.msra.mxu0 %v3348
    %3382 = vmatprep.subr.bf16.mxu0 %v3351
    %3383 = vmatpush1.bf16.msra.mxu0 %v3350
    %3384 = vmatprep.subr.bf16.mxu0 %v3353
    %3385 = vmatpush1.bf16.msra.mxu0 %v3352
    %3386 = vmatprep.subr.bf16.mxu0 %v3355
    %3387 = vmatpush1.bf16.msra.mxu0 %v3354
    %3388 = vmatprep.subr.bf16.mxu0 %v3357
    %3389 = vmatpush1.bf16.msra.mxu0 %v3356
    %3390 = vmatprep.subr.bf16.mxu0 %v3359
    %3391 = vmatpush1.bf16.msra.mxu0 %v3358
    %3392 = vmatprep.subr.bf16.mxu0 0
    %3393 = vmatpush1.bf16.msra.mxu0 0
    %3394 = vmatprep.subr.bf16.mxu0 0
    %3395 = vmatpush1.bf16.msra.mxu0 0
    %3396 = vmatprep.subr.bf16.mxu0 0
    %3397 = vmatpush1.bf16.msra.mxu0 0
    %3398 = vmatprep.subr.bf16.mxu0 0
    %3399 = vmatpush1.bf16.msra.mxu0 0
    %3400 = vmatprep.subr.bf16.mxu0 0
    %3401 = vmatpush1.bf16.msra.mxu0 0
    %3402 = vmatprep.subr.bf16.mxu0 0
    %3403 = vmatpush1.bf16.msra.mxu0 0
    %3404 = vmatprep.subr.bf16.mxu0 0
    %3405 = vmatpush1.bf16.msra.mxu0 0
    %3406 = vmatprep.subr.bf16.mxu0 0
    %3407 = vmatpush1.bf16.msra.mxu0 0
    %3408 = vmatprep.mubr.bf16.mxu0 0
    %3409 = vmatmul.mubr.bf16.gmra.mrb[0].mxu0 %v3266
    %v3410 = vpop.f32.mrb[0].mxu0
    %v3411 = vadd.f32 %v3289, %v3410
    %v3412 = vpop.f32.mrb[0].mxu0
    %v3413 = vadd.f32 %v3293, %v3412
    %v3414 = vpop.f32.mrb[0].mxu0
    %v3415 = vadd.f32 %v3289, %v3414
    %v3416 = vpop.f32.mrb[0].mxu0
    %v3417 = vadd.f32 %v3293, %v3416
    %3418 = vmatprep.mubr.bf16.mxu0 0
    %3419 = vmatmul.mubr.bf16.gmra.mrb[0].mxu0 %v3267
    %v3420 = vpop.f32.mrb[0].mxu0
    %v3421 = vadd.f32 %v3289, %v3420
    %v3422 = vpop.f32.mrb[0].mxu0
    %v3423 = vadd.f32 %v3293, %v3422
    %v3424 = vpop.f32.mrb[0].mxu0
    %v3425 = vadd.f32 %v3289, %v3424
    %v3426 = vpop.f32.mrb[0].mxu0
    %v3427 = vadd.f32 %v3293, %v3426
    %3428 = vdwg.mxu0
    %3429 = vst [vmem:[#allocation2] sm:$0xff] %v3411
    %3430 = vst [vmem:[#allocation2 + $0x8] sm:$0xff] %v3413
    %3431 = vst [vmem:[#allocation2 + $0x10] sm:$0xff] %v3415
    %3432 = vst [vmem:[#allocation2 + $0x18] sm:$0xff] %v3417
    %3433 = vst [vmem:[#allocation2 + $0x20] sm:$0xff] %v3421
    %3434 = vst [vmem:[#allocation2 + $0x28] sm:$0xff] %v3423
    %3435 = vst [vmem:[#allocation2 + $0x30] sm:$0xff] %v3425
    %3436 = vst [vmem:[#allocation2 + $0x38] sm:$0xff] %v3427
    %v3437 = vld [vmem:[#allocation21] sm:$0xff]
    %v3438 = vld [vmem:[#allocation21 + $0x8] sm:$0xff]
    %v3439 = vld [vmem:[#allocation21 + $0x10] sm:$0xff]
    %v3440 = vld [vmem:[#allocation21 + $0x18] sm:$0xff]
    %v3441 = vld [vmem:[#allocation21 + $0x20] sm:$0xff]
    %v3442 = vld [vmem:[#allocation21 + $0x28] sm:$0xff]
    %v3443 = vld [vmem:[#allocation21 + $0x30] sm:$0xff]
    %v3444 = vld [vmem:[#allocation21 + $0x38] sm:$0xff]
    %v3445 = vld [vmem:[#allocation2] sm:$0xff]
    %v3446 = vld [vmem:[#allocation2 + $0x38] sm:$0xff]
    %v3455 = vunpack.c.l.b16 %v3437
    %v3456 = vunpack.c.h.b16 %v3437
    %v3457 = vunpack.c.l.b16 %v3438
    %v3458 = vunpack.c.h.b16 %v3438
    %v3459 = vunpack.c.l.b16 %v3439
    %v3460 = vunpack.c.h.b16 %v3439
    %v3461 = vunpack.c.l.b16 %v3440
    %v3462 = vunpack.c.h.b16 %v3440
    %v3463 = vunpack.c.l.b16 %v3441
    %v3464 = vunpack.c.h.b16 %v3441
    %v3465 = vunpack.c.l.b16 %v3442
    %v3466 = vunpack.c.h.b16 %v3442
    %v3467 = vunpack.c.l.b16 %v3443
    %v3468 = vunpack.c.h.b16 %v3443
    %v3469 = vunpack.c.l.b16 %v3444
    %v3470 = vunpack.c.h.b16 %v3444
    %v3471 = vpack.c.b16 %v3457, %v3455
    %v3472 = vpack.c.b16 %v3458, %v3456
    %v3473 = vpack.c.b16 %v3461, %v3459
    %v3474 = vpack.c.b16 %v3462, %v3460
    %v3475 = vpack.c.b16 %v3465, %v3463
    %v3476 = vpack.c.b16 %v3466, %v3464
    %v3477 = vpack.c.b16 %v3469, %v3467
    %v3478 = vpack.c.b16 %v3470, %v3468
    %3487 = vmatprep.subr.bf16.mxu0 %v3472
    %3488 = vmatpush1.bf16.msra.mxu0 %v3471
    %3489 = vmatprep.subr.bf16.mxu0 %v3474
    %3490 = vmatpush1.bf16.msra.mxu0 %v3473
    %3491 = vmatprep.subr.bf16.mxu0 %v3476
    %3492 = vmatpush1.bf16.msra.mxu0 %v3475
    %3493 = vmatprep.subr.bf16.mxu0 %v3478
    %3494 = vmatpush1.bf16.msra.mxu0 %v3477
    %3495 = vmatprep.subr.bf16.mxu0 0
    %3496 = vmatpush1.bf16.msra.mxu0 0
    %3497 = vmatprep.subr.bf16.mxu0 0
    %3498 = vmatpush1.bf16.msra.mxu0 0
    %3499 = vmatprep.subr.bf16.mxu0 0
    %3500 = vmatpush1.bf16.msra.mxu0 0
    %3501 = vmatprep.subr.bf16.mxu0 0
    %3502 = vmatpush1.bf16.msra.mxu0 0
    %3503 = vmatprep.subr.bf16.mxu0 0
    %3504 = vmatpush1.bf16.msra.mxu0 0
    %3505 = vmatprep.subr.bf16.mxu0 0
    %3506 = vmatpush1.bf16.msra.mxu0 0
    %3507 = vmatprep.subr.bf16.mxu0 0
    %3508 = vmatpush1.bf16.msra.mxu0 0
    %3509 = vmatprep.subr.bf16.mxu0 0
    %3510 = vmatpush1.bf16.msra.mxu0 0
    %3511 = vmatprep.subr.bf16.mxu0 0
    %3512 = vmatpush1.bf16.msra.mxu0 0
    %3513 = vmatprep.subr.bf16.mxu0 0
    %3514 = vmatpush1.bf16.msra.mxu0 0
    %3515 = vmatprep.subr.bf16.mxu0 0
    %3516 = vmatpush1.bf16.msra.mxu0 0
    %3517 = vmatprep.subr.bf16.mxu0 0
    %3518 = vmatpush1.bf16.msra.mxu0 0
    %3519 = vmatprep.mubr.bf16.mxu0 0
    %3520 = vmatmul.mubr.bf16.gmra.mrb[0].mxu0 %v538
    %v3521 = vpop.f32.mrb[0].mxu0
    %v3522 = vadd.f32 0.0, %v3521
    %v3523 = vpop.f32.mrb[0].mxu0
    %v3524 = vadd.f32 0.0, %v3523
    %v3525 = vpop.f32.mrb[0].mxu0
    %v3526 = vpop.f32.mrb[0].mxu0
    %3527 = vdwg.mxu0
    %v3528 = vadd.f32 %v3445, %v3522
    %v3529 = vadd.f32 %v3446, %v3524
    %v3530 = vxor.u32 %v3528, 2147483648
    %v3531 = vxor.u32 %v3529, 2147483648
    %v3532 = vmul.f32 %v3530, 1.442695
    %v3533 = vpow.pop %v3532
    %v3534 = vmul.f32 %v3531, 1.442695
    %v3535 = vpow.pop %v3534
    %v3536 = vadd.f32 %v3533, 1.0
    %v3537 = vadd.f32 %v3535, 1.0
    %v3538 = vrcp.pop %v3536
    %v3539 = vmul.f32 1.0, %v3538
    %v3540 = vrcp.pop %v3537
    %v3541 = vmul.f32 1.0, %v3540
    %v3542 = vtanh.pop %v3528
    %v3543 = vtanh.pop %v3529
    %3545 = vrot.lane.b32.xlu0 %v3541, 32
    %v3546 = vpop.permute.xlu0 %3545
    %v3548 = vsel %vm316, %v3539, %v3546
    %3550 = vrot.lane.b32.xlu0 %v3539, 96
    %v3551 = vpop.permute.xlu0 %3550
    %v3553 = vsel %vm316, %v3551, %v3541
    %3555 = vrot.lane.b32.xlu0 %v3542, 64
    %v3556 = vpop.permute.xlu0 %3555
    %3559 = vrot.lane.b32.xlu0 %v3543, 96
    %v3560 = vpop.permute.xlu0 %3559
    %v3562 = vsel %vm316, %v3556, %v3560
    %3563 = vrot.lane.b32.xlu0 %v3539, 32
    %v3564 = vpop.permute.xlu0 %3563
    %3566 = vrot.lane.b32.xlu0 %v3541, 64
    %v3567 = vpop.permute.xlu0 %3566
    %v3569 = vsel %vm316, %v3564, %v3567
    %v3570 = vld [vmem:[%s3] sm:$0xff]
    %v3571 = vmul.f32 %v3553, 0.0
    %v3572 = vmul.f32 %v3548, %v3562
    %v3573 = vadd.f32 %v3571, %v3572
    %v3574 = vmul.f32 %v3570, %v3573
    %v3575 = vtanh.pop %v3574
    %v3576 = vmul.f32 %v3569, %v3575
    %v3577 = vmul.f32 %v3570, %v3576
    %3578 = vst.msk [vmem:[#allocation5] sm:$0xff] %vm316, %v3577
    %3580 = vrot.lane.b32.xlu0 %v3577, 64
    %v3581 = vpop.permute.xlu0 %3580
    %3583 = vst.msk [vmem:[#allocation5 + $0x8] sm:$0xff] %vm636, %v3581
    %v3584 = vld [vmem:[#allocation2 + $0x10] sm:$0xff]
    %v3585 = vld [vmem:[#allocation2 + $0x28] sm:$0xff]
    %v3586 = vpack.c.bf16 %v3577, %v3577
    %v3588 = vsel %vm536, %v3586, 0
    %3590 = vmatprep.subr.bf16.mxu0 %v3472
    %3591 = vmatpush1.bf16.msra.mxu0 %v3471
    %3592 = vmatprep.subr.bf16.mxu0 %v3474
    %3593 = vmatpush1.bf16.msra.mxu0 %v3473
    %3594 = vmatprep.subr.bf16.mxu0 %v3476
    %3595 = vmatpush1.bf16.msra.mxu0 %v3475
    %3596 = vmatprep.subr.bf16.mxu0 %v3478
    %3597 = vmatpush1.bf16.msra.mxu0 %v3477
    %3598 = vmatprep.subr.bf16.mxu0 0
    %3599 = vmatpush1.bf16.msra.mxu0 0
    %3600 = vmatprep.subr.bf16.mxu0 0
    %3601 = vmatpush1.bf16.msra.mxu0 0
    %3602 = vmatprep.subr.bf16.mxu0 0
    %3603 = vmatpush1.bf16.msra.mxu0 0
    %3604 = vmatprep.subr.bf16.mxu0 0
    %3605 = vmatpush1.bf16.msra.mxu0 0
    %3606 = vmatprep.subr.bf16.mxu0 0
    %3607 = vmatpush1.bf16.msra.mxu0 0
    %3608 = vmatprep.subr.bf16.mxu0 0
    %3609 = vmatpush1.bf16.msra.mxu0 0
    %3610 = vmatprep.subr.bf16.mxu0 0
    %3611 = vmatpush1.bf16.msra.mxu0 0
    %3612 = vmatprep.subr.bf16.mxu0 0
    %3613 = vmatpush1.bf16.msra.mxu0 0
    %3614 = vmatprep.subr.bf16.mxu0 0
    %3615 = vmatpush1.bf16.msra.mxu0 0
    %3616 = vmatprep.subr.bf16.mxu0 0
    %3617 = vmatpush1.bf16.msra.mxu0 0
    %3618 = vmatprep.subr.bf16.mxu0 0
    %3619 = vmatpush1.bf16.msra.mxu0 0
    %3620 = vmatprep.subr.bf16.mxu0 0
    %3621 = vmatpush1.bf16.msra.mxu0 0
    %3622 = vmatprep.mubr.bf16.mxu0 0
    %3623 = vmatmul.mubr.bf16.gmra.mrb[0].mxu0 %v3588
    %v3624 = vpop.f32.mrb[0].mxu0
    %v3625 = vadd.f32 0.0, %v3624
    %v3626 = vpop.f32.mrb[0].mxu0
    %v3627 = vadd.f32 0.0, %v3626
    %v3628 = vpop.f32.mrb[0].mxu0
    %v3629 = vpop.f32.mrb[0].mxu0
    %3630 = vdwg.mxu0
    %v3631 = vadd.f32 %v3584, %v3625
    %v3632 = vadd.f32 %v3585, %v3627
    %v3633 = vxor.u32 %v3631, 2147483648
    %v3634 = vxor.u32 %v3632, 2147483648
    %v3635 = vmul.f32 %v3633, 1.442695
    %v3636 = vpow.pop %v3635
    %v3637 = vmul.f32 %v3634, 1.442695
    %v3638 = vpow.pop %v3637
    %v3639 = vadd.f32 %v3636, 1.0
    %v3640 = vadd.f32 %v3638, 1.0
    %v3641 = vrcp.pop %v3639
    %v3642 = vmul.f32 1.0, %v3641
    %v3643 = vrcp.pop %v3640
    %v3644 = vmul.f32 1.0, %v3643
    %v3645 = vtanh.pop %v3631
    %v3646 = vtanh.pop %v3632
    %3648 = vrot.lane.b32.xlu0 %v3644, 32
    %v3649 = vpop.permute.xlu0 %3648
    %v3651 = vsel %vm316, %v3642, %v3649
    %3653 = vrot.lane.b32.xlu0 %v3642, 96
    %v3654 = vpop.permute.xlu0 %3653
    %v3656 = vsel %vm316, %v3654, %v3644
    %3658 = vrot.lane.b32.xlu0 %v3645, 64
    %v3659 = vpop.permute.xlu0 %3658
    %3662 = vrot.lane.b32.xlu0 %v3646, 96
    %v3663 = vpop.permute.xlu0 %3662
    %v3665 = vsel %vm316, %v3659, %v3663
    %3666 = vrot.lane.b32.xlu0 %v3642, 32
    %v3667 = vpop.permute.xlu0 %3666
    %3669 = vrot.lane.b32.xlu0 %v3644, 64
    %v3670 = vpop.permute.xlu0 %3669
    %v3672 = vsel %vm316, %v3667, %v3670
    %v3673 = vld [vmem:[%s3 + $0x8] sm:$0xff]
    %v3674 = vmul.f32 %v3656, %v3574
    %v3675 = vmul.f32 %v3651, %v3665
    %v3676 = vadd.f32 %v3674, %v3675
    %v3677 = vmul.f32 %v3673, %v3676
    %v3678 = vtanh.pop %v3677
    %v3679 = vmul.f32 %v3672, %v3678
    %v3680 = vmul.f32 %v3673, %v3679
    %3682 = vrot.lane.b32.xlu0 %v3680, 64
    %v3683 = vpop.permute.xlu0 %3682
    %3685 = vst.msk [vmem:[#allocation5] sm:$0xff] %vm739, %v3683
    %3686 = vst.msk [vmem:[#allocation5 + $0x8] sm:$0xff] %vm741, %v3680
    %v3687 = vld [vmem:[#allocation2 + $0x20] sm:$0xff]
    %v3688 = vld [vmem:[#allocation2 + $0x18] sm:$0xff]
    %v3689 = vpack.c.bf16 %v3680, %v3680
    %v3691 = vsel %vm536, %v3689, 0
    %3693 = vmatprep.subr.bf16.mxu0 %v3472
    %3694 = vmatpush1.bf16.msra.mxu0 %v3471
    %3695 = vmatprep.subr.bf16.mxu0 %v3474
    %3696 = vmatpush1.bf16.msra.mxu0 %v3473
    %3697 = vmatprep.subr.bf16.mxu0 %v3476
    %3698 = vmatpush1.bf16.msra.mxu0 %v3475
    %3699 = vmatprep.subr.bf16.mxu0 %v3478
    %3700 = vmatpush1.bf16.msra.mxu0 %v3477
    %3701 = vmatprep.subr.bf16.mxu0 0
    %3702 = vmatpush1.bf16.msra.mxu0 0
    %3703 = vmatprep.subr.bf16.mxu0 0
    %3704 = vmatpush1.bf16.msra.mxu0 0
    %3705 = vmatprep.subr.bf16.mxu0 0
    %3706 = vmatpush1.bf16.msra.mxu0 0
    %3707 = vmatprep.subr.bf16.mxu0 0
    %3708 = vmatpush1.bf16.msra.mxu0 0
    %3709 = vmatprep.subr.bf16.mxu0 0
    %3710 = vmatpush1.bf16.msra.mxu0 0
    %3711 = vmatprep.subr.bf16.mxu0 0
    %3712 = vmatpush1.bf16.msra.mxu0 0
    %3713 = vmatprep.subr.bf16.mxu0 0
    %3714 = vmatpush1.bf16.msra.mxu0 0
    %3715 = vmatprep.subr.bf16.mxu0 0
    %3716 = vmatpush1.bf16.msra.mxu0 0
    %3717 = vmatprep.subr.bf16.mxu0 0
    %3718 = vmatpush1.bf16.msra.mxu0 0
    %3719 = vmatprep.subr.bf16.mxu0 0
    %3720 = vmatpush1.bf16.msra.mxu0 0
    %3721 = vmatprep.subr.bf16.mxu0 0
    %3722 = vmatpush1.bf16.msra.mxu0 0
    %3723 = vmatprep.subr.bf16.mxu0 0
    %3724 = vmatpush1.bf16.msra.mxu0 0
    %3725 = vmatprep.mubr.bf16.mxu0 0
    %3726 = vmatmul.mubr.bf16.gmra.mrb[0].mxu0 %v3691
    %v3727 = vpop.f32.mrb[0].mxu0
    %v3728 = vadd.f32 0.0, %v3727
    %v3729 = vpop.f32.mrb[0].mxu0
    %v3730 = vadd.f32 0.0, %v3729
    %v3731 = vpop.f32.mrb[0].mxu0
    %v3732 = vpop.f32.mrb[0].mxu0
    %3733 = vdwg.mxu0
    %v3734 = vadd.f32 %v3687, %v3728
    %v3735 = vadd.f32 %v3688, %v3730
    %v3736 = vxor.u32 %v3734, 2147483648
    %v3737 = vxor.u32 %v3735, 2147483648
    %v3738 = vmul.f32 %v3736, 1.442695
    %v3739 = vpow.pop %v3738
    %v3740 = vmul.f32 %v3737, 1.442695
    %v3741 = vpow.pop %v3740
    %v3742 = vadd.f32 %v3739, 1.0
    %v3743 = vadd.f32 %v3741, 1.0
    %v3744 = vrcp.pop %v3742
    %v3745 = vmul.f32 1.0, %v3744
    %v3746 = vrcp.pop %v3743
    %v3747 = vmul.f32 1.0, %v3746
    %v3748 = vtanh.pop %v3734
    %v3749 = vtanh.pop %v3735
    %3751 = vrot.lane.b32.xlu0 %v3747, 32
    %v3752 = vpop.permute.xlu0 %3751
    %v3754 = vsel %vm316, %v3745, %v3752
    %3756 = vrot.lane.b32.xlu0 %v3745, 96
    %v3757 = vpop.permute.xlu0 %3756
    %v3759 = vsel %vm316, %v3757, %v3747
    %3761 = vrot.lane.b32.xlu0 %v3748, 64
    %v3762 = vpop.permute.xlu0 %3761
    %3765 = vrot.lane.b32.xlu0 %v3749, 96
    %v3766 = vpop.permute.xlu0 %3765
    %v3768 = vsel %vm316, %v3762, %v3766
    %3769 = vrot.lane.b32.xlu0 %v3745, 32
    %v3770 = vpop.permute.xlu0 %3769
    %3772 = vrot.lane.b32.xlu0 %v3747, 64
    %v3773 = vpop.permute.xlu0 %3772
    %v3775 = vsel %vm316, %v3770, %v3773
    %v3776 = vld [vmem:[%s3 + $0x10] sm:$0xff]
    %v3777 = vmul.f32 %v3759, %v3677
    %v3778 = vmul.f32 %v3754, %v3768
    %v3779 = vadd.f32 %v3777, %v3778
    %v3780 = vmul.f32 %v3776, %v3779
    %v3781 = vtanh.pop %v3780
    %v3782 = vmul.f32 %v3775, %v3781
    %v3783 = vmul.f32 %v3776, %v3782
    %3784 = vst.msk [vmem:[#allocation5 + $0x8] sm:$0xff] %vm316, %v3783
    %3786 = vrot.lane.b32.xlu0 %v3783, 64
    %v3787 = vpop.permute.xlu0 %3786
    %3789 = vst.msk [vmem:[#allocation5] sm:$0xff] %vm636, %v3787
    %v3790 = vld [vmem:[#allocation2 + $0x30] sm:$0xff]
    %v3791 = vld [vmem:[#allocation2 + $0x8] sm:$0xff]
    %v3792 = vpack.c.bf16 %v3783, %v3783
    %v3794 = vsel %vm536, %v3792, 0
    %3796 = vmatprep.subr.bf16.mxu0 %v3472
    %3797 = vmatpush1.bf16.msra.mxu0 %v3471
    %3798 = vmatprep.subr.bf16.mxu0 %v3474
    %3799 = vmatpush1.bf16.msra.mxu0 %v3473
    %3800 = vmatprep.subr.bf16.mxu0 %v3476
    %3801 = vmatpush1.bf16.msra.mxu0 %v3475
    %3802 = vmatprep.subr.bf16.mxu0 %v3478
    %3803 = vmatpush1.bf16.msra.mxu0 %v3477
    %3804 = vmatprep.subr.bf16.mxu0 0
    %3805 = vmatpush1.bf16.msra.mxu0 0
    %3806 = vmatprep.subr.bf16.mxu0 0
    %3807 = vmatpush1.bf16.msra.mxu0 0
    %3808 = vmatprep.subr.bf16.mxu0 0
    %3809 = vmatpush1.bf16.msra.mxu0 0
    %3810 = vmatprep.subr.bf16.mxu0 0
    %3811 = vmatpush1.bf16.msra.mxu0 0
    %3812 = vmatprep.subr.bf16.mxu0 0
    %3813 = vmatpush1.bf16.msra.mxu0 0
    %3814 = vmatprep.subr.bf16.mxu0 0
    %3815 = vmatpush1.bf16.msra.mxu0 0
    %3816 = vmatprep.subr.bf16.mxu0 0
    %3817 = vmatpush1.bf16.msra.mxu0 0
    %3818 = vmatprep.subr.bf16.mxu0 0
    %3819 = vmatpush1.bf16.msra.mxu0 0
    %3820 = vmatprep.subr.bf16.mxu0 0
    %3821 = vmatpush1.bf16.msra.mxu0 0
    %3822 = vmatprep.subr.bf16.mxu0 0
    %3823 = vmatpush1.bf16.msra.mxu0 0
    %3824 = vmatprep.subr.bf16.mxu0 0
    %3825 = vmatpush1.bf16.msra.mxu0 0
    %3826 = vmatprep.subr.bf16.mxu0 0
    %3827 = vmatpush1.bf16.msra.mxu0 0
    %3828 = vmatprep.mubr.bf16.mxu0 0
    %3829 = vmatmul.mubr.bf16.gmra.mrb[0].mxu0 %v3794
    %v3830 = vpop.f32.mrb[0].mxu0
    %v3831 = vadd.f32 0.0, %v3830
    %v3832 = vpop.f32.mrb[0].mxu0
    %v3833 = vadd.f32 0.0, %v3832
    %v3834 = vpop.f32.mrb[0].mxu0
    %v3835 = vpop.f32.mrb[0].mxu0
    %3836 = vdwg.mxu0
    %v3837 = vadd.f32 %v3790, %v3831
    %v3838 = vadd.f32 %v3791, %v3833
    %v3839 = vxor.u32 %v3837, 2147483648
    %v3840 = vxor.u32 %v3838, 2147483648
    %v3841 = vmul.f32 %v3839, 1.442695
    %v3842 = vpow.pop %v3841
    %v3843 = vmul.f32 %v3840, 1.442695
    %v3844 = vpow.pop %v3843
    %v3845 = vadd.f32 %v3842, 1.0
    %v3846 = vadd.f32 %v3844, 1.0
    %v3847 = vrcp.pop %v3845
    %v3848 = vmul.f32 1.0, %v3847
    %v3849 = vrcp.pop %v3846
    %v3850 = vmul.f32 1.0, %v3849
    %v3851 = vtanh.pop %v3837
    %v3852 = vtanh.pop %v3838
    %3854 = vrot.lane.b32.xlu0 %v3850, 32
    %v3855 = vpop.permute.xlu0 %3854
    %v3857 = vsel %vm316, %v3848, %v3855
    %3859 = vrot.lane.b32.xlu0 %v3848, 96
    %v3860 = vpop.permute.xlu0 %3859
    %v3862 = vsel %vm316, %v3860, %v3850
    %3864 = vrot.lane.b32.xlu0 %v3851, 64
    %v3865 = vpop.permute.xlu0 %3864
    %3868 = vrot.lane.b32.xlu0 %v3852, 96
    %v3869 = vpop.permute.xlu0 %3868
    %v3871 = vsel %vm316, %v3865, %v3869
    %3872 = vrot.lane.b32.xlu0 %v3848, 32
    %v3873 = vpop.permute.xlu0 %3872
    %3875 = vrot.lane.b32.xlu0 %v3850, 64
    %v3876 = vpop.permute.xlu0 %3875
    %v3878 = vsel %vm316, %v3873, %v3876
    %v3879 = vld [vmem:[%s3 + $0x18] sm:$0xff]
    %v3880 = vmul.f32 %v3862, %v3780
    %v3881 = vmul.f32 %v3857, %v3871
    %v3882 = vadd.f32 %v3880, %v3881
    %v3883 = vmul.f32 %v3879, %v3882
    %v3884 = vtanh.pop %v3883
    %v3885 = vmul.f32 %v3878, %v3884
    %v3886 = vmul.f32 %v3879, %v3885
    %3888 = vrot.lane.b32.xlu0 %v3886, 64
    %v3889 = vpop.permute.xlu0 %3888
    %3891 = vst.msk [vmem:[#allocation5 + $0x8] sm:$0xff] %vm739, %v3889
    %3892 = vst.msk [vmem:[#allocation5] sm:$0xff] %vm741, %v3886
    %v3893 = vld [vmem:[#allocation5] sm:$0xff]
    %v3894 = vld [vmem:[#allocation5 + $0x8] sm:$0xff]
    %v3895 = vpack.c.bf16 %v3894, %v3893
    %v3896 = vld [vmem:[#allocation23] sm:$0xff]
    %v3897 = vld [vmem:[#allocation23 + $0x8] sm:$0xff]
    %v3898 = vld [vmem:[#allocation23 + $0x10] sm:$0xff]
    %v3899 = vld [vmem:[#allocation23 + $0x18] sm:$0xff]
    %v3900 = vld [vmem:[#allocation23 + $0x20] sm:$0xff]
    %v3901 = vld [vmem:[#allocation23 + $0x28] sm:$0xff]
    %v3902 = vld [vmem:[#allocation23 + $0x30] sm:$0xff]
    %v3903 = vld [vmem:[#allocation23 + $0x38] sm:$0xff]
    %v3904 = vld [vmem:[#allocation23 + $0x40] sm:$0xff]
    %v3905 = vld [vmem:[#allocation23 + $0x48] sm:$0xff]
    %v3906 = vld [vmem:[#allocation23 + $0x50] sm:$0xff]
    %v3907 = vld [vmem:[#allocation23 + $0x58] sm:$0xff]
    %v3908 = vld [vmem:[#allocation23 + $0x60] sm:$0xff]
    %v3909 = vld [vmem:[#allocation23 + $0x68] sm:$0xff]
    %v3910 = vld [vmem:[#allocation23 + $0x70] sm:$0xff]
    %v3911 = vld [vmem:[#allocation23 + $0x78] sm:$0xff]
    %v3912 = vld [vmem:[#allocation24] sm:$0x3]
    %v3914 = vlaneseq
    %v3915 = vshrl.u32 %v3914, 7
    %v3916 = vsub.s32 0, %v3915
    %v3917 = vrot.slane %v3912, %v3916
    %v3918 = vlaneseq
    %v3919 = vshrl.u32 %v3918, 7
    %v3920 = vsub.s32 1, %v3919
    %v3921 = vrot.slane %v3912, %v3920
    %v3940 = vunpack.c.l.b16 %v3896
    %v3941 = vunpack.c.h.b16 %v3896
    %v3942 = vunpack.c.l.b16 %v3897
    %v3943 = vunpack.c.h.b16 %v3897
    %v3944 = vunpack.c.l.b16 %v3898
    %v3945 = vunpack.c.h.b16 %v3898
    %v3946 = vunpack.c.l.b16 %v3899
    %v3947 = vunpack.c.h.b16 %v3899
    %v3948 = vunpack.c.l.b16 %v3900
    %v3949 = vunpack.c.h.b16 %v3900
    %v3950 = vunpack.c.l.b16 %v3901
    %v3951 = vunpack.c.h.b16 %v3901
    %v3952 = vunpack.c.l.b16 %v3902
    %v3953 = vunpack.c.h.b16 %v3902
    %v3954 = vunpack.c.l.b16 %v3903
    %v3955 = vunpack.c.h.b16 %v3903
    %v3956 = vunpack.c.l.b16 %v3904
    %v3957 = vunpack.c.h.b16 %v3904
    %v3958 = vunpack.c.l.b16 %v3905
    %v3959 = vunpack.c.h.b16 %v3905
    %v3960 = vunpack.c.l.b16 %v3906
    %v3961 = vunpack.c.h.b16 %v3906
    %v3962 = vunpack.c.l.b16 %v3907
    %v3963 = vunpack.c.h.b16 %v3907
    %v3964 = vunpack.c.l.b16 %v3908
    %v3965 = vunpack.c.h.b16 %v3908
    %v3966 = vunpack.c.l.b16 %v3909
    %v3967 = vunpack.c.h.b16 %v3909
    %v3968 = vunpack.c.l.b16 %v3910
    %v3969 = vunpack.c.h.b16 %v3910
    %v3970 = vunpack.c.l.b16 %v3911
    %v3971 = vunpack.c.h.b16 %v3911
    %v3972 = vpack.c.b16 %v3942, %v3940
    %v3973 = vpack.c.b16 %v3943, %v3941
    %v3974 = vpack.c.b16 %v3946, %v3944
    %v3975 = vpack.c.b16 %v3947, %v3945
    %v3976 = vpack.c.b16 %v3950, %v3948
    %v3977 = vpack.c.b16 %v3951, %v3949
    %v3978 = vpack.c.b16 %v3954, %v3952
    %v3979 = vpack.c.b16 %v3955, %v3953
    %v3980 = vpack.c.b16 %v3958, %v3956
    %v3981 = vpack.c.b16 %v3959, %v3957
    %v3982 = vpack.c.b16 %v3962, %v3960
    %v3983 = vpack.c.b16 %v3963, %v3961
    %v3984 = vpack.c.b16 %v3966, %v3964
    %v3985 = vpack.c.b16 %v3967, %v3965
    %v3986 = vpack.c.b16 %v3970, %v3968
    %v3987 = vpack.c.b16 %v3971, %v3969
    %4004 = vmatprep.subr.bf16.mxu0 %v3973
    %4005 = vmatpush1.bf16.msra.mxu0 %v3972
    %4006 = vmatprep.subr.bf16.mxu0 %v3975
    %4007 = vmatpush1.bf16.msra.mxu0 %v3974
    %4008 = vmatprep.subr.bf16.mxu0 %v3977
    %4009 = vmatpush1.bf16.msra.mxu0 %v3976
    %4010 = vmatprep.subr.bf16.mxu0 %v3979
    %4011 = vmatpush1.bf16.msra.mxu0 %v3978
    %4012 = vmatprep.subr.bf16.mxu0 %v3981
    %4013 = vmatpush1.bf16.msra.mxu0 %v3980
    %4014 = vmatprep.subr.bf16.mxu0 %v3983
    %4015 = vmatpush1.bf16.msra.mxu0 %v3982
    %4016 = vmatprep.subr.bf16.mxu0 %v3985
    %4017 = vmatpush1.bf16.msra.mxu0 %v3984
    %4018 = vmatprep.subr.bf16.mxu0 %v3987
    %4019 = vmatpush1.bf16.msra.mxu0 %v3986
    %4020 = vmatprep.subr.bf16.mxu0 0
    %4021 = vmatpush1.bf16.msra.mxu0 0
    %4022 = vmatprep.subr.bf16.mxu0 0
    %4023 = vmatpush1.bf16.msra.mxu0 0
    %4024 = vmatprep.subr.bf16.mxu0 0
    %4025 = vmatpush1.bf16.msra.mxu0 0
    %4026 = vmatprep.subr.bf16.mxu0 0
    %4027 = vmatpush1.bf16.msra.mxu0 0
    %4028 = vmatprep.subr.bf16.mxu0 0
    %4029 = vmatpush1.bf16.msra.mxu0 0
    %4030 = vmatprep.subr.bf16.mxu0 0
    %4031 = vmatpush1.bf16.msra.mxu0 0
    %4032 = vmatprep.subr.bf16.mxu0 0
    %4033 = vmatpush1.bf16.msra.mxu0 0
    %4034 = vmatprep.subr.bf16.mxu0 0
    %4035 = vmatpush1.bf16.msra.mxu0 0
    %4036 = vmatprep.mubr.bf16.mxu0 0
    %4037 = vmatmul.mubr.bf16.gmra.mrb[0].mxu0 %v3895
    %v4038 = vpop.f32.mrb[0].mxu0
    %v4039 = vadd.f32 %v3917, %v4038
    %v4040 = vpop.f32.mrb[0].mxu0
    %v4041 = vadd.f32 %v3921, %v4040
    %v4042 = vpop.f32.mrb[0].mxu0
    %v4043 = vadd.f32 %v3917, %v4042
    %v4044 = vpop.f32.mrb[0].mxu0
    %v4045 = vadd.f32 %v3921, %v4044
    %4046 = vdwg.mxu0
    %4047 = vst [vmem:[#allocation2] sm:$0xff] %v4039
    %4048 = vst [vmem:[#allocation2 + $0x8] sm:$0xff] %v4041
    %4049 = vst [vmem:[#allocation2 + $0x10] sm:$0xff] %v4043
    %4050 = vst [vmem:[#allocation2 + $0x18] sm:$0xff] %v4045
    %v4051 = vld [vmem:[#allocation26] sm:$0xff]
    %v4052 = vld [vmem:[#allocation26 + $0x8] sm:$0xff]
    %v4053 = vld [vmem:[#allocation26 + $0x10] sm:$0xff]
    %v4054 = vld [vmem:[#allocation26 + $0x18] sm:$0xff]
    %v4055 = vld [vmem:[#allocation26 + $0x20] sm:$0xff]
    %v4056 = vld [vmem:[#allocation26 + $0x28] sm:$0xff]
    %v4057 = vld [vmem:[#allocation26 + $0x30] sm:$0xff]
    %v4058 = vld [vmem:[#allocation26 + $0x38] sm:$0xff]
    %v4059 = vld [vmem:[#allocation2] sm:$0xff]
    %v4060 = vld [vmem:[#allocation2 + $0x18] sm:$0xff]
    %v4069 = vunpack.c.l.b16 %v4051
    %v4070 = vunpack.c.h.b16 %v4051
    %v4071 = vunpack.c.l.b16 %v4052
    %v4072 = vunpack.c.h.b16 %v4052
    %v4073 = vunpack.c.l.b16 %v4053
    %v4074 = vunpack.c.h.b16 %v4053
    %v4075 = vunpack.c.l.b16 %v4054
    %v4076 = vunpack.c.h.b16 %v4054
    %v4077 = vunpack.c.l.b16 %v4055
    %v4078 = vunpack.c.h.b16 %v4055
    %v4079 = vunpack.c.l.b16 %v4056
    %v4080 = vunpack.c.h.b16 %v4056
    %v4081 = vunpack.c.l.b16 %v4057
    %v4082 = vunpack.c.h.b16 %v4057
    %v4083 = vunpack.c.l.b16 %v4058
    %v4084 = vunpack.c.h.b16 %v4058
    %v4085 = vpack.c.b16 %v4071, %v4069
    %v4086 = vpack.c.b16 %v4072, %v4070
    %v4087 = vpack.c.b16 %v4075, %v4073
    %v4088 = vpack.c.b16 %v4076, %v4074
    %v4089 = vpack.c.b16 %v4079, %v4077
    %v4090 = vpack.c.b16 %v4080, %v4078
    %v4091 = vpack.c.b16 %v4083, %v4081
    %v4092 = vpack.c.b16 %v4084, %v4082
    %4101 = vmatprep.subr.bf16.mxu0 %v4086
    %4102 = vmatpush1.bf16.msra.mxu0 %v4085
    %4103 = vmatprep.subr.bf16.mxu0 %v4088
    %4104 = vmatpush1.bf16.msra.mxu0 %v4087
    %4105 = vmatprep.subr.bf16.mxu0 %v4090
    %4106 = vmatpush1.bf16.msra.mxu0 %v4089
    %4107 = vmatprep.subr.bf16.mxu0 %v4092
    %4108 = vmatpush1.bf16.msra.mxu0 %v4091
    %4109 = vmatprep.subr.bf16.mxu0 0
    %4110 = vmatpush1.bf16.msra.mxu0 0
    %4111 = vmatprep.subr.bf16.mxu0 0
    %4112 = vmatpush1.bf16.msra.mxu0 0
    %4113 = vmatprep.subr.bf16.mxu0 0
    %4114 = vmatpush1.bf16.msra.mxu0 0
    %4115 = vmatprep.subr.bf16.mxu0 0
    %4116 = vmatpush1.bf16.msra.mxu0 0
    %4117 = vmatprep.subr.bf16.mxu0 0
    %4118 = vmatpush1.bf16.msra.mxu0 0
    %4119 = vmatprep.subr.bf16.mxu0 0
    %4120 = vmatpush1.bf16.msra.mxu0 0
    %4121 = vmatprep.subr.bf16.mxu0 0
    %4122 = vmatpush1.bf16.msra.mxu0 0
    %4123 = vmatprep.subr.bf16.mxu0 0
    %4124 = vmatpush1.bf16.msra.mxu0 0
    %4125 = vmatprep.subr.bf16.mxu0 0
    %4126 = vmatpush1.bf16.msra.mxu0 0
    %4127 = vmatprep.subr.bf16.mxu0 0
    %4128 = vmatpush1.bf16.msra.mxu0 0
    %4129 = vmatprep.subr.bf16.mxu0 0
    %4130 = vmatpush1.bf16.msra.mxu0 0
    %4131 = vmatprep.subr.bf16.mxu0 0
    %4132 = vmatpush1.bf16.msra.mxu0 0
    %4133 = vmatprep.mubr.bf16.mxu0 0
    %4134 = vmatmul.mubr.bf16.gmra.mrb[0].mxu0 %v538
    %v4135 = vpop.f32.mrb[0].mxu0
    %v4136 = vadd.f32 0.0, %v4135
    %v4137 = vpop.f32.mrb[0].mxu0
    %v4138 = vadd.f32 0.0, %v4137
    %v4139 = vpop.f32.mrb[0].mxu0
    %v4140 = vpop.f32.mrb[0].mxu0
    %4141 = vdwg.mxu0
    %v4142 = vadd.f32 %v4059, %v4136
    %v4143 = vadd.f32 %v4060, %v4138
    %v4144 = vxor.u32 %v4142, 2147483648
    %v4145 = vxor.u32 %v4143, 2147483648
    %v4146 = vmul.f32 %v4144, 1.442695
    %v4147 = vpow.pop %v4146
    %v4148 = vmul.f32 %v4145, 1.442695
    %v4149 = vpow.pop %v4148
    %v4150 = vadd.f32 %v4147, 1.0
    %v4151 = vadd.f32 %v4149, 1.0
    %v4152 = vrcp.pop %v4150
    %v4153 = vmul.f32 1.0, %v4152
    %v4154 = vrcp.pop %v4151
    %v4155 = vmul.f32 1.0, %v4154
    %v4156 = vtanh.pop %v4142
    %v4157 = vtanh.pop %v4143
    %4159 = vrot.lane.b32.xlu0 %v4155, 32
    %v4160 = vpop.permute.xlu0 %4159
    %v4162 = vsel %vm316, %v4153, %v4160
    %4164 = vrot.lane.b32.xlu0 %v4153, 96
    %v4165 = vpop.permute.xlu0 %4164
    %v4167 = vsel %vm316, %v4165, %v4155
    %4169 = vrot.lane.b32.xlu0 %v4156, 64
    %v4170 = vpop.permute.xlu0 %4169
    %4173 = vrot.lane.b32.xlu0 %v4157, 96
    %v4174 = vpop.permute.xlu0 %4173
    %v4176 = vsel %vm316, %v4170, %v4174
    %4177 = vrot.lane.b32.xlu0 %v4153, 32
    %v4178 = vpop.permute.xlu0 %4177
    %4180 = vrot.lane.b32.xlu0 %v4155, 64
    %v4181 = vpop.permute.xlu0 %4180
    %v4183 = vsel %vm316, %v4178, %v4181
    %v4184 = vld [vmem:[#allocation9] sm:$0xff]
    %v4185 = vmul.f32 %v4167, 0.0
    %v4186 = vmul.f32 %v4162, %v4176
    %v4187 = vadd.f32 %v4185, %v4186
    %v4188 = vmul.f32 %v4184, %v4187
    %v4189 = vtanh.pop %v4188
    %v4190 = vmul.f32 %v4183, %v4189
    %v4191 = vmul.f32 %v4184, %v4190
    %4192 = vst.msk [vmem:[#allocation6] sm:$0xff] %vm316, %v4191
    %4193 = vst.msk [vmem:[#allocation6 + $0x8] sm:$0xff] %vm741, %v4191
    %v4194 = vld [vmem:[#allocation2 + $0x10] sm:$0xff]
    %v4195 = vld [vmem:[#allocation2 + $0x8] sm:$0xff]
    %v4196 = vpack.c.bf16 %v4191, %v4191
    %v4198 = vsel %vm536, %v4196, 0
    %4200 = vmatprep.subr.bf16.mxu0 %v4086
    %4201 = vmatpush1.bf16.msra.mxu0 %v4085
    %4202 = vmatprep.subr.bf16.mxu0 %v4088
    %4203 = vmatpush1.bf16.msra.mxu0 %v4087
    %4204 = vmatprep.subr.bf16.mxu0 %v4090
    %4205 = vmatpush1.bf16.msra.mxu0 %v4089
    %4206 = vmatprep.subr.bf16.mxu0 %v4092
    %4207 = vmatpush1.bf16.msra.mxu0 %v4091
    %4208 = vmatprep.subr.bf16.mxu0 0
    %4209 = vmatpush1.bf16.msra.mxu0 0
    %4210 = vmatprep.subr.bf16.mxu0 0
    %4211 = vmatpush1.bf16.msra.mxu0 0
    %4212 = vmatprep.subr.bf16.mxu0 0
    %4213 = vmatpush1.bf16.msra.mxu0 0
    %4214 = vmatprep.subr.bf16.mxu0 0
    %4215 = vmatpush1.bf16.msra.mxu0 0
    %4216 = vmatprep.subr.bf16.mxu0 0
    %4217 = vmatpush1.bf16.msra.mxu0 0
    %4218 = vmatprep.subr.bf16.mxu0 0
    %4219 = vmatpush1.bf16.msra.mxu0 0
    %4220 = vmatprep.subr.bf16.mxu0 0
    %4221 = vmatpush1.bf16.msra.mxu0 0
    %4222 = vmatprep.subr.bf16.mxu0 0
    %4223 = vmatpush1.bf16.msra.mxu0 0
    %4224 = vmatprep.subr.bf16.mxu0 0
    %4225 = vmatpush1.bf16.msra.mxu0 0
    %4226 = vmatprep.subr.bf16.mxu0 0
    %4227 = vmatpush1.bf16.msra.mxu0 0
    %4228 = vmatprep.subr.bf16.mxu0 0
    %4229 = vmatpush1.bf16.msra.mxu0 0
    %4230 = vmatprep.subr.bf16.mxu0 0
    %4231 = vmatpush1.bf16.msra.mxu0 0
    %4232 = vmatprep.mubr.bf16.mxu0 0
    %4233 = vmatmul.mubr.bf16.gmra.mrb[0].mxu0 %v4198
    %v4234 = vpop.f32.mrb[0].mxu0
    %v4235 = vadd.f32 0.0, %v4234
    %v4236 = vpop.f32.mrb[0].mxu0
    %v4237 = vadd.f32 0.0, %v4236
    %v4238 = vpop.f32.mrb[0].mxu0
    %v4239 = vpop.f32.mrb[0].mxu0
    %4240 = vdwg.mxu0
    %v4241 = vadd.f32 %v4194, %v4235
    %v4242 = vadd.f32 %v4195, %v4237
    %v4243 = vxor.u32 %v4241, 2147483648
    %v4244 = vxor.u32 %v4242, 2147483648
    %v4245 = vmul.f32 %v4243, 1.442695
    %v4246 = vpow.pop %v4245
    %v4247 = vmul.f32 %v4244, 1.442695
    %v4248 = vpow.pop %v4247
    %v4249 = vadd.f32 %v4246, 1.0
    %v4250 = vadd.f32 %v4248, 1.0
    %v4251 = vrcp.pop %v4249
    %v4252 = vmul.f32 1.0, %v4251
    %v4253 = vrcp.pop %v4250
    %v4254 = vmul.f32 1.0, %v4253
    %v4255 = vtanh.pop %v4241
    %v4256 = vtanh.pop %v4242
    %4258 = vrot.lane.b32.xlu0 %v4254, 32
    %v4259 = vpop.permute.xlu0 %4258
    %v4261 = vsel %vm316, %v4252, %v4259
    %4263 = vrot.lane.b32.xlu0 %v4252, 96
    %v4264 = vpop.permute.xlu0 %4263
    %v4266 = vsel %vm316, %v4264, %v4254
    %4268 = vrot.lane.b32.xlu0 %v4255, 64
    %v4269 = vpop.permute.xlu0 %4268
    %4272 = vrot.lane.b32.xlu0 %v4256, 96
    %v4273 = vpop.permute.xlu0 %4272
    %v4275 = vsel %vm316, %v4269, %v4273
    %4276 = vrot.lane.b32.xlu0 %v4252, 32
    %v4277 = vpop.permute.xlu0 %4276
    %4279 = vrot.lane.b32.xlu0 %v4254, 64
    %v4280 = vpop.permute.xlu0 %4279
    %v4282 = vsel %vm316, %v4277, %v4280
    %v4283 = vld [vmem:[#allocation9 + $0x8] sm:$0xff]
    %v4284 = vmul.f32 %v4266, %v4188
    %v4285 = vmul.f32 %v4261, %v4275
    %v4286 = vadd.f32 %v4284, %v4285
    %v4287 = vmul.f32 %v4283, %v4286
    %v4288 = vtanh.pop %v4287
    %v4289 = vmul.f32 %v4282, %v4288
    %v4290 = vmul.f32 %v4283, %v4289
    %4291 = vst.msk [vmem:[#allocation6 + $0x8] sm:$0xff] %vm316, %v4290
    %4292 = vst.msk [vmem:[#allocation6] sm:$0xff] %vm741, %v4290
    %v4293 = vld [vmem:[#allocation6] sm:$0xff]
    %v4294 = vld [vmem:[#allocation6 + $0x8] sm:$0xff]
    %v4295 = vpack.c.bf16 %v4294, %v4293
    %v4296 = vld [vmem:[#allocation27] sm:$0xff]
    %v4297 = vld [vmem:[#allocation27 + $0x8] sm:$0xff]
    %v4298 = vld [vmem:[#allocation27 + $0x10] sm:$0xff]
    %v4299 = vld [vmem:[#allocation27 + $0x18] sm:$0xff]
    %v4300 = vld [vmem:[#allocation27 + $0x20] sm:$0xff]
    %v4301 = vld [vmem:[#allocation27 + $0x28] sm:$0xff]
    %v4302 = vld [vmem:[#allocation27 + $0x30] sm:$0xff]
    %v4303 = vld [vmem:[#allocation27 + $0x38] sm:$0xff]
    %v4304 = vld [vmem:[#allocation29] sm:$0x3]
    %v4306 = vlaneseq
    %v4307 = vshrl.u32 %v4306, 7
    %v4308 = vsub.s32 0, %v4307
    %v4309 = vrot.slane %v4304, %v4308
    %v4310 = vlaneseq
    %v4311 = vshrl.u32 %v4310, 7
    %v4312 = vsub.s32 1, %v4311
    %v4313 = vrot.slane %v4304, %v4312
    %v4324 = vunpack.c.l.b16 %v4296
    %v4325 = vunpack.c.h.b16 %v4296
    %v4326 = vunpack.c.l.b16 %v4297
    %v4327 = vunpack.c.h.b16 %v4297
    %v4328 = vunpack.c.l.b16 %v4298
    %v4329 = vunpack.c.h.b16 %v4298
    %v4330 = vunpack.c.l.b16 %v4299
    %v4331 = vunpack.c.h.b16 %v4299
    %v4332 = vunpack.c.l.b16 %v4300
    %v4333 = vunpack.c.h.b16 %v4300
    %v4334 = vunpack.c.l.b16 %v4301
    %v4335 = vunpack.c.h.b16 %v4301
    %v4336 = vunpack.c.l.b16 %v4302
    %v4337 = vunpack.c.h.b16 %v4302
    %v4338 = vunpack.c.l.b16 %v4303
    %v4339 = vunpack.c.h.b16 %v4303
    %v4340 = vpack.c.b16 %v4326, %v4324
    %v4341 = vpack.c.b16 %v4327, %v4325
    %v4342 = vpack.c.b16 %v4330, %v4328
    %v4343 = vpack.c.b16 %v4331, %v4329
    %v4344 = vpack.c.b16 %v4334, %v4332
    %v4345 = vpack.c.b16 %v4335, %v4333
    %v4346 = vpack.c.b16 %v4338, %v4336
    %v4347 = vpack.c.b16 %v4339, %v4337
    %v4357 = vsel %vm536, %v4295, 0
    %4359 = vmatprep.subr.bf16.mxu0 %v4341
    %4360 = vmatpush1.bf16.msra.mxu0 %v4340
    %4361 = vmatprep.subr.bf16.mxu0 %v4343
    %4362 = vmatpush1.bf16.msra.mxu0 %v4342
    %4363 = vmatprep.subr.bf16.mxu0 %v4345
    %4364 = vmatpush1.bf16.msra.mxu0 %v4344
    %4365 = vmatprep.subr.bf16.mxu0 %v4347
    %4366 = vmatpush1.bf16.msra.mxu0 %v4346
    %4367 = vmatprep.subr.bf16.mxu0 0
    %4368 = vmatpush1.bf16.msra.mxu0 0
    %4369 = vmatprep.subr.bf16.mxu0 0
    %4370 = vmatpush1.bf16.msra.mxu0 0
    %4371 = vmatprep.subr.bf16.mxu0 0
    %4372 = vmatpush1.bf16.msra.mxu0 0
    %4373 = vmatprep.subr.bf16.mxu0 0
    %4374 = vmatpush1.bf16.msra.mxu0 0
    %4375 = vmatprep.subr.bf16.mxu0 0
    %4376 = vmatpush1.bf16.msra.mxu0 0
    %4377 = vmatprep.subr.bf16.mxu0 0
    %4378 = vmatpush1.bf16.msra.mxu0 0
    %4379 = vmatprep.subr.bf16.mxu0 0
    %4380 = vmatpush1.bf16.msra.mxu0 0
    %4381 = vmatprep.subr.bf16.mxu0 0
    %4382 = vmatpush1.bf16.msra.mxu0 0
    %4383 = vmatprep.subr.bf16.mxu0 0
    %4384 = vmatpush1.bf16.msra.mxu0 0
    %4385 = vmatprep.subr.bf16.mxu0 0
    %4386 = vmatpush1.bf16.msra.mxu0 0
    %4387 = vmatprep.subr.bf16.mxu0 0
    %4388 = vmatpush1.bf16.msra.mxu0 0
    %4389 = vmatprep.subr.bf16.mxu0 0
    %4390 = vmatpush1.bf16.msra.mxu0 0
    %4391 = vmatprep.mubr.bf16.mxu0 0
    %4392 = vmatmul.mubr.bf16.gmra.mrb[0].mxu0 %v4357
    %v4393 = vpop.f32.mrb[0].mxu0
    %v4394 = vadd.f32 %v4309, %v4393
    %v4395 = vpop.f32.mrb[0].mxu0
    %v4396 = vadd.f32 %v4313, %v4395
    %v4397 = vpop.f32.mrb[0].mxu0
    %v4398 = vadd.f32 %v4309, %v4397
    %v4399 = vpop.f32.mrb[0].mxu0
    %v4400 = vadd.f32 %v4313, %v4399
    %4401 = vdwg.mxu0
    %4402 = vst [vmem:[%s19] sm:$0xff] %v4394
    %4403 = vst [vmem:[%s19 + $0x8] sm:$0xff] %v4396
    %4404 = vst [vmem:[%s19 + $0x10] sm:$0xff] %v4398
    %4405 = vst [vmem:[%s19 + $0x18] sm:$0xff] %v4400
    // Predicated region
    $region138: #{encoder_forward.1} parent=1 // pred_check
      _
    $region139: #{encoder_forward.1} parent=1 // pred_check_branch
      %4407 = sbr.rel (0) target = $region141
    $region140: #{encoder_forward.1} parent=1 // pred_region
      _
    $region141: #{encoder_forward.1} parent=1 // pred_fallthru
      _
    // Predicated region
    $region142: #{encoder_forward.1} parent=1 // pred_check
      _
    $region143: #{encoder_forward.1} parent=1 // pred_check_branch
      %4409 = sbr.rel (0) target = $region145
    $region144: #{encoder_forward.1} parent=1 // pred_region
      _
    $region145: #{encoder_forward.1} parent=1 // pred_fallthru
      _
    %4410 = vsyncpa [#allocation8], 1
    %4411 = vsyncpa [#allocation10], 1
    %4412 = vsyncpa [#allocation13], 1
    %4413 = vsyncpa [#allocation16], 1
    %4414 = vsyncpa [#allocation19], 1
    %4415 = vsyncpa [#allocation22], 1
    %4416 = vsyncpa [#allocation25], 1
    %4417 = vsyncpa [#allocation28], 1

</llo_original>
